<compile_context>
chip_gen: v7x
topology: tpu7x:2x2x1
jax: 0.10.0
libtpu: 0.0.40
codegen_flags: <defaults>
</compile_context>

<pallas_src>
import functools

import jax
import jax.numpy as jnp
from jax.experimental import pallas as pl
from jax.experimental.pallas import tpu as pltpu


def _attention_kernel(x_ref, wq_ref, wk_ref, wv_ref, bias_ref, wproj_ref,
                      bproj_ref, o_ref, *, blk_b, heads, dim_head):
    # x_ref:     (BLK_B, N, C)       f32
    # wq/wk/wv:  (H, C, D)           bf16 (attention scale folded into Wq)
    # bias_ref:  (H, N, N)           f32
    # wproj_ref: (H, D, out_c)       bf16
    # bproj_ref: (1, out_c)          f32
    # o_ref:     (BLK_B, N, out_c)
    n = x_ref.shape[1]
    c = x_ref.shape[2]
    m = blk_b * n          # rows fed to the MXU
    z = heads * blk_b      # folded (head, batch) attention batch

    # Fold the batch block into the matmul M dimension; bf16 MXU operands.
    xf = x_ref[...].reshape(m, c).astype(jnp.bfloat16)
    xh = jnp.broadcast_to(xf[None], (heads, m, c))               # (H, M, C)

    # Head-batched QKV projections: one batched dot_general per tensor.
    q = jnp.einsum("hmc,hcd->hmd", xh, wq_ref[...],
                   preferred_element_type=jnp.float32)           # (H, M, D)
    k = jnp.einsum("hmc,hcd->hmd", xh, wk_ref[...],
                   preferred_element_type=jnp.float32)
    v = jnp.einsum("hmc,hcd->hmd", xh, wv_ref[...],
                   preferred_element_type=jnp.float32)

    # Fold (head, batch) into one batch axis Z for the attention matmuls.
    qz = q.astype(jnp.bfloat16).reshape(z, n, dim_head)
    kz = k.astype(jnp.bfloat16).reshape(z, n, dim_head)
    vz = v.astype(jnp.bfloat16).reshape(z, n, dim_head)

    dots = jnp.einsum("zqd,zkd->zqk", qz, kz,
                      preferred_element_type=jnp.float32)        # (Z, N, N)

    # Relative position bias: per head, shared across the batch block (f32).
    dots = dots.reshape(heads, blk_b, n, n) + bias_ref[...][:, None, :, :]

    # Softmax in f32; reciprocal on the (otherwise idle) EUP slot.
    dots_max = jnp.max(dots, axis=-1, keepdims=True)
    e = jnp.exp(dots - dots_max)
    denom = jnp.sum(e, axis=-1, keepdims=True)
    attn = e * pl.reciprocal(denom, approx=True)                 # (H, BLK_B, N, N)

    ctx = jnp.einsum("zqk,zkd->zqd",
                     attn.reshape(z, n, n).astype(jnp.bfloat16), vz,
                     preferred_element_type=jnp.float32)         # (Z, N, D)

    # Output projection with head concat folded in: sum_h ctx_h @ Wproj_h.
    ctx_h = ctx.astype(jnp.bfloat16).reshape(heads, m, dim_head)  # (H, M, D)
    proj = jnp.einsum("hmd,hdo->hmo", ctx_h, wproj_ref[...],
                      preferred_element_type=jnp.float32)         # (H, M, out_c)
    out = jnp.sum(proj, axis=0) + bproj_ref[...]                  # (M, out_c)
    o_ref[...] = out.reshape(blk_b, n, out.shape[-1]).astype(o_ref.dtype)


def _pick_block_b(batch, max_blk=8):
    """Largest divisor of `batch` <= max_blk that keeps the grid length >= 2
    (so both v7x TensorCores get work when the batch allows)."""
    if batch <= 1:
        return 1
    best = 1
    for cand in range(1, min(batch, max_blk) + 1):
        if batch % cand == 0 and batch // cand >= 2:
            best = cand
    return best


def make_relative_bias(bias_table, ih, iw, heads):
    """Replicates the PyTorch relative_index construction + gather, in plain JAX."""
    ch, cw = jnp.meshgrid(jnp.arange(ih), jnp.arange(iw), indexing="ij")
    coords = jnp.stack([ch, cw]).reshape(2, -1)                 # (2, n)
    rel = coords[:, :, None] - coords[:, None, :]               # (2, n, n)
    rel = rel.at[0].add(ih - 1)
    rel = rel.at[1].add(iw - 1)
    rel = rel.at[0].multiply(2 * iw - 1)
    rel_index = rel.transpose(1, 2, 0).sum(-1).reshape(-1)      # (n*n,)
    n = ih * iw
    rel_bias = bias_table[rel_index]                            # (n*n, heads)
    rel_bias = rel_bias.reshape(n, n, heads).transpose(2, 0, 1) # (heads, n, n)
    return rel_bias


def attention_forward(x, params, *, ih, iw, heads, dim_head):
    """x: (B, N, C) with N == ih*iw. Returns (B, N, out_c)."""
    B, N, C = x.shape
    assert N == ih * iw
    inner = heads * dim_head
    scale = dim_head ** (-0.5)

    wqkv = params["wqkv"]                               # (C, 3*inner)
    wproj = params["wproj"]                             # (inner, out_c)
    bproj = params["bproj"].reshape(1, -1).astype(jnp.float32)
    out_c = wproj.shape[1]

    # Per-head weight re-layout (once, outside the kernel):
    #   Wq/Wk/Wv -> (H, C, D)   (scale folded into Wq)
    #   Wproj    -> (H, D, out_c) so the head concat folds into the contraction.
    # MXU operands stored as bf16; accumulation stays f32 in-kernel.
    def to_heads(w):                                    # (C, inner) -> (H, C, D)
        return w.reshape(C, heads, dim_head).transpose(1, 0, 2)

    wq = (to_heads(wqkv[:, :inner]) * scale).astype(jnp.bfloat16)
    wk = to_heads(wqkv[:, inner:2 * inner]).astype(jnp.bfloat16)
    wv = to_heads(wqkv[:, 2 * inner:]).astype(jnp.bfloat16)
    wproj_h = wproj.reshape(heads, dim_head, out_c).astype(jnp.bfloat16)

    rel_bias = make_relative_bias(params["bias_table"], ih, iw, heads).astype(jnp.float32)

    blk_b = _pick_block_b(B)
    grid = (B // blk_b,)

    kernel = functools.partial(_attention_kernel,
                               blk_b=blk_b, heads=heads, dim_head=dim_head)

    return pl.pallas_call(
        kernel,
        out_shape=jax.ShapeDtypeStruct((B, N, out_c), x.dtype),
        grid_spec=pltpu.PrefetchScalarGridSpec(
            num_scalar_prefetch=0,
            grid=grid,
            in_specs=[
                pl.BlockSpec((blk_b, N, C), lambda g: (g, 0, 0)),             # x block
                pl.BlockSpec((heads, C, dim_head), lambda g: (0, 0, 0)),      # Wq (scaled)
                pl.BlockSpec((heads, C, dim_head), lambda g: (0, 0, 0)),      # Wk
                pl.BlockSpec((heads, C, dim_head), lambda g: (0, 0, 0)),      # Wv
                pl.BlockSpec((heads, N, N), lambda g: (0, 0, 0)),             # relative bias
                pl.BlockSpec((heads, dim_head, out_c), lambda g: (0, 0, 0)),  # Wproj
                pl.BlockSpec((1, out_c), lambda g: (0, 0)),                   # bproj
            ],
            out_specs=pl.BlockSpec((blk_b, N, out_c), lambda g: (g, 0, 0)),
        ),
        compiler_params=pltpu.CompilerParams(
            dimension_semantics=("parallel",)),
    )(x, wq, wk, wv, rel_bias, wproj_h, bproj)


def reference_forward(x, params, *, ih, iw, heads, dim_head):
    """Pure JAX f32 reference mirroring the PyTorch forward."""
    B, N, C = x.shape
    inner = heads * dim_head
    scale = dim_head ** (-0.5)
    qkv = x @ params["wqkv"]                                   # (B, N, 3*inner)
    q, k, v = jnp.split(qkv, 3, axis=-1)

    def to_heads(t):
        return t.reshape(B, N, heads, dim_head).transpose(0, 2, 1, 3)  # (B, H, N, D)

    q, k, v = map(to_heads, (q, k, v))
    dots = jnp.einsum("bhnd,bhmd->bhnm", q, k) * scale
    rel_bias = make_relative_bias(params["bias_table"], ih, iw, heads)[None]  # (1,H,N,N)
    attn = jax.nn.softmax(dots + rel_bias, axis=-1)
    out = jnp.einsum("bhnm,bhmd->bhnd", attn, v)
    out = out.transpose(0, 2, 1, 3).reshape(B, N, inner)
    return out @ params["wproj"] + params["bproj"]


if __name__ == "__main__":
    # Small shapes consistent with the module; B=8 exercises BLK_B>1 and grid>=2.
    B = 8
    in_c = 32
    out_c = 32
    ih = iw = 4
    heads = 8
    dim_head = 32
    N = ih * iw
    inner = heads * dim_head

    key = jax.random.PRNGKey(0)
    kx, k1, k2, k3, k4 = jax.random.split(key, 5)

    x = jax.random.normal(kx, (B, N, in_c), dtype=jnp.float32)

    # Deterministic synthetic parameters (PyTorch inits bias_table to zeros;
    # we use small random values so the bias path is actually exercised).
    params = {
        "wqkv": jax.random.normal(k1, (in_c, 3 * inner), dtype=jnp.float32) * 0.05,
        "wproj": jax.random.normal(k2, (inner, out_c), dtype=jnp.float32) * 0.05,
        "bproj": jax.random.normal(k3, (1, out_c), dtype=jnp.float32) * 0.05,
        "bias_table": jax.random.normal(
            k4, ((2 * ih - 1) * (2 * iw - 1), heads), dtype=jnp.float32) * 0.05,
    }

    out = attention_forward(x, params, ih=ih, iw=iw, heads=heads, dim_head=dim_head)
    out = jax.block_until_ready(out)

    ref = reference_forward(x, params, ih=ih, iw=iw, heads=heads, dim_head=dim_head)
    assert out.shape == (B, N, out_c)
    # Kernel uses bf16 MXU operands (f32 accumulation) + approx reciprocal, so
    # compare against the f32 reference with a bf16-appropriate tolerance.
    assert jnp.allclose(out, ref, atol=2e-2, rtol=2e-2), "mismatch vs reference"

    print("KERNEL_OK")
</pallas_src>

<mosaic_0001>
module attributes {stable_mosaic.version = 11 : i64} {
  func.func @_attention_kernel(%arg0: i32, %arg1: memref<4x16x32xf32, #tpu.memory_space<vmem>>, %arg2: memref<8x32x32xbf16, #tpu.memory_space<vmem>>, %arg3: memref<8x32x32xbf16, #tpu.memory_space<vmem>>, %arg4: memref<8x32x32xbf16, #tpu.memory_space<vmem>>, %arg5: memref<8x16x16xf32, #tpu.memory_space<vmem>>, %arg6: memref<8x32x32xbf16, #tpu.memory_space<vmem>>, %arg7: memref<1x32xf32, #tpu.memory_space<vmem>>, %arg8: memref<4x16x32xf32, #tpu.memory_space<vmem>>) attributes {dimension_semantics = [#tpu.dimension_semantics<parallel>], iteration_bounds = array<i64: 2>, scalar_prefetch = 0 : i64, scratch_operands = 0 : i64, tpu.core_type = #tpu.core_type<tc>, window_params = [{transform_indices = @transform_0, window_bounds = array<i64: 4, 16, 32>}, {pipeline_mode = #tpu.pipeline_mode<synchronous>, transform_indices = @transform_1, window_bounds = array<i64: 8, 32, 32>}, {pipeline_mode = #tpu.pipeline_mode<synchronous>, transform_indices = @transform_2, window_bounds = array<i64: 8, 32, 32>}, {pipeline_mode = #tpu.pipeline_mode<synchronous>, transform_indices = @transform_3, window_bounds = array<i64: 8, 32, 32>}, {pipeline_mode = #tpu.pipeline_mode<synchronous>, transform_indices = @transform_4, window_bounds = array<i64: 8, 16, 16>}, {pipeline_mode = #tpu.pipeline_mode<synchronous>, transform_indices = @transform_5, window_bounds = array<i64: 8, 32, 32>}, {pipeline_mode = #tpu.pipeline_mode<synchronous>, transform_indices = @transform_6, window_bounds = array<i64: 1, 32>}, {transform_indices = @transform_7, window_bounds = array<i64: 4, 16, 32>}]} {
    %c0 = arith.constant 0 : index
    %c0_0 = arith.constant 0 : index
    %c0_1 = arith.constant 0 : index
    %0 = vector.load %arg1[%c0, %c0_0, %c0_1] : memref<4x16x32xf32, #tpu.memory_space<vmem>>, vector<4x16x32xf32>
    %1 = vector.shape_cast %0 : vector<4x16x32xf32> to vector<64x32xf32>
    %2 = arith.truncf %1 : vector<64x32xf32> to vector<64x32xbf16>
    %3 = vector.shape_cast %2 : vector<64x32xbf16> to vector<1x64x32xbf16>
    %4 = vector.shape_cast %3 : vector<1x64x32xbf16> to vector<1x64x32xbf16>
    %5 = vector.broadcast %4 : vector<1x64x32xbf16> to vector<8x64x32xbf16>
    %c0_2 = arith.constant 0 : index
    %c0_3 = arith.constant 0 : index
    %c0_4 = arith.constant 0 : index
    %6 = vector.load %arg2[%c0_2, %c0_3, %c0_4] : memref<8x32x32xbf16, #tpu.memory_space<vmem>>, vector<8x32x32xbf16>
    "tpu.trace_start"() <{level = 10 : i32, message = "hmc,hcd->hmd"}> : () -> ()
    %cst = arith.constant dense<0.000000e+00> : vector<8x64x32xf32>
    %7 = tpu.matmul %5, %6, %cst {dimension_numbers = #tpu.dot_dimension_numbers<[2], [1], [1], [2], [0, 0, 0, 1, 1, 2], [0], [0]>} : vector<8x64x32xbf16>, vector<8x32x32xbf16>, vector<8x64x32xf32> -> vector<8x64x32xf32>
    "tpu.trace_stop"() : () -> ()
    %c0_5 = arith.constant 0 : index
    %c0_6 = arith.constant 0 : index
    %c0_7 = arith.constant 0 : index
    %8 = vector.load %arg3[%c0_5, %c0_6, %c0_7] : memref<8x32x32xbf16, #tpu.memory_space<vmem>>, vector<8x32x32xbf16>
    "tpu.trace_start"() <{level = 10 : i32, message = "hmc,hcd->hmd"}> : () -> ()
    %cst_8 = arith.constant dense<0.000000e+00> : vector<8x64x32xf32>
    %9 = tpu.matmul %5, %8, %cst_8 {dimension_numbers = #tpu.dot_dimension_numbers<[2], [1], [1], [2], [0, 0, 0, 1, 1, 2], [0], [0]>} : vector<8x64x32xbf16>, vector<8x32x32xbf16>, vector<8x64x32xf32> -> vector<8x64x32xf32>
    "tpu.trace_stop"() : () -> ()
    %c0_9 = arith.constant 0 : index
    %c0_10 = arith.constant 0 : index
    %c0_11 = arith.constant 0 : index
    %10 = vector.load %arg4[%c0_9, %c0_10, %c0_11] : memref<8x32x32xbf16, #tpu.memory_space<vmem>>, vector<8x32x32xbf16>
    "tpu.trace_start"() <{level = 10 : i32, message = "hmc,hcd->hmd"}> : () -> ()
    %cst_12 = arith.constant dense<0.000000e+00> : vector<8x64x32xf32>
    %11 = tpu.matmul %5, %10, %cst_12 {dimension_numbers = #tpu.dot_dimension_numbers<[2], [1], [1], [2], [0, 0, 0, 1, 1, 2], [0], [0]>} : vector<8x64x32xbf16>, vector<8x32x32xbf16>, vector<8x64x32xf32> -> vector<8x64x32xf32>
    "tpu.trace_stop"() : () -> ()
    %12 = arith.truncf %7 : vector<8x64x32xf32> to vector<8x64x32xbf16>
    %13 = vector.shape_cast %12 : vector<8x64x32xbf16> to vector<32x16x32xbf16>
    %14 = arith.truncf %9 : vector<8x64x32xf32> to vector<8x64x32xbf16>
    %15 = vector.shape_cast %14 : vector<8x64x32xbf16> to vector<32x16x32xbf16>
    %16 = arith.truncf %11 : vector<8x64x32xf32> to vector<8x64x32xbf16>
    %17 = vector.shape_cast %16 : vector<8x64x32xbf16> to vector<32x16x32xbf16>
    "tpu.trace_start"() <{level = 10 : i32, message = "zqd,zkd->zqk"}> : () -> ()
    %cst_13 = arith.constant dense<0.000000e+00> : vector<32x16x16xf32>
    %18 = tpu.matmul %13, %15, %cst_13 {dimension_numbers = #tpu.dot_dimension_numbers<[2], [2], [1], [1], [0, 0, 0, 1, 1, 1], [0], [0]>} : vector<32x16x32xbf16>, vector<32x16x32xbf16>, vector<32x16x16xf32> -> vector<32x16x16xf32>
    "tpu.trace_stop"() : () -> ()
    %19 = vector.shape_cast %18 : vector<32x16x16xf32> to vector<8x4x16x16xf32>
    %c0_14 = arith.constant 0 : index
    %c0_15 = arith.constant 0 : index
    %c0_16 = arith.constant 0 : index
    %20 = vector.load %arg5[%c0_14, %c0_15, %c0_16] : memref<8x16x16xf32, #tpu.memory_space<vmem>>, vector<8x16x16xf32>
    %21 = vector.shape_cast %20 : vector<8x16x16xf32> to vector<8x1x16x16xf32>
    %22 = vector.broadcast %21 : vector<8x1x16x16xf32> to vector<8x4x16x16xf32>
    %23 = arith.addf %19, %22 : vector<8x4x16x16xf32>
    %cst_17 = arith.constant dense<0xFF800000> : vector<8x4x16xf32>
    %24 = vector.multi_reduction <maximumf>, %23, %cst_17 [3] : vector<8x4x16x16xf32> to vector<8x4x16xf32>
    %25 = vector.shape_cast %24 : vector<8x4x16xf32> to vector<8x4x16x1xf32>
    %26 = vector.broadcast %25 : vector<8x4x16x1xf32> to vector<8x4x16x16xf32>
    %27 = arith.subf %23, %26 : vector<8x4x16x16xf32>
    %28 = math.exp %27 : vector<8x4x16x16xf32>
    %cst_18 = arith.constant dense<0.000000e+00> : vector<8x4x16xf32>
    %29 = vector.multi_reduction <add>, %28, %cst_18 [3] : vector<8x4x16x16xf32> to vector<8x4x16xf32>
    %30 = vector.shape_cast %29 : vector<8x4x16xf32> to vector<8x4x16x1xf32>
    %31 = tpu.reciprocal %30 {approx = true} : vector<8x4x16x1xf32> -> vector<8x4x16x1xf32>
    %32 = vector.broadcast %31 : vector<8x4x16x1xf32> to vector<8x4x16x16xf32>
    %33 = arith.mulf %28, %32 : vector<8x4x16x16xf32>
    %34 = vector.shape_cast %33 : vector<8x4x16x16xf32> to vector<32x16x16xf32>
    %35 = arith.truncf %34 : vector<32x16x16xf32> to vector<32x16x16xbf16>
    "tpu.trace_start"() <{level = 10 : i32, message = "zqk,zkd->zqd"}> : () -> ()
    %cst_19 = arith.constant dense<0.000000e+00> : vector<32x16x32xf32>
    %36 = tpu.matmul %35, %17, %cst_19 {dimension_numbers = #tpu.dot_dimension_numbers<[2], [1], [1], [2], [0, 0, 0, 1, 1, 2], [0], [0]>} : vector<32x16x16xbf16>, vector<32x16x32xbf16>, vector<32x16x32xf32> -> vector<32x16x32xf32>
    "tpu.trace_stop"() : () -> ()
    %37 = arith.truncf %36 : vector<32x16x32xf32> to vector<32x16x32xbf16>
    %38 = vector.shape_cast %37 : vector<32x16x32xbf16> to vector<8x64x32xbf16>
    %c0_20 = arith.constant 0 : index
    %c0_21 = arith.constant 0 : index
    %c0_22 = arith.constant 0 : index
    %39 = vector.load %arg6[%c0_20, %c0_21, %c0_22] : memref<8x32x32xbf16, #tpu.memory_space<vmem>>, vector<8x32x32xbf16>
    "tpu.trace_start"() <{level = 10 : i32, message = "hmd,hdo->hmo"}> : () -> ()
    %cst_23 = arith.constant dense<0.000000e+00> : vector<8x64x32xf32>
    %40 = tpu.matmul %38, %39, %cst_23 {dimension_numbers = #tpu.dot_dimension_numbers<[2], [1], [1], [2], [0, 0, 0, 1, 1, 2], [0], [0]>} : vector<8x64x32xbf16>, vector<8x32x32xbf16>, vector<8x64x32xf32> -> vector<8x64x32xf32>
    "tpu.trace_stop"() : () -> ()
    %cst_24 = arith.constant dense<0.000000e+00> : vector<64x32xf32>
    %41 = vector.multi_reduction <add>, %40, %cst_24 [0] : vector<8x64x32xf32> to vector<64x32xf32>
    %c0_25 = arith.constant 0 : index
    %c0_26 = arith.constant 0 : index
    %42 = vector.load %arg7[%c0_25, %c0_26] : memref<1x32xf32, #tpu.memory_space<vmem>>, vector<1x32xf32>
    %43 = vector.broadcast %42 : vector<1x32xf32> to vector<64x32xf32>
    %44 = arith.addf %41, %43 : vector<64x32xf32>
    %45 = vector.shape_cast %44 : vector<64x32xf32> to vector<4x16x32xf32>
    %c0_27 = arith.constant 0 : index
    %c0_28 = arith.constant 0 : index
    %c0_29 = arith.constant 0 : index
    %46 = vector.load %arg8[%c0_27, %c0_28, %c0_29] : memref<4x16x32xf32, #tpu.memory_space<vmem>>, vector<4x16x32xf32>
    tpu.vector_store %arg8[%c0_27, %c0_28, %c0_29], %45 {strides = array<i32>} : memref<4x16x32xf32, #tpu.memory_space<vmem>>, vector<4x16x32xf32>,
    return
  }
  func.func @transform_0(%arg0: i32) -> (i32, i32, i32) {
    %c0_i32 = arith.constant 0 : i32
    %c0_i32_0 = arith.constant 0 : i32
    %c0_i32_1 = arith.constant 0 : i32
    return %arg0, %c0_i32, %c0_i32_0 : i32, i32, i32
  }
  func.func @transform_1(%arg0: i32) -> (i32, i32, i32) {
    %c0_i32 = arith.constant 0 : i32
    %c0_i32_0 = arith.constant 0 : i32
    %c0_i32_1 = arith.constant 0 : i32
    %c0_i32_2 = arith.constant 0 : i32
    return %c0_i32, %c0_i32_0, %c0_i32_1 : i32, i32, i32
  }
  func.func @transform_2(%arg0: i32) -> (i32, i32, i32) {
    %c0_i32 = arith.constant 0 : i32
    %c0_i32_0 = arith.constant 0 : i32
    %c0_i32_1 = arith.constant 0 : i32
    %c0_i32_2 = arith.constant 0 : i32
    return %c0_i32, %c0_i32_0, %c0_i32_1 : i32, i32, i32
  }
  func.func @transform_3(%arg0: i32) -> (i32, i32, i32) {
    %c0_i32 = arith.constant 0 : i32
    %c0_i32_0 = arith.constant 0 : i32
    %c0_i32_1 = arith.constant 0 : i32
    %c0_i32_2 = arith.constant 0 : i32
    return %c0_i32, %c0_i32_0, %c0_i32_1 : i32, i32, i32
  }
  func.func @transform_4(%arg0: i32) -> (i32, i32, i32) {
    %c0_i32 = arith.constant 0 : i32
    %c0_i32_0 = arith.constant 0 : i32
    %c0_i32_1 = arith.constant 0 : i32
    %c0_i32_2 = arith.constant 0 : i32
    return %c0_i32, %c0_i32_0, %c0_i32_1 : i32, i32, i32
  }
  func.func @transform_5(%arg0: i32) -> (i32, i32, i32) {
    %c0_i32 = arith.constant 0 : i32
    %c0_i32_0 = arith.constant 0 : i32
    %c0_i32_1 = arith.constant 0 : i32
    %c0_i32_2 = arith.constant 0 : i32
    return %c0_i32, %c0_i32_0, %c0_i32_1 : i32, i32, i32
  }
  func.func @transform_6(%arg0: i32) -> (i32, i32) {
    %c0_i32 = arith.constant 0 : i32
    %c0_i32_0 = arith.constant 0 : i32
    %c0_i32_1 = arith.constant 0 : i32
    return %c0_i32, %c0_i32_0 : i32, i32
  }
  func.func @transform_7(%arg0: i32) -> (i32, i32, i32) {
    %c0_i32 = arith.constant 0 : i32
    %c0_i32_0 = arith.constant 0 : i32
    %c0_i32_1 = arith.constant 0 : i32
    return %arg0, %c0_i32, %c0_i32_0 : i32, i32, i32
  }
}

</mosaic_0001>

<llo_original>
// kernel: tpu_custom_call.1
$region0: #{tpu_custom_call.1}
  #allocation0 [shape = 'u32[]', space=smem, size = 0x4, offset = 0x4, fixed_abs, tag = 'smem constant byte address 0x4 - core index']
  #allocation1 [shape = 'u32[144,128]{1,0:T(1,128)}', space=vmem, size = 0x12000, scoped, tag = 'internal scratch']
  %s0 = inlined_call_operand.hbm [shape: f32[8,16,32], index: 0, kind: input, shape index: {}]
  %s1 = inlined_call_operand.hbm [shape: bf16[8,32,32], index: 1, kind: input, shape index: {}]
  %s2 = inlined_call_operand.hbm [shape: bf16[8,32,32], index: 2, kind: input, shape index: {}]
  %s3 = inlined_call_operand.hbm [shape: bf16[8,32,32], index: 3, kind: input, shape index: {}]
  %s4 = inlined_call_operand.hbm [shape: f32[8,16,16], index: 4, kind: input, shape index: {}]
  %s5 = inlined_call_operand.hbm [shape: bf16[8,32,32], index: 5, kind: input, shape index: {}]
  %s6 = inlined_call_operand.vmem [shape: f32[1,32], index: 6, kind: input, shape index: {}]
  %s7 = inlined_call_operand.hbm [shape: f32[8,16,32], index: 7, kind: output, shape index: {}]
  %s8 = sld [smem:[#allocation0]]
  $region85: #{tpu_custom_call.1} parent=0
    _
  %s10 = ssub.s32 1, %s8
  %s11 = scalar_select 0, %s10, %s8
  $region1: #{tpu_custom_call.1} parent=0
    #allocation2 [shape = 'u8[65536]{0}', space=vmem, size = 0x10000, scoped, tag = 'input window, operand 0']
    #allocation3 [shape = 's32[2]{0}', space=sflag, size = 0x8, scoped, tag = 'scoped memory for tpu_custom_call.1']
    #allocation4 [shape = 's32[2]{0}', space=sflag, size = 0x8, scoped, tag = 'scoped memory for tpu_custom_call.1']
    #allocation5 [shape = 'u8[65536]{0}', space=vmem, size = 0x10000, scoped, tag = 'input window, operand 1, single buffered']
    #allocation6 [shape = 's32[1]{0}', space=sflag, size = 0x4, scoped, tag = 'scoped memory for tpu_custom_call.1']
    #allocation7 [shape = 'u8[65536]{0}', space=vmem, size = 0x10000, scoped, tag = 'input window, operand 2, single buffered']
    #allocation8 [shape = 'u8[65536]{0}', space=vmem, size = 0x10000, scoped, tag = 'input window, operand 3, single buffered']
    #allocation9 [shape = 's32[1]{0}', space=sflag, size = 0x4, scoped, tag = 'scoped memory for tpu_custom_call.1']
    #allocation10 [shape = 'u8[65536]{0}', space=vmem, size = 0x10000, scoped, tag = 'input window, operand 4, single buffered']
    #allocation11 [shape = 'u8[65536]{0}', space=vmem, size = 0x10000, scoped, tag = 'input window, operand 5, single buffered']
    #allocation12 [shape = 's32[1]{0}', space=sflag, size = 0x4, scoped, tag = 'scoped memory for tpu_custom_call.1']
    #allocation13 [shape = 'u8[65536]{0}', space=vmem, size = 0x10000, scoped, tag = 'output window, operand 0']
    %12 = vsyncpa [#allocation3], 0
    %s13 = scalar_lea.sflag [#allocation3], 1
    %14 = vsyncpa %s13, 0
    %15 = vsyncpa [#allocation6], 0
    %16 = vsyncpa [#allocation9], 0
    %17 = vsyncpa [#allocation12], 0
    %18 = vsyncpa [#allocation4], 0
    %s19 = scalar_lea.sflag [#allocation4], 1
    %20 = vsyncpa %s19, 0
    loop: start=0, step=1, limit=4
    $region2: #{tpu_custom_call.1} parent=1 // loop_pre_header
      _
    $region3: #{tpu_custom_call.1} parent=1 // loop_header
      %s22 = sphi 0, %s26
      %p23 = scmp.ge.s32.totalorder %s22, 4
      %s32 = sphi 0, %s34
      %s35 = sphi 0, %s32
      %s36 = sphi 0, %s35
      %s52 = sphi 0, %s36
      %s56 = sphi 0, %s56
      %s58 = sphi 0, %s56
      %s59 = sphi 0, %s58
      %s73 = sphi 0, %s59
      %s77 = sphi 0, %s77
      %s79 = sphi 0, %s77
      %s80 = sphi 0, %s79
      %s94 = sphi 0, %s80
      %s98 = sphi 0, %s98
      %s100 = sphi 0, %s98
      %s101 = sphi 0, %s100
      %s115 = sphi 0, %s101
      %s119 = sphi 0, %s119
      %s121 = sphi 0, %s119
      %s122 = sphi 0, %s121
      %s136 = sphi 0, %s122
      %s140 = sphi 0, %s140
      %s142 = sphi 0, %s140
      %s143 = sphi 0, %s142
      %s157 = sphi 0, %s143
      %s161 = sphi 0, %s161
      %s163 = sphi 0, %s161
      %s164 = sphi 0, %s163
      %s178 = sphi 0, %s164
      %s184 = sphi 0, %s186
      %s187 = sphi 0, %s184
      %s188 = sphi 0, %s187
      %s204 = sphi 0, %s188
    $region4: #{tpu_custom_call.1} parent=1 // loop_header_branch
      %25 = sbr.rel (%p23) target = $region8
    $region5: #{tpu_custom_call.1} parent=1 // loop_body
      %s27 = ssub.s32 %s22, 1
      %s28 = ssub.s32 %s22, 2
      %s29 = sadd.s32 %s22, 1
      %s30 = ssub.s32 %s22, %s29
      %p31 = scmp.eq.s32.totalorder %s30, 0
      %s33 = sadd.s32 %s32, 1
      %s34 = scalar_select %p31, %s32, %s33
      %p37 = pneg %p31
      %p38 = scmp.eq.s32.totalorder %s22, 1
      %p39 = por %p37, %p38
      %p40 = scmp.ne.s32.totalorder %s32, %s35
      %p41 = scmp.eq.s32.totalorder %s22, 0
      %p42 = por %p40, %p41
      %p43 = scmp.ne.s32.totalorder %s32, %s35
      %p44 = scmp.eq.s32.totalorder %s27, 1
      %p45 = por %p43, %p44
      %p46 = scmp.ne.s32.totalorder %s35, %s36
      %p47 = scmp.eq.s32.totalorder %s27, 0
      %p48 = por %p46, %p47
      %p49 = scmp.ne.s32.totalorder %s35, %s36
      %p50 = scmp.eq.s32.totalorder %s28, 1
      %p51 = por %p49, %p50
      %p53 = scmp.ne.s32.totalorder %s36, %s52
      %p54 = scmp.eq.s32.totalorder %s28, 0
      %p55 = por %p53, %p54
      %s57 = sadd.s32 %s56, 1
      %p60 = scmp.eq.s32.totalorder %s22, 1
      %p61 = scmp.ne.s32.totalorder %s56, %s58
      %p62 = scmp.eq.s32.totalorder %s22, 0
      %p63 = por %p61, %p62
      %p64 = scmp.ne.s32.totalorder %s56, %s58
      %p65 = scmp.eq.s32.totalorder %s27, 1
      %p66 = por %p64, %p65
      %p67 = scmp.ne.s32.totalorder %s58, %s59
      %p68 = scmp.eq.s32.totalorder %s27, 0
      %p69 = por %p67, %p68
      %p70 = scmp.ne.s32.totalorder %s58, %s59
      %p71 = scmp.eq.s32.totalorder %s28, 1
      %p72 = por %p70, %p71
      %p74 = scmp.ne.s32.totalorder %s59, %s73
      %p75 = scmp.eq.s32.totalorder %s28, 0
      %p76 = por %p74, %p75
      %s78 = sadd.s32 %s77, 1
      %p81 = scmp.eq.s32.totalorder %s22, 1
      %p82 = scmp.ne.s32.totalorder %s77, %s79
      %p83 = scmp.eq.s32.totalorder %s22, 0
      %p84 = por %p82, %p83
      %p85 = scmp.ne.s32.totalorder %s77, %s79
      %p86 = scmp.eq.s32.totalorder %s27, 1
      %p87 = por %p85, %p86
      %p88 = scmp.ne.s32.totalorder %s79, %s80
      %p89 = scmp.eq.s32.totalorder %s27, 0
      %p90 = por %p88, %p89
      %p91 = scmp.ne.s32.totalorder %s79, %s80
      %p92 = scmp.eq.s32.totalorder %s28, 1
      %p93 = por %p91, %p92
      %p95 = scmp.ne.s32.totalorder %s80, %s94
      %p96 = scmp.eq.s32.totalorder %s28, 0
      %p97 = por %p95, %p96
      %s99 = sadd.s32 %s98, 1
      %p102 = scmp.eq.s32.totalorder %s22, 1
      %p103 = scmp.ne.s32.totalorder %s98, %s100
      %p104 = scmp.eq.s32.totalorder %s22, 0
      %p105 = por %p103, %p104
      %p106 = scmp.ne.s32.totalorder %s98, %s100
      %p107 = scmp.eq.s32.totalorder %s27, 1
      %p108 = por %p106, %p107
      %p109 = scmp.ne.s32.totalorder %s100, %s101
      %p110 = scmp.eq.s32.totalorder %s27, 0
      %p111 = por %p109, %p110
      %p112 = scmp.ne.s32.totalorder %s100, %s101
      %p113 = scmp.eq.s32.totalorder %s28, 1
      %p114 = por %p112, %p113
      %p116 = scmp.ne.s32.totalorder %s101, %s115
      %p117 = scmp.eq.s32.totalorder %s28, 0
      %p118 = por %p116, %p117
      %s120 = sadd.s32 %s119, 1
      %p123 = scmp.eq.s32.totalorder %s22, 1
      %p124 = scmp.ne.s32.totalorder %s119, %s121
      %p125 = scmp.eq.s32.totalorder %s22, 0
      %p126 = por %p124, %p125
      %p127 = scmp.ne.s32.totalorder %s119, %s121
      %p128 = scmp.eq.s32.totalorder %s27, 1
      %p129 = por %p127, %p128
      %p130 = scmp.ne.s32.totalorder %s121, %s122
      %p131 = scmp.eq.s32.totalorder %s27, 0
      %p132 = por %p130, %p131
      %p133 = scmp.ne.s32.totalorder %s121, %s122
      %p134 = scmp.eq.s32.totalorder %s28, 1
      %p135 = por %p133, %p134
      %p137 = scmp.ne.s32.totalorder %s122, %s136
      %p138 = scmp.eq.s32.totalorder %s28, 0
      %p139 = por %p137, %p138
      %s141 = sadd.s32 %s140, 1
      %p144 = scmp.eq.s32.totalorder %s22, 1
      %p145 = scmp.ne.s32.totalorder %s140, %s142
      %p146 = scmp.eq.s32.totalorder %s22, 0
      %p147 = por %p145, %p146
      %p148 = scmp.ne.s32.totalorder %s140, %s142
      %p149 = scmp.eq.s32.totalorder %s27, 1
      %p150 = por %p148, %p149
      %p151 = scmp.ne.s32.totalorder %s142, %s143
      %p152 = scmp.eq.s32.totalorder %s27, 0
      %p153 = por %p151, %p152
      %p154 = scmp.ne.s32.totalorder %s142, %s143
      %p155 = scmp.eq.s32.totalorder %s28, 1
      %p156 = por %p154, %p155
      %p158 = scmp.ne.s32.totalorder %s143, %s157
      %p159 = scmp.eq.s32.totalorder %s28, 0
      %p160 = por %p158, %p159
      %s162 = sadd.s32 %s161, 1
      %p165 = scmp.eq.s32.totalorder %s22, 1
      %p166 = scmp.ne.s32.totalorder %s161, %s163
      %p167 = scmp.eq.s32.totalorder %s22, 0
      %p168 = por %p166, %p167
      %p169 = scmp.ne.s32.totalorder %s161, %s163
      %p170 = scmp.eq.s32.totalorder %s27, 1
      %p171 = por %p169, %p170
      %p172 = scmp.ne.s32.totalorder %s163, %s164
      %p173 = scmp.eq.s32.totalorder %s27, 0
      %p174 = por %p172, %p173
      %p175 = scmp.ne.s32.totalorder %s163, %s164
      %p176 = scmp.eq.s32.totalorder %s28, 1
      %p177 = por %p175, %p176
      %p179 = scmp.ne.s32.totalorder %s164, %s178
      %p180 = scmp.eq.s32.totalorder %s28, 0
      %p181 = por %p179, %p180
      %s182 = ssub.s32 %s22, %s29
      %p183 = scmp.eq.s32.totalorder %s182, 0
      %s185 = sadd.s32 %s184, 1
      %s186 = scalar_select %p183, %s184, %s185
      %p189 = pneg %p183
      %p190 = scmp.eq.s32.totalorder %s22, 1
      %p191 = por %p189, %p190
      %p192 = scmp.ne.s32.totalorder %s184, %s187
      %p193 = scmp.eq.s32.totalorder %s22, 0
      %p194 = por %p192, %p193
      %p195 = scmp.ne.s32.totalorder %s184, %s187
      %p196 = scmp.eq.s32.totalorder %s27, 1
      %p197 = por %p195, %p196
      %p198 = scmp.ne.s32.totalorder %s187, %s188
      %p199 = scmp.eq.s32.totalorder %s27, 0
      %p200 = por %p198, %p199
      %p201 = scmp.ne.s32.totalorder %s187, %s188
      %p202 = scmp.eq.s32.totalorder %s28, 1
      %p203 = por %p201, %p202
      %p205 = scmp.ne.s32.totalorder %s188, %s204
      %p206 = scmp.eq.s32.totalorder %s28, 0
      %p207 = por %p205, %p206
      %p208 = scmp.le.s32.totalorder 1, %s22
      %p209 = scmp.lt.s32.totalorder %s22, 3
      %p210 = pnand %p208, %p209
      %p211 = pneg %p210
      // Predicated region
      $region9: #{tpu_custom_call.1} parent=5 // pred_check
        _
      $region10: #{tpu_custom_call.1} parent=5 // pred_check_branch
        %213 = sbr.rel (%p210) target = $region12
      $region11: #{tpu_custom_call.1} parent=5 // pred_region
        %s214 = ssub.s32 %s22, 1
        // Predicated region
        $region13: #{tpu_custom_call.1} parent=11 // pred_check
          %p215 = pneg %p69
        $region14: #{tpu_custom_call.1} parent=11 // pred_check_branch
          %217 = sbr.rel (%p215) target = $region16
        $region15: #{tpu_custom_call.1} parent=11 // pred_region
          %s219 = ssub.s32 2048, 2048
          %220 = vsyncadd [#allocation6], %s219
          %s221 = sshll.u32 [#allocation5], 4
          %s222 = int_to_ptr.vmem [resolvable:$true] %s221
          %227 = dma.hbm_to_vmem [thread:$0]  %s1, 2048, %s222, [#allocation6], 64, 64, 4
        $region16: #{tpu_custom_call.1} parent=11 // pred_fallthru
          _
        // Predicated region
        $region17: #{tpu_custom_call.1} parent=11 // pred_check
          %p228 = pneg %p90
        $region18: #{tpu_custom_call.1} parent=11 // pred_check_branch
          %230 = sbr.rel (%p228) target = $region20
        $region19: #{tpu_custom_call.1} parent=11 // pred_region
          %s232 = ssub.s32 2048, 2048
          %233 = vsyncadd [#allocation6], %s232
          %s234 = sshll.u32 [#allocation7], 4
          %s235 = int_to_ptr.vmem [resolvable:$true] %s234
          %240 = dma.hbm_to_vmem [thread:$0]  %s2, 2048, %s235, [#allocation6], 64, 64, 4
        $region20: #{tpu_custom_call.1} parent=11 // pred_fallthru
          _
        // Predicated region
        $region21: #{tpu_custom_call.1} parent=11 // pred_check
          %p241 = pneg %p111
        $region22: #{tpu_custom_call.1} parent=11 // pred_check_branch
          %243 = sbr.rel (%p241) target = $region24
        $region23: #{tpu_custom_call.1} parent=11 // pred_region
          %s245 = ssub.s32 2048, 2048
          %246 = vsyncadd [#allocation9], %s245
          %s247 = sshll.u32 [#allocation8], 4
          %s248 = int_to_ptr.vmem [resolvable:$true] %s247
          %253 = dma.hbm_to_vmem [thread:$0]  %s3, 2048, %s248, [#allocation9], 64, 64, 4
        $region24: #{tpu_custom_call.1} parent=11 // pred_fallthru
          _
        // Predicated region
        $region25: #{tpu_custom_call.1} parent=11 // pred_check
          %p254 = pneg %p132
        $region26: #{tpu_custom_call.1} parent=11 // pred_check_branch
          %256 = sbr.rel (%p254) target = $region28
        $region27: #{tpu_custom_call.1} parent=11 // pred_region
          %s258 = ssub.s32 2048, 2048
          %259 = vsyncadd [#allocation9], %s258
          %s260 = sshll.u32 [#allocation10], 4
          %s261 = int_to_ptr.vmem [resolvable:$true] %s260
          %266 = dma.hbm_to_vmem [thread:$0]  %s4, 2048, %s261, [#allocation9], 128, 128, 8
        $region28: #{tpu_custom_call.1} parent=11 // pred_fallthru
          _
        // Predicated region
        $region29: #{tpu_custom_call.1} parent=11 // pred_check
          %p267 = pneg %p153
        $region30: #{tpu_custom_call.1} parent=11 // pred_check_branch
          %269 = sbr.rel (%p267) target = $region32
        $region31: #{tpu_custom_call.1} parent=11 // pred_region
          %s271 = ssub.s32 2048, 2048
          %272 = vsyncadd [#allocation12], %s271
          %s273 = sshll.u32 [#allocation11], 4
          %s274 = int_to_ptr.vmem [resolvable:$true] %s273
          %279 = dma.hbm_to_vmem [thread:$0]  %s5, 2048, %s274, [#allocation12], 64, 64, 4
        $region32: #{tpu_custom_call.1} parent=11 // pred_fallthru
          _
        // Predicated region
        $region33: #{tpu_custom_call.1} parent=11 // pred_check
          %p280 = pneg %p174
        $region34: #{tpu_custom_call.1} parent=11 // pred_check_branch
          %282 = sbr.rel (%p280) target = $region36
        $region35: #{tpu_custom_call.1} parent=11 // pred_region
          _
        $region36: #{tpu_custom_call.1} parent=11 // pred_fallthru
          _
      $region12: #{tpu_custom_call.1} parent=5 // pred_fallthru
        _
      %p283 = scmp.lt.s32.totalorder %s22, 2
      // Predicated region
      $region37: #{tpu_custom_call.1} parent=5 // pred_check
        %p284 = pneg %p283
      $region38: #{tpu_custom_call.1} parent=5 // pred_check_branch
        %286 = sbr.rel (%p284) target = $region40
      $region39: #{tpu_custom_call.1} parent=5 // pred_region
        // Predicated region
        $region41: #{tpu_custom_call.1} parent=39 // pred_check
          %p287 = pneg %p42
        $region42: #{tpu_custom_call.1} parent=39 // pred_check_branch
          %289 = sbr.rel (%p287) target = $region44
        $region43: #{tpu_custom_call.1} parent=39 // pred_region
          %s290 = sand.u32 %s32, 1
          %s291 = scalar_lea.sflag [#allocation3], %s290
          %s292 = sand.u32 %s32, 1
          %s293 = smul.addr %s292, 64
          %s294 = scalar_lea.vmem [#allocation2], %s293
          %s295 = smul.u32 4, %s22
          %s297 = ssub.s32 1024, 1024
          %298 = vsyncadd %s291, %s297
          %s299 = smul.addr %s295, 2
          %s300 = smul.addr %s299, 128
          %s301 = scalar_lea.hbm %s0, %s300
          %s302 = sshll.u32 %s294, 4
          %s303 = int_to_ptr.vmem [resolvable:$true] %s302
          %308 = dma.hbm_to_vmem [thread:$0]  %s301, 1024, %s303, %s291, 128, 128, 8
        $region44: #{tpu_custom_call.1} parent=39 // pred_fallthru
          _
      $region40: #{tpu_custom_call.1} parent=5 // pred_fallthru
        _
      %p309 = scmp.le.s32.totalorder 1, %s22
      %p310 = scmp.lt.s32.totalorder %s22, 3
      %p311 = pnand %p309, %p310
      %p312 = pneg %p311
      // Predicated region
      $region45: #{tpu_custom_call.1} parent=5 // pred_check
        _
      $region46: #{tpu_custom_call.1} parent=5 // pred_check_branch
        %314 = sbr.rel (%p311) target = $region48
      $region47: #{tpu_custom_call.1} parent=5 // pred_region
        %s315 = ssub.s32 %s22, 1
        %s316 = sand.u32 %s35, 1
        %s317 = scalar_lea.sflag [#allocation3], %s316
        %s318 = sand.u32 %s35, 1
        %s319 = smul.addr %s318, 64
        %s320 = scalar_lea.vmem [#allocation2], %s319
        // Predicated region
        $region49: #{tpu_custom_call.1} parent=47 // pred_check
          %p321 = pneg %p48
        $region50: #{tpu_custom_call.1} parent=47 // pred_check_branch
          %323 = sbr.rel (%p321) target = $region52
        $region51: #{tpu_custom_call.1} parent=47 // pred_region
          %324 = dma.done %s317, 1024
        $region52: #{tpu_custom_call.1} parent=47 // pred_fallthru
          _
        // Predicated region
        $region53: #{tpu_custom_call.1} parent=47 // pred_check
          %p325 = pneg %p69
        $region54: #{tpu_custom_call.1} parent=47 // pred_check_branch
          %327 = sbr.rel (%p325) target = $region56
        $region55: #{tpu_custom_call.1} parent=47 // pred_region
          %328 = dma.done [#allocation6], 2048
        $region56: #{tpu_custom_call.1} parent=47 // pred_fallthru
          _
        // Predicated region
        $region57: #{tpu_custom_call.1} parent=47 // pred_check
          %p329 = pneg %p90
        $region58: #{tpu_custom_call.1} parent=47 // pred_check_branch
          %331 = sbr.rel (%p329) target = $region60
        $region59: #{tpu_custom_call.1} parent=47 // pred_region
          %332 = dma.done [#allocation6], 2048
        $region60: #{tpu_custom_call.1} parent=47 // pred_fallthru
          _
        // Predicated region
        $region61: #{tpu_custom_call.1} parent=47 // pred_check
          %p333 = pneg %p111
        $region62: #{tpu_custom_call.1} parent=47 // pred_check_branch
          %335 = sbr.rel (%p333) target = $region64
        $region63: #{tpu_custom_call.1} parent=47 // pred_region
          %336 = dma.done [#allocation9], 2048
        $region64: #{tpu_custom_call.1} parent=47 // pred_fallthru
          _
        // Predicated region
        $region65: #{tpu_custom_call.1} parent=47 // pred_check
          %p337 = pneg %p132
        $region66: #{tpu_custom_call.1} parent=47 // pred_check_branch
          %339 = sbr.rel (%p337) target = $region68
        $region67: #{tpu_custom_call.1} parent=47 // pred_region
          %340 = dma.done [#allocation9], 2048
        $region68: #{tpu_custom_call.1} parent=47 // pred_fallthru
          _
        // Predicated region
        $region69: #{tpu_custom_call.1} parent=47 // pred_check
          %p341 = pneg %p153
        $region70: #{tpu_custom_call.1} parent=47 // pred_check_branch
          %343 = sbr.rel (%p341) target = $region72
        $region71: #{tpu_custom_call.1} parent=47 // pred_region
          %344 = dma.done [#allocation12], 2048
        $region72: #{tpu_custom_call.1} parent=47 // pred_fallthru
          _
        %s345 = sand.u32 %s35, 1
        %s346 = scalar_lea.sflag [#allocation3], %s345
        %s347 = sand.u32 %s35, 1
        %s348 = smul.addr %s347, 64
        %s349 = scalar_lea.vmem [#allocation2], %s348
        %p350 = pneg %p48
        %p351 = pneg %p45
        %p352 = pneg %p69
        %p353 = pneg %p66
        %p354 = pneg %p90
        %p355 = pneg %p87
        %p356 = pneg %p111
        %p357 = pneg %p108
        %p358 = pneg %p132
        %p359 = pneg %p129
        %p360 = pneg %p153
        %p361 = pneg %p150
        %p362 = pneg %p174
        %p363 = pneg %p171
        %p364 = pneg %p200
        %p365 = pneg %p197
        %s366 = sand.u32 %s187, 1
        %s367 = scalar_lea.sflag [#allocation4], %s366
        %s368 = sand.u32 %s187, 1
        %s369 = smul.addr %s368, 64
        %s370 = scalar_lea.vmem [#allocation13], %s369
        %s371 = smul.u32 4, %s27
        %s372 = smul.u32 4, %s27
        %v374 = vld [vmem:[%s320] sm:$0xff]
        %v375 = vld [vmem:[%s320 + $0x8] sm:$0xff]
        %v376 = vld [vmem:[%s320 + $0x10] sm:$0xff]
        %v377 = vld [vmem:[%s320 + $0x18] sm:$0xff]
        %v378 = vld [vmem:[%s320 + $0x20] sm:$0xff]
        %v379 = vld [vmem:[%s320 + $0x28] sm:$0xff]
        %v380 = vld [vmem:[%s320 + $0x30] sm:$0xff]
        %v381 = vld [vmem:[%s320 + $0x38] sm:$0xff]
        %v382 = vpack.c.bf16 %v375, %v374
        %v383 = vpack.c.bf16 %v377, %v376
        %v384 = vpack.c.bf16 %v379, %v378
        %v385 = vpack.c.bf16 %v381, %v380
        %v386 = vld [vmem:[#allocation5] sm:$0xf]
        %v387 = vld [vmem:[#allocation5 + $0x4] sm:$0xf]
        %v388 = vld [vmem:[#allocation5 + $0x8] sm:$0xf]
        %v389 = vld [vmem:[#allocation5 + $0xc] sm:$0xf]
        %v390 = vld [vmem:[#allocation5 + $0x10] sm:$0xf]
        %v391 = vld [vmem:[#allocation5 + $0x14] sm:$0xf]
        %v392 = vld [vmem:[#allocation5 + $0x18] sm:$0xf]
        %v393 = vld [vmem:[#allocation5 + $0x1c] sm:$0xf]
        %v394 = vld [vmem:[#allocation5 + $0x20] sm:$0xf]
        %v395 = vld [vmem:[#allocation5 + $0x24] sm:$0xf]
        %v396 = vld [vmem:[#allocation5 + $0x28] sm:$0xf]
        %v397 = vld [vmem:[#allocation5 + $0x2c] sm:$0xf]
        %v398 = vld [vmem:[#allocation5 + $0x30] sm:$0xf]
        %v399 = vld [vmem:[#allocation5 + $0x34] sm:$0xf]
        %v400 = vld [vmem:[#allocation5 + $0x38] sm:$0xf]
        %v401 = vld [vmem:[#allocation5 + $0x3c] sm:$0xf]
        %v402 = vld [vmem:[#allocation5 + $0x40] sm:$0xf]
        %v403 = vld [vmem:[#allocation5 + $0x44] sm:$0xf]
        %v404 = vld [vmem:[#allocation5 + $0x48] sm:$0xf]
        %v405 = vld [vmem:[#allocation5 + $0x4c] sm:$0xf]
        %v406 = vld [vmem:[#allocation5 + $0x50] sm:$0xf]
        %v407 = vld [vmem:[#allocation5 + $0x54] sm:$0xf]
        %v408 = vld [vmem:[#allocation5 + $0x58] sm:$0xf]
        %v409 = vld [vmem:[#allocation5 + $0x5c] sm:$0xf]
        %v410 = vld [vmem:[#allocation5 + $0x60] sm:$0xf]
        %v411 = vld [vmem:[#allocation5 + $0x64] sm:$0xf]
        %v412 = vld [vmem:[#allocation5 + $0x68] sm:$0xf]
        %v413 = vld [vmem:[#allocation5 + $0x6c] sm:$0xf]
        %v414 = vld [vmem:[#allocation5 + $0x70] sm:$0xf]
        %v415 = vld [vmem:[#allocation5 + $0x74] sm:$0xf]
        %v416 = vld [vmem:[#allocation5 + $0x78] sm:$0xf]
        %v417 = vld [vmem:[#allocation5 + $0x7c] sm:$0xf]
        %v422 = vunpack.c.l.b16 %v386
        %v423 = vunpack.c.l.b16 %v387
        %v424 = vunpack.c.l.b16 %v388
        %v425 = vunpack.c.l.b16 %v389
        %v426 = vpack.c.b16 %v423, %v422
        %v427 = vpack.c.b16 %v425, %v424
        %vm430 = vcmask 261120
        %v432 = vsel %vm430, %v382, 0
        %v435 = vsel %vm430, %v383, 0
        %v438 = vsel %vm430, %v384, 0
        %v441 = vsel %vm430, %v385, 0
        %443 = vmatprep.subr.bf16.mxu0 0
        %444 = vmatpush1.bf16.msra.mxu0 %v426
        %445 = vmatprep.subr.bf16.mxu0 0
        %446 = vmatpush1.bf16.msra.mxu0 %v427
        %447 = vmatprep.subr.bf16.mxu0 0
        %448 = vmatpush1.bf16.msra.mxu0 0
        %449 = vmatprep.subr.bf16.mxu0 0
        %450 = vmatpush1.bf16.msra.mxu0 0
        %451 = vmatprep.subr.bf16.mxu0 0
        %452 = vmatpush1.bf16.msra.mxu0 0
        %453 = vmatprep.subr.bf16.mxu0 0
        %454 = vmatpush1.bf16.msra.mxu0 0
        %455 = vmatprep.subr.bf16.mxu0 0
        %456 = vmatpush1.bf16.msra.mxu0 0
        %457 = vmatprep.subr.bf16.mxu0 0
        %458 = vmatpush1.bf16.msra.mxu0 0
        %459 = vmatprep.subr.bf16.mxu0 0
        %460 = vmatpush1.bf16.msra.mxu0 0
        %461 = vmatprep.subr.bf16.mxu0 0
        %462 = vmatpush1.bf16.msra.mxu0 0
        %463 = vmatprep.subr.bf16.mxu0 0
        %464 = vmatpush1.bf16.msra.mxu0 0
        %465 = vmatprep.subr.bf16.mxu0 0
        %466 = vmatpush1.bf16.msra.mxu0 0
        %467 = vmatprep.subr.bf16.mxu0 0
        %468 = vmatpush1.bf16.msra.mxu0 0
        %469 = vmatprep.subr.bf16.mxu0 0
        %470 = vmatpush1.bf16.msra.mxu0 0
        %471 = vmatprep.subr.bf16.mxu0 0
        %472 = vmatpush1.bf16.msra.mxu0 0
        %473 = vmatprep.subr.bf16.mxu0 0
        %474 = vmatpush1.bf16.msra.mxu0 0
        %475 = vmatprep.mubr.bf16.mxu0 0
        %476 = vmatmul.mubr.bf16.gmra.mrb[0].mxu0 %v432
        %v477 = vpop.f32.mrb[0].mxu0
        %v478 = vadd.f32 0.0, %v477
        %v479 = vpop.f32.mrb[0].mxu0
        %v480 = vpop.f32.mrb[0].mxu0
        %v481 = vadd.f32 0.0, %v480
        %v482 = vpop.f32.mrb[0].mxu0
        %483 = vmatprep.mubr.bf16.mxu0 0
        %484 = vmatmul.mubr.bf16.gmra.mrb[0].mxu0 %v435
        %v485 = vpop.f32.mrb[0].mxu0
        %v486 = vadd.f32 0.0, %v485
        %v487 = vpop.f32.mrb[0].mxu0
        %v488 = vpop.f32.mrb[0].mxu0
        %v489 = vadd.f32 0.0, %v488
        %v490 = vpop.f32.mrb[0].mxu0
        %491 = vmatprep.mubr.bf16.mxu0 0
        %492 = vmatmul.mubr.bf16.gmra.mrb[0].mxu0 %v438
        %v493 = vpop.f32.mrb[0].mxu0
        %v494 = vadd.f32 0.0, %v493
        %v495 = vpop.f32.mrb[0].mxu0
        %v496 = vpop.f32.mrb[0].mxu0
        %v497 = vadd.f32 0.0, %v496
        %v498 = vpop.f32.mrb[0].mxu0
        %499 = vmatprep.mubr.bf16.mxu0 0
        %500 = vmatmul.mubr.bf16.gmra.mrb[0].mxu0 %v441
        %v501 = vpop.f32.mrb[0].mxu0
        %v502 = vadd.f32 0.0, %v501
        %v503 = vpop.f32.mrb[0].mxu0
        %v504 = vpop.f32.mrb[0].mxu0
        %v505 = vadd.f32 0.0, %v504
        %v506 = vpop.f32.mrb[0].mxu0
        %507 = vdwg.mxu0
        %v512 = vunpack.c.l.b16 %v390
        %v513 = vunpack.c.l.b16 %v391
        %v514 = vunpack.c.l.b16 %v392
        %v515 = vunpack.c.l.b16 %v393
        %v516 = vpack.c.b16 %v513, %v512
        %v517 = vpack.c.b16 %v515, %v514
        %520 = vmatprep.subr.bf16.mxu0 0
        %521 = vmatpush1.bf16.msra.mxu0 %v516
        %522 = vmatprep.subr.bf16.mxu0 0
        %523 = vmatpush1.bf16.msra.mxu0 %v517
        %524 = vmatprep.subr.bf16.mxu0 0
        %525 = vmatpush1.bf16.msra.mxu0 0
        %526 = vmatprep.subr.bf16.mxu0 0
        %527 = vmatpush1.bf16.msra.mxu0 0
        %528 = vmatprep.subr.bf16.mxu0 0
        %529 = vmatpush1.bf16.msra.mxu0 0
        %530 = vmatprep.subr.bf16.mxu0 0
        %531 = vmatpush1.bf16.msra.mxu0 0
        %532 = vmatprep.subr.bf16.mxu0 0
        %533 = vmatpush1.bf16.msra.mxu0 0
        %534 = vmatprep.subr.bf16.mxu0 0
        %535 = vmatpush1.bf16.msra.mxu0 0
        %536 = vmatprep.subr.bf16.mxu0 0
        %537 = vmatpush1.bf16.msra.mxu0 0
        %538 = vmatprep.subr.bf16.mxu0 0
        %539 = vmatpush1.bf16.msra.mxu0 0
        %540 = vmatprep.subr.bf16.mxu0 0
        %541 = vmatpush1.bf16.msra.mxu0 0
        %542 = vmatprep.subr.bf16.mxu0 0
        %543 = vmatpush1.bf16.msra.mxu0 0
        %544 = vmatprep.subr.bf16.mxu0 0
        %545 = vmatpush1.bf16.msra.mxu0 0
        %546 = vmatprep.subr.bf16.mxu0 0
        %547 = vmatpush1.bf16.msra.mxu0 0
        %548 = vmatprep.subr.bf16.mxu0 0
        %549 = vmatpush1.bf16.msra.mxu0 0
        %550 = vmatprep.subr.bf16.mxu0 0
        %551 = vmatpush1.bf16.msra.mxu0 0
        %552 = vmatprep.mubr.bf16.mxu0 0
        %553 = vmatmul.mubr.bf16.gmra.mrb[0].mxu0 %v432
        %v554 = vpop.f32.mrb[0].mxu0
        %v555 = vadd.f32 0.0, %v554
        %v556 = vpop.f32.mrb[0].mxu0
        %v557 = vpop.f32.mrb[0].mxu0
        %v558 = vadd.f32 0.0, %v557
        %v559 = vpop.f32.mrb[0].mxu0
        %560 = vmatprep.mubr.bf16.mxu0 0
        %561 = vmatmul.mubr.bf16.gmra.mrb[0].mxu0 %v435
        %v562 = vpop.f32.mrb[0].mxu0
        %v563 = vadd.f32 0.0, %v562
        %v564 = vpop.f32.mrb[0].mxu0
        %v565 = vpop.f32.mrb[0].mxu0
        %v566 = vadd.f32 0.0, %v565
        %v567 = vpop.f32.mrb[0].mxu0
        %568 = vmatprep.mubr.bf16.mxu0 0
        %569 = vmatmul.mubr.bf16.gmra.mrb[0].mxu0 %v438
        %v570 = vpop.f32.mrb[0].mxu0
        %v571 = vadd.f32 0.0, %v570
        %v572 = vpop.f32.mrb[0].mxu0
        %v573 = vpop.f32.mrb[0].mxu0
        %v574 = vadd.f32 0.0, %v573
        %v575 = vpop.f32.mrb[0].mxu0
        %576 = vmatprep.mubr.bf16.mxu0 0
        %577 = vmatmul.mubr.bf16.gmra.mrb[0].mxu0 %v441
        %v578 = vpop.f32.mrb[0].mxu0
        %v579 = vadd.f32 0.0, %v578
        %v580 = vpop.f32.mrb[0].mxu0
        %v581 = vpop.f32.mrb[0].mxu0
        %v582 = vadd.f32 0.0, %v581
        %v583 = vpop.f32.mrb[0].mxu0
        %584 = vdwg.mxu0
        %v589 = vunpack.c.l.b16 %v394
        %v590 = vunpack.c.l.b16 %v395
        %v591 = vunpack.c.l.b16 %v396
        %v592 = vunpack.c.l.b16 %v397
        %v593 = vpack.c.b16 %v590, %v589
        %v594 = vpack.c.b16 %v592, %v591
        %597 = vmatprep.subr.bf16.mxu0 0
        %598 = vmatpush1.bf16.msra.mxu0 %v593
        %599 = vmatprep.subr.bf16.mxu0 0
        %600 = vmatpush1.bf16.msra.mxu0 %v594
        %601 = vmatprep.subr.bf16.mxu0 0
        %602 = vmatpush1.bf16.msra.mxu0 0
        %603 = vmatprep.subr.bf16.mxu0 0
        %604 = vmatpush1.bf16.msra.mxu0 0
        %605 = vmatprep.subr.bf16.mxu0 0
        %606 = vmatpush1.bf16.msra.mxu0 0
        %607 = vmatprep.subr.bf16.mxu0 0
        %608 = vmatpush1.bf16.msra.mxu0 0
        %609 = vmatprep.subr.bf16.mxu0 0
        %610 = vmatpush1.bf16.msra.mxu0 0
        %611 = vmatprep.subr.bf16.mxu0 0
        %612 = vmatpush1.bf16.msra.mxu0 0
        %613 = vmatprep.subr.bf16.mxu0 0
        %614 = vmatpush1.bf16.msra.mxu0 0
        %615 = vmatprep.subr.bf16.mxu0 0
        %616 = vmatpush1.bf16.msra.mxu0 0
        %617 = vmatprep.subr.bf16.mxu0 0
        %618 = vmatpush1.bf16.msra.mxu0 0
        %619 = vmatprep.subr.bf16.mxu0 0
        %620 = vmatpush1.bf16.msra.mxu0 0
        %621 = vmatprep.subr.bf16.mxu0 0
        %622 = vmatpush1.bf16.msra.mxu0 0
        %623 = vmatprep.subr.bf16.mxu0 0
        %624 = vmatpush1.bf16.msra.mxu0 0
        %625 = vmatprep.subr.bf16.mxu0 0
        %626 = vmatpush1.bf16.msra.mxu0 0
        %627 = vmatprep.subr.bf16.mxu0 0
        %628 = vmatpush1.bf16.msra.mxu0 0
        %629 = vmatprep.mubr.bf16.mxu0 0
        %630 = vmatmul.mubr.bf16.gmra.mrb[0].mxu0 %v432
        %v631 = vpop.f32.mrb[0].mxu0
        %v632 = vadd.f32 0.0, %v631
        %v633 = vpop.f32.mrb[0].mxu0
        %v634 = vpop.f32.mrb[0].mxu0
        %v635 = vadd.f32 0.0, %v634
        %v636 = vpop.f32.mrb[0].mxu0
        %637 = vmatprep.mubr.bf16.mxu0 0
        %638 = vmatmul.mubr.bf16.gmra.mrb[0].mxu0 %v435
        %v639 = vpop.f32.mrb[0].mxu0
        %v640 = vadd.f32 0.0, %v639
        %v641 = vpop.f32.mrb[0].mxu0
        %v642 = vpop.f32.mrb[0].mxu0
        %v643 = vadd.f32 0.0, %v642
        %v644 = vpop.f32.mrb[0].mxu0
        %645 = vmatprep.mubr.bf16.mxu0 0
        %646 = vmatmul.mubr.bf16.gmra.mrb[0].mxu0 %v438
        %v647 = vpop.f32.mrb[0].mxu0
        %v648 = vadd.f32 0.0, %v647
        %v649 = vpop.f32.mrb[0].mxu0
        %v650 = vpop.f32.mrb[0].mxu0
        %v651 = vadd.f32 0.0, %v650
        %v652 = vpop.f32.mrb[0].mxu0
        %653 = vmatprep.mubr.bf16.mxu0 0
        %654 = vmatmul.mubr.bf16.gmra.mrb[0].mxu0 %v441
        %v655 = vpop.f32.mrb[0].mxu0
        %v656 = vadd.f32 0.0, %v655
        %v657 = vpop.f32.mrb[0].mxu0
        %v658 = vpop.f32.mrb[0].mxu0
        %v659 = vadd.f32 0.0, %v658
        %v660 = vpop.f32.mrb[0].mxu0
        %661 = vdwg.mxu0
        %v666 = vunpack.c.l.b16 %v398
        %v667 = vunpack.c.l.b16 %v399
        %v668 = vunpack.c.l.b16 %v400
        %v669 = vunpack.c.l.b16 %v401
        %v670 = vpack.c.b16 %v667, %v666
        %v671 = vpack.c.b16 %v669, %v668
        %674 = vmatprep.subr.bf16.mxu0 0
        %675 = vmatpush1.bf16.msra.mxu0 %v670
        %676 = vmatprep.subr.bf16.mxu0 0
        %677 = vmatpush1.bf16.msra.mxu0 %v671
        %678 = vmatprep.subr.bf16.mxu0 0
        %679 = vmatpush1.bf16.msra.mxu0 0
        %680 = vmatprep.subr.bf16.mxu0 0
        %681 = vmatpush1.bf16.msra.mxu0 0
        %682 = vmatprep.subr.bf16.mxu0 0
        %683 = vmatpush1.bf16.msra.mxu0 0
        %684 = vmatprep.subr.bf16.mxu0 0
        %685 = vmatpush1.bf16.msra.mxu0 0
        %686 = vmatprep.subr.bf16.mxu0 0
        %687 = vmatpush1.bf16.msra.mxu0 0
        %688 = vmatprep.subr.bf16.mxu0 0
        %689 = vmatpush1.bf16.msra.mxu0 0
        %690 = vmatprep.subr.bf16.mxu0 0
        %691 = vmatpush1.bf16.msra.mxu0 0
        %692 = vmatprep.subr.bf16.mxu0 0
        %693 = vmatpush1.bf16.msra.mxu0 0
        %694 = vmatprep.subr.bf16.mxu0 0
        %695 = vmatpush1.bf16.msra.mxu0 0
        %696 = vmatprep.subr.bf16.mxu0 0
        %697 = vmatpush1.bf16.msra.mxu0 0
        %698 = vmatprep.subr.bf16.mxu0 0
        %699 = vmatpush1.bf16.msra.mxu0 0
        %700 = vmatprep.subr.bf16.mxu0 0
        %701 = vmatpush1.bf16.msra.mxu0 0
        %702 = vmatprep.subr.bf16.mxu0 0
        %703 = vmatpush1.bf16.msra.mxu0 0
        %704 = vmatprep.subr.bf16.mxu0 0
        %705 = vmatpush1.bf16.msra.mxu0 0
        %706 = vmatprep.mubr.bf16.mxu0 0
        %707 = vmatmul.mubr.bf16.gmra.mrb[0].mxu0 %v432
        %v708 = vpop.f32.mrb[0].mxu0
        %v709 = vadd.f32 0.0, %v708
        %v710 = vpop.f32.mrb[0].mxu0
        %v711 = vpop.f32.mrb[0].mxu0
        %v712 = vadd.f32 0.0, %v711
        %v713 = vpop.f32.mrb[0].mxu0
        %714 = vmatprep.mubr.bf16.mxu0 0
        %715 = vmatmul.mubr.bf16.gmra.mrb[0].mxu0 %v435
        %v716 = vpop.f32.mrb[0].mxu0
        %v717 = vadd.f32 0.0, %v716
        %v718 = vpop.f32.mrb[0].mxu0
        %v719 = vpop.f32.mrb[0].mxu0
        %v720 = vadd.f32 0.0, %v719
        %v721 = vpop.f32.mrb[0].mxu0
        %722 = vmatprep.mubr.bf16.mxu0 0
        %723 = vmatmul.mubr.bf16.gmra.mrb[0].mxu0 %v438
        %v724 = vpop.f32.mrb[0].mxu0
        %v725 = vadd.f32 0.0, %v724
        %v726 = vpop.f32.mrb[0].mxu0
        %v727 = vpop.f32.mrb[0].mxu0
        %v728 = vadd.f32 0.0, %v727
        %v729 = vpop.f32.mrb[0].mxu0
        %730 = vmatprep.mubr.bf16.mxu0 0
        %731 = vmatmul.mubr.bf16.gmra.mrb[0].mxu0 %v441
        %v732 = vpop.f32.mrb[0].mxu0
        %v733 = vadd.f32 0.0, %v732
        %v734 = vpop.f32.mrb[0].mxu0
        %v735 = vpop.f32.mrb[0].mxu0
        %v736 = vadd.f32 0.0, %v735
        %v737 = vpop.f32.mrb[0].mxu0
        %738 = vdwg.mxu0
        %v743 = vunpack.c.l.b16 %v402
        %v744 = vunpack.c.l.b16 %v403
        %v745 = vunpack.c.l.b16 %v404
        %v746 = vunpack.c.l.b16 %v405
        %v747 = vpack.c.b16 %v744, %v743
        %v748 = vpack.c.b16 %v746, %v745
        %751 = vmatprep.subr.bf16.mxu0 0
        %752 = vmatpush1.bf16.msra.mxu0 %v747
        %753 = vmatprep.subr.bf16.mxu0 0
        %754 = vmatpush1.bf16.msra.mxu0 %v748
        %755 = vmatprep.subr.bf16.mxu0 0
        %756 = vmatpush1.bf16.msra.mxu0 0
        %757 = vmatprep.subr.bf16.mxu0 0
        %758 = vmatpush1.bf16.msra.mxu0 0
        %759 = vmatprep.subr.bf16.mxu0 0
        %760 = vmatpush1.bf16.msra.mxu0 0
        %761 = vmatprep.subr.bf16.mxu0 0
        %762 = vmatpush1.bf16.msra.mxu0 0
        %763 = vmatprep.subr.bf16.mxu0 0
        %764 = vmatpush1.bf16.msra.mxu0 0
        %765 = vmatprep.subr.bf16.mxu0 0
        %766 = vmatpush1.bf16.msra.mxu0 0
        %767 = vmatprep.subr.bf16.mxu0 0
        %768 = vmatpush1.bf16.msra.mxu0 0
        %769 = vmatprep.subr.bf16.mxu0 0
        %770 = vmatpush1.bf16.msra.mxu0 0
        %771 = vmatprep.subr.bf16.mxu0 0
        %772 = vmatpush1.bf16.msra.mxu0 0
        %773 = vmatprep.subr.bf16.mxu0 0
        %774 = vmatpush1.bf16.msra.mxu0 0
        %775 = vmatprep.subr.bf16.mxu0 0
        %776 = vmatpush1.bf16.msra.mxu0 0
        %777 = vmatprep.subr.bf16.mxu0 0
        %778 = vmatpush1.bf16.msra.mxu0 0
        %779 = vmatprep.subr.bf16.mxu0 0
        %780 = vmatpush1.bf16.msra.mxu0 0
        %781 = vmatprep.subr.bf16.mxu0 0
        %782 = vmatpush1.bf16.msra.mxu0 0
        %783 = vmatprep.mubr.bf16.mxu0 0
        %784 = vmatmul.mubr.bf16.gmra.mrb[0].mxu0 %v432
        %v785 = vpop.f32.mrb[0].mxu0
        %v786 = vadd.f32 0.0, %v785
        %v787 = vpop.f32.mrb[0].mxu0
        %v788 = vpop.f32.mrb[0].mxu0
        %v789 = vadd.f32 0.0, %v788
        %v790 = vpop.f32.mrb[0].mxu0
        %791 = vmatprep.mubr.bf16.mxu0 0
        %792 = vmatmul.mubr.bf16.gmra.mrb[0].mxu0 %v435
        %v793 = vpop.f32.mrb[0].mxu0
        %v794 = vadd.f32 0.0, %v793
        %v795 = vpop.f32.mrb[0].mxu0
        %v796 = vpop.f32.mrb[0].mxu0
        %v797 = vadd.f32 0.0, %v796
        %v798 = vpop.f32.mrb[0].mxu0
        %799 = vmatprep.mubr.bf16.mxu0 0
        %800 = vmatmul.mubr.bf16.gmra.mrb[0].mxu0 %v438
        %v801 = vpop.f32.mrb[0].mxu0
        %v802 = vadd.f32 0.0, %v801
        %v803 = vpop.f32.mrb[0].mxu0
        %v804 = vpop.f32.mrb[0].mxu0
        %v805 = vadd.f32 0.0, %v804
        %v806 = vpop.f32.mrb[0].mxu0
        %807 = vmatprep.mubr.bf16.mxu0 0
        %808 = vmatmul.mubr.bf16.gmra.mrb[0].mxu0 %v441
        %v809 = vpop.f32.mrb[0].mxu0
        %v810 = vadd.f32 0.0, %v809
        %v811 = vpop.f32.mrb[0].mxu0
        %v812 = vpop.f32.mrb[0].mxu0
        %v813 = vadd.f32 0.0, %v812
        %v814 = vpop.f32.mrb[0].mxu0
        %815 = vdwg.mxu0
        %v820 = vunpack.c.l.b16 %v406
        %v821 = vunpack.c.l.b16 %v407
        %v822 = vunpack.c.l.b16 %v408
        %v823 = vunpack.c.l.b16 %v409
        %v824 = vpack.c.b16 %v821, %v820
        %v825 = vpack.c.b16 %v823, %v822
        %828 = vmatprep.subr.bf16.mxu0 0
        %829 = vmatpush1.bf16.msra.mxu0 %v824
        %830 = vmatprep.subr.bf16.mxu0 0
        %831 = vmatpush1.bf16.msra.mxu0 %v825
        %832 = vmatprep.subr.bf16.mxu0 0
        %833 = vmatpush1.bf16.msra.mxu0 0
        %834 = vmatprep.subr.bf16.mxu0 0
        %835 = vmatpush1.bf16.msra.mxu0 0
        %836 = vmatprep.subr.bf16.mxu0 0
        %837 = vmatpush1.bf16.msra.mxu0 0
        %838 = vmatprep.subr.bf16.mxu0 0
        %839 = vmatpush1.bf16.msra.mxu0 0
        %840 = vmatprep.subr.bf16.mxu0 0
        %841 = vmatpush1.bf16.msra.mxu0 0
        %842 = vmatprep.subr.bf16.mxu0 0
        %843 = vmatpush1.bf16.msra.mxu0 0
        %844 = vmatprep.subr.bf16.mxu0 0
        %845 = vmatpush1.bf16.msra.mxu0 0
        %846 = vmatprep.subr.bf16.mxu0 0
        %847 = vmatpush1.bf16.msra.mxu0 0
        %848 = vmatprep.subr.bf16.mxu0 0
        %849 = vmatpush1.bf16.msra.mxu0 0
        %850 = vmatprep.subr.bf16.mxu0 0
        %851 = vmatpush1.bf16.msra.mxu0 0
        %852 = vmatprep.subr.bf16.mxu0 0
        %853 = vmatpush1.bf16.msra.mxu0 0
        %854 = vmatprep.subr.bf16.mxu0 0
        %855 = vmatpush1.bf16.msra.mxu0 0
        %856 = vmatprep.subr.bf16.mxu0 0
        %857 = vmatpush1.bf16.msra.mxu0 0
        %858 = vmatprep.subr.bf16.mxu0 0
        %859 = vmatpush1.bf16.msra.mxu0 0
        %860 = vmatprep.mubr.bf16.mxu0 0
        %861 = vmatmul.mubr.bf16.gmra.mrb[0].mxu0 %v432
        %v862 = vpop.f32.mrb[0].mxu0
        %v863 = vadd.f32 0.0, %v862
        %v864 = vpop.f32.mrb[0].mxu0
        %v865 = vpop.f32.mrb[0].mxu0
        %v866 = vadd.f32 0.0, %v865
        %v867 = vpop.f32.mrb[0].mxu0
        %868 = vmatprep.mubr.bf16.mxu0 0
        %869 = vmatmul.mubr.bf16.gmra.mrb[0].mxu0 %v435
        %v870 = vpop.f32.mrb[0].mxu0
        %v871 = vadd.f32 0.0, %v870
        %v872 = vpop.f32.mrb[0].mxu0
        %v873 = vpop.f32.mrb[0].mxu0
        %v874 = vadd.f32 0.0, %v873
        %v875 = vpop.f32.mrb[0].mxu0
        %876 = vmatprep.mubr.bf16.mxu0 0
        %877 = vmatmul.mubr.bf16.gmra.mrb[0].mxu0 %v438
        %v878 = vpop.f32.mrb[0].mxu0
        %v879 = vadd.f32 0.0, %v878
        %v880 = vpop.f32.mrb[0].mxu0
        %v881 = vpop.f32.mrb[0].mxu0
        %v882 = vadd.f32 0.0, %v881
        %v883 = vpop.f32.mrb[0].mxu0
        %884 = vmatprep.mubr.bf16.mxu0 0
        %885 = vmatmul.mubr.bf16.gmra.mrb[0].mxu0 %v441
        %v886 = vpop.f32.mrb[0].mxu0
        %v887 = vadd.f32 0.0, %v886
        %v888 = vpop.f32.mrb[0].mxu0
        %v889 = vpop.f32.mrb[0].mxu0
        %v890 = vadd.f32 0.0, %v889
        %v891 = vpop.f32.mrb[0].mxu0
        %892 = vdwg.mxu0
        %v897 = vunpack.c.l.b16 %v410
        %v898 = vunpack.c.l.b16 %v411
        %v899 = vunpack.c.l.b16 %v412
        %v900 = vunpack.c.l.b16 %v413
        %v901 = vpack.c.b16 %v898, %v897
        %v902 = vpack.c.b16 %v900, %v899
        %905 = vmatprep.subr.bf16.mxu0 0
        %906 = vmatpush1.bf16.msra.mxu0 %v901
        %907 = vmatprep.subr.bf16.mxu0 0
        %908 = vmatpush1.bf16.msra.mxu0 %v902
        %909 = vmatprep.subr.bf16.mxu0 0
        %910 = vmatpush1.bf16.msra.mxu0 0
        %911 = vmatprep.subr.bf16.mxu0 0
        %912 = vmatpush1.bf16.msra.mxu0 0
        %913 = vmatprep.subr.bf16.mxu0 0
        %914 = vmatpush1.bf16.msra.mxu0 0
        %915 = vmatprep.subr.bf16.mxu0 0
        %916 = vmatpush1.bf16.msra.mxu0 0
        %917 = vmatprep.subr.bf16.mxu0 0
        %918 = vmatpush1.bf16.msra.mxu0 0
        %919 = vmatprep.subr.bf16.mxu0 0
        %920 = vmatpush1.bf16.msra.mxu0 0
        %921 = vmatprep.subr.bf16.mxu0 0
        %922 = vmatpush1.bf16.msra.mxu0 0
        %923 = vmatprep.subr.bf16.mxu0 0
        %924 = vmatpush1.bf16.msra.mxu0 0
        %925 = vmatprep.subr.bf16.mxu0 0
        %926 = vmatpush1.bf16.msra.mxu0 0
        %927 = vmatprep.subr.bf16.mxu0 0
        %928 = vmatpush1.bf16.msra.mxu0 0
        %929 = vmatprep.subr.bf16.mxu0 0
        %930 = vmatpush1.bf16.msra.mxu0 0
        %931 = vmatprep.subr.bf16.mxu0 0
        %932 = vmatpush1.bf16.msra.mxu0 0
        %933 = vmatprep.subr.bf16.mxu0 0
        %934 = vmatpush1.bf16.msra.mxu0 0
        %935 = vmatprep.subr.bf16.mxu0 0
        %936 = vmatpush1.bf16.msra.mxu0 0
        %937 = vmatprep.mubr.bf16.mxu0 0
        %938 = vmatmul.mubr.bf16.gmra.mrb[0].mxu0 %v432
        %v939 = vpop.f32.mrb[0].mxu0
        %v940 = vadd.f32 0.0, %v939
        %v941 = vpop.f32.mrb[0].mxu0
        %v942 = vpop.f32.mrb[0].mxu0
        %v943 = vadd.f32 0.0, %v942
        %v944 = vpop.f32.mrb[0].mxu0
        %945 = vmatprep.mubr.bf16.mxu0 0
        %946 = vmatmul.mubr.bf16.gmra.mrb[0].mxu0 %v435
        %v947 = vpop.f32.mrb[0].mxu0
        %v948 = vadd.f32 0.0, %v947
        %v949 = vpop.f32.mrb[0].mxu0
        %v950 = vpop.f32.mrb[0].mxu0
        %v951 = vadd.f32 0.0, %v950
        %v952 = vpop.f32.mrb[0].mxu0
        %953 = vmatprep.mubr.bf16.mxu0 0
        %954 = vmatmul.mubr.bf16.gmra.mrb[0].mxu0 %v438
        %v955 = vpop.f32.mrb[0].mxu0
        %v956 = vadd.f32 0.0, %v955
        %v957 = vpop.f32.mrb[0].mxu0
        %v958 = vpop.f32.mrb[0].mxu0
        %v959 = vadd.f32 0.0, %v958
        %v960 = vpop.f32.mrb[0].mxu0
        %961 = vmatprep.mubr.bf16.mxu0 0
        %962 = vmatmul.mubr.bf16.gmra.mrb[0].mxu0 %v441
        %v963 = vpop.f32.mrb[0].mxu0
        %v964 = vadd.f32 0.0, %v963
        %v965 = vpop.f32.mrb[0].mxu0
        %v966 = vpop.f32.mrb[0].mxu0
        %v967 = vadd.f32 0.0, %v966
        %v968 = vpop.f32.mrb[0].mxu0
        %969 = vdwg.mxu0
        %v974 = vunpack.c.l.b16 %v414
        %v975 = vunpack.c.l.b16 %v415
        %v976 = vunpack.c.l.b16 %v416
        %v977 = vunpack.c.l.b16 %v417
        %v978 = vpack.c.b16 %v975, %v974
        %v979 = vpack.c.b16 %v977, %v976
        %982 = vmatprep.subr.bf16.mxu0 0
        %983 = vmatpush1.bf16.msra.mxu0 %v978
        %984 = vmatprep.subr.bf16.mxu0 0
        %985 = vmatpush1.bf16.msra.mxu0 %v979
        %986 = vmatprep.subr.bf16.mxu0 0
        %987 = vmatpush1.bf16.msra.mxu0 0
        %988 = vmatprep.subr.bf16.mxu0 0
        %989 = vmatpush1.bf16.msra.mxu0 0
        %990 = vmatprep.subr.bf16.mxu0 0
        %991 = vmatpush1.bf16.msra.mxu0 0
        %992 = vmatprep.subr.bf16.mxu0 0
        %993 = vmatpush1.bf16.msra.mxu0 0
        %994 = vmatprep.subr.bf16.mxu0 0
        %995 = vmatpush1.bf16.msra.mxu0 0
        %996 = vmatprep.subr.bf16.mxu0 0
        %997 = vmatpush1.bf16.msra.mxu0 0
        %998 = vmatprep.subr.bf16.mxu0 0
        %999 = vmatpush1.bf16.msra.mxu0 0
        %1000 = vmatprep.subr.bf16.mxu0 0
        %1001 = vmatpush1.bf16.msra.mxu0 0
        %1002 = vmatprep.subr.bf16.mxu0 0
        %1003 = vmatpush1.bf16.msra.mxu0 0
        %1004 = vmatprep.subr.bf16.mxu0 0
        %1005 = vmatpush1.bf16.msra.mxu0 0
        %1006 = vmatprep.subr.bf16.mxu0 0
        %1007 = vmatpush1.bf16.msra.mxu0 0
        %1008 = vmatprep.subr.bf16.mxu0 0
        %1009 = vmatpush1.bf16.msra.mxu0 0
        %1010 = vmatprep.subr.bf16.mxu0 0
        %1011 = vmatpush1.bf16.msra.mxu0 0
        %1012 = vmatprep.subr.bf16.mxu0 0
        %1013 = vmatpush1.bf16.msra.mxu0 0
        %1014 = vmatprep.mubr.bf16.mxu0 0
        %1015 = vmatmul.mubr.bf16.gmra.mrb[0].mxu0 %v432
        %v1016 = vpop.f32.mrb[0].mxu0
        %v1017 = vadd.f32 0.0, %v1016
        %v1018 = vpop.f32.mrb[0].mxu0
        %v1019 = vpop.f32.mrb[0].mxu0
        %v1020 = vadd.f32 0.0, %v1019
        %v1021 = vpop.f32.mrb[0].mxu0
        %1022 = vmatprep.mubr.bf16.mxu0 0
        %1023 = vmatmul.mubr.bf16.gmra.mrb[0].mxu0 %v435
        %v1024 = vpop.f32.mrb[0].mxu0
        %v1025 = vadd.f32 0.0, %v1024
        %v1026 = vpop.f32.mrb[0].mxu0
        %v1027 = vpop.f32.mrb[0].mxu0
        %v1028 = vadd.f32 0.0, %v1027
        %v1029 = vpop.f32.mrb[0].mxu0
        %1030 = vmatprep.mubr.bf16.mxu0 0
        %1031 = vmatmul.mubr.bf16.gmra.mrb[0].mxu0 %v438
        %v1032 = vpop.f32.mrb[0].mxu0
        %v1033 = vadd.f32 0.0, %v1032
        %v1034 = vpop.f32.mrb[0].mxu0
        %v1035 = vpop.f32.mrb[0].mxu0
        %v1036 = vadd.f32 0.0, %v1035
        %v1037 = vpop.f32.mrb[0].mxu0
        %1038 = vmatprep.mubr.bf16.mxu0 0
        %1039 = vmatmul.mubr.bf16.gmra.mrb[0].mxu0 %v441
        %v1040 = vpop.f32.mrb[0].mxu0
        %v1041 = vadd.f32 0.0, %v1040
        %v1042 = vpop.f32.mrb[0].mxu0
        %v1043 = vpop.f32.mrb[0].mxu0
        %v1044 = vadd.f32 0.0, %v1043
        %v1045 = vpop.f32.mrb[0].mxu0
        %1046 = vdwg.mxu0
        %v1047 = vld [vmem:[#allocation7] sm:$0xf]
        %v1048 = vld [vmem:[#allocation7 + $0x4] sm:$0xf]
        %v1049 = vld [vmem:[#allocation7 + $0x8] sm:$0xf]
        %v1050 = vld [vmem:[#allocation7 + $0xc] sm:$0xf]
        %v1051 = vld [vmem:[#allocation7 + $0x10] sm:$0xf]
        %v1052 = vld [vmem:[#allocation7 + $0x14] sm:$0xf]
        %v1053 = vld [vmem:[#allocation7 + $0x18] sm:$0xf]
        %v1054 = vld [vmem:[#allocation7 + $0x1c] sm:$0xf]
        %v1055 = vld [vmem:[#allocation7 + $0x20] sm:$0xf]
        %v1056 = vld [vmem:[#allocation7 + $0x24] sm:$0xf]
        %v1057 = vld [vmem:[#allocation7 + $0x28] sm:$0xf]
        %v1058 = vld [vmem:[#allocation7 + $0x2c] sm:$0xf]
        %v1059 = vld [vmem:[#allocation7 + $0x30] sm:$0xf]
        %v1060 = vld [vmem:[#allocation7 + $0x34] sm:$0xf]
        %v1061 = vld [vmem:[#allocation7 + $0x38] sm:$0xf]
        %v1062 = vld [vmem:[#allocation7 + $0x3c] sm:$0xf]
        %v1063 = vld [vmem:[#allocation7 + $0x40] sm:$0xf]
        %v1064 = vld [vmem:[#allocation7 + $0x44] sm:$0xf]
        %v1065 = vld [vmem:[#allocation7 + $0x48] sm:$0xf]
        %v1066 = vld [vmem:[#allocation7 + $0x4c] sm:$0xf]
        %v1067 = vld [vmem:[#allocation7 + $0x50] sm:$0xf]
        %v1068 = vld [vmem:[#allocation7 + $0x54] sm:$0xf]
        %v1069 = vld [vmem:[#allocation7 + $0x58] sm:$0xf]
        %v1070 = vld [vmem:[#allocation7 + $0x5c] sm:$0xf]
        %v1071 = vld [vmem:[#allocation7 + $0x60] sm:$0xf]
        %v1072 = vld [vmem:[#allocation7 + $0x64] sm:$0xf]
        %v1073 = vld [vmem:[#allocation7 + $0x68] sm:$0xf]
        %v1074 = vld [vmem:[#allocation7 + $0x6c] sm:$0xf]
        %v1075 = vld [vmem:[#allocation7 + $0x70] sm:$0xf]
        %v1076 = vld [vmem:[#allocation7 + $0x74] sm:$0xf]
        %v1077 = vld [vmem:[#allocation7 + $0x78] sm:$0xf]
        %v1078 = vld [vmem:[#allocation7 + $0x7c] sm:$0xf]
        %v1083 = vunpack.c.l.b16 %v1047
        %v1084 = vunpack.c.l.b16 %v1048
        %v1085 = vunpack.c.l.b16 %v1049
        %v1086 = vunpack.c.l.b16 %v1050
        %v1087 = vpack.c.b16 %v1084, %v1083
        %v1088 = vpack.c.b16 %v1086, %v1085
        %1091 = vmatprep.subr.bf16.mxu0 0
        %1092 = vmatpush1.bf16.msra.mxu0 %v1087
        %1093 = vmatprep.subr.bf16.mxu0 0
        %1094 = vmatpush1.bf16.msra.mxu0 %v1088
        %1095 = vmatprep.subr.bf16.mxu0 0
        %1096 = vmatpush1.bf16.msra.mxu0 0
        %1097 = vmatprep.subr.bf16.mxu0 0
        %1098 = vmatpush1.bf16.msra.mxu0 0
        %1099 = vmatprep.subr.bf16.mxu0 0
        %1100 = vmatpush1.bf16.msra.mxu0 0
        %1101 = vmatprep.subr.bf16.mxu0 0
        %1102 = vmatpush1.bf16.msra.mxu0 0
        %1103 = vmatprep.subr.bf16.mxu0 0
        %1104 = vmatpush1.bf16.msra.mxu0 0
        %1105 = vmatprep.subr.bf16.mxu0 0
        %1106 = vmatpush1.bf16.msra.mxu0 0
        %1107 = vmatprep.subr.bf16.mxu0 0
        %1108 = vmatpush1.bf16.msra.mxu0 0
        %1109 = vmatprep.subr.bf16.mxu0 0
        %1110 = vmatpush1.bf16.msra.mxu0 0
        %1111 = vmatprep.subr.bf16.mxu0 0
        %1112 = vmatpush1.bf16.msra.mxu0 0
        %1113 = vmatprep.subr.bf16.mxu0 0
        %1114 = vmatpush1.bf16.msra.mxu0 0
        %1115 = vmatprep.subr.bf16.mxu0 0
        %1116 = vmatpush1.bf16.msra.mxu0 0
        %1117 = vmatprep.subr.bf16.mxu0 0
        %1118 = vmatpush1.bf16.msra.mxu0 0
        %1119 = vmatprep.subr.bf16.mxu0 0
        %1120 = vmatpush1.bf16.msra.mxu0 0
        %1121 = vmatprep.subr.bf16.mxu0 0
        %1122 = vmatpush1.bf16.msra.mxu0 0
        %1123 = vmatprep.mubr.bf16.mxu0 0
        %1124 = vmatmul.mubr.bf16.gmra.mrb[0].mxu0 %v432
        %v1125 = vpop.f32.mrb[0].mxu0
        %v1126 = vadd.f32 0.0, %v1125
        %v1127 = vpop.f32.mrb[0].mxu0
        %v1128 = vpop.f32.mrb[0].mxu0
        %v1129 = vadd.f32 0.0, %v1128
        %v1130 = vpop.f32.mrb[0].mxu0
        %1131 = vmatprep.mubr.bf16.mxu0 0
        %1132 = vmatmul.mubr.bf16.gmra.mrb[0].mxu0 %v435
        %v1133 = vpop.f32.mrb[0].mxu0
        %v1134 = vadd.f32 0.0, %v1133
        %v1135 = vpop.f32.mrb[0].mxu0
        %v1136 = vpop.f32.mrb[0].mxu0
        %v1137 = vadd.f32 0.0, %v1136
        %v1138 = vpop.f32.mrb[0].mxu0
        %1139 = vmatprep.mubr.bf16.mxu0 0
        %1140 = vmatmul.mubr.bf16.gmra.mrb[0].mxu0 %v438
        %v1141 = vpop.f32.mrb[0].mxu0
        %v1142 = vadd.f32 0.0, %v1141
        %v1143 = vpop.f32.mrb[0].mxu0
        %v1144 = vpop.f32.mrb[0].mxu0
        %v1145 = vadd.f32 0.0, %v1144
        %v1146 = vpop.f32.mrb[0].mxu0
        %1147 = vmatprep.mubr.bf16.mxu0 0
        %1148 = vmatmul.mubr.bf16.gmra.mrb[0].mxu0 %v441
        %v1149 = vpop.f32.mrb[0].mxu0
        %v1150 = vadd.f32 0.0, %v1149
        %v1151 = vpop.f32.mrb[0].mxu0
        %v1152 = vpop.f32.mrb[0].mxu0
        %v1153 = vadd.f32 0.0, %v1152
        %v1154 = vpop.f32.mrb[0].mxu0
        %1155 = vdwg.mxu0
        %v1160 = vunpack.c.l.b16 %v1051
        %v1161 = vunpack.c.l.b16 %v1052
        %v1162 = vunpack.c.l.b16 %v1053
        %v1163 = vunpack.c.l.b16 %v1054
        %v1164 = vpack.c.b16 %v1161, %v1160
        %v1165 = vpack.c.b16 %v1163, %v1162
        %1168 = vmatprep.subr.bf16.mxu0 0
        %1169 = vmatpush1.bf16.msra.mxu0 %v1164
        %1170 = vmatprep.subr.bf16.mxu0 0
        %1171 = vmatpush1.bf16.msra.mxu0 %v1165
        %1172 = vmatprep.subr.bf16.mxu0 0
        %1173 = vmatpush1.bf16.msra.mxu0 0
        %1174 = vmatprep.subr.bf16.mxu0 0
        %1175 = vmatpush1.bf16.msra.mxu0 0
        %1176 = vmatprep.subr.bf16.mxu0 0
        %1177 = vmatpush1.bf16.msra.mxu0 0
        %1178 = vmatprep.subr.bf16.mxu0 0
        %1179 = vmatpush1.bf16.msra.mxu0 0
        %1180 = vmatprep.subr.bf16.mxu0 0
        %1181 = vmatpush1.bf16.msra.mxu0 0
        %1182 = vmatprep.subr.bf16.mxu0 0
        %1183 = vmatpush1.bf16.msra.mxu0 0
        %1184 = vmatprep.subr.bf16.mxu0 0
        %1185 = vmatpush1.bf16.msra.mxu0 0
        %1186 = vmatprep.subr.bf16.mxu0 0
        %1187 = vmatpush1.bf16.msra.mxu0 0
        %1188 = vmatprep.subr.bf16.mxu0 0
        %1189 = vmatpush1.bf16.msra.mxu0 0
        %1190 = vmatprep.subr.bf16.mxu0 0
        %1191 = vmatpush1.bf16.msra.mxu0 0
        %1192 = vmatprep.subr.bf16.mxu0 0
        %1193 = vmatpush1.bf16.msra.mxu0 0
        %1194 = vmatprep.subr.bf16.mxu0 0
        %1195 = vmatpush1.bf16.msra.mxu0 0
        %1196 = vmatprep.subr.bf16.mxu0 0
        %1197 = vmatpush1.bf16.msra.mxu0 0
        %1198 = vmatprep.subr.bf16.mxu0 0
        %1199 = vmatpush1.bf16.msra.mxu0 0
        %1200 = vmatprep.mubr.bf16.mxu0 0
        %1201 = vmatmul.mubr.bf16.gmra.mrb[0].mxu0 %v432
        %v1202 = vpop.f32.mrb[0].mxu0
        %v1203 = vadd.f32 0.0, %v1202
        %v1204 = vpop.f32.mrb[0].mxu0
        %v1205 = vpop.f32.mrb[0].mxu0
        %v1206 = vadd.f32 0.0, %v1205
        %v1207 = vpop.f32.mrb[0].mxu0
        %1208 = vmatprep.mubr.bf16.mxu0 0
        %1209 = vmatmul.mubr.bf16.gmra.mrb[0].mxu0 %v435
        %v1210 = vpop.f32.mrb[0].mxu0
        %v1211 = vadd.f32 0.0, %v1210
        %v1212 = vpop.f32.mrb[0].mxu0
        %v1213 = vpop.f32.mrb[0].mxu0
        %v1214 = vadd.f32 0.0, %v1213
        %v1215 = vpop.f32.mrb[0].mxu0
        %1216 = vmatprep.mubr.bf16.mxu0 0
        %1217 = vmatmul.mubr.bf16.gmra.mrb[0].mxu0 %v438
        %v1218 = vpop.f32.mrb[0].mxu0
        %v1219 = vadd.f32 0.0, %v1218
        %v1220 = vpop.f32.mrb[0].mxu0
        %v1221 = vpop.f32.mrb[0].mxu0
        %v1222 = vadd.f32 0.0, %v1221
        %v1223 = vpop.f32.mrb[0].mxu0
        %1224 = vmatprep.mubr.bf16.mxu0 0
        %1225 = vmatmul.mubr.bf16.gmra.mrb[0].mxu0 %v441
        %v1226 = vpop.f32.mrb[0].mxu0
        %v1227 = vadd.f32 0.0, %v1226
        %v1228 = vpop.f32.mrb[0].mxu0
        %v1229 = vpop.f32.mrb[0].mxu0
        %v1230 = vadd.f32 0.0, %v1229
        %v1231 = vpop.f32.mrb[0].mxu0
        %1232 = vdwg.mxu0
        %v1237 = vunpack.c.l.b16 %v1055
        %v1238 = vunpack.c.l.b16 %v1056
        %v1239 = vunpack.c.l.b16 %v1057
        %v1240 = vunpack.c.l.b16 %v1058
        %v1241 = vpack.c.b16 %v1238, %v1237
        %v1242 = vpack.c.b16 %v1240, %v1239
        %1245 = vmatprep.subr.bf16.mxu0 0
        %1246 = vmatpush1.bf16.msra.mxu0 %v1241
        %1247 = vmatprep.subr.bf16.mxu0 0
        %1248 = vmatpush1.bf16.msra.mxu0 %v1242
        %1249 = vmatprep.subr.bf16.mxu0 0
        %1250 = vmatpush1.bf16.msra.mxu0 0
        %1251 = vmatprep.subr.bf16.mxu0 0
        %1252 = vmatpush1.bf16.msra.mxu0 0
        %1253 = vmatprep.subr.bf16.mxu0 0
        %1254 = vmatpush1.bf16.msra.mxu0 0
        %1255 = vmatprep.subr.bf16.mxu0 0
        %1256 = vmatpush1.bf16.msra.mxu0 0
        %1257 = vmatprep.subr.bf16.mxu0 0
        %1258 = vmatpush1.bf16.msra.mxu0 0
        %1259 = vmatprep.subr.bf16.mxu0 0
        %1260 = vmatpush1.bf16.msra.mxu0 0
        %1261 = vmatprep.subr.bf16.mxu0 0
        %1262 = vmatpush1.bf16.msra.mxu0 0
        %1263 = vmatprep.subr.bf16.mxu0 0
        %1264 = vmatpush1.bf16.msra.mxu0 0
        %1265 = vmatprep.subr.bf16.mxu0 0
        %1266 = vmatpush1.bf16.msra.mxu0 0
        %1267 = vmatprep.subr.bf16.mxu0 0
        %1268 = vmatpush1.bf16.msra.mxu0 0
        %1269 = vmatprep.subr.bf16.mxu0 0
        %1270 = vmatpush1.bf16.msra.mxu0 0
        %1271 = vmatprep.subr.bf16.mxu0 0
        %1272 = vmatpush1.bf16.msra.mxu0 0
        %1273 = vmatprep.subr.bf16.mxu0 0
        %1274 = vmatpush1.bf16.msra.mxu0 0
        %1275 = vmatprep.subr.bf16.mxu0 0
        %1276 = vmatpush1.bf16.msra.mxu0 0
        %1277 = vmatprep.mubr.bf16.mxu0 0
        %1278 = vmatmul.mubr.bf16.gmra.mrb[0].mxu0 %v432
        %v1279 = vpop.f32.mrb[0].mxu0
        %v1280 = vadd.f32 0.0, %v1279
        %v1281 = vpop.f32.mrb[0].mxu0
        %v1282 = vpop.f32.mrb[0].mxu0
        %v1283 = vadd.f32 0.0, %v1282
        %v1284 = vpop.f32.mrb[0].mxu0
        %1285 = vmatprep.mubr.bf16.mxu0 0
        %1286 = vmatmul.mubr.bf16.gmra.mrb[0].mxu0 %v435
        %v1287 = vpop.f32.mrb[0].mxu0
        %v1288 = vadd.f32 0.0, %v1287
        %v1289 = vpop.f32.mrb[0].mxu0
        %v1290 = vpop.f32.mrb[0].mxu0
        %v1291 = vadd.f32 0.0, %v1290
        %v1292 = vpop.f32.mrb[0].mxu0
        %1293 = vmatprep.mubr.bf16.mxu0 0
        %1294 = vmatmul.mubr.bf16.gmra.mrb[0].mxu0 %v438
        %v1295 = vpop.f32.mrb[0].mxu0
        %v1296 = vadd.f32 0.0, %v1295
        %v1297 = vpop.f32.mrb[0].mxu0
        %v1298 = vpop.f32.mrb[0].mxu0
        %v1299 = vadd.f32 0.0, %v1298
        %v1300 = vpop.f32.mrb[0].mxu0
        %1301 = vmatprep.mubr.bf16.mxu0 0
        %1302 = vmatmul.mubr.bf16.gmra.mrb[0].mxu0 %v441
        %v1303 = vpop.f32.mrb[0].mxu0
        %v1304 = vadd.f32 0.0, %v1303
        %v1305 = vpop.f32.mrb[0].mxu0
        %v1306 = vpop.f32.mrb[0].mxu0
        %v1307 = vadd.f32 0.0, %v1306
        %v1308 = vpop.f32.mrb[0].mxu0
        %1309 = vdwg.mxu0
        %v1314 = vunpack.c.l.b16 %v1059
        %v1315 = vunpack.c.l.b16 %v1060
        %v1316 = vunpack.c.l.b16 %v1061
        %v1317 = vunpack.c.l.b16 %v1062
        %v1318 = vpack.c.b16 %v1315, %v1314
        %v1319 = vpack.c.b16 %v1317, %v1316
        %1322 = vmatprep.subr.bf16.mxu0 0
        %1323 = vmatpush1.bf16.msra.mxu0 %v1318
        %1324 = vmatprep.subr.bf16.mxu0 0
        %1325 = vmatpush1.bf16.msra.mxu0 %v1319
        %1326 = vmatprep.subr.bf16.mxu0 0
        %1327 = vmatpush1.bf16.msra.mxu0 0
        %1328 = vmatprep.subr.bf16.mxu0 0
        %1329 = vmatpush1.bf16.msra.mxu0 0
        %1330 = vmatprep.subr.bf16.mxu0 0
        %1331 = vmatpush1.bf16.msra.mxu0 0
        %1332 = vmatprep.subr.bf16.mxu0 0
        %1333 = vmatpush1.bf16.msra.mxu0 0
        %1334 = vmatprep.subr.bf16.mxu0 0
        %1335 = vmatpush1.bf16.msra.mxu0 0
        %1336 = vmatprep.subr.bf16.mxu0 0
        %1337 = vmatpush1.bf16.msra.mxu0 0
        %1338 = vmatprep.subr.bf16.mxu0 0
        %1339 = vmatpush1.bf16.msra.mxu0 0
        %1340 = vmatprep.subr.bf16.mxu0 0
        %1341 = vmatpush1.bf16.msra.mxu0 0
        %1342 = vmatprep.subr.bf16.mxu0 0
        %1343 = vmatpush1.bf16.msra.mxu0 0
        %1344 = vmatprep.subr.bf16.mxu0 0
        %1345 = vmatpush1.bf16.msra.mxu0 0
        %1346 = vmatprep.subr.bf16.mxu0 0
        %1347 = vmatpush1.bf16.msra.mxu0 0
        %1348 = vmatprep.subr.bf16.mxu0 0
        %1349 = vmatpush1.bf16.msra.mxu0 0
        %1350 = vmatprep.subr.bf16.mxu0 0
        %1351 = vmatpush1.bf16.msra.mxu0 0
        %1352 = vmatprep.subr.bf16.mxu0 0
        %1353 = vmatpush1.bf16.msra.mxu0 0
        %1354 = vmatprep.mubr.bf16.mxu0 0
        %1355 = vmatmul.mubr.bf16.gmra.mrb[0].mxu0 %v432
        %v1356 = vpop.f32.mrb[0].mxu0
        %v1357 = vadd.f32 0.0, %v1356
        %v1358 = vpop.f32.mrb[0].mxu0
        %v1359 = vpop.f32.mrb[0].mxu0
        %v1360 = vadd.f32 0.0, %v1359
        %v1361 = vpop.f32.mrb[0].mxu0
        %1362 = vmatprep.mubr.bf16.mxu0 0
        %1363 = vmatmul.mubr.bf16.gmra.mrb[0].mxu0 %v435
        %v1364 = vpop.f32.mrb[0].mxu0
        %v1365 = vadd.f32 0.0, %v1364
        %v1366 = vpop.f32.mrb[0].mxu0
        %v1367 = vpop.f32.mrb[0].mxu0
        %v1368 = vadd.f32 0.0, %v1367
        %v1369 = vpop.f32.mrb[0].mxu0
        %1370 = vmatprep.mubr.bf16.mxu0 0
        %1371 = vmatmul.mubr.bf16.gmra.mrb[0].mxu0 %v438
        %v1372 = vpop.f32.mrb[0].mxu0
        %v1373 = vadd.f32 0.0, %v1372
        %v1374 = vpop.f32.mrb[0].mxu0
        %v1375 = vpop.f32.mrb[0].mxu0
        %v1376 = vadd.f32 0.0, %v1375
        %v1377 = vpop.f32.mrb[0].mxu0
        %1378 = vmatprep.mubr.bf16.mxu0 0
        %1379 = vmatmul.mubr.bf16.gmra.mrb[0].mxu0 %v441
        %v1380 = vpop.f32.mrb[0].mxu0
        %v1381 = vadd.f32 0.0, %v1380
        %v1382 = vpop.f32.mrb[0].mxu0
        %v1383 = vpop.f32.mrb[0].mxu0
        %v1384 = vadd.f32 0.0, %v1383
        %v1385 = vpop.f32.mrb[0].mxu0
        %1386 = vdwg.mxu0
        %v1391 = vunpack.c.l.b16 %v1063
        %v1392 = vunpack.c.l.b16 %v1064
        %v1393 = vunpack.c.l.b16 %v1065
        %v1394 = vunpack.c.l.b16 %v1066
        %v1395 = vpack.c.b16 %v1392, %v1391
        %v1396 = vpack.c.b16 %v1394, %v1393
        %1399 = vmatprep.subr.bf16.mxu0 0
        %1400 = vmatpush1.bf16.msra.mxu0 %v1395
        %1401 = vmatprep.subr.bf16.mxu0 0
        %1402 = vmatpush1.bf16.msra.mxu0 %v1396
        %1403 = vmatprep.subr.bf16.mxu0 0
        %1404 = vmatpush1.bf16.msra.mxu0 0
        %1405 = vmatprep.subr.bf16.mxu0 0
        %1406 = vmatpush1.bf16.msra.mxu0 0
        %1407 = vmatprep.subr.bf16.mxu0 0
        %1408 = vmatpush1.bf16.msra.mxu0 0
        %1409 = vmatprep.subr.bf16.mxu0 0
        %1410 = vmatpush1.bf16.msra.mxu0 0
        %1411 = vmatprep.subr.bf16.mxu0 0
        %1412 = vmatpush1.bf16.msra.mxu0 0
        %1413 = vmatprep.subr.bf16.mxu0 0
        %1414 = vmatpush1.bf16.msra.mxu0 0
        %1415 = vmatprep.subr.bf16.mxu0 0
        %1416 = vmatpush1.bf16.msra.mxu0 0
        %1417 = vmatprep.subr.bf16.mxu0 0
        %1418 = vmatpush1.bf16.msra.mxu0 0
        %1419 = vmatprep.subr.bf16.mxu0 0
        %1420 = vmatpush1.bf16.msra.mxu0 0
        %1421 = vmatprep.subr.bf16.mxu0 0
        %1422 = vmatpush1.bf16.msra.mxu0 0
        %1423 = vmatprep.subr.bf16.mxu0 0
        %1424 = vmatpush1.bf16.msra.mxu0 0
        %1425 = vmatprep.subr.bf16.mxu0 0
        %1426 = vmatpush1.bf16.msra.mxu0 0
        %1427 = vmatprep.subr.bf16.mxu0 0
        %1428 = vmatpush1.bf16.msra.mxu0 0
        %1429 = vmatprep.subr.bf16.mxu0 0
        %1430 = vmatpush1.bf16.msra.mxu0 0
        %1431 = vmatprep.mubr.bf16.mxu0 0
        %1432 = vmatmul.mubr.bf16.gmra.mrb[0].mxu0 %v432
        %v1433 = vpop.f32.mrb[0].mxu0
        %v1434 = vadd.f32 0.0, %v1433
        %v1435 = vpop.f32.mrb[0].mxu0
        %v1436 = vpop.f32.mrb[0].mxu0
        %v1437 = vadd.f32 0.0, %v1436
        %v1438 = vpop.f32.mrb[0].mxu0
        %1439 = vmatprep.mubr.bf16.mxu0 0
        %1440 = vmatmul.mubr.bf16.gmra.mrb[0].mxu0 %v435
        %v1441 = vpop.f32.mrb[0].mxu0
        %v1442 = vadd.f32 0.0, %v1441
        %v1443 = vpop.f32.mrb[0].mxu0
        %v1444 = vpop.f32.mrb[0].mxu0
        %v1445 = vadd.f32 0.0, %v1444
        %v1446 = vpop.f32.mrb[0].mxu0
        %1447 = vmatprep.mubr.bf16.mxu0 0
        %1448 = vmatmul.mubr.bf16.gmra.mrb[0].mxu0 %v438
        %v1449 = vpop.f32.mrb[0].mxu0
        %v1450 = vadd.f32 0.0, %v1449
        %v1451 = vpop.f32.mrb[0].mxu0
        %v1452 = vpop.f32.mrb[0].mxu0
        %v1453 = vadd.f32 0.0, %v1452
        %v1454 = vpop.f32.mrb[0].mxu0
        %1455 = vmatprep.mubr.bf16.mxu0 0
        %1456 = vmatmul.mubr.bf16.gmra.mrb[0].mxu0 %v441
        %v1457 = vpop.f32.mrb[0].mxu0
        %v1458 = vadd.f32 0.0, %v1457
        %v1459 = vpop.f32.mrb[0].mxu0
        %v1460 = vpop.f32.mrb[0].mxu0
        %v1461 = vadd.f32 0.0, %v1460
        %v1462 = vpop.f32.mrb[0].mxu0
        %1463 = vdwg.mxu0
        %v1468 = vunpack.c.l.b16 %v1067
        %v1469 = vunpack.c.l.b16 %v1068
        %v1470 = vunpack.c.l.b16 %v1069
        %v1471 = vunpack.c.l.b16 %v1070
        %v1472 = vpack.c.b16 %v1469, %v1468
        %v1473 = vpack.c.b16 %v1471, %v1470
        %1476 = vmatprep.subr.bf16.mxu0 0
        %1477 = vmatpush1.bf16.msra.mxu0 %v1472
        %1478 = vmatprep.subr.bf16.mxu0 0
        %1479 = vmatpush1.bf16.msra.mxu0 %v1473
        %1480 = vmatprep.subr.bf16.mxu0 0
        %1481 = vmatpush1.bf16.msra.mxu0 0
        %1482 = vmatprep.subr.bf16.mxu0 0
        %1483 = vmatpush1.bf16.msra.mxu0 0
        %1484 = vmatprep.subr.bf16.mxu0 0
        %1485 = vmatpush1.bf16.msra.mxu0 0
        %1486 = vmatprep.subr.bf16.mxu0 0
        %1487 = vmatpush1.bf16.msra.mxu0 0
        %1488 = vmatprep.subr.bf16.mxu0 0
        %1489 = vmatpush1.bf16.msra.mxu0 0
        %1490 = vmatprep.subr.bf16.mxu0 0
        %1491 = vmatpush1.bf16.msra.mxu0 0
        %1492 = vmatprep.subr.bf16.mxu0 0
        %1493 = vmatpush1.bf16.msra.mxu0 0
        %1494 = vmatprep.subr.bf16.mxu0 0
        %1495 = vmatpush1.bf16.msra.mxu0 0
        %1496 = vmatprep.subr.bf16.mxu0 0
        %1497 = vmatpush1.bf16.msra.mxu0 0
        %1498 = vmatprep.subr.bf16.mxu0 0
        %1499 = vmatpush1.bf16.msra.mxu0 0
        %1500 = vmatprep.subr.bf16.mxu0 0
        %1501 = vmatpush1.bf16.msra.mxu0 0
        %1502 = vmatprep.subr.bf16.mxu0 0
        %1503 = vmatpush1.bf16.msra.mxu0 0
        %1504 = vmatprep.subr.bf16.mxu0 0
        %1505 = vmatpush1.bf16.msra.mxu0 0
        %1506 = vmatprep.subr.bf16.mxu0 0
        %1507 = vmatpush1.bf16.msra.mxu0 0
        %1508 = vmatprep.mubr.bf16.mxu0 0
        %1509 = vmatmul.mubr.bf16.gmra.mrb[0].mxu0 %v432
        %v1510 = vpop.f32.mrb[0].mxu0
        %v1511 = vadd.f32 0.0, %v1510
        %v1512 = vpop.f32.mrb[0].mxu0
        %v1513 = vpop.f32.mrb[0].mxu0
        %v1514 = vadd.f32 0.0, %v1513
        %v1515 = vpop.f32.mrb[0].mxu0
        %1516 = vmatprep.mubr.bf16.mxu0 0
        %1517 = vmatmul.mubr.bf16.gmra.mrb[0].mxu0 %v435
        %v1518 = vpop.f32.mrb[0].mxu0
        %v1519 = vadd.f32 0.0, %v1518
        %v1520 = vpop.f32.mrb[0].mxu0
        %v1521 = vpop.f32.mrb[0].mxu0
        %v1522 = vadd.f32 0.0, %v1521
        %v1523 = vpop.f32.mrb[0].mxu0
        %1524 = vmatprep.mubr.bf16.mxu0 0
        %1525 = vmatmul.mubr.bf16.gmra.mrb[0].mxu0 %v438
        %v1526 = vpop.f32.mrb[0].mxu0
        %v1527 = vadd.f32 0.0, %v1526
        %v1528 = vpop.f32.mrb[0].mxu0
        %v1529 = vpop.f32.mrb[0].mxu0
        %v1530 = vadd.f32 0.0, %v1529
        %v1531 = vpop.f32.mrb[0].mxu0
        %1532 = vmatprep.mubr.bf16.mxu0 0
        %1533 = vmatmul.mubr.bf16.gmra.mrb[0].mxu0 %v441
        %v1534 = vpop.f32.mrb[0].mxu0
        %v1535 = vadd.f32 0.0, %v1534
        %v1536 = vpop.f32.mrb[0].mxu0
        %v1537 = vpop.f32.mrb[0].mxu0
        %v1538 = vadd.f32 0.0, %v1537
        %v1539 = vpop.f32.mrb[0].mxu0
        %1540 = vdwg.mxu0
        %v1545 = vunpack.c.l.b16 %v1071
        %v1546 = vunpack.c.l.b16 %v1072
        %v1547 = vunpack.c.l.b16 %v1073
        %v1548 = vunpack.c.l.b16 %v1074
        %v1549 = vpack.c.b16 %v1546, %v1545
        %v1550 = vpack.c.b16 %v1548, %v1547
        %1553 = vmatprep.subr.bf16.mxu0 0
        %1554 = vmatpush1.bf16.msra.mxu0 %v1549
        %1555 = vmatprep.subr.bf16.mxu0 0
        %1556 = vmatpush1.bf16.msra.mxu0 %v1550
        %1557 = vmatprep.subr.bf16.mxu0 0
        %1558 = vmatpush1.bf16.msra.mxu0 0
        %1559 = vmatprep.subr.bf16.mxu0 0
        %1560 = vmatpush1.bf16.msra.mxu0 0
        %1561 = vmatprep.subr.bf16.mxu0 0
        %1562 = vmatpush1.bf16.msra.mxu0 0
        %1563 = vmatprep.subr.bf16.mxu0 0
        %1564 = vmatpush1.bf16.msra.mxu0 0
        %1565 = vmatprep.subr.bf16.mxu0 0
        %1566 = vmatpush1.bf16.msra.mxu0 0
        %1567 = vmatprep.subr.bf16.mxu0 0
        %1568 = vmatpush1.bf16.msra.mxu0 0
        %1569 = vmatprep.subr.bf16.mxu0 0
        %1570 = vmatpush1.bf16.msra.mxu0 0
        %1571 = vmatprep.subr.bf16.mxu0 0
        %1572 = vmatpush1.bf16.msra.mxu0 0
        %1573 = vmatprep.subr.bf16.mxu0 0
        %1574 = vmatpush1.bf16.msra.mxu0 0
        %1575 = vmatprep.subr.bf16.mxu0 0
        %1576 = vmatpush1.bf16.msra.mxu0 0
        %1577 = vmatprep.subr.bf16.mxu0 0
        %1578 = vmatpush1.bf16.msra.mxu0 0
        %1579 = vmatprep.subr.bf16.mxu0 0
        %1580 = vmatpush1.bf16.msra.mxu0 0
        %1581 = vmatprep.subr.bf16.mxu0 0
        %1582 = vmatpush1.bf16.msra.mxu0 0
        %1583 = vmatprep.subr.bf16.mxu0 0
        %1584 = vmatpush1.bf16.msra.mxu0 0
        %1585 = vmatprep.mubr.bf16.mxu0 0
        %1586 = vmatmul.mubr.bf16.gmra.mrb[0].mxu0 %v432
        %v1587 = vpop.f32.mrb[0].mxu0
        %v1588 = vadd.f32 0.0, %v1587
        %v1589 = vpop.f32.mrb[0].mxu0
        %v1590 = vpop.f32.mrb[0].mxu0
        %v1591 = vadd.f32 0.0, %v1590
        %v1592 = vpop.f32.mrb[0].mxu0
        %1593 = vmatprep.mubr.bf16.mxu0 0
        %1594 = vmatmul.mubr.bf16.gmra.mrb[0].mxu0 %v435
        %v1595 = vpop.f32.mrb[0].mxu0
        %v1596 = vadd.f32 0.0, %v1595
        %v1597 = vpop.f32.mrb[0].mxu0
        %v1598 = vpop.f32.mrb[0].mxu0
        %v1599 = vadd.f32 0.0, %v1598
        %v1600 = vpop.f32.mrb[0].mxu0
        %1601 = vmatprep.mubr.bf16.mxu0 0
        %1602 = vmatmul.mubr.bf16.gmra.mrb[0].mxu0 %v438
        %v1603 = vpop.f32.mrb[0].mxu0
        %v1604 = vadd.f32 0.0, %v1603
        %v1605 = vpop.f32.mrb[0].mxu0
        %v1606 = vpop.f32.mrb[0].mxu0
        %v1607 = vadd.f32 0.0, %v1606
        %v1608 = vpop.f32.mrb[0].mxu0
        %1609 = vmatprep.mubr.bf16.mxu0 0
        %1610 = vmatmul.mubr.bf16.gmra.mrb[0].mxu0 %v441
        %v1611 = vpop.f32.mrb[0].mxu0
        %v1612 = vadd.f32 0.0, %v1611
        %v1613 = vpop.f32.mrb[0].mxu0
        %v1614 = vpop.f32.mrb[0].mxu0
        %v1615 = vadd.f32 0.0, %v1614
        %v1616 = vpop.f32.mrb[0].mxu0
        %1617 = vdwg.mxu0
        %v1622 = vunpack.c.l.b16 %v1075
        %v1623 = vunpack.c.l.b16 %v1076
        %v1624 = vunpack.c.l.b16 %v1077
        %v1625 = vunpack.c.l.b16 %v1078
        %v1626 = vpack.c.b16 %v1623, %v1622
        %v1627 = vpack.c.b16 %v1625, %v1624
        %1630 = vmatprep.subr.bf16.mxu0 0
        %1631 = vmatpush1.bf16.msra.mxu0 %v1626
        %1632 = vmatprep.subr.bf16.mxu0 0
        %1633 = vmatpush1.bf16.msra.mxu0 %v1627
        %1634 = vmatprep.subr.bf16.mxu0 0
        %1635 = vmatpush1.bf16.msra.mxu0 0
        %1636 = vmatprep.subr.bf16.mxu0 0
        %1637 = vmatpush1.bf16.msra.mxu0 0
        %1638 = vmatprep.subr.bf16.mxu0 0
        %1639 = vmatpush1.bf16.msra.mxu0 0
        %1640 = vmatprep.subr.bf16.mxu0 0
        %1641 = vmatpush1.bf16.msra.mxu0 0
        %1642 = vmatprep.subr.bf16.mxu0 0
        %1643 = vmatpush1.bf16.msra.mxu0 0
        %1644 = vmatprep.subr.bf16.mxu0 0
        %1645 = vmatpush1.bf16.msra.mxu0 0
        %1646 = vmatprep.subr.bf16.mxu0 0
        %1647 = vmatpush1.bf16.msra.mxu0 0
        %1648 = vmatprep.subr.bf16.mxu0 0
        %1649 = vmatpush1.bf16.msra.mxu0 0
        %1650 = vmatprep.subr.bf16.mxu0 0
        %1651 = vmatpush1.bf16.msra.mxu0 0
        %1652 = vmatprep.subr.bf16.mxu0 0
        %1653 = vmatpush1.bf16.msra.mxu0 0
        %1654 = vmatprep.subr.bf16.mxu0 0
        %1655 = vmatpush1.bf16.msra.mxu0 0
        %1656 = vmatprep.subr.bf16.mxu0 0
        %1657 = vmatpush1.bf16.msra.mxu0 0
        %1658 = vmatprep.subr.bf16.mxu0 0
        %1659 = vmatpush1.bf16.msra.mxu0 0
        %1660 = vmatprep.subr.bf16.mxu0 0
        %1661 = vmatpush1.bf16.msra.mxu0 0
        %1662 = vmatprep.mubr.bf16.mxu0 0
        %1663 = vmatmul.mubr.bf16.gmra.mrb[0].mxu0 %v432
        %v1664 = vpop.f32.mrb[0].mxu0
        %v1665 = vadd.f32 0.0, %v1664
        %v1666 = vpop.f32.mrb[0].mxu0
        %v1667 = vpop.f32.mrb[0].mxu0
        %v1668 = vadd.f32 0.0, %v1667
        %v1669 = vpop.f32.mrb[0].mxu0
        %1670 = vmatprep.mubr.bf16.mxu0 0
        %1671 = vmatmul.mubr.bf16.gmra.mrb[0].mxu0 %v435
        %v1672 = vpop.f32.mrb[0].mxu0
        %v1673 = vadd.f32 0.0, %v1672
        %v1674 = vpop.f32.mrb[0].mxu0
        %v1675 = vpop.f32.mrb[0].mxu0
        %v1676 = vadd.f32 0.0, %v1675
        %v1677 = vpop.f32.mrb[0].mxu0
        %1678 = vmatprep.mubr.bf16.mxu0 0
        %1679 = vmatmul.mubr.bf16.gmra.mrb[0].mxu0 %v438
        %v1680 = vpop.f32.mrb[0].mxu0
        %v1681 = vadd.f32 0.0, %v1680
        %v1682 = vpop.f32.mrb[0].mxu0
        %v1683 = vpop.f32.mrb[0].mxu0
        %v1684 = vadd.f32 0.0, %v1683
        %v1685 = vpop.f32.mrb[0].mxu0
        %1686 = vmatprep.mubr.bf16.mxu0 0
        %1687 = vmatmul.mubr.bf16.gmra.mrb[0].mxu0 %v441
        %v1688 = vpop.f32.mrb[0].mxu0
        %v1689 = vadd.f32 0.0, %v1688
        %v1690 = vpop.f32.mrb[0].mxu0
        %v1691 = vpop.f32.mrb[0].mxu0
        %v1692 = vadd.f32 0.0, %v1691
        %v1693 = vpop.f32.mrb[0].mxu0
        %1694 = vdwg.mxu0
        %v1695 = vld [vmem:[#allocation8] sm:$0xf]
        %v1696 = vld [vmem:[#allocation8 + $0x4] sm:$0xf]
        %v1697 = vld [vmem:[#allocation8 + $0x8] sm:$0xf]
        %v1698 = vld [vmem:[#allocation8 + $0xc] sm:$0xf]
        %v1699 = vld [vmem:[#allocation8 + $0x10] sm:$0xf]
        %v1700 = vld [vmem:[#allocation8 + $0x14] sm:$0xf]
        %v1701 = vld [vmem:[#allocation8 + $0x18] sm:$0xf]
        %v1702 = vld [vmem:[#allocation8 + $0x1c] sm:$0xf]
        %v1703 = vld [vmem:[#allocation8 + $0x20] sm:$0xf]
        %v1704 = vld [vmem:[#allocation8 + $0x24] sm:$0xf]
        %v1705 = vld [vmem:[#allocation8 + $0x28] sm:$0xf]
        %v1706 = vld [vmem:[#allocation8 + $0x2c] sm:$0xf]
        %v1707 = vld [vmem:[#allocation8 + $0x30] sm:$0xf]
        %v1708 = vld [vmem:[#allocation8 + $0x34] sm:$0xf]
        %v1709 = vld [vmem:[#allocation8 + $0x38] sm:$0xf]
        %v1710 = vld [vmem:[#allocation8 + $0x3c] sm:$0xf]
        %v1711 = vld [vmem:[#allocation8 + $0x40] sm:$0xf]
        %v1712 = vld [vmem:[#allocation8 + $0x44] sm:$0xf]
        %v1713 = vld [vmem:[#allocation8 + $0x48] sm:$0xf]
        %v1714 = vld [vmem:[#allocation8 + $0x4c] sm:$0xf]
        %v1715 = vld [vmem:[#allocation8 + $0x50] sm:$0xf]
        %v1716 = vld [vmem:[#allocation8 + $0x54] sm:$0xf]
        %v1717 = vld [vmem:[#allocation8 + $0x58] sm:$0xf]
        %v1718 = vld [vmem:[#allocation8 + $0x5c] sm:$0xf]
        %v1719 = vld [vmem:[#allocation8 + $0x60] sm:$0xf]
        %v1720 = vld [vmem:[#allocation8 + $0x64] sm:$0xf]
        %v1721 = vld [vmem:[#allocation8 + $0x68] sm:$0xf]
        %v1722 = vld [vmem:[#allocation8 + $0x6c] sm:$0xf]
        %v1723 = vld [vmem:[#allocation8 + $0x70] sm:$0xf]
        %v1724 = vld [vmem:[#allocation8 + $0x74] sm:$0xf]
        %v1725 = vld [vmem:[#allocation8 + $0x78] sm:$0xf]
        %v1726 = vld [vmem:[#allocation8 + $0x7c] sm:$0xf]
        %v1731 = vunpack.c.l.b16 %v1695
        %v1732 = vunpack.c.l.b16 %v1696
        %v1733 = vunpack.c.l.b16 %v1697
        %v1734 = vunpack.c.l.b16 %v1698
        %v1735 = vpack.c.b16 %v1732, %v1731
        %v1736 = vpack.c.b16 %v1734, %v1733
        %1739 = vmatprep.subr.bf16.mxu0 0
        %1740 = vmatpush1.bf16.msra.mxu0 %v1735
        %1741 = vmatprep.subr.bf16.mxu0 0
        %1742 = vmatpush1.bf16.msra.mxu0 %v1736
        %1743 = vmatprep.subr.bf16.mxu0 0
        %1744 = vmatpush1.bf16.msra.mxu0 0
        %1745 = vmatprep.subr.bf16.mxu0 0
        %1746 = vmatpush1.bf16.msra.mxu0 0
        %1747 = vmatprep.subr.bf16.mxu0 0
        %1748 = vmatpush1.bf16.msra.mxu0 0
        %1749 = vmatprep.subr.bf16.mxu0 0
        %1750 = vmatpush1.bf16.msra.mxu0 0
        %1751 = vmatprep.subr.bf16.mxu0 0
        %1752 = vmatpush1.bf16.msra.mxu0 0
        %1753 = vmatprep.subr.bf16.mxu0 0
        %1754 = vmatpush1.bf16.msra.mxu0 0
        %1755 = vmatprep.subr.bf16.mxu0 0
        %1756 = vmatpush1.bf16.msra.mxu0 0
        %1757 = vmatprep.subr.bf16.mxu0 0
        %1758 = vmatpush1.bf16.msra.mxu0 0
        %1759 = vmatprep.subr.bf16.mxu0 0
        %1760 = vmatpush1.bf16.msra.mxu0 0
        %1761 = vmatprep.subr.bf16.mxu0 0
        %1762 = vmatpush1.bf16.msra.mxu0 0
        %1763 = vmatprep.subr.bf16.mxu0 0
        %1764 = vmatpush1.bf16.msra.mxu0 0
        %1765 = vmatprep.subr.bf16.mxu0 0
        %1766 = vmatpush1.bf16.msra.mxu0 0
        %1767 = vmatprep.subr.bf16.mxu0 0
        %1768 = vmatpush1.bf16.msra.mxu0 0
        %1769 = vmatprep.subr.bf16.mxu0 0
        %1770 = vmatpush1.bf16.msra.mxu0 0
        %1771 = vmatprep.mubr.bf16.mxu0 0
        %1772 = vmatmul.mubr.bf16.gmra.mrb[0].mxu0 %v432
        %v1773 = vpop.f32.mrb[0].mxu0
        %v1774 = vadd.f32 0.0, %v1773
        %v1775 = vpop.f32.mrb[0].mxu0
        %v1776 = vpop.f32.mrb[0].mxu0
        %v1777 = vadd.f32 0.0, %v1776
        %v1778 = vpop.f32.mrb[0].mxu0
        %1779 = vmatprep.mubr.bf16.mxu0 0
        %1780 = vmatmul.mubr.bf16.gmra.mrb[0].mxu0 %v435
        %v1781 = vpop.f32.mrb[0].mxu0
        %v1782 = vadd.f32 0.0, %v1781
        %v1783 = vpop.f32.mrb[0].mxu0
        %v1784 = vpop.f32.mrb[0].mxu0
        %v1785 = vadd.f32 0.0, %v1784
        %v1786 = vpop.f32.mrb[0].mxu0
        %1787 = vmatprep.mubr.bf16.mxu0 0
        %1788 = vmatmul.mubr.bf16.gmra.mrb[0].mxu0 %v438
        %v1789 = vpop.f32.mrb[0].mxu0
        %v1790 = vadd.f32 0.0, %v1789
        %v1791 = vpop.f32.mrb[0].mxu0
        %v1792 = vpop.f32.mrb[0].mxu0
        %v1793 = vadd.f32 0.0, %v1792
        %v1794 = vpop.f32.mrb[0].mxu0
        %1795 = vmatprep.mubr.bf16.mxu0 0
        %1796 = vmatmul.mubr.bf16.gmra.mrb[0].mxu0 %v441
        %v1797 = vpop.f32.mrb[0].mxu0
        %v1798 = vadd.f32 0.0, %v1797
        %v1799 = vpop.f32.mrb[0].mxu0
        %v1800 = vpop.f32.mrb[0].mxu0
        %v1801 = vadd.f32 0.0, %v1800
        %v1802 = vpop.f32.mrb[0].mxu0
        %1803 = vdwg.mxu0
        %v1808 = vunpack.c.l.b16 %v1699
        %v1809 = vunpack.c.l.b16 %v1700
        %v1810 = vunpack.c.l.b16 %v1701
        %v1811 = vunpack.c.l.b16 %v1702
        %v1812 = vpack.c.b16 %v1809, %v1808
        %v1813 = vpack.c.b16 %v1811, %v1810
        %1816 = vmatprep.subr.bf16.mxu0 0
        %1817 = vmatpush1.bf16.msra.mxu0 %v1812
        %1818 = vmatprep.subr.bf16.mxu0 0
        %1819 = vmatpush1.bf16.msra.mxu0 %v1813
        %1820 = vmatprep.subr.bf16.mxu0 0
        %1821 = vmatpush1.bf16.msra.mxu0 0
        %1822 = vmatprep.subr.bf16.mxu0 0
        %1823 = vmatpush1.bf16.msra.mxu0 0
        %1824 = vmatprep.subr.bf16.mxu0 0
        %1825 = vmatpush1.bf16.msra.mxu0 0
        %1826 = vmatprep.subr.bf16.mxu0 0
        %1827 = vmatpush1.bf16.msra.mxu0 0
        %1828 = vmatprep.subr.bf16.mxu0 0
        %1829 = vmatpush1.bf16.msra.mxu0 0
        %1830 = vmatprep.subr.bf16.mxu0 0
        %1831 = vmatpush1.bf16.msra.mxu0 0
        %1832 = vmatprep.subr.bf16.mxu0 0
        %1833 = vmatpush1.bf16.msra.mxu0 0
        %1834 = vmatprep.subr.bf16.mxu0 0
        %1835 = vmatpush1.bf16.msra.mxu0 0
        %1836 = vmatprep.subr.bf16.mxu0 0
        %1837 = vmatpush1.bf16.msra.mxu0 0
        %1838 = vmatprep.subr.bf16.mxu0 0
        %1839 = vmatpush1.bf16.msra.mxu0 0
        %1840 = vmatprep.subr.bf16.mxu0 0
        %1841 = vmatpush1.bf16.msra.mxu0 0
        %1842 = vmatprep.subr.bf16.mxu0 0
        %1843 = vmatpush1.bf16.msra.mxu0 0
        %1844 = vmatprep.subr.bf16.mxu0 0
        %1845 = vmatpush1.bf16.msra.mxu0 0
        %1846 = vmatprep.subr.bf16.mxu0 0
        %1847 = vmatpush1.bf16.msra.mxu0 0
        %1848 = vmatprep.mubr.bf16.mxu0 0
        %1849 = vmatmul.mubr.bf16.gmra.mrb[0].mxu0 %v432
        %v1850 = vpop.f32.mrb[0].mxu0
        %v1851 = vadd.f32 0.0, %v1850
        %v1852 = vpop.f32.mrb[0].mxu0
        %v1853 = vpop.f32.mrb[0].mxu0
        %v1854 = vadd.f32 0.0, %v1853
        %v1855 = vpop.f32.mrb[0].mxu0
        %1856 = vmatprep.mubr.bf16.mxu0 0
        %1857 = vmatmul.mubr.bf16.gmra.mrb[0].mxu0 %v435
        %v1858 = vpop.f32.mrb[0].mxu0
        %v1859 = vadd.f32 0.0, %v1858
        %v1860 = vpop.f32.mrb[0].mxu0
        %v1861 = vpop.f32.mrb[0].mxu0
        %v1862 = vadd.f32 0.0, %v1861
        %v1863 = vpop.f32.mrb[0].mxu0
        %1864 = vmatprep.mubr.bf16.mxu0 0
        %1865 = vmatmul.mubr.bf16.gmra.mrb[0].mxu0 %v438
        %v1866 = vpop.f32.mrb[0].mxu0
        %v1867 = vadd.f32 0.0, %v1866
        %v1868 = vpop.f32.mrb[0].mxu0
        %v1869 = vpop.f32.mrb[0].mxu0
        %v1870 = vadd.f32 0.0, %v1869
        %v1871 = vpop.f32.mrb[0].mxu0
        %1872 = vmatprep.mubr.bf16.mxu0 0
        %1873 = vmatmul.mubr.bf16.gmra.mrb[0].mxu0 %v441
        %v1874 = vpop.f32.mrb[0].mxu0
        %v1875 = vadd.f32 0.0, %v1874
        %v1876 = vpop.f32.mrb[0].mxu0
        %v1877 = vpop.f32.mrb[0].mxu0
        %v1878 = vadd.f32 0.0, %v1877
        %v1879 = vpop.f32.mrb[0].mxu0
        %1880 = vdwg.mxu0
        %v1885 = vunpack.c.l.b16 %v1703
        %v1886 = vunpack.c.l.b16 %v1704
        %v1887 = vunpack.c.l.b16 %v1705
        %v1888 = vunpack.c.l.b16 %v1706
        %v1889 = vpack.c.b16 %v1886, %v1885
        %v1890 = vpack.c.b16 %v1888, %v1887
        %1893 = vmatprep.subr.bf16.mxu0 0
        %1894 = vmatpush1.bf16.msra.mxu0 %v1889
        %1895 = vmatprep.subr.bf16.mxu0 0
        %1896 = vmatpush1.bf16.msra.mxu0 %v1890
        %1897 = vmatprep.subr.bf16.mxu0 0
        %1898 = vmatpush1.bf16.msra.mxu0 0
        %1899 = vmatprep.subr.bf16.mxu0 0
        %1900 = vmatpush1.bf16.msra.mxu0 0
        %1901 = vmatprep.subr.bf16.mxu0 0
        %1902 = vmatpush1.bf16.msra.mxu0 0
        %1903 = vmatprep.subr.bf16.mxu0 0
        %1904 = vmatpush1.bf16.msra.mxu0 0
        %1905 = vmatprep.subr.bf16.mxu0 0
        %1906 = vmatpush1.bf16.msra.mxu0 0
        %1907 = vmatprep.subr.bf16.mxu0 0
        %1908 = vmatpush1.bf16.msra.mxu0 0
        %1909 = vmatprep.subr.bf16.mxu0 0
        %1910 = vmatpush1.bf16.msra.mxu0 0
        %1911 = vmatprep.subr.bf16.mxu0 0
        %1912 = vmatpush1.bf16.msra.mxu0 0
        %1913 = vmatprep.subr.bf16.mxu0 0
        %1914 = vmatpush1.bf16.msra.mxu0 0
        %1915 = vmatprep.subr.bf16.mxu0 0
        %1916 = vmatpush1.bf16.msra.mxu0 0
        %1917 = vmatprep.subr.bf16.mxu0 0
        %1918 = vmatpush1.bf16.msra.mxu0 0
        %1919 = vmatprep.subr.bf16.mxu0 0
        %1920 = vmatpush1.bf16.msra.mxu0 0
        %1921 = vmatprep.subr.bf16.mxu0 0
        %1922 = vmatpush1.bf16.msra.mxu0 0
        %1923 = vmatprep.subr.bf16.mxu0 0
        %1924 = vmatpush1.bf16.msra.mxu0 0
        %1925 = vmatprep.mubr.bf16.mxu0 0
        %1926 = vmatmul.mubr.bf16.gmra.mrb[0].mxu0 %v432
        %v1927 = vpop.f32.mrb[0].mxu0
        %v1928 = vadd.f32 0.0, %v1927
        %v1929 = vpop.f32.mrb[0].mxu0
        %v1930 = vpop.f32.mrb[0].mxu0
        %v1931 = vadd.f32 0.0, %v1930
        %v1932 = vpop.f32.mrb[0].mxu0
        %1933 = vmatprep.mubr.bf16.mxu0 0
        %1934 = vmatmul.mubr.bf16.gmra.mrb[0].mxu0 %v435
        %v1935 = vpop.f32.mrb[0].mxu0
        %v1936 = vadd.f32 0.0, %v1935
        %v1937 = vpop.f32.mrb[0].mxu0
        %v1938 = vpop.f32.mrb[0].mxu0
        %v1939 = vadd.f32 0.0, %v1938
        %v1940 = vpop.f32.mrb[0].mxu0
        %1941 = vmatprep.mubr.bf16.mxu0 0
        %1942 = vmatmul.mubr.bf16.gmra.mrb[0].mxu0 %v438
        %v1943 = vpop.f32.mrb[0].mxu0
        %v1944 = vadd.f32 0.0, %v1943
        %v1945 = vpop.f32.mrb[0].mxu0
        %v1946 = vpop.f32.mrb[0].mxu0
        %v1947 = vadd.f32 0.0, %v1946
        %v1948 = vpop.f32.mrb[0].mxu0
        %1949 = vmatprep.mubr.bf16.mxu0 0
        %1950 = vmatmul.mubr.bf16.gmra.mrb[0].mxu0 %v441
        %v1951 = vpop.f32.mrb[0].mxu0
        %v1952 = vadd.f32 0.0, %v1951
        %v1953 = vpop.f32.mrb[0].mxu0
        %v1954 = vpop.f32.mrb[0].mxu0
        %v1955 = vadd.f32 0.0, %v1954
        %v1956 = vpop.f32.mrb[0].mxu0
        %1957 = vdwg.mxu0
        %v1962 = vunpack.c.l.b16 %v1707
        %v1963 = vunpack.c.l.b16 %v1708
        %v1964 = vunpack.c.l.b16 %v1709
        %v1965 = vunpack.c.l.b16 %v1710
        %v1966 = vpack.c.b16 %v1963, %v1962
        %v1967 = vpack.c.b16 %v1965, %v1964
        %1970 = vmatprep.subr.bf16.mxu0 0
        %1971 = vmatpush1.bf16.msra.mxu0 %v1966
        %1972 = vmatprep.subr.bf16.mxu0 0
        %1973 = vmatpush1.bf16.msra.mxu0 %v1967
        %1974 = vmatprep.subr.bf16.mxu0 0
        %1975 = vmatpush1.bf16.msra.mxu0 0
        %1976 = vmatprep.subr.bf16.mxu0 0
        %1977 = vmatpush1.bf16.msra.mxu0 0
        %1978 = vmatprep.subr.bf16.mxu0 0
        %1979 = vmatpush1.bf16.msra.mxu0 0
        %1980 = vmatprep.subr.bf16.mxu0 0
        %1981 = vmatpush1.bf16.msra.mxu0 0
        %1982 = vmatprep.subr.bf16.mxu0 0
        %1983 = vmatpush1.bf16.msra.mxu0 0
        %1984 = vmatprep.subr.bf16.mxu0 0
        %1985 = vmatpush1.bf16.msra.mxu0 0
        %1986 = vmatprep.subr.bf16.mxu0 0
        %1987 = vmatpush1.bf16.msra.mxu0 0
        %1988 = vmatprep.subr.bf16.mxu0 0
        %1989 = vmatpush1.bf16.msra.mxu0 0
        %1990 = vmatprep.subr.bf16.mxu0 0
        %1991 = vmatpush1.bf16.msra.mxu0 0
        %1992 = vmatprep.subr.bf16.mxu0 0
        %1993 = vmatpush1.bf16.msra.mxu0 0
        %1994 = vmatprep.subr.bf16.mxu0 0
        %1995 = vmatpush1.bf16.msra.mxu0 0
        %1996 = vmatprep.subr.bf16.mxu0 0
        %1997 = vmatpush1.bf16.msra.mxu0 0
        %1998 = vmatprep.subr.bf16.mxu0 0
        %1999 = vmatpush1.bf16.msra.mxu0 0
        %2000 = vmatprep.subr.bf16.mxu0 0
        %2001 = vmatpush1.bf16.msra.mxu0 0
        %2002 = vmatprep.mubr.bf16.mxu0 0
        %2003 = vmatmul.mubr.bf16.gmra.mrb[0].mxu0 %v432
        %v2004 = vpop.f32.mrb[0].mxu0
        %v2005 = vadd.f32 0.0, %v2004
        %v2006 = vpop.f32.mrb[0].mxu0
        %v2007 = vpop.f32.mrb[0].mxu0
        %v2008 = vadd.f32 0.0, %v2007
        %v2009 = vpop.f32.mrb[0].mxu0
        %2010 = vmatprep.mubr.bf16.mxu0 0
        %2011 = vmatmul.mubr.bf16.gmra.mrb[0].mxu0 %v435
        %v2012 = vpop.f32.mrb[0].mxu0
        %v2013 = vadd.f32 0.0, %v2012
        %v2014 = vpop.f32.mrb[0].mxu0
        %v2015 = vpop.f32.mrb[0].mxu0
        %v2016 = vadd.f32 0.0, %v2015
        %v2017 = vpop.f32.mrb[0].mxu0
        %2018 = vmatprep.mubr.bf16.mxu0 0
        %2019 = vmatmul.mubr.bf16.gmra.mrb[0].mxu0 %v438
        %v2020 = vpop.f32.mrb[0].mxu0
        %v2021 = vadd.f32 0.0, %v2020
        %v2022 = vpop.f32.mrb[0].mxu0
        %v2023 = vpop.f32.mrb[0].mxu0
        %v2024 = vadd.f32 0.0, %v2023
        %v2025 = vpop.f32.mrb[0].mxu0
        %2026 = vmatprep.mubr.bf16.mxu0 0
        %2027 = vmatmul.mubr.bf16.gmra.mrb[0].mxu0 %v441
        %v2028 = vpop.f32.mrb[0].mxu0
        %v2029 = vadd.f32 0.0, %v2028
        %v2030 = vpop.f32.mrb[0].mxu0
        %v2031 = vpop.f32.mrb[0].mxu0
        %v2032 = vadd.f32 0.0, %v2031
        %v2033 = vpop.f32.mrb[0].mxu0
        %2034 = vdwg.mxu0
        %v2039 = vunpack.c.l.b16 %v1711
        %v2040 = vunpack.c.l.b16 %v1712
        %v2041 = vunpack.c.l.b16 %v1713
        %v2042 = vunpack.c.l.b16 %v1714
        %v2043 = vpack.c.b16 %v2040, %v2039
        %v2044 = vpack.c.b16 %v2042, %v2041
        %2047 = vmatprep.subr.bf16.mxu0 0
        %2048 = vmatpush1.bf16.msra.mxu0 %v2043
        %2049 = vmatprep.subr.bf16.mxu0 0
        %2050 = vmatpush1.bf16.msra.mxu0 %v2044
        %2051 = vmatprep.subr.bf16.mxu0 0
        %2052 = vmatpush1.bf16.msra.mxu0 0
        %2053 = vmatprep.subr.bf16.mxu0 0
        %2054 = vmatpush1.bf16.msra.mxu0 0
        %2055 = vmatprep.subr.bf16.mxu0 0
        %2056 = vmatpush1.bf16.msra.mxu0 0
        %2057 = vmatprep.subr.bf16.mxu0 0
        %2058 = vmatpush1.bf16.msra.mxu0 0
        %2059 = vmatprep.subr.bf16.mxu0 0
        %2060 = vmatpush1.bf16.msra.mxu0 0
        %2061 = vmatprep.subr.bf16.mxu0 0
        %2062 = vmatpush1.bf16.msra.mxu0 0
        %2063 = vmatprep.subr.bf16.mxu0 0
        %2064 = vmatpush1.bf16.msra.mxu0 0
        %2065 = vmatprep.subr.bf16.mxu0 0
        %2066 = vmatpush1.bf16.msra.mxu0 0
        %2067 = vmatprep.subr.bf16.mxu0 0
        %2068 = vmatpush1.bf16.msra.mxu0 0
        %2069 = vmatprep.subr.bf16.mxu0 0
        %2070 = vmatpush1.bf16.msra.mxu0 0
        %2071 = vmatprep.subr.bf16.mxu0 0
        %2072 = vmatpush1.bf16.msra.mxu0 0
        %2073 = vmatprep.subr.bf16.mxu0 0
        %2074 = vmatpush1.bf16.msra.mxu0 0
        %2075 = vmatprep.subr.bf16.mxu0 0
        %2076 = vmatpush1.bf16.msra.mxu0 0
        %2077 = vmatprep.subr.bf16.mxu0 0
        %2078 = vmatpush1.bf16.msra.mxu0 0
        %2079 = vmatprep.mubr.bf16.mxu0 0
        %2080 = vmatmul.mubr.bf16.gmra.mrb[0].mxu0 %v432
        %v2081 = vpop.f32.mrb[0].mxu0
        %v2082 = vadd.f32 0.0, %v2081
        %v2083 = vpop.f32.mrb[0].mxu0
        %v2084 = vpop.f32.mrb[0].mxu0
        %v2085 = vadd.f32 0.0, %v2084
        %v2086 = vpop.f32.mrb[0].mxu0
        %2087 = vmatprep.mubr.bf16.mxu0 0
        %2088 = vmatmul.mubr.bf16.gmra.mrb[0].mxu0 %v435
        %v2089 = vpop.f32.mrb[0].mxu0
        %v2090 = vadd.f32 0.0, %v2089
        %v2091 = vpop.f32.mrb[0].mxu0
        %v2092 = vpop.f32.mrb[0].mxu0
        %v2093 = vadd.f32 0.0, %v2092
        %v2094 = vpop.f32.mrb[0].mxu0
        %2095 = vmatprep.mubr.bf16.mxu0 0
        %2096 = vmatmul.mubr.bf16.gmra.mrb[0].mxu0 %v438
        %v2097 = vpop.f32.mrb[0].mxu0
        %v2098 = vadd.f32 0.0, %v2097
        %v2099 = vpop.f32.mrb[0].mxu0
        %v2100 = vpop.f32.mrb[0].mxu0
        %v2101 = vadd.f32 0.0, %v2100
        %v2102 = vpop.f32.mrb[0].mxu0
        %2103 = vmatprep.mubr.bf16.mxu0 0
        %2104 = vmatmul.mubr.bf16.gmra.mrb[0].mxu0 %v441
        %v2105 = vpop.f32.mrb[0].mxu0
        %v2106 = vadd.f32 0.0, %v2105
        %v2107 = vpop.f32.mrb[0].mxu0
        %v2108 = vpop.f32.mrb[0].mxu0
        %v2109 = vadd.f32 0.0, %v2108
        %v2110 = vpop.f32.mrb[0].mxu0
        %2111 = vdwg.mxu0
        %v2116 = vunpack.c.l.b16 %v1715
        %v2117 = vunpack.c.l.b16 %v1716
        %v2118 = vunpack.c.l.b16 %v1717
        %v2119 = vunpack.c.l.b16 %v1718
        %v2120 = vpack.c.b16 %v2117, %v2116
        %v2121 = vpack.c.b16 %v2119, %v2118
        %2124 = vmatprep.subr.bf16.mxu0 0
        %2125 = vmatpush1.bf16.msra.mxu0 %v2120
        %2126 = vmatprep.subr.bf16.mxu0 0
        %2127 = vmatpush1.bf16.msra.mxu0 %v2121
        %2128 = vmatprep.subr.bf16.mxu0 0
        %2129 = vmatpush1.bf16.msra.mxu0 0
        %2130 = vmatprep.subr.bf16.mxu0 0
        %2131 = vmatpush1.bf16.msra.mxu0 0
        %2132 = vmatprep.subr.bf16.mxu0 0
        %2133 = vmatpush1.bf16.msra.mxu0 0
        %2134 = vmatprep.subr.bf16.mxu0 0
        %2135 = vmatpush1.bf16.msra.mxu0 0
        %2136 = vmatprep.subr.bf16.mxu0 0
        %2137 = vmatpush1.bf16.msra.mxu0 0
        %2138 = vmatprep.subr.bf16.mxu0 0
        %2139 = vmatpush1.bf16.msra.mxu0 0
        %2140 = vmatprep.subr.bf16.mxu0 0
        %2141 = vmatpush1.bf16.msra.mxu0 0
        %2142 = vmatprep.subr.bf16.mxu0 0
        %2143 = vmatpush1.bf16.msra.mxu0 0
        %2144 = vmatprep.subr.bf16.mxu0 0
        %2145 = vmatpush1.bf16.msra.mxu0 0
        %2146 = vmatprep.subr.bf16.mxu0 0
        %2147 = vmatpush1.bf16.msra.mxu0 0
        %2148 = vmatprep.subr.bf16.mxu0 0
        %2149 = vmatpush1.bf16.msra.mxu0 0
        %2150 = vmatprep.subr.bf16.mxu0 0
        %2151 = vmatpush1.bf16.msra.mxu0 0
        %2152 = vmatprep.subr.bf16.mxu0 0
        %2153 = vmatpush1.bf16.msra.mxu0 0
        %2154 = vmatprep.subr.bf16.mxu0 0
        %2155 = vmatpush1.bf16.msra.mxu0 0
        %2156 = vmatprep.mubr.bf16.mxu0 0
        %2157 = vmatmul.mubr.bf16.gmra.mrb[0].mxu0 %v432
        %v2158 = vpop.f32.mrb[0].mxu0
        %v2159 = vadd.f32 0.0, %v2158
        %v2160 = vpop.f32.mrb[0].mxu0
        %v2161 = vpop.f32.mrb[0].mxu0
        %v2162 = vadd.f32 0.0, %v2161
        %v2163 = vpop.f32.mrb[0].mxu0
        %2164 = vmatprep.mubr.bf16.mxu0 0
        %2165 = vmatmul.mubr.bf16.gmra.mrb[0].mxu0 %v435
        %v2166 = vpop.f32.mrb[0].mxu0
        %v2167 = vadd.f32 0.0, %v2166
        %v2168 = vpop.f32.mrb[0].mxu0
        %v2169 = vpop.f32.mrb[0].mxu0
        %v2170 = vadd.f32 0.0, %v2169
        %v2171 = vpop.f32.mrb[0].mxu0
        %2172 = vmatprep.mubr.bf16.mxu0 0
        %2173 = vmatmul.mubr.bf16.gmra.mrb[0].mxu0 %v438
        %v2174 = vpop.f32.mrb[0].mxu0
        %v2175 = vadd.f32 0.0, %v2174
        %v2176 = vpop.f32.mrb[0].mxu0
        %v2177 = vpop.f32.mrb[0].mxu0
        %v2178 = vadd.f32 0.0, %v2177
        %v2179 = vpop.f32.mrb[0].mxu0
        %2180 = vmatprep.mubr.bf16.mxu0 0
        %2181 = vmatmul.mubr.bf16.gmra.mrb[0].mxu0 %v441
        %v2182 = vpop.f32.mrb[0].mxu0
        %v2183 = vadd.f32 0.0, %v2182
        %v2184 = vpop.f32.mrb[0].mxu0
        %v2185 = vpop.f32.mrb[0].mxu0
        %v2186 = vadd.f32 0.0, %v2185
        %v2187 = vpop.f32.mrb[0].mxu0
        %2188 = vdwg.mxu0
        %v2193 = vunpack.c.l.b16 %v1719
        %v2194 = vunpack.c.l.b16 %v1720
        %v2195 = vunpack.c.l.b16 %v1721
        %v2196 = vunpack.c.l.b16 %v1722
        %v2197 = vpack.c.b16 %v2194, %v2193
        %v2198 = vpack.c.b16 %v2196, %v2195
        %2201 = vmatprep.subr.bf16.mxu0 0
        %2202 = vmatpush1.bf16.msra.mxu0 %v2197
        %2203 = vmatprep.subr.bf16.mxu0 0
        %2204 = vmatpush1.bf16.msra.mxu0 %v2198
        %2205 = vmatprep.subr.bf16.mxu0 0
        %2206 = vmatpush1.bf16.msra.mxu0 0
        %2207 = vmatprep.subr.bf16.mxu0 0
        %2208 = vmatpush1.bf16.msra.mxu0 0
        %2209 = vmatprep.subr.bf16.mxu0 0
        %2210 = vmatpush1.bf16.msra.mxu0 0
        %2211 = vmatprep.subr.bf16.mxu0 0
        %2212 = vmatpush1.bf16.msra.mxu0 0
        %2213 = vmatprep.subr.bf16.mxu0 0
        %2214 = vmatpush1.bf16.msra.mxu0 0
        %2215 = vmatprep.subr.bf16.mxu0 0
        %2216 = vmatpush1.bf16.msra.mxu0 0
        %2217 = vmatprep.subr.bf16.mxu0 0
        %2218 = vmatpush1.bf16.msra.mxu0 0
        %2219 = vmatprep.subr.bf16.mxu0 0
        %2220 = vmatpush1.bf16.msra.mxu0 0
        %2221 = vmatprep.subr.bf16.mxu0 0
        %2222 = vmatpush1.bf16.msra.mxu0 0
        %2223 = vmatprep.subr.bf16.mxu0 0
        %2224 = vmatpush1.bf16.msra.mxu0 0
        %2225 = vmatprep.subr.bf16.mxu0 0
        %2226 = vmatpush1.bf16.msra.mxu0 0
        %2227 = vmatprep.subr.bf16.mxu0 0
        %2228 = vmatpush1.bf16.msra.mxu0 0
        %2229 = vmatprep.subr.bf16.mxu0 0
        %2230 = vmatpush1.bf16.msra.mxu0 0
        %2231 = vmatprep.subr.bf16.mxu0 0
        %2232 = vmatpush1.bf16.msra.mxu0 0
        %2233 = vmatprep.mubr.bf16.mxu0 0
        %2234 = vmatmul.mubr.bf16.gmra.mrb[0].mxu0 %v432
        %v2235 = vpop.f32.mrb[0].mxu0
        %v2236 = vadd.f32 0.0, %v2235
        %v2237 = vpop.f32.mrb[0].mxu0
        %v2238 = vpop.f32.mrb[0].mxu0
        %v2239 = vadd.f32 0.0, %v2238
        %v2240 = vpop.f32.mrb[0].mxu0
        %2241 = vmatprep.mubr.bf16.mxu0 0
        %2242 = vmatmul.mubr.bf16.gmra.mrb[0].mxu0 %v435
        %v2243 = vpop.f32.mrb[0].mxu0
        %v2244 = vadd.f32 0.0, %v2243
        %v2245 = vpop.f32.mrb[0].mxu0
        %v2246 = vpop.f32.mrb[0].mxu0
        %v2247 = vadd.f32 0.0, %v2246
        %v2248 = vpop.f32.mrb[0].mxu0
        %2249 = vmatprep.mubr.bf16.mxu0 0
        %2250 = vmatmul.mubr.bf16.gmra.mrb[0].mxu0 %v438
        %v2251 = vpop.f32.mrb[0].mxu0
        %v2252 = vadd.f32 0.0, %v2251
        %v2253 = vpop.f32.mrb[0].mxu0
        %v2254 = vpop.f32.mrb[0].mxu0
        %v2255 = vadd.f32 0.0, %v2254
        %v2256 = vpop.f32.mrb[0].mxu0
        %2257 = vmatprep.mubr.bf16.mxu0 0
        %2258 = vmatmul.mubr.bf16.gmra.mrb[0].mxu0 %v441
        %v2259 = vpop.f32.mrb[0].mxu0
        %v2260 = vadd.f32 0.0, %v2259
        %v2261 = vpop.f32.mrb[0].mxu0
        %v2262 = vpop.f32.mrb[0].mxu0
        %v2263 = vadd.f32 0.0, %v2262
        %v2264 = vpop.f32.mrb[0].mxu0
        %2265 = vdwg.mxu0
        %v2270 = vunpack.c.l.b16 %v1723
        %v2271 = vunpack.c.l.b16 %v1724
        %v2272 = vunpack.c.l.b16 %v1725
        %v2273 = vunpack.c.l.b16 %v1726
        %v2274 = vpack.c.b16 %v2271, %v2270
        %v2275 = vpack.c.b16 %v2273, %v2272
        %2278 = vmatprep.subr.bf16.mxu0 0
        %2279 = vmatpush1.bf16.msra.mxu0 %v2274
        %2280 = vmatprep.subr.bf16.mxu0 0
        %2281 = vmatpush1.bf16.msra.mxu0 %v2275
        %2282 = vmatprep.subr.bf16.mxu0 0
        %2283 = vmatpush1.bf16.msra.mxu0 0
        %2284 = vmatprep.subr.bf16.mxu0 0
        %2285 = vmatpush1.bf16.msra.mxu0 0
        %2286 = vmatprep.subr.bf16.mxu0 0
        %2287 = vmatpush1.bf16.msra.mxu0 0
        %2288 = vmatprep.subr.bf16.mxu0 0
        %2289 = vmatpush1.bf16.msra.mxu0 0
        %2290 = vmatprep.subr.bf16.mxu0 0
        %2291 = vmatpush1.bf16.msra.mxu0 0
        %2292 = vmatprep.subr.bf16.mxu0 0
        %2293 = vmatpush1.bf16.msra.mxu0 0
        %2294 = vmatprep.subr.bf16.mxu0 0
        %2295 = vmatpush1.bf16.msra.mxu0 0
        %2296 = vmatprep.subr.bf16.mxu0 0
        %2297 = vmatpush1.bf16.msra.mxu0 0
        %2298 = vmatprep.subr.bf16.mxu0 0
        %2299 = vmatpush1.bf16.msra.mxu0 0
        %2300 = vmatprep.subr.bf16.mxu0 0
        %2301 = vmatpush1.bf16.msra.mxu0 0
        %2302 = vmatprep.subr.bf16.mxu0 0
        %2303 = vmatpush1.bf16.msra.mxu0 0
        %2304 = vmatprep.subr.bf16.mxu0 0
        %2305 = vmatpush1.bf16.msra.mxu0 0
        %2306 = vmatprep.subr.bf16.mxu0 0
        %2307 = vmatpush1.bf16.msra.mxu0 0
        %2308 = vmatprep.subr.bf16.mxu0 0
        %2309 = vmatpush1.bf16.msra.mxu0 0
        %2310 = vmatprep.mubr.bf16.mxu0 0
        %2311 = vmatmul.mubr.bf16.gmra.mrb[0].mxu0 %v432
        %v2312 = vpop.f32.mrb[0].mxu0
        %v2313 = vadd.f32 0.0, %v2312
        %v2314 = vpop.f32.mrb[0].mxu0
        %v2315 = vpop.f32.mrb[0].mxu0
        %v2316 = vadd.f32 0.0, %v2315
        %v2317 = vpop.f32.mrb[0].mxu0
        %2318 = vmatprep.mubr.bf16.mxu0 0
        %2319 = vmatmul.mubr.bf16.gmra.mrb[0].mxu0 %v435
        %v2320 = vpop.f32.mrb[0].mxu0
        %v2321 = vadd.f32 0.0, %v2320
        %v2322 = vpop.f32.mrb[0].mxu0
        %v2323 = vpop.f32.mrb[0].mxu0
        %v2324 = vadd.f32 0.0, %v2323
        %v2325 = vpop.f32.mrb[0].mxu0
        %2326 = vmatprep.mubr.bf16.mxu0 0
        %2327 = vmatmul.mubr.bf16.gmra.mrb[0].mxu0 %v438
        %v2328 = vpop.f32.mrb[0].mxu0
        %v2329 = vadd.f32 0.0, %v2328
        %v2330 = vpop.f32.mrb[0].mxu0
        %v2331 = vpop.f32.mrb[0].mxu0
        %v2332 = vadd.f32 0.0, %v2331
        %v2333 = vpop.f32.mrb[0].mxu0
        %2334 = vmatprep.mubr.bf16.mxu0 0
        %2335 = vmatmul.mubr.bf16.gmra.mrb[0].mxu0 %v441
        %v2336 = vpop.f32.mrb[0].mxu0
        %v2337 = vadd.f32 0.0, %v2336
        %v2338 = vpop.f32.mrb[0].mxu0
        %v2339 = vpop.f32.mrb[0].mxu0
        %v2340 = vadd.f32 0.0, %v2339
        %v2341 = vpop.f32.mrb[0].mxu0
        %2342 = vdwg.mxu0
        %v2343 = vpack.c.bf16 %v481, %v478
        %v2344 = vpack.c.bf16 %v489, %v486
        %v2345 = vpack.c.bf16 %v497, %v494
        %v2346 = vpack.c.bf16 %v505, %v502
        %v2347 = vpack.c.bf16 %v558, %v555
        %v2348 = vpack.c.bf16 %v566, %v563
        %v2349 = vpack.c.bf16 %v574, %v571
        %v2350 = vpack.c.bf16 %v582, %v579
        %v2351 = vpack.c.bf16 %v635, %v632
        %v2352 = vpack.c.bf16 %v643, %v640
        %v2353 = vpack.c.bf16 %v651, %v648
        %v2354 = vpack.c.bf16 %v659, %v656
        %v2355 = vpack.c.bf16 %v712, %v709
        %v2356 = vpack.c.bf16 %v720, %v717
        %v2357 = vpack.c.bf16 %v728, %v725
        %v2358 = vpack.c.bf16 %v736, %v733
        %v2359 = vpack.c.bf16 %v789, %v786
        %v2360 = vpack.c.bf16 %v797, %v794
        %v2361 = vpack.c.bf16 %v805, %v802
        %v2362 = vpack.c.bf16 %v813, %v810
        %v2363 = vpack.c.bf16 %v866, %v863
        %v2364 = vpack.c.bf16 %v874, %v871
        %v2365 = vpack.c.bf16 %v882, %v879
        %v2366 = vpack.c.bf16 %v890, %v887
        %v2367 = vpack.c.bf16 %v943, %v940
        %v2368 = vpack.c.bf16 %v951, %v948
        %v2369 = vpack.c.bf16 %v959, %v956
        %v2370 = vpack.c.bf16 %v967, %v964
        %v2371 = vpack.c.bf16 %v1020, %v1017
        %v2372 = vpack.c.bf16 %v1028, %v1025
        %v2373 = vpack.c.bf16 %v1036, %v1033
        %v2374 = vpack.c.bf16 %v1044, %v1041
        %v2375 = vpack.c.bf16 %v1129, %v1126
        %v2376 = vpack.c.bf16 %v1137, %v1134
        %v2377 = vpack.c.bf16 %v1145, %v1142
        %v2378 = vpack.c.bf16 %v1153, %v1150
        %v2379 = vpack.c.bf16 %v1206, %v1203
        %v2380 = vpack.c.bf16 %v1214, %v1211
        %v2381 = vpack.c.bf16 %v1222, %v1219
        %v2382 = vpack.c.bf16 %v1230, %v1227
        %v2383 = vpack.c.bf16 %v1283, %v1280
        %v2384 = vpack.c.bf16 %v1291, %v1288
        %v2385 = vpack.c.bf16 %v1299, %v1296
        %v2386 = vpack.c.bf16 %v1307, %v1304
        %v2387 = vpack.c.bf16 %v1360, %v1357
        %v2388 = vpack.c.bf16 %v1368, %v1365
        %v2389 = vpack.c.bf16 %v1376, %v1373
        %v2390 = vpack.c.bf16 %v1384, %v1381
        %v2391 = vpack.c.bf16 %v1437, %v1434
        %v2392 = vpack.c.bf16 %v1445, %v1442
        %v2393 = vpack.c.bf16 %v1453, %v1450
        %v2394 = vpack.c.bf16 %v1461, %v1458
        %v2395 = vpack.c.bf16 %v1514, %v1511
        %v2396 = vpack.c.bf16 %v1522, %v1519
        %v2397 = vpack.c.bf16 %v1530, %v1527
        %v2398 = vpack.c.bf16 %v1538, %v1535
        %v2399 = vpack.c.bf16 %v1591, %v1588
        %v2400 = vpack.c.bf16 %v1599, %v1596
        %v2401 = vpack.c.bf16 %v1607, %v1604
        %v2402 = vpack.c.bf16 %v1615, %v1612
        %v2403 = vpack.c.bf16 %v1668, %v1665
        %v2404 = vpack.c.bf16 %v1676, %v1673
        %v2405 = vpack.c.bf16 %v1684, %v1681
        %v2406 = vpack.c.bf16 %v1692, %v1689
        %v2407 = vpack.c.bf16 %v1777, %v1774
        %v2408 = vpack.c.bf16 %v1785, %v1782
        %v2409 = vpack.c.bf16 %v1793, %v1790
        %v2410 = vpack.c.bf16 %v1801, %v1798
        %v2411 = vpack.c.bf16 %v1854, %v1851
        %v2412 = vpack.c.bf16 %v1862, %v1859
        %v2413 = vpack.c.bf16 %v1870, %v1867
        %v2414 = vpack.c.bf16 %v1878, %v1875
        %v2415 = vpack.c.bf16 %v1931, %v1928
        %v2416 = vpack.c.bf16 %v1939, %v1936
        %v2417 = vpack.c.bf16 %v1947, %v1944
        %v2418 = vpack.c.bf16 %v1955, %v1952
        %v2419 = vpack.c.bf16 %v2008, %v2005
        %v2420 = vpack.c.bf16 %v2016, %v2013
        %v2421 = vpack.c.bf16 %v2024, %v2021
        %v2422 = vpack.c.bf16 %v2032, %v2029
        %v2423 = vpack.c.bf16 %v2085, %v2082
        %v2424 = vpack.c.bf16 %v2093, %v2090
        %v2425 = vpack.c.bf16 %v2101, %v2098
        %v2426 = vpack.c.bf16 %v2109, %v2106
        %v2427 = vpack.c.bf16 %v2162, %v2159
        %v2428 = vpack.c.bf16 %v2170, %v2167
        %v2429 = vpack.c.bf16 %v2178, %v2175
        %v2430 = vpack.c.bf16 %v2186, %v2183
        %v2431 = vpack.c.bf16 %v2239, %v2236
        %v2432 = vpack.c.bf16 %v2247, %v2244
        %v2433 = vpack.c.bf16 %v2255, %v2252
        %v2434 = vpack.c.bf16 %v2263, %v2260
        %v2435 = vpack.c.bf16 %v2316, %v2313
        %v2436 = vpack.c.bf16 %v2324, %v2321
        %v2437 = vpack.c.bf16 %v2332, %v2329
        %v2438 = vpack.c.bf16 %v2340, %v2337
        %v2440 = vsel %vm430, %v2343, 0
        %v2443 = vsel %vm430, %v2375, 0
        %2445 = vmatprep.subr.bf16.mxu0 0
        %2446 = vmatpush1.bf16.xpose.msra.mxu0 %v2443
        %2447 = vmatprep.subr.bf16.mxu0 0
        %2448 = vmatpush1.bf16.xpose.msra.mxu0 0
        %2449 = vmatprep.subr.bf16.mxu0 0
        %2450 = vmatpush1.bf16.xpose.msra.mxu0 0
        %2451 = vmatprep.subr.bf16.mxu0 0
        %2452 = vmatpush1.bf16.xpose.msra.mxu0 0
        %2453 = vmatprep.subr.bf16.mxu0 0
        %2454 = vmatpush1.bf16.xpose.msra.mxu0 0
        %2455 = vmatprep.subr.bf16.mxu0 0
        %2456 = vmatpush1.bf16.xpose.msra.mxu0 0
        %2457 = vmatprep.subr.bf16.mxu0 0
        %2458 = vmatpush1.bf16.xpose.msra.mxu0 0
        %2459 = vmatprep.subr.bf16.mxu0 0
        %2460 = vmatpush1.bf16.xpose.msra.mxu0 0
        %2461 = vmatprep.subr.bf16.mxu0 0
        %2462 = vmatpush1.bf16.xpose.msra.mxu0 0
        %2463 = vmatprep.subr.bf16.mxu0 0
        %2464 = vmatpush1.bf16.xpose.msra.mxu0 0
        %2465 = vmatprep.subr.bf16.mxu0 0
        %2466 = vmatpush1.bf16.xpose.msra.mxu0 0
        %2467 = vmatprep.subr.bf16.mxu0 0
        %2468 = vmatpush1.bf16.xpose.msra.mxu0 0
        %2469 = vmatprep.subr.bf16.mxu0 0
        %2470 = vmatpush1.bf16.xpose.msra.mxu0 0
        %2471 = vmatprep.subr.bf16.mxu0 0
        %2472 = vmatpush1.bf16.xpose.msra.mxu0 0
        %2473 = vmatprep.subr.bf16.mxu0 0
        %2474 = vmatpush1.bf16.xpose.msra.mxu0 0
        %2475 = vmatprep.subr.bf16.mxu0 0
        %2476 = vmatpush1.bf16.xpose.msra.mxu0 0
        %2477 = vmatprep.mubr.bf16.mxu0 0
        %2478 = vmatmul.mubr.bf16.gmra.mrb[0].mxu0 %v2440
        %v2479 = vpop.f32.mrb[0].mxu0
        %v2480 = vadd.f32 0.0, %v2479
        %v2481 = vpop.f32.mrb[0].mxu0
        %v2482 = vpop.f32.mrb[0].mxu0
        %v2483 = vadd.f32 0.0, %v2482
        %v2484 = vpop.f32.mrb[0].mxu0
        %2485 = vdwg.mxu0
        %v2487 = vsel %vm430, %v2344, 0
        %v2490 = vsel %vm430, %v2376, 0
        %2492 = vmatprep.subr.bf16.mxu0 0
        %2493 = vmatpush1.bf16.xpose.msra.mxu0 %v2490
        %2494 = vmatprep.subr.bf16.mxu0 0
        %2495 = vmatpush1.bf16.xpose.msra.mxu0 0
        %2496 = vmatprep.subr.bf16.mxu0 0
        %2497 = vmatpush1.bf16.xpose.msra.mxu0 0
        %2498 = vmatprep.subr.bf16.mxu0 0
        %2499 = vmatpush1.bf16.xpose.msra.mxu0 0
        %2500 = vmatprep.subr.bf16.mxu0 0
        %2501 = vmatpush1.bf16.xpose.msra.mxu0 0
        %2502 = vmatprep.subr.bf16.mxu0 0
        %2503 = vmatpush1.bf16.xpose.msra.mxu0 0
        %2504 = vmatprep.subr.bf16.mxu0 0
        %2505 = vmatpush1.bf16.xpose.msra.mxu0 0
        %2506 = vmatprep.subr.bf16.mxu0 0
        %2507 = vmatpush1.bf16.xpose.msra.mxu0 0
        %2508 = vmatprep.subr.bf16.mxu0 0
        %2509 = vmatpush1.bf16.xpose.msra.mxu0 0
        %2510 = vmatprep.subr.bf16.mxu0 0
        %2511 = vmatpush1.bf16.xpose.msra.mxu0 0
        %2512 = vmatprep.subr.bf16.mxu0 0
        %2513 = vmatpush1.bf16.xpose.msra.mxu0 0
        %2514 = vmatprep.subr.bf16.mxu0 0
        %2515 = vmatpush1.bf16.xpose.msra.mxu0 0
        %2516 = vmatprep.subr.bf16.mxu0 0
        %2517 = vmatpush1.bf16.xpose.msra.mxu0 0
        %2518 = vmatprep.subr.bf16.mxu0 0
        %2519 = vmatpush1.bf16.xpose.msra.mxu0 0
        %2520 = vmatprep.subr.bf16.mxu0 0
        %2521 = vmatpush1.bf16.xpose.msra.mxu0 0
        %2522 = vmatprep.subr.bf16.mxu0 0
        %2523 = vmatpush1.bf16.xpose.msra.mxu0 0
        %2524 = vmatprep.mubr.bf16.mxu0 0
        %2525 = vmatmul.mubr.bf16.gmra.mrb[0].mxu0 %v2487
        %v2526 = vpop.f32.mrb[0].mxu0
        %v2527 = vadd.f32 0.0, %v2526
        %v2528 = vpop.f32.mrb[0].mxu0
        %v2529 = vpop.f32.mrb[0].mxu0
        %v2530 = vadd.f32 0.0, %v2529
        %v2531 = vpop.f32.mrb[0].mxu0
        %2532 = vdwg.mxu0
        %v2534 = vsel %vm430, %v2345, 0
        %v2537 = vsel %vm430, %v2377, 0
        %2539 = vmatprep.subr.bf16.mxu0 0
        %2540 = vmatpush1.bf16.xpose.msra.mxu0 %v2537
        %2541 = vmatprep.subr.bf16.mxu0 0
        %2542 = vmatpush1.bf16.xpose.msra.mxu0 0
        %2543 = vmatprep.subr.bf16.mxu0 0
        %2544 = vmatpush1.bf16.xpose.msra.mxu0 0
        %2545 = vmatprep.subr.bf16.mxu0 0
        %2546 = vmatpush1.bf16.xpose.msra.mxu0 0
        %2547 = vmatprep.subr.bf16.mxu0 0
        %2548 = vmatpush1.bf16.xpose.msra.mxu0 0
        %2549 = vmatprep.subr.bf16.mxu0 0
        %2550 = vmatpush1.bf16.xpose.msra.mxu0 0
        %2551 = vmatprep.subr.bf16.mxu0 0
        %2552 = vmatpush1.bf16.xpose.msra.mxu0 0
        %2553 = vmatprep.subr.bf16.mxu0 0
        %2554 = vmatpush1.bf16.xpose.msra.mxu0 0
        %2555 = vmatprep.subr.bf16.mxu0 0
        %2556 = vmatpush1.bf16.xpose.msra.mxu0 0
        %2557 = vmatprep.subr.bf16.mxu0 0
        %2558 = vmatpush1.bf16.xpose.msra.mxu0 0
        %2559 = vmatprep.subr.bf16.mxu0 0
        %2560 = vmatpush1.bf16.xpose.msra.mxu0 0
        %2561 = vmatprep.subr.bf16.mxu0 0
        %2562 = vmatpush1.bf16.xpose.msra.mxu0 0
        %2563 = vmatprep.subr.bf16.mxu0 0
        %2564 = vmatpush1.bf16.xpose.msra.mxu0 0
        %2565 = vmatprep.subr.bf16.mxu0 0
        %2566 = vmatpush1.bf16.xpose.msra.mxu0 0
        %2567 = vmatprep.subr.bf16.mxu0 0
        %2568 = vmatpush1.bf16.xpose.msra.mxu0 0
        %2569 = vmatprep.subr.bf16.mxu0 0
        %2570 = vmatpush1.bf16.xpose.msra.mxu0 0
        %2571 = vmatprep.mubr.bf16.mxu0 0
        %2572 = vmatmul.mubr.bf16.gmra.mrb[0].mxu0 %v2534
        %v2573 = vpop.f32.mrb[0].mxu0
        %v2574 = vadd.f32 0.0, %v2573
        %v2575 = vpop.f32.mrb[0].mxu0
        %v2576 = vpop.f32.mrb[0].mxu0
        %v2577 = vadd.f32 0.0, %v2576
        %v2578 = vpop.f32.mrb[0].mxu0
        %2579 = vdwg.mxu0
        %v2581 = vsel %vm430, %v2346, 0
        %v2584 = vsel %vm430, %v2378, 0
        %2586 = vmatprep.subr.bf16.mxu0 0
        %2587 = vmatpush1.bf16.xpose.msra.mxu0 %v2584
        %2588 = vmatprep.subr.bf16.mxu0 0
        %2589 = vmatpush1.bf16.xpose.msra.mxu0 0
        %2590 = vmatprep.subr.bf16.mxu0 0
        %2591 = vmatpush1.bf16.xpose.msra.mxu0 0
        %2592 = vmatprep.subr.bf16.mxu0 0
        %2593 = vmatpush1.bf16.xpose.msra.mxu0 0
        %2594 = vmatprep.subr.bf16.mxu0 0
        %2595 = vmatpush1.bf16.xpose.msra.mxu0 0
        %2596 = vmatprep.subr.bf16.mxu0 0
        %2597 = vmatpush1.bf16.xpose.msra.mxu0 0
        %2598 = vmatprep.subr.bf16.mxu0 0
        %2599 = vmatpush1.bf16.xpose.msra.mxu0 0
        %2600 = vmatprep.subr.bf16.mxu0 0
        %2601 = vmatpush1.bf16.xpose.msra.mxu0 0
        %2602 = vmatprep.subr.bf16.mxu0 0
        %2603 = vmatpush1.bf16.xpose.msra.mxu0 0
        %2604 = vmatprep.subr.bf16.mxu0 0
        %2605 = vmatpush1.bf16.xpose.msra.mxu0 0
        %2606 = vmatprep.subr.bf16.mxu0 0
        %2607 = vmatpush1.bf16.xpose.msra.mxu0 0
        %2608 = vmatprep.subr.bf16.mxu0 0
        %2609 = vmatpush1.bf16.xpose.msra.mxu0 0
        %2610 = vmatprep.subr.bf16.mxu0 0
        %2611 = vmatpush1.bf16.xpose.msra.mxu0 0
        %2612 = vmatprep.subr.bf16.mxu0 0
        %2613 = vmatpush1.bf16.xpose.msra.mxu0 0
        %2614 = vmatprep.subr.bf16.mxu0 0
        %2615 = vmatpush1.bf16.xpose.msra.mxu0 0
        %2616 = vmatprep.subr.bf16.mxu0 0
        %2617 = vmatpush1.bf16.xpose.msra.mxu0 0
        %2618 = vmatprep.mubr.bf16.mxu0 0
        %2619 = vmatmul.mubr.bf16.gmra.mrb[0].mxu0 %v2581
        %v2620 = vpop.f32.mrb[0].mxu0
        %v2621 = vadd.f32 0.0, %v2620
        %v2622 = vpop.f32.mrb[0].mxu0
        %v2623 = vpop.f32.mrb[0].mxu0
        %v2624 = vadd.f32 0.0, %v2623
        %v2625 = vpop.f32.mrb[0].mxu0
        %2626 = vdwg.mxu0
        %v2628 = vsel %vm430, %v2347, 0
        %v2631 = vsel %vm430, %v2379, 0
        %2633 = vmatprep.subr.bf16.mxu0 0
        %2634 = vmatpush1.bf16.xpose.msra.mxu0 %v2631
        %2635 = vmatprep.subr.bf16.mxu0 0
        %2636 = vmatpush1.bf16.xpose.msra.mxu0 0
        %2637 = vmatprep.subr.bf16.mxu0 0
        %2638 = vmatpush1.bf16.xpose.msra.mxu0 0
        %2639 = vmatprep.subr.bf16.mxu0 0
        %2640 = vmatpush1.bf16.xpose.msra.mxu0 0
        %2641 = vmatprep.subr.bf16.mxu0 0
        %2642 = vmatpush1.bf16.xpose.msra.mxu0 0
        %2643 = vmatprep.subr.bf16.mxu0 0
        %2644 = vmatpush1.bf16.xpose.msra.mxu0 0
        %2645 = vmatprep.subr.bf16.mxu0 0
        %2646 = vmatpush1.bf16.xpose.msra.mxu0 0
        %2647 = vmatprep.subr.bf16.mxu0 0
        %2648 = vmatpush1.bf16.xpose.msra.mxu0 0
        %2649 = vmatprep.subr.bf16.mxu0 0
        %2650 = vmatpush1.bf16.xpose.msra.mxu0 0
        %2651 = vmatprep.subr.bf16.mxu0 0
        %2652 = vmatpush1.bf16.xpose.msra.mxu0 0
        %2653 = vmatprep.subr.bf16.mxu0 0
        %2654 = vmatpush1.bf16.xpose.msra.mxu0 0
        %2655 = vmatprep.subr.bf16.mxu0 0
        %2656 = vmatpush1.bf16.xpose.msra.mxu0 0
        %2657 = vmatprep.subr.bf16.mxu0 0
        %2658 = vmatpush1.bf16.xpose.msra.mxu0 0
        %2659 = vmatprep.subr.bf16.mxu0 0
        %2660 = vmatpush1.bf16.xpose.msra.mxu0 0
        %2661 = vmatprep.subr.bf16.mxu0 0
        %2662 = vmatpush1.bf16.xpose.msra.mxu0 0
        %2663 = vmatprep.subr.bf16.mxu0 0
        %2664 = vmatpush1.bf16.xpose.msra.mxu0 0
        %2665 = vmatprep.mubr.bf16.mxu0 0
        %2666 = vmatmul.mubr.bf16.gmra.mrb[0].mxu0 %v2628
        %v2667 = vpop.f32.mrb[0].mxu0
        %v2668 = vadd.f32 0.0, %v2667
        %v2669 = vpop.f32.mrb[0].mxu0
        %v2670 = vpop.f32.mrb[0].mxu0
        %v2671 = vadd.f32 0.0, %v2670
        %v2672 = vpop.f32.mrb[0].mxu0
        %2673 = vdwg.mxu0
        %v2675 = vsel %vm430, %v2348, 0
        %v2678 = vsel %vm430, %v2380, 0
        %2680 = vmatprep.subr.bf16.mxu0 0
        %2681 = vmatpush1.bf16.xpose.msra.mxu0 %v2678
        %2682 = vmatprep.subr.bf16.mxu0 0
        %2683 = vmatpush1.bf16.xpose.msra.mxu0 0
        %2684 = vmatprep.subr.bf16.mxu0 0
        %2685 = vmatpush1.bf16.xpose.msra.mxu0 0
        %2686 = vmatprep.subr.bf16.mxu0 0
        %2687 = vmatpush1.bf16.xpose.msra.mxu0 0
        %2688 = vmatprep.subr.bf16.mxu0 0
        %2689 = vmatpush1.bf16.xpose.msra.mxu0 0
        %2690 = vmatprep.subr.bf16.mxu0 0
        %2691 = vmatpush1.bf16.xpose.msra.mxu0 0
        %2692 = vmatprep.subr.bf16.mxu0 0
        %2693 = vmatpush1.bf16.xpose.msra.mxu0 0
        %2694 = vmatprep.subr.bf16.mxu0 0
        %2695 = vmatpush1.bf16.xpose.msra.mxu0 0
        %2696 = vmatprep.subr.bf16.mxu0 0
        %2697 = vmatpush1.bf16.xpose.msra.mxu0 0
        %2698 = vmatprep.subr.bf16.mxu0 0
        %2699 = vmatpush1.bf16.xpose.msra.mxu0 0
        %2700 = vmatprep.subr.bf16.mxu0 0
        %2701 = vmatpush1.bf16.xpose.msra.mxu0 0
        %2702 = vmatprep.subr.bf16.mxu0 0
        %2703 = vmatpush1.bf16.xpose.msra.mxu0 0
        %2704 = vmatprep.subr.bf16.mxu0 0
        %2705 = vmatpush1.bf16.xpose.msra.mxu0 0
        %2706 = vmatprep.subr.bf16.mxu0 0
        %2707 = vmatpush1.bf16.xpose.msra.mxu0 0
        %2708 = vmatprep.subr.bf16.mxu0 0
        %2709 = vmatpush1.bf16.xpose.msra.mxu0 0
        %2710 = vmatprep.subr.bf16.mxu0 0
        %2711 = vmatpush1.bf16.xpose.msra.mxu0 0
        %2712 = vmatprep.mubr.bf16.mxu0 0
        %2713 = vmatmul.mubr.bf16.gmra.mrb[0].mxu0 %v2675
        %v2714 = vpop.f32.mrb[0].mxu0
        %v2715 = vadd.f32 0.0, %v2714
        %v2716 = vpop.f32.mrb[0].mxu0
        %v2717 = vpop.f32.mrb[0].mxu0
        %v2718 = vadd.f32 0.0, %v2717
        %v2719 = vpop.f32.mrb[0].mxu0
        %2720 = vdwg.mxu0
        %v2722 = vsel %vm430, %v2349, 0
        %v2725 = vsel %vm430, %v2381, 0
        %2727 = vmatprep.subr.bf16.mxu0 0
        %2728 = vmatpush1.bf16.xpose.msra.mxu0 %v2725
        %2729 = vmatprep.subr.bf16.mxu0 0
        %2730 = vmatpush1.bf16.xpose.msra.mxu0 0
        %2731 = vmatprep.subr.bf16.mxu0 0
        %2732 = vmatpush1.bf16.xpose.msra.mxu0 0
        %2733 = vmatprep.subr.bf16.mxu0 0
        %2734 = vmatpush1.bf16.xpose.msra.mxu0 0
        %2735 = vmatprep.subr.bf16.mxu0 0
        %2736 = vmatpush1.bf16.xpose.msra.mxu0 0
        %2737 = vmatprep.subr.bf16.mxu0 0
        %2738 = vmatpush1.bf16.xpose.msra.mxu0 0
        %2739 = vmatprep.subr.bf16.mxu0 0
        %2740 = vmatpush1.bf16.xpose.msra.mxu0 0
        %2741 = vmatprep.subr.bf16.mxu0 0
        %2742 = vmatpush1.bf16.xpose.msra.mxu0 0
        %2743 = vmatprep.subr.bf16.mxu0 0
        %2744 = vmatpush1.bf16.xpose.msra.mxu0 0
        %2745 = vmatprep.subr.bf16.mxu0 0
        %2746 = vmatpush1.bf16.xpose.msra.mxu0 0
        %2747 = vmatprep.subr.bf16.mxu0 0
        %2748 = vmatpush1.bf16.xpose.msra.mxu0 0
        %2749 = vmatprep.subr.bf16.mxu0 0
        %2750 = vmatpush1.bf16.xpose.msra.mxu0 0
        %2751 = vmatprep.subr.bf16.mxu0 0
        %2752 = vmatpush1.bf16.xpose.msra.mxu0 0
        %2753 = vmatprep.subr.bf16.mxu0 0
        %2754 = vmatpush1.bf16.xpose.msra.mxu0 0
        %2755 = vmatprep.subr.bf16.mxu0 0
        %2756 = vmatpush1.bf16.xpose.msra.mxu0 0
        %2757 = vmatprep.subr.bf16.mxu0 0
        %2758 = vmatpush1.bf16.xpose.msra.mxu0 0
        %2759 = vmatprep.mubr.bf16.mxu0 0
        %2760 = vmatmul.mubr.bf16.gmra.mrb[0].mxu0 %v2722
        %v2761 = vpop.f32.mrb[0].mxu0
        %v2762 = vadd.f32 0.0, %v2761
        %v2763 = vpop.f32.mrb[0].mxu0
        %v2764 = vpop.f32.mrb[0].mxu0
        %v2765 = vadd.f32 0.0, %v2764
        %v2766 = vpop.f32.mrb[0].mxu0
        %2767 = vdwg.mxu0
        %v2769 = vsel %vm430, %v2350, 0
        %v2772 = vsel %vm430, %v2382, 0
        %2774 = vmatprep.subr.bf16.mxu0 0
        %2775 = vmatpush1.bf16.xpose.msra.mxu0 %v2772
        %2776 = vmatprep.subr.bf16.mxu0 0
        %2777 = vmatpush1.bf16.xpose.msra.mxu0 0
        %2778 = vmatprep.subr.bf16.mxu0 0
        %2779 = vmatpush1.bf16.xpose.msra.mxu0 0
        %2780 = vmatprep.subr.bf16.mxu0 0
        %2781 = vmatpush1.bf16.xpose.msra.mxu0 0
        %2782 = vmatprep.subr.bf16.mxu0 0
        %2783 = vmatpush1.bf16.xpose.msra.mxu0 0
        %2784 = vmatprep.subr.bf16.mxu0 0
        %2785 = vmatpush1.bf16.xpose.msra.mxu0 0
        %2786 = vmatprep.subr.bf16.mxu0 0
        %2787 = vmatpush1.bf16.xpose.msra.mxu0 0
        %2788 = vmatprep.subr.bf16.mxu0 0
        %2789 = vmatpush1.bf16.xpose.msra.mxu0 0
        %2790 = vmatprep.subr.bf16.mxu0 0
        %2791 = vmatpush1.bf16.xpose.msra.mxu0 0
        %2792 = vmatprep.subr.bf16.mxu0 0
        %2793 = vmatpush1.bf16.xpose.msra.mxu0 0
        %2794 = vmatprep.subr.bf16.mxu0 0
        %2795 = vmatpush1.bf16.xpose.msra.mxu0 0
        %2796 = vmatprep.subr.bf16.mxu0 0
        %2797 = vmatpush1.bf16.xpose.msra.mxu0 0
        %2798 = vmatprep.subr.bf16.mxu0 0
        %2799 = vmatpush1.bf16.xpose.msra.mxu0 0
        %2800 = vmatprep.subr.bf16.mxu0 0
        %2801 = vmatpush1.bf16.xpose.msra.mxu0 0
        %2802 = vmatprep.subr.bf16.mxu0 0
        %2803 = vmatpush1.bf16.xpose.msra.mxu0 0
        %2804 = vmatprep.subr.bf16.mxu0 0
        %2805 = vmatpush1.bf16.xpose.msra.mxu0 0
        %2806 = vmatprep.mubr.bf16.mxu0 0
        %2807 = vmatmul.mubr.bf16.gmra.mrb[0].mxu0 %v2769
        %v2808 = vpop.f32.mrb[0].mxu0
        %v2809 = vadd.f32 0.0, %v2808
        %v2810 = vpop.f32.mrb[0].mxu0
        %v2811 = vpop.f32.mrb[0].mxu0
        %v2812 = vadd.f32 0.0, %v2811
        %v2813 = vpop.f32.mrb[0].mxu0
        %2814 = vdwg.mxu0
        %v2816 = vsel %vm430, %v2351, 0
        %v2819 = vsel %vm430, %v2383, 0
        %2821 = vmatprep.subr.bf16.mxu0 0
        %2822 = vmatpush1.bf16.xpose.msra.mxu0 %v2819
        %2823 = vmatprep.subr.bf16.mxu0 0
        %2824 = vmatpush1.bf16.xpose.msra.mxu0 0
        %2825 = vmatprep.subr.bf16.mxu0 0
        %2826 = vmatpush1.bf16.xpose.msra.mxu0 0
        %2827 = vmatprep.subr.bf16.mxu0 0
        %2828 = vmatpush1.bf16.xpose.msra.mxu0 0
        %2829 = vmatprep.subr.bf16.mxu0 0
        %2830 = vmatpush1.bf16.xpose.msra.mxu0 0
        %2831 = vmatprep.subr.bf16.mxu0 0
        %2832 = vmatpush1.bf16.xpose.msra.mxu0 0
        %2833 = vmatprep.subr.bf16.mxu0 0
        %2834 = vmatpush1.bf16.xpose.msra.mxu0 0
        %2835 = vmatprep.subr.bf16.mxu0 0
        %2836 = vmatpush1.bf16.xpose.msra.mxu0 0
        %2837 = vmatprep.subr.bf16.mxu0 0
        %2838 = vmatpush1.bf16.xpose.msra.mxu0 0
        %2839 = vmatprep.subr.bf16.mxu0 0
        %2840 = vmatpush1.bf16.xpose.msra.mxu0 0
        %2841 = vmatprep.subr.bf16.mxu0 0
        %2842 = vmatpush1.bf16.xpose.msra.mxu0 0
        %2843 = vmatprep.subr.bf16.mxu0 0
        %2844 = vmatpush1.bf16.xpose.msra.mxu0 0
        %2845 = vmatprep.subr.bf16.mxu0 0
        %2846 = vmatpush1.bf16.xpose.msra.mxu0 0
        %2847 = vmatprep.subr.bf16.mxu0 0
        %2848 = vmatpush1.bf16.xpose.msra.mxu0 0
        %2849 = vmatprep.subr.bf16.mxu0 0
        %2850 = vmatpush1.bf16.xpose.msra.mxu0 0
        %2851 = vmatprep.subr.bf16.mxu0 0
        %2852 = vmatpush1.bf16.xpose.msra.mxu0 0
        %2853 = vmatprep.mubr.bf16.mxu0 0
        %2854 = vmatmul.mubr.bf16.gmra.mrb[0].mxu0 %v2816
        %v2855 = vpop.f32.mrb[0].mxu0
        %v2856 = vadd.f32 0.0, %v2855
        %v2857 = vpop.f32.mrb[0].mxu0
        %v2858 = vpop.f32.mrb[0].mxu0
        %v2859 = vadd.f32 0.0, %v2858
        %v2860 = vpop.f32.mrb[0].mxu0
        %2861 = vdwg.mxu0
        %v2863 = vsel %vm430, %v2352, 0
        %v2866 = vsel %vm430, %v2384, 0
        %2868 = vmatprep.subr.bf16.mxu0 0
        %2869 = vmatpush1.bf16.xpose.msra.mxu0 %v2866
        %2870 = vmatprep.subr.bf16.mxu0 0
        %2871 = vmatpush1.bf16.xpose.msra.mxu0 0
        %2872 = vmatprep.subr.bf16.mxu0 0
        %2873 = vmatpush1.bf16.xpose.msra.mxu0 0
        %2874 = vmatprep.subr.bf16.mxu0 0
        %2875 = vmatpush1.bf16.xpose.msra.mxu0 0
        %2876 = vmatprep.subr.bf16.mxu0 0
        %2877 = vmatpush1.bf16.xpose.msra.mxu0 0
        %2878 = vmatprep.subr.bf16.mxu0 0
        %2879 = vmatpush1.bf16.xpose.msra.mxu0 0
        %2880 = vmatprep.subr.bf16.mxu0 0
        %2881 = vmatpush1.bf16.xpose.msra.mxu0 0
        %2882 = vmatprep.subr.bf16.mxu0 0
        %2883 = vmatpush1.bf16.xpose.msra.mxu0 0
        %2884 = vmatprep.subr.bf16.mxu0 0
        %2885 = vmatpush1.bf16.xpose.msra.mxu0 0
        %2886 = vmatprep.subr.bf16.mxu0 0
        %2887 = vmatpush1.bf16.xpose.msra.mxu0 0
        %2888 = vmatprep.subr.bf16.mxu0 0
        %2889 = vmatpush1.bf16.xpose.msra.mxu0 0
        %2890 = vmatprep.subr.bf16.mxu0 0
        %2891 = vmatpush1.bf16.xpose.msra.mxu0 0
        %2892 = vmatprep.subr.bf16.mxu0 0
        %2893 = vmatpush1.bf16.xpose.msra.mxu0 0
        %2894 = vmatprep.subr.bf16.mxu0 0
        %2895 = vmatpush1.bf16.xpose.msra.mxu0 0
        %2896 = vmatprep.subr.bf16.mxu0 0
        %2897 = vmatpush1.bf16.xpose.msra.mxu0 0
        %2898 = vmatprep.subr.bf16.mxu0 0
        %2899 = vmatpush1.bf16.xpose.msra.mxu0 0
        %2900 = vmatprep.mubr.bf16.mxu0 0
        %2901 = vmatmul.mubr.bf16.gmra.mrb[0].mxu0 %v2863
        %v2902 = vpop.f32.mrb[0].mxu0
        %v2903 = vadd.f32 0.0, %v2902
        %v2904 = vpop.f32.mrb[0].mxu0
        %v2905 = vpop.f32.mrb[0].mxu0
        %v2906 = vadd.f32 0.0, %v2905
        %v2907 = vpop.f32.mrb[0].mxu0
        %2908 = vdwg.mxu0
        %v2910 = vsel %vm430, %v2353, 0
        %v2913 = vsel %vm430, %v2385, 0
        %2915 = vmatprep.subr.bf16.mxu0 0
        %2916 = vmatpush1.bf16.xpose.msra.mxu0 %v2913
        %2917 = vmatprep.subr.bf16.mxu0 0
        %2918 = vmatpush1.bf16.xpose.msra.mxu0 0
        %2919 = vmatprep.subr.bf16.mxu0 0
        %2920 = vmatpush1.bf16.xpose.msra.mxu0 0
        %2921 = vmatprep.subr.bf16.mxu0 0
        %2922 = vmatpush1.bf16.xpose.msra.mxu0 0
        %2923 = vmatprep.subr.bf16.mxu0 0
        %2924 = vmatpush1.bf16.xpose.msra.mxu0 0
        %2925 = vmatprep.subr.bf16.mxu0 0
        %2926 = vmatpush1.bf16.xpose.msra.mxu0 0
        %2927 = vmatprep.subr.bf16.mxu0 0
        %2928 = vmatpush1.bf16.xpose.msra.mxu0 0
        %2929 = vmatprep.subr.bf16.mxu0 0
        %2930 = vmatpush1.bf16.xpose.msra.mxu0 0
        %2931 = vmatprep.subr.bf16.mxu0 0
        %2932 = vmatpush1.bf16.xpose.msra.mxu0 0
        %2933 = vmatprep.subr.bf16.mxu0 0
        %2934 = vmatpush1.bf16.xpose.msra.mxu0 0
        %2935 = vmatprep.subr.bf16.mxu0 0
        %2936 = vmatpush1.bf16.xpose.msra.mxu0 0
        %2937 = vmatprep.subr.bf16.mxu0 0
        %2938 = vmatpush1.bf16.xpose.msra.mxu0 0
        %2939 = vmatprep.subr.bf16.mxu0 0
        %2940 = vmatpush1.bf16.xpose.msra.mxu0 0
        %2941 = vmatprep.subr.bf16.mxu0 0
        %2942 = vmatpush1.bf16.xpose.msra.mxu0 0
        %2943 = vmatprep.subr.bf16.mxu0 0
        %2944 = vmatpush1.bf16.xpose.msra.mxu0 0
        %2945 = vmatprep.subr.bf16.mxu0 0
        %2946 = vmatpush1.bf16.xpose.msra.mxu0 0
        %2947 = vmatprep.mubr.bf16.mxu0 0
        %2948 = vmatmul.mubr.bf16.gmra.mrb[0].mxu0 %v2910
        %v2949 = vpop.f32.mrb[0].mxu0
        %v2950 = vadd.f32 0.0, %v2949
        %v2951 = vpop.f32.mrb[0].mxu0
        %v2952 = vpop.f32.mrb[0].mxu0
        %v2953 = vadd.f32 0.0, %v2952
        %v2954 = vpop.f32.mrb[0].mxu0
        %2955 = vdwg.mxu0
        %v2957 = vsel %vm430, %v2354, 0
        %v2960 = vsel %vm430, %v2386, 0
        %2962 = vmatprep.subr.bf16.mxu0 0
        %2963 = vmatpush1.bf16.xpose.msra.mxu0 %v2960
        %2964 = vmatprep.subr.bf16.mxu0 0
        %2965 = vmatpush1.bf16.xpose.msra.mxu0 0
        %2966 = vmatprep.subr.bf16.mxu0 0
        %2967 = vmatpush1.bf16.xpose.msra.mxu0 0
        %2968 = vmatprep.subr.bf16.mxu0 0
        %2969 = vmatpush1.bf16.xpose.msra.mxu0 0
        %2970 = vmatprep.subr.bf16.mxu0 0
        %2971 = vmatpush1.bf16.xpose.msra.mxu0 0
        %2972 = vmatprep.subr.bf16.mxu0 0
        %2973 = vmatpush1.bf16.xpose.msra.mxu0 0
        %2974 = vmatprep.subr.bf16.mxu0 0
        %2975 = vmatpush1.bf16.xpose.msra.mxu0 0
        %2976 = vmatprep.subr.bf16.mxu0 0
        %2977 = vmatpush1.bf16.xpose.msra.mxu0 0
        %2978 = vmatprep.subr.bf16.mxu0 0
        %2979 = vmatpush1.bf16.xpose.msra.mxu0 0
        %2980 = vmatprep.subr.bf16.mxu0 0
        %2981 = vmatpush1.bf16.xpose.msra.mxu0 0
        %2982 = vmatprep.subr.bf16.mxu0 0
        %2983 = vmatpush1.bf16.xpose.msra.mxu0 0
        %2984 = vmatprep.subr.bf16.mxu0 0
        %2985 = vmatpush1.bf16.xpose.msra.mxu0 0
        %2986 = vmatprep.subr.bf16.mxu0 0
        %2987 = vmatpush1.bf16.xpose.msra.mxu0 0
        %2988 = vmatprep.subr.bf16.mxu0 0
        %2989 = vmatpush1.bf16.xpose.msra.mxu0 0
        %2990 = vmatprep.subr.bf16.mxu0 0
        %2991 = vmatpush1.bf16.xpose.msra.mxu0 0
        %2992 = vmatprep.subr.bf16.mxu0 0
        %2993 = vmatpush1.bf16.xpose.msra.mxu0 0
        %2994 = vmatprep.mubr.bf16.mxu0 0
        %2995 = vmatmul.mubr.bf16.gmra.mrb[0].mxu0 %v2957
        %v2996 = vpop.f32.mrb[0].mxu0
        %v2997 = vadd.f32 0.0, %v2996
        %v2998 = vpop.f32.mrb[0].mxu0
        %v2999 = vpop.f32.mrb[0].mxu0
        %v3000 = vadd.f32 0.0, %v2999
        %v3001 = vpop.f32.mrb[0].mxu0
        %3002 = vdwg.mxu0
        %v3004 = vsel %vm430, %v2355, 0
        %v3007 = vsel %vm430, %v2387, 0
        %3009 = vmatprep.subr.bf16.mxu0 0
        %3010 = vmatpush1.bf16.xpose.msra.mxu0 %v3007
        %3011 = vmatprep.subr.bf16.mxu0 0
        %3012 = vmatpush1.bf16.xpose.msra.mxu0 0
        %3013 = vmatprep.subr.bf16.mxu0 0
        %3014 = vmatpush1.bf16.xpose.msra.mxu0 0
        %3015 = vmatprep.subr.bf16.mxu0 0
        %3016 = vmatpush1.bf16.xpose.msra.mxu0 0
        %3017 = vmatprep.subr.bf16.mxu0 0
        %3018 = vmatpush1.bf16.xpose.msra.mxu0 0
        %3019 = vmatprep.subr.bf16.mxu0 0
        %3020 = vmatpush1.bf16.xpose.msra.mxu0 0
        %3021 = vmatprep.subr.bf16.mxu0 0
        %3022 = vmatpush1.bf16.xpose.msra.mxu0 0
        %3023 = vmatprep.subr.bf16.mxu0 0
        %3024 = vmatpush1.bf16.xpose.msra.mxu0 0
        %3025 = vmatprep.subr.bf16.mxu0 0
        %3026 = vmatpush1.bf16.xpose.msra.mxu0 0
        %3027 = vmatprep.subr.bf16.mxu0 0
        %3028 = vmatpush1.bf16.xpose.msra.mxu0 0
        %3029 = vmatprep.subr.bf16.mxu0 0
        %3030 = vmatpush1.bf16.xpose.msra.mxu0 0
        %3031 = vmatprep.subr.bf16.mxu0 0
        %3032 = vmatpush1.bf16.xpose.msra.mxu0 0
        %3033 = vmatprep.subr.bf16.mxu0 0
        %3034 = vmatpush1.bf16.xpose.msra.mxu0 0
        %3035 = vmatprep.subr.bf16.mxu0 0
        %3036 = vmatpush1.bf16.xpose.msra.mxu0 0
        %3037 = vmatprep.subr.bf16.mxu0 0
        %3038 = vmatpush1.bf16.xpose.msra.mxu0 0
        %3039 = vmatprep.subr.bf16.mxu0 0
        %3040 = vmatpush1.bf16.xpose.msra.mxu0 0
        %3041 = vmatprep.mubr.bf16.mxu0 0
        %3042 = vmatmul.mubr.bf16.gmra.mrb[0].mxu0 %v3004
        %v3043 = vpop.f32.mrb[0].mxu0
        %v3044 = vadd.f32 0.0, %v3043
        %v3045 = vpop.f32.mrb[0].mxu0
        %v3046 = vpop.f32.mrb[0].mxu0
        %v3047 = vadd.f32 0.0, %v3046
        %v3048 = vpop.f32.mrb[0].mxu0
        %3049 = vdwg.mxu0
        %v3051 = vsel %vm430, %v2356, 0
        %v3054 = vsel %vm430, %v2388, 0
        %3056 = vmatprep.subr.bf16.mxu0 0
        %3057 = vmatpush1.bf16.xpose.msra.mxu0 %v3054
        %3058 = vmatprep.subr.bf16.mxu0 0
        %3059 = vmatpush1.bf16.xpose.msra.mxu0 0
        %3060 = vmatprep.subr.bf16.mxu0 0
        %3061 = vmatpush1.bf16.xpose.msra.mxu0 0
        %3062 = vmatprep.subr.bf16.mxu0 0
        %3063 = vmatpush1.bf16.xpose.msra.mxu0 0
        %3064 = vmatprep.subr.bf16.mxu0 0
        %3065 = vmatpush1.bf16.xpose.msra.mxu0 0
        %3066 = vmatprep.subr.bf16.mxu0 0
        %3067 = vmatpush1.bf16.xpose.msra.mxu0 0
        %3068 = vmatprep.subr.bf16.mxu0 0
        %3069 = vmatpush1.bf16.xpose.msra.mxu0 0
        %3070 = vmatprep.subr.bf16.mxu0 0
        %3071 = vmatpush1.bf16.xpose.msra.mxu0 0
        %3072 = vmatprep.subr.bf16.mxu0 0
        %3073 = vmatpush1.bf16.xpose.msra.mxu0 0
        %3074 = vmatprep.subr.bf16.mxu0 0
        %3075 = vmatpush1.bf16.xpose.msra.mxu0 0
        %3076 = vmatprep.subr.bf16.mxu0 0
        %3077 = vmatpush1.bf16.xpose.msra.mxu0 0
        %3078 = vmatprep.subr.bf16.mxu0 0
        %3079 = vmatpush1.bf16.xpose.msra.mxu0 0
        %3080 = vmatprep.subr.bf16.mxu0 0
        %3081 = vmatpush1.bf16.xpose.msra.mxu0 0
        %3082 = vmatprep.subr.bf16.mxu0 0
        %3083 = vmatpush1.bf16.xpose.msra.mxu0 0
        %3084 = vmatprep.subr.bf16.mxu0 0
        %3085 = vmatpush1.bf16.xpose.msra.mxu0 0
        %3086 = vmatprep.subr.bf16.mxu0 0
        %3087 = vmatpush1.bf16.xpose.msra.mxu0 0
        %3088 = vmatprep.mubr.bf16.mxu0 0
        %3089 = vmatmul.mubr.bf16.gmra.mrb[0].mxu0 %v3051
        %v3090 = vpop.f32.mrb[0].mxu0
        %v3091 = vadd.f32 0.0, %v3090
        %v3092 = vpop.f32.mrb[0].mxu0
        %v3093 = vpop.f32.mrb[0].mxu0
        %v3094 = vadd.f32 0.0, %v3093
        %v3095 = vpop.f32.mrb[0].mxu0
        %3096 = vdwg.mxu0
        %v3098 = vsel %vm430, %v2357, 0
        %v3101 = vsel %vm430, %v2389, 0
        %3103 = vmatprep.subr.bf16.mxu0 0
        %3104 = vmatpush1.bf16.xpose.msra.mxu0 %v3101
        %3105 = vmatprep.subr.bf16.mxu0 0
        %3106 = vmatpush1.bf16.xpose.msra.mxu0 0
        %3107 = vmatprep.subr.bf16.mxu0 0
        %3108 = vmatpush1.bf16.xpose.msra.mxu0 0
        %3109 = vmatprep.subr.bf16.mxu0 0
        %3110 = vmatpush1.bf16.xpose.msra.mxu0 0
        %3111 = vmatprep.subr.bf16.mxu0 0
        %3112 = vmatpush1.bf16.xpose.msra.mxu0 0
        %3113 = vmatprep.subr.bf16.mxu0 0
        %3114 = vmatpush1.bf16.xpose.msra.mxu0 0
        %3115 = vmatprep.subr.bf16.mxu0 0
        %3116 = vmatpush1.bf16.xpose.msra.mxu0 0
        %3117 = vmatprep.subr.bf16.mxu0 0
        %3118 = vmatpush1.bf16.xpose.msra.mxu0 0
        %3119 = vmatprep.subr.bf16.mxu0 0
        %3120 = vmatpush1.bf16.xpose.msra.mxu0 0
        %3121 = vmatprep.subr.bf16.mxu0 0
        %3122 = vmatpush1.bf16.xpose.msra.mxu0 0
        %3123 = vmatprep.subr.bf16.mxu0 0
        %3124 = vmatpush1.bf16.xpose.msra.mxu0 0
        %3125 = vmatprep.subr.bf16.mxu0 0
        %3126 = vmatpush1.bf16.xpose.msra.mxu0 0
        %3127 = vmatprep.subr.bf16.mxu0 0
        %3128 = vmatpush1.bf16.xpose.msra.mxu0 0
        %3129 = vmatprep.subr.bf16.mxu0 0
        %3130 = vmatpush1.bf16.xpose.msra.mxu0 0
        %3131 = vmatprep.subr.bf16.mxu0 0
        %3132 = vmatpush1.bf16.xpose.msra.mxu0 0
        %3133 = vmatprep.subr.bf16.mxu0 0
        %3134 = vmatpush1.bf16.xpose.msra.mxu0 0
        %3135 = vmatprep.mubr.bf16.mxu0 0
        %3136 = vmatmul.mubr.bf16.gmra.mrb[0].mxu0 %v3098
        %v3137 = vpop.f32.mrb[0].mxu0
        %v3138 = vadd.f32 0.0, %v3137
        %v3139 = vpop.f32.mrb[0].mxu0
        %v3140 = vpop.f32.mrb[0].mxu0
        %v3141 = vadd.f32 0.0, %v3140
        %v3142 = vpop.f32.mrb[0].mxu0
        %3143 = vdwg.mxu0
        %v3145 = vsel %vm430, %v2358, 0
        %v3148 = vsel %vm430, %v2390, 0
        %3150 = vmatprep.subr.bf16.mxu0 0
        %3151 = vmatpush1.bf16.xpose.msra.mxu0 %v3148
        %3152 = vmatprep.subr.bf16.mxu0 0
        %3153 = vmatpush1.bf16.xpose.msra.mxu0 0
        %3154 = vmatprep.subr.bf16.mxu0 0
        %3155 = vmatpush1.bf16.xpose.msra.mxu0 0
        %3156 = vmatprep.subr.bf16.mxu0 0
        %3157 = vmatpush1.bf16.xpose.msra.mxu0 0
        %3158 = vmatprep.subr.bf16.mxu0 0
        %3159 = vmatpush1.bf16.xpose.msra.mxu0 0
        %3160 = vmatprep.subr.bf16.mxu0 0
        %3161 = vmatpush1.bf16.xpose.msra.mxu0 0
        %3162 = vmatprep.subr.bf16.mxu0 0
        %3163 = vmatpush1.bf16.xpose.msra.mxu0 0
        %3164 = vmatprep.subr.bf16.mxu0 0
        %3165 = vmatpush1.bf16.xpose.msra.mxu0 0
        %3166 = vmatprep.subr.bf16.mxu0 0
        %3167 = vmatpush1.bf16.xpose.msra.mxu0 0
        %3168 = vmatprep.subr.bf16.mxu0 0
        %3169 = vmatpush1.bf16.xpose.msra.mxu0 0
        %3170 = vmatprep.subr.bf16.mxu0 0
        %3171 = vmatpush1.bf16.xpose.msra.mxu0 0
        %3172 = vmatprep.subr.bf16.mxu0 0
        %3173 = vmatpush1.bf16.xpose.msra.mxu0 0
        %3174 = vmatprep.subr.bf16.mxu0 0
        %3175 = vmatpush1.bf16.xpose.msra.mxu0 0
        %3176 = vmatprep.subr.bf16.mxu0 0
        %3177 = vmatpush1.bf16.xpose.msra.mxu0 0
        %3178 = vmatprep.subr.bf16.mxu0 0
        %3179 = vmatpush1.bf16.xpose.msra.mxu0 0
        %3180 = vmatprep.subr.bf16.mxu0 0
        %3181 = vmatpush1.bf16.xpose.msra.mxu0 0
        %3182 = vmatprep.mubr.bf16.mxu0 0
        %3183 = vmatmul.mubr.bf16.gmra.mrb[0].mxu0 %v3145
        %v3184 = vpop.f32.mrb[0].mxu0
        %v3185 = vadd.f32 0.0, %v3184
        %v3186 = vpop.f32.mrb[0].mxu0
        %v3187 = vpop.f32.mrb[0].mxu0
        %v3188 = vadd.f32 0.0, %v3187
        %v3189 = vpop.f32.mrb[0].mxu0
        %3190 = vdwg.mxu0
        %v3192 = vsel %vm430, %v2359, 0
        %v3195 = vsel %vm430, %v2391, 0
        %3197 = vmatprep.subr.bf16.mxu0 0
        %3198 = vmatpush1.bf16.xpose.msra.mxu0 %v3195
        %3199 = vmatprep.subr.bf16.mxu0 0
        %3200 = vmatpush1.bf16.xpose.msra.mxu0 0
        %3201 = vmatprep.subr.bf16.mxu0 0
        %3202 = vmatpush1.bf16.xpose.msra.mxu0 0
        %3203 = vmatprep.subr.bf16.mxu0 0
        %3204 = vmatpush1.bf16.xpose.msra.mxu0 0
        %3205 = vmatprep.subr.bf16.mxu0 0
        %3206 = vmatpush1.bf16.xpose.msra.mxu0 0
        %3207 = vmatprep.subr.bf16.mxu0 0
        %3208 = vmatpush1.bf16.xpose.msra.mxu0 0
        %3209 = vmatprep.subr.bf16.mxu0 0
        %3210 = vmatpush1.bf16.xpose.msra.mxu0 0
        %3211 = vmatprep.subr.bf16.mxu0 0
        %3212 = vmatpush1.bf16.xpose.msra.mxu0 0
        %3213 = vmatprep.subr.bf16.mxu0 0
        %3214 = vmatpush1.bf16.xpose.msra.mxu0 0
        %3215 = vmatprep.subr.bf16.mxu0 0
        %3216 = vmatpush1.bf16.xpose.msra.mxu0 0
        %3217 = vmatprep.subr.bf16.mxu0 0
        %3218 = vmatpush1.bf16.xpose.msra.mxu0 0
        %3219 = vmatprep.subr.bf16.mxu0 0
        %3220 = vmatpush1.bf16.xpose.msra.mxu0 0
        %3221 = vmatprep.subr.bf16.mxu0 0
        %3222 = vmatpush1.bf16.xpose.msra.mxu0 0
        %3223 = vmatprep.subr.bf16.mxu0 0
        %3224 = vmatpush1.bf16.xpose.msra.mxu0 0
        %3225 = vmatprep.subr.bf16.mxu0 0
        %3226 = vmatpush1.bf16.xpose.msra.mxu0 0
        %3227 = vmatprep.subr.bf16.mxu0 0
        %3228 = vmatpush1.bf16.xpose.msra.mxu0 0
        %3229 = vmatprep.mubr.bf16.mxu0 0
        %3230 = vmatmul.mubr.bf16.gmra.mrb[0].mxu0 %v3192
        %v3231 = vpop.f32.mrb[0].mxu0
        %v3232 = vadd.f32 0.0, %v3231
        %v3233 = vpop.f32.mrb[0].mxu0
        %v3234 = vpop.f32.mrb[0].mxu0
        %v3235 = vadd.f32 0.0, %v3234
        %v3236 = vpop.f32.mrb[0].mxu0
        %3237 = vdwg.mxu0
        %v3239 = vsel %vm430, %v2360, 0
        %v3242 = vsel %vm430, %v2392, 0
        %3244 = vmatprep.subr.bf16.mxu0 0
        %3245 = vmatpush1.bf16.xpose.msra.mxu0 %v3242
        %3246 = vmatprep.subr.bf16.mxu0 0
        %3247 = vmatpush1.bf16.xpose.msra.mxu0 0
        %3248 = vmatprep.subr.bf16.mxu0 0
        %3249 = vmatpush1.bf16.xpose.msra.mxu0 0
        %3250 = vmatprep.subr.bf16.mxu0 0
        %3251 = vmatpush1.bf16.xpose.msra.mxu0 0
        %3252 = vmatprep.subr.bf16.mxu0 0
        %3253 = vmatpush1.bf16.xpose.msra.mxu0 0
        %3254 = vmatprep.subr.bf16.mxu0 0
        %3255 = vmatpush1.bf16.xpose.msra.mxu0 0
        %3256 = vmatprep.subr.bf16.mxu0 0
        %3257 = vmatpush1.bf16.xpose.msra.mxu0 0
        %3258 = vmatprep.subr.bf16.mxu0 0
        %3259 = vmatpush1.bf16.xpose.msra.mxu0 0
        %3260 = vmatprep.subr.bf16.mxu0 0
        %3261 = vmatpush1.bf16.xpose.msra.mxu0 0
        %3262 = vmatprep.subr.bf16.mxu0 0
        %3263 = vmatpush1.bf16.xpose.msra.mxu0 0
        %3264 = vmatprep.subr.bf16.mxu0 0
        %3265 = vmatpush1.bf16.xpose.msra.mxu0 0
        %3266 = vmatprep.subr.bf16.mxu0 0
        %3267 = vmatpush1.bf16.xpose.msra.mxu0 0
        %3268 = vmatprep.subr.bf16.mxu0 0
        %3269 = vmatpush1.bf16.xpose.msra.mxu0 0
        %3270 = vmatprep.subr.bf16.mxu0 0
        %3271 = vmatpush1.bf16.xpose.msra.mxu0 0
        %3272 = vmatprep.subr.bf16.mxu0 0
        %3273 = vmatpush1.bf16.xpose.msra.mxu0 0
        %3274 = vmatprep.subr.bf16.mxu0 0
        %3275 = vmatpush1.bf16.xpose.msra.mxu0 0
        %3276 = vmatprep.mubr.bf16.mxu0 0
        %3277 = vmatmul.mubr.bf16.gmra.mrb[0].mxu0 %v3239
        %v3278 = vpop.f32.mrb[0].mxu0
        %v3279 = vadd.f32 0.0, %v3278
        %v3280 = vpop.f32.mrb[0].mxu0
        %v3281 = vpop.f32.mrb[0].mxu0
        %v3282 = vadd.f32 0.0, %v3281
        %v3283 = vpop.f32.mrb[0].mxu0
        %3284 = vdwg.mxu0
        %v3286 = vsel %vm430, %v2361, 0
        %v3289 = vsel %vm430, %v2393, 0
        %3291 = vmatprep.subr.bf16.mxu0 0
        %3292 = vmatpush1.bf16.xpose.msra.mxu0 %v3289
        %3293 = vmatprep.subr.bf16.mxu0 0
        %3294 = vmatpush1.bf16.xpose.msra.mxu0 0
        %3295 = vmatprep.subr.bf16.mxu0 0
        %3296 = vmatpush1.bf16.xpose.msra.mxu0 0
        %3297 = vmatprep.subr.bf16.mxu0 0
        %3298 = vmatpush1.bf16.xpose.msra.mxu0 0
        %3299 = vmatprep.subr.bf16.mxu0 0
        %3300 = vmatpush1.bf16.xpose.msra.mxu0 0
        %3301 = vmatprep.subr.bf16.mxu0 0
        %3302 = vmatpush1.bf16.xpose.msra.mxu0 0
        %3303 = vmatprep.subr.bf16.mxu0 0
        %3304 = vmatpush1.bf16.xpose.msra.mxu0 0
        %3305 = vmatprep.subr.bf16.mxu0 0
        %3306 = vmatpush1.bf16.xpose.msra.mxu0 0
        %3307 = vmatprep.subr.bf16.mxu0 0
        %3308 = vmatpush1.bf16.xpose.msra.mxu0 0
        %3309 = vmatprep.subr.bf16.mxu0 0
        %3310 = vmatpush1.bf16.xpose.msra.mxu0 0
        %3311 = vmatprep.subr.bf16.mxu0 0
        %3312 = vmatpush1.bf16.xpose.msra.mxu0 0
        %3313 = vmatprep.subr.bf16.mxu0 0
        %3314 = vmatpush1.bf16.xpose.msra.mxu0 0
        %3315 = vmatprep.subr.bf16.mxu0 0
        %3316 = vmatpush1.bf16.xpose.msra.mxu0 0
        %3317 = vmatprep.subr.bf16.mxu0 0
        %3318 = vmatpush1.bf16.xpose.msra.mxu0 0
        %3319 = vmatprep.subr.bf16.mxu0 0
        %3320 = vmatpush1.bf16.xpose.msra.mxu0 0
        %3321 = vmatprep.subr.bf16.mxu0 0
        %3322 = vmatpush1.bf16.xpose.msra.mxu0 0
        %3323 = vmatprep.mubr.bf16.mxu0 0
        %3324 = vmatmul.mubr.bf16.gmra.mrb[0].mxu0 %v3286
        %v3325 = vpop.f32.mrb[0].mxu0
        %v3326 = vadd.f32 0.0, %v3325
        %v3327 = vpop.f32.mrb[0].mxu0
        %v3328 = vpop.f32.mrb[0].mxu0
        %v3329 = vadd.f32 0.0, %v3328
        %v3330 = vpop.f32.mrb[0].mxu0
        %3331 = vdwg.mxu0
        %v3333 = vsel %vm430, %v2362, 0
        %v3336 = vsel %vm430, %v2394, 0
        %3338 = vmatprep.subr.bf16.mxu0 0
        %3339 = vmatpush1.bf16.xpose.msra.mxu0 %v3336
        %3340 = vmatprep.subr.bf16.mxu0 0
        %3341 = vmatpush1.bf16.xpose.msra.mxu0 0
        %3342 = vmatprep.subr.bf16.mxu0 0
        %3343 = vmatpush1.bf16.xpose.msra.mxu0 0
        %3344 = vmatprep.subr.bf16.mxu0 0
        %3345 = vmatpush1.bf16.xpose.msra.mxu0 0
        %3346 = vmatprep.subr.bf16.mxu0 0
        %3347 = vmatpush1.bf16.xpose.msra.mxu0 0
        %3348 = vmatprep.subr.bf16.mxu0 0
        %3349 = vmatpush1.bf16.xpose.msra.mxu0 0
        %3350 = vmatprep.subr.bf16.mxu0 0
        %3351 = vmatpush1.bf16.xpose.msra.mxu0 0
        %3352 = vmatprep.subr.bf16.mxu0 0
        %3353 = vmatpush1.bf16.xpose.msra.mxu0 0
        %3354 = vmatprep.subr.bf16.mxu0 0
        %3355 = vmatpush1.bf16.xpose.msra.mxu0 0
        %3356 = vmatprep.subr.bf16.mxu0 0
        %3357 = vmatpush1.bf16.xpose.msra.mxu0 0
        %3358 = vmatprep.subr.bf16.mxu0 0
        %3359 = vmatpush1.bf16.xpose.msra.mxu0 0
        %3360 = vmatprep.subr.bf16.mxu0 0
        %3361 = vmatpush1.bf16.xpose.msra.mxu0 0
        %3362 = vmatprep.subr.bf16.mxu0 0
        %3363 = vmatpush1.bf16.xpose.msra.mxu0 0
        %3364 = vmatprep.subr.bf16.mxu0 0
        %3365 = vmatpush1.bf16.xpose.msra.mxu0 0
        %3366 = vmatprep.subr.bf16.mxu0 0
        %3367 = vmatpush1.bf16.xpose.msra.mxu0 0
        %3368 = vmatprep.subr.bf16.mxu0 0
        %3369 = vmatpush1.bf16.xpose.msra.mxu0 0
        %3370 = vmatprep.mubr.bf16.mxu0 0
        %3371 = vmatmul.mubr.bf16.gmra.mrb[0].mxu0 %v3333
        %v3372 = vpop.f32.mrb[0].mxu0
        %v3373 = vadd.f32 0.0, %v3372
        %v3374 = vpop.f32.mrb[0].mxu0
        %v3375 = vpop.f32.mrb[0].mxu0
        %v3376 = vadd.f32 0.0, %v3375
        %v3377 = vpop.f32.mrb[0].mxu0
        %3378 = vdwg.mxu0
        %v3380 = vsel %vm430, %v2363, 0
        %v3383 = vsel %vm430, %v2395, 0
        %3385 = vmatprep.subr.bf16.mxu0 0
        %3386 = vmatpush1.bf16.xpose.msra.mxu0 %v3383
        %3387 = vmatprep.subr.bf16.mxu0 0
        %3388 = vmatpush1.bf16.xpose.msra.mxu0 0
        %3389 = vmatprep.subr.bf16.mxu0 0
        %3390 = vmatpush1.bf16.xpose.msra.mxu0 0
        %3391 = vmatprep.subr.bf16.mxu0 0
        %3392 = vmatpush1.bf16.xpose.msra.mxu0 0
        %3393 = vmatprep.subr.bf16.mxu0 0
        %3394 = vmatpush1.bf16.xpose.msra.mxu0 0
        %3395 = vmatprep.subr.bf16.mxu0 0
        %3396 = vmatpush1.bf16.xpose.msra.mxu0 0
        %3397 = vmatprep.subr.bf16.mxu0 0
        %3398 = vmatpush1.bf16.xpose.msra.mxu0 0
        %3399 = vmatprep.subr.bf16.mxu0 0
        %3400 = vmatpush1.bf16.xpose.msra.mxu0 0
        %3401 = vmatprep.subr.bf16.mxu0 0
        %3402 = vmatpush1.bf16.xpose.msra.mxu0 0
        %3403 = vmatprep.subr.bf16.mxu0 0
        %3404 = vmatpush1.bf16.xpose.msra.mxu0 0
        %3405 = vmatprep.subr.bf16.mxu0 0
        %3406 = vmatpush1.bf16.xpose.msra.mxu0 0
        %3407 = vmatprep.subr.bf16.mxu0 0
        %3408 = vmatpush1.bf16.xpose.msra.mxu0 0
        %3409 = vmatprep.subr.bf16.mxu0 0
        %3410 = vmatpush1.bf16.xpose.msra.mxu0 0
        %3411 = vmatprep.subr.bf16.mxu0 0
        %3412 = vmatpush1.bf16.xpose.msra.mxu0 0
        %3413 = vmatprep.subr.bf16.mxu0 0
        %3414 = vmatpush1.bf16.xpose.msra.mxu0 0
        %3415 = vmatprep.subr.bf16.mxu0 0
        %3416 = vmatpush1.bf16.xpose.msra.mxu0 0
        %3417 = vmatprep.mubr.bf16.mxu0 0
        %3418 = vmatmul.mubr.bf16.gmra.mrb[0].mxu0 %v3380
        %v3419 = vpop.f32.mrb[0].mxu0
        %v3420 = vadd.f32 0.0, %v3419
        %v3421 = vpop.f32.mrb[0].mxu0
        %v3422 = vpop.f32.mrb[0].mxu0
        %v3423 = vadd.f32 0.0, %v3422
        %v3424 = vpop.f32.mrb[0].mxu0
        %3425 = vdwg.mxu0
        %v3427 = vsel %vm430, %v2364, 0
        %v3430 = vsel %vm430, %v2396, 0
        %3432 = vmatprep.subr.bf16.mxu0 0
        %3433 = vmatpush1.bf16.xpose.msra.mxu0 %v3430
        %3434 = vmatprep.subr.bf16.mxu0 0
        %3435 = vmatpush1.bf16.xpose.msra.mxu0 0
        %3436 = vmatprep.subr.bf16.mxu0 0
        %3437 = vmatpush1.bf16.xpose.msra.mxu0 0
        %3438 = vmatprep.subr.bf16.mxu0 0
        %3439 = vmatpush1.bf16.xpose.msra.mxu0 0
        %3440 = vmatprep.subr.bf16.mxu0 0
        %3441 = vmatpush1.bf16.xpose.msra.mxu0 0
        %3442 = vmatprep.subr.bf16.mxu0 0
        %3443 = vmatpush1.bf16.xpose.msra.mxu0 0
        %3444 = vmatprep.subr.bf16.mxu0 0
        %3445 = vmatpush1.bf16.xpose.msra.mxu0 0
        %3446 = vmatprep.subr.bf16.mxu0 0
        %3447 = vmatpush1.bf16.xpose.msra.mxu0 0
        %3448 = vmatprep.subr.bf16.mxu0 0
        %3449 = vmatpush1.bf16.xpose.msra.mxu0 0
        %3450 = vmatprep.subr.bf16.mxu0 0
        %3451 = vmatpush1.bf16.xpose.msra.mxu0 0
        %3452 = vmatprep.subr.bf16.mxu0 0
        %3453 = vmatpush1.bf16.xpose.msra.mxu0 0
        %3454 = vmatprep.subr.bf16.mxu0 0
        %3455 = vmatpush1.bf16.xpose.msra.mxu0 0
        %3456 = vmatprep.subr.bf16.mxu0 0
        %3457 = vmatpush1.bf16.xpose.msra.mxu0 0
        %3458 = vmatprep.subr.bf16.mxu0 0
        %3459 = vmatpush1.bf16.xpose.msra.mxu0 0
        %3460 = vmatprep.subr.bf16.mxu0 0
        %3461 = vmatpush1.bf16.xpose.msra.mxu0 0
        %3462 = vmatprep.subr.bf16.mxu0 0
        %3463 = vmatpush1.bf16.xpose.msra.mxu0 0
        %3464 = vmatprep.mubr.bf16.mxu0 0
        %3465 = vmatmul.mubr.bf16.gmra.mrb[0].mxu0 %v3427
        %v3466 = vpop.f32.mrb[0].mxu0
        %v3467 = vadd.f32 0.0, %v3466
        %v3468 = vpop.f32.mrb[0].mxu0
        %v3469 = vpop.f32.mrb[0].mxu0
        %v3470 = vadd.f32 0.0, %v3469
        %v3471 = vpop.f32.mrb[0].mxu0
        %3472 = vdwg.mxu0
        %v3474 = vsel %vm430, %v2365, 0
        %v3477 = vsel %vm430, %v2397, 0
        %3479 = vmatprep.subr.bf16.mxu0 0
        %3480 = vmatpush1.bf16.xpose.msra.mxu0 %v3477
        %3481 = vmatprep.subr.bf16.mxu0 0
        %3482 = vmatpush1.bf16.xpose.msra.mxu0 0
        %3483 = vmatprep.subr.bf16.mxu0 0
        %3484 = vmatpush1.bf16.xpose.msra.mxu0 0
        %3485 = vmatprep.subr.bf16.mxu0 0
        %3486 = vmatpush1.bf16.xpose.msra.mxu0 0
        %3487 = vmatprep.subr.bf16.mxu0 0
        %3488 = vmatpush1.bf16.xpose.msra.mxu0 0
        %3489 = vmatprep.subr.bf16.mxu0 0
        %3490 = vmatpush1.bf16.xpose.msra.mxu0 0
        %3491 = vmatprep.subr.bf16.mxu0 0
        %3492 = vmatpush1.bf16.xpose.msra.mxu0 0
        %3493 = vmatprep.subr.bf16.mxu0 0
        %3494 = vmatpush1.bf16.xpose.msra.mxu0 0
        %3495 = vmatprep.subr.bf16.mxu0 0
        %3496 = vmatpush1.bf16.xpose.msra.mxu0 0
        %3497 = vmatprep.subr.bf16.mxu0 0
        %3498 = vmatpush1.bf16.xpose.msra.mxu0 0
        %3499 = vmatprep.subr.bf16.mxu0 0
        %3500 = vmatpush1.bf16.xpose.msra.mxu0 0
        %3501 = vmatprep.subr.bf16.mxu0 0
        %3502 = vmatpush1.bf16.xpose.msra.mxu0 0
        %3503 = vmatprep.subr.bf16.mxu0 0
        %3504 = vmatpush1.bf16.xpose.msra.mxu0 0
        %3505 = vmatprep.subr.bf16.mxu0 0
        %3506 = vmatpush1.bf16.xpose.msra.mxu0 0
        %3507 = vmatprep.subr.bf16.mxu0 0
        %3508 = vmatpush1.bf16.xpose.msra.mxu0 0
        %3509 = vmatprep.subr.bf16.mxu0 0
        %3510 = vmatpush1.bf16.xpose.msra.mxu0 0
        %3511 = vmatprep.mubr.bf16.mxu0 0
        %3512 = vmatmul.mubr.bf16.gmra.mrb[0].mxu0 %v3474
        %v3513 = vpop.f32.mrb[0].mxu0
        %v3514 = vadd.f32 0.0, %v3513
        %v3515 = vpop.f32.mrb[0].mxu0
        %v3516 = vpop.f32.mrb[0].mxu0
        %v3517 = vadd.f32 0.0, %v3516
        %v3518 = vpop.f32.mrb[0].mxu0
        %3519 = vdwg.mxu0
        %v3521 = vsel %vm430, %v2366, 0
        %v3524 = vsel %vm430, %v2398, 0
        %3526 = vmatprep.subr.bf16.mxu0 0
        %3527 = vmatpush1.bf16.xpose.msra.mxu0 %v3524
        %3528 = vmatprep.subr.bf16.mxu0 0
        %3529 = vmatpush1.bf16.xpose.msra.mxu0 0
        %3530 = vmatprep.subr.bf16.mxu0 0
        %3531 = vmatpush1.bf16.xpose.msra.mxu0 0
        %3532 = vmatprep.subr.bf16.mxu0 0
        %3533 = vmatpush1.bf16.xpose.msra.mxu0 0
        %3534 = vmatprep.subr.bf16.mxu0 0
        %3535 = vmatpush1.bf16.xpose.msra.mxu0 0
        %3536 = vmatprep.subr.bf16.mxu0 0
        %3537 = vmatpush1.bf16.xpose.msra.mxu0 0
        %3538 = vmatprep.subr.bf16.mxu0 0
        %3539 = vmatpush1.bf16.xpose.msra.mxu0 0
        %3540 = vmatprep.subr.bf16.mxu0 0
        %3541 = vmatpush1.bf16.xpose.msra.mxu0 0
        %3542 = vmatprep.subr.bf16.mxu0 0
        %3543 = vmatpush1.bf16.xpose.msra.mxu0 0
        %3544 = vmatprep.subr.bf16.mxu0 0
        %3545 = vmatpush1.bf16.xpose.msra.mxu0 0
        %3546 = vmatprep.subr.bf16.mxu0 0
        %3547 = vmatpush1.bf16.xpose.msra.mxu0 0
        %3548 = vmatprep.subr.bf16.mxu0 0
        %3549 = vmatpush1.bf16.xpose.msra.mxu0 0
        %3550 = vmatprep.subr.bf16.mxu0 0
        %3551 = vmatpush1.bf16.xpose.msra.mxu0 0
        %3552 = vmatprep.subr.bf16.mxu0 0
        %3553 = vmatpush1.bf16.xpose.msra.mxu0 0
        %3554 = vmatprep.subr.bf16.mxu0 0
        %3555 = vmatpush1.bf16.xpose.msra.mxu0 0
        %3556 = vmatprep.subr.bf16.mxu0 0
        %3557 = vmatpush1.bf16.xpose.msra.mxu0 0
        %3558 = vmatprep.mubr.bf16.mxu0 0
        %3559 = vmatmul.mubr.bf16.gmra.mrb[0].mxu0 %v3521
        %v3560 = vpop.f32.mrb[0].mxu0
        %v3561 = vadd.f32 0.0, %v3560
        %v3562 = vpop.f32.mrb[0].mxu0
        %v3563 = vpop.f32.mrb[0].mxu0
        %v3564 = vadd.f32 0.0, %v3563
        %v3565 = vpop.f32.mrb[0].mxu0
        %3566 = vdwg.mxu0
        %v3568 = vsel %vm430, %v2367, 0
        %v3571 = vsel %vm430, %v2399, 0
        %3573 = vmatprep.subr.bf16.mxu0 0
        %3574 = vmatpush1.bf16.xpose.msra.mxu0 %v3571
        %3575 = vmatprep.subr.bf16.mxu0 0
        %3576 = vmatpush1.bf16.xpose.msra.mxu0 0
        %3577 = vmatprep.subr.bf16.mxu0 0
        %3578 = vmatpush1.bf16.xpose.msra.mxu0 0
        %3579 = vmatprep.subr.bf16.mxu0 0
        %3580 = vmatpush1.bf16.xpose.msra.mxu0 0
        %3581 = vmatprep.subr.bf16.mxu0 0
        %3582 = vmatpush1.bf16.xpose.msra.mxu0 0
        %3583 = vmatprep.subr.bf16.mxu0 0
        %3584 = vmatpush1.bf16.xpose.msra.mxu0 0
        %3585 = vmatprep.subr.bf16.mxu0 0
        %3586 = vmatpush1.bf16.xpose.msra.mxu0 0
        %3587 = vmatprep.subr.bf16.mxu0 0
        %3588 = vmatpush1.bf16.xpose.msra.mxu0 0
        %3589 = vmatprep.subr.bf16.mxu0 0
        %3590 = vmatpush1.bf16.xpose.msra.mxu0 0
        %3591 = vmatprep.subr.bf16.mxu0 0
        %3592 = vmatpush1.bf16.xpose.msra.mxu0 0
        %3593 = vmatprep.subr.bf16.mxu0 0
        %3594 = vmatpush1.bf16.xpose.msra.mxu0 0
        %3595 = vmatprep.subr.bf16.mxu0 0
        %3596 = vmatpush1.bf16.xpose.msra.mxu0 0
        %3597 = vmatprep.subr.bf16.mxu0 0
        %3598 = vmatpush1.bf16.xpose.msra.mxu0 0
        %3599 = vmatprep.subr.bf16.mxu0 0
        %3600 = vmatpush1.bf16.xpose.msra.mxu0 0
        %3601 = vmatprep.subr.bf16.mxu0 0
        %3602 = vmatpush1.bf16.xpose.msra.mxu0 0
        %3603 = vmatprep.subr.bf16.mxu0 0
        %3604 = vmatpush1.bf16.xpose.msra.mxu0 0
        %3605 = vmatprep.mubr.bf16.mxu0 0
        %3606 = vmatmul.mubr.bf16.gmra.mrb[0].mxu0 %v3568
        %v3607 = vpop.f32.mrb[0].mxu0
        %v3608 = vadd.f32 0.0, %v3607
        %v3609 = vpop.f32.mrb[0].mxu0
        %v3610 = vpop.f32.mrb[0].mxu0
        %v3611 = vadd.f32 0.0, %v3610
        %v3612 = vpop.f32.mrb[0].mxu0
        %3613 = vdwg.mxu0
        %v3615 = vsel %vm430, %v2368, 0
        %v3618 = vsel %vm430, %v2400, 0
        %3620 = vmatprep.subr.bf16.mxu0 0
        %3621 = vmatpush1.bf16.xpose.msra.mxu0 %v3618
        %3622 = vmatprep.subr.bf16.mxu0 0
        %3623 = vmatpush1.bf16.xpose.msra.mxu0 0
        %3624 = vmatprep.subr.bf16.mxu0 0
        %3625 = vmatpush1.bf16.xpose.msra.mxu0 0
        %3626 = vmatprep.subr.bf16.mxu0 0
        %3627 = vmatpush1.bf16.xpose.msra.mxu0 0
        %3628 = vmatprep.subr.bf16.mxu0 0
        %3629 = vmatpush1.bf16.xpose.msra.mxu0 0
        %3630 = vmatprep.subr.bf16.mxu0 0
        %3631 = vmatpush1.bf16.xpose.msra.mxu0 0
        %3632 = vmatprep.subr.bf16.mxu0 0
        %3633 = vmatpush1.bf16.xpose.msra.mxu0 0
        %3634 = vmatprep.subr.bf16.mxu0 0
        %3635 = vmatpush1.bf16.xpose.msra.mxu0 0
        %3636 = vmatprep.subr.bf16.mxu0 0
        %3637 = vmatpush1.bf16.xpose.msra.mxu0 0
        %3638 = vmatprep.subr.bf16.mxu0 0
        %3639 = vmatpush1.bf16.xpose.msra.mxu0 0
        %3640 = vmatprep.subr.bf16.mxu0 0
        %3641 = vmatpush1.bf16.xpose.msra.mxu0 0
        %3642 = vmatprep.subr.bf16.mxu0 0
        %3643 = vmatpush1.bf16.xpose.msra.mxu0 0
        %3644 = vmatprep.subr.bf16.mxu0 0
        %3645 = vmatpush1.bf16.xpose.msra.mxu0 0
        %3646 = vmatprep.subr.bf16.mxu0 0
        %3647 = vmatpush1.bf16.xpose.msra.mxu0 0
        %3648 = vmatprep.subr.bf16.mxu0 0
        %3649 = vmatpush1.bf16.xpose.msra.mxu0 0
        %3650 = vmatprep.subr.bf16.mxu0 0
        %3651 = vmatpush1.bf16.xpose.msra.mxu0 0
        %3652 = vmatprep.mubr.bf16.mxu0 0
        %3653 = vmatmul.mubr.bf16.gmra.mrb[0].mxu0 %v3615
        %v3654 = vpop.f32.mrb[0].mxu0
        %v3655 = vadd.f32 0.0, %v3654
        %v3656 = vpop.f32.mrb[0].mxu0
        %v3657 = vpop.f32.mrb[0].mxu0
        %v3658 = vadd.f32 0.0, %v3657
        %v3659 = vpop.f32.mrb[0].mxu0
        %3660 = vdwg.mxu0
        %v3662 = vsel %vm430, %v2369, 0
        %v3665 = vsel %vm430, %v2401, 0
        %3667 = vmatprep.subr.bf16.mxu0 0
        %3668 = vmatpush1.bf16.xpose.msra.mxu0 %v3665
        %3669 = vmatprep.subr.bf16.mxu0 0
        %3670 = vmatpush1.bf16.xpose.msra.mxu0 0
        %3671 = vmatprep.subr.bf16.mxu0 0
        %3672 = vmatpush1.bf16.xpose.msra.mxu0 0
        %3673 = vmatprep.subr.bf16.mxu0 0
        %3674 = vmatpush1.bf16.xpose.msra.mxu0 0
        %3675 = vmatprep.subr.bf16.mxu0 0
        %3676 = vmatpush1.bf16.xpose.msra.mxu0 0
        %3677 = vmatprep.subr.bf16.mxu0 0
        %3678 = vmatpush1.bf16.xpose.msra.mxu0 0
        %3679 = vmatprep.subr.bf16.mxu0 0
        %3680 = vmatpush1.bf16.xpose.msra.mxu0 0
        %3681 = vmatprep.subr.bf16.mxu0 0
        %3682 = vmatpush1.bf16.xpose.msra.mxu0 0
        %3683 = vmatprep.subr.bf16.mxu0 0
        %3684 = vmatpush1.bf16.xpose.msra.mxu0 0
        %3685 = vmatprep.subr.bf16.mxu0 0
        %3686 = vmatpush1.bf16.xpose.msra.mxu0 0
        %3687 = vmatprep.subr.bf16.mxu0 0
        %3688 = vmatpush1.bf16.xpose.msra.mxu0 0
        %3689 = vmatprep.subr.bf16.mxu0 0
        %3690 = vmatpush1.bf16.xpose.msra.mxu0 0
        %3691 = vmatprep.subr.bf16.mxu0 0
        %3692 = vmatpush1.bf16.xpose.msra.mxu0 0
        %3693 = vmatprep.subr.bf16.mxu0 0
        %3694 = vmatpush1.bf16.xpose.msra.mxu0 0
        %3695 = vmatprep.subr.bf16.mxu0 0
        %3696 = vmatpush1.bf16.xpose.msra.mxu0 0
        %3697 = vmatprep.subr.bf16.mxu0 0
        %3698 = vmatpush1.bf16.xpose.msra.mxu0 0
        %3699 = vmatprep.mubr.bf16.mxu0 0
        %3700 = vmatmul.mubr.bf16.gmra.mrb[0].mxu0 %v3662
        %v3701 = vpop.f32.mrb[0].mxu0
        %v3702 = vadd.f32 0.0, %v3701
        %v3703 = vpop.f32.mrb[0].mxu0
        %v3704 = vpop.f32.mrb[0].mxu0
        %v3705 = vadd.f32 0.0, %v3704
        %v3706 = vpop.f32.mrb[0].mxu0
        %3707 = vdwg.mxu0
        %v3709 = vsel %vm430, %v2370, 0
        %v3712 = vsel %vm430, %v2402, 0
        %3714 = vmatprep.subr.bf16.mxu0 0
        %3715 = vmatpush1.bf16.xpose.msra.mxu0 %v3712
        %3716 = vmatprep.subr.bf16.mxu0 0
        %3717 = vmatpush1.bf16.xpose.msra.mxu0 0
        %3718 = vmatprep.subr.bf16.mxu0 0
        %3719 = vmatpush1.bf16.xpose.msra.mxu0 0
        %3720 = vmatprep.subr.bf16.mxu0 0
        %3721 = vmatpush1.bf16.xpose.msra.mxu0 0
        %3722 = vmatprep.subr.bf16.mxu0 0
        %3723 = vmatpush1.bf16.xpose.msra.mxu0 0
        %3724 = vmatprep.subr.bf16.mxu0 0
        %3725 = vmatpush1.bf16.xpose.msra.mxu0 0
        %3726 = vmatprep.subr.bf16.mxu0 0
        %3727 = vmatpush1.bf16.xpose.msra.mxu0 0
        %3728 = vmatprep.subr.bf16.mxu0 0
        %3729 = vmatpush1.bf16.xpose.msra.mxu0 0
        %3730 = vmatprep.subr.bf16.mxu0 0
        %3731 = vmatpush1.bf16.xpose.msra.mxu0 0
        %3732 = vmatprep.subr.bf16.mxu0 0
        %3733 = vmatpush1.bf16.xpose.msra.mxu0 0
        %3734 = vmatprep.subr.bf16.mxu0 0
        %3735 = vmatpush1.bf16.xpose.msra.mxu0 0
        %3736 = vmatprep.subr.bf16.mxu0 0
        %3737 = vmatpush1.bf16.xpose.msra.mxu0 0
        %3738 = vmatprep.subr.bf16.mxu0 0
        %3739 = vmatpush1.bf16.xpose.msra.mxu0 0
        %3740 = vmatprep.subr.bf16.mxu0 0
        %3741 = vmatpush1.bf16.xpose.msra.mxu0 0
        %3742 = vmatprep.subr.bf16.mxu0 0
        %3743 = vmatpush1.bf16.xpose.msra.mxu0 0
        %3744 = vmatprep.subr.bf16.mxu0 0
        %3745 = vmatpush1.bf16.xpose.msra.mxu0 0
        %3746 = vmatprep.mubr.bf16.mxu0 0
        %3747 = vmatmul.mubr.bf16.gmra.mrb[0].mxu0 %v3709
        %v3748 = vpop.f32.mrb[0].mxu0
        %v3749 = vadd.f32 0.0, %v3748
        %v3750 = vpop.f32.mrb[0].mxu0
        %v3751 = vpop.f32.mrb[0].mxu0
        %v3752 = vadd.f32 0.0, %v3751
        %v3753 = vpop.f32.mrb[0].mxu0
        %3754 = vdwg.mxu0
        %v3756 = vsel %vm430, %v2371, 0
        %v3759 = vsel %vm430, %v2403, 0
        %3761 = vmatprep.subr.bf16.mxu0 0
        %3762 = vmatpush1.bf16.xpose.msra.mxu0 %v3759
        %3763 = vmatprep.subr.bf16.mxu0 0
        %3764 = vmatpush1.bf16.xpose.msra.mxu0 0
        %3765 = vmatprep.subr.bf16.mxu0 0
        %3766 = vmatpush1.bf16.xpose.msra.mxu0 0
        %3767 = vmatprep.subr.bf16.mxu0 0
        %3768 = vmatpush1.bf16.xpose.msra.mxu0 0
        %3769 = vmatprep.subr.bf16.mxu0 0
        %3770 = vmatpush1.bf16.xpose.msra.mxu0 0
        %3771 = vmatprep.subr.bf16.mxu0 0
        %3772 = vmatpush1.bf16.xpose.msra.mxu0 0
        %3773 = vmatprep.subr.bf16.mxu0 0
        %3774 = vmatpush1.bf16.xpose.msra.mxu0 0
        %3775 = vmatprep.subr.bf16.mxu0 0
        %3776 = vmatpush1.bf16.xpose.msra.mxu0 0
        %3777 = vmatprep.subr.bf16.mxu0 0
        %3778 = vmatpush1.bf16.xpose.msra.mxu0 0
        %3779 = vmatprep.subr.bf16.mxu0 0
        %3780 = vmatpush1.bf16.xpose.msra.mxu0 0
        %3781 = vmatprep.subr.bf16.mxu0 0
        %3782 = vmatpush1.bf16.xpose.msra.mxu0 0
        %3783 = vmatprep.subr.bf16.mxu0 0
        %3784 = vmatpush1.bf16.xpose.msra.mxu0 0
        %3785 = vmatprep.subr.bf16.mxu0 0
        %3786 = vmatpush1.bf16.xpose.msra.mxu0 0
        %3787 = vmatprep.subr.bf16.mxu0 0
        %3788 = vmatpush1.bf16.xpose.msra.mxu0 0
        %3789 = vmatprep.subr.bf16.mxu0 0
        %3790 = vmatpush1.bf16.xpose.msra.mxu0 0
        %3791 = vmatprep.subr.bf16.mxu0 0
        %3792 = vmatpush1.bf16.xpose.msra.mxu0 0
        %3793 = vmatprep.mubr.bf16.mxu0 0
        %3794 = vmatmul.mubr.bf16.gmra.mrb[0].mxu0 %v3756
        %v3795 = vpop.f32.mrb[0].mxu0
        %v3796 = vadd.f32 0.0, %v3795
        %v3797 = vpop.f32.mrb[0].mxu0
        %v3798 = vpop.f32.mrb[0].mxu0
        %v3799 = vadd.f32 0.0, %v3798
        %v3800 = vpop.f32.mrb[0].mxu0
        %3801 = vdwg.mxu0
        %v3803 = vsel %vm430, %v2372, 0
        %v3806 = vsel %vm430, %v2404, 0
        %3808 = vmatprep.subr.bf16.mxu0 0
        %3809 = vmatpush1.bf16.xpose.msra.mxu0 %v3806
        %3810 = vmatprep.subr.bf16.mxu0 0
        %3811 = vmatpush1.bf16.xpose.msra.mxu0 0
        %3812 = vmatprep.subr.bf16.mxu0 0
        %3813 = vmatpush1.bf16.xpose.msra.mxu0 0
        %3814 = vmatprep.subr.bf16.mxu0 0
        %3815 = vmatpush1.bf16.xpose.msra.mxu0 0
        %3816 = vmatprep.subr.bf16.mxu0 0
        %3817 = vmatpush1.bf16.xpose.msra.mxu0 0
        %3818 = vmatprep.subr.bf16.mxu0 0
        %3819 = vmatpush1.bf16.xpose.msra.mxu0 0
        %3820 = vmatprep.subr.bf16.mxu0 0
        %3821 = vmatpush1.bf16.xpose.msra.mxu0 0
        %3822 = vmatprep.subr.bf16.mxu0 0
        %3823 = vmatpush1.bf16.xpose.msra.mxu0 0
        %3824 = vmatprep.subr.bf16.mxu0 0
        %3825 = vmatpush1.bf16.xpose.msra.mxu0 0
        %3826 = vmatprep.subr.bf16.mxu0 0
        %3827 = vmatpush1.bf16.xpose.msra.mxu0 0
        %3828 = vmatprep.subr.bf16.mxu0 0
        %3829 = vmatpush1.bf16.xpose.msra.mxu0 0
        %3830 = vmatprep.subr.bf16.mxu0 0
        %3831 = vmatpush1.bf16.xpose.msra.mxu0 0
        %3832 = vmatprep.subr.bf16.mxu0 0
        %3833 = vmatpush1.bf16.xpose.msra.mxu0 0
        %3834 = vmatprep.subr.bf16.mxu0 0
        %3835 = vmatpush1.bf16.xpose.msra.mxu0 0
        %3836 = vmatprep.subr.bf16.mxu0 0
        %3837 = vmatpush1.bf16.xpose.msra.mxu0 0
        %3838 = vmatprep.subr.bf16.mxu0 0
        %3839 = vmatpush1.bf16.xpose.msra.mxu0 0
        %3840 = vmatprep.mubr.bf16.mxu0 0
        %3841 = vmatmul.mubr.bf16.gmra.mrb[0].mxu0 %v3803
        %v3842 = vpop.f32.mrb[0].mxu0
        %v3843 = vadd.f32 0.0, %v3842
        %v3844 = vpop.f32.mrb[0].mxu0
        %v3845 = vpop.f32.mrb[0].mxu0
        %v3846 = vadd.f32 0.0, %v3845
        %v3847 = vpop.f32.mrb[0].mxu0
        %3848 = vdwg.mxu0
        %v3850 = vsel %vm430, %v2373, 0
        %v3853 = vsel %vm430, %v2405, 0
        %3855 = vmatprep.subr.bf16.mxu0 0
        %3856 = vmatpush1.bf16.xpose.msra.mxu0 %v3853
        %3857 = vmatprep.subr.bf16.mxu0 0
        %3858 = vmatpush1.bf16.xpose.msra.mxu0 0
        %3859 = vmatprep.subr.bf16.mxu0 0
        %3860 = vmatpush1.bf16.xpose.msra.mxu0 0
        %3861 = vmatprep.subr.bf16.mxu0 0
        %3862 = vmatpush1.bf16.xpose.msra.mxu0 0
        %3863 = vmatprep.subr.bf16.mxu0 0
        %3864 = vmatpush1.bf16.xpose.msra.mxu0 0
        %3865 = vmatprep.subr.bf16.mxu0 0
        %3866 = vmatpush1.bf16.xpose.msra.mxu0 0
        %3867 = vmatprep.subr.bf16.mxu0 0
        %3868 = vmatpush1.bf16.xpose.msra.mxu0 0
        %3869 = vmatprep.subr.bf16.mxu0 0
        %3870 = vmatpush1.bf16.xpose.msra.mxu0 0
        %3871 = vmatprep.subr.bf16.mxu0 0
        %3872 = vmatpush1.bf16.xpose.msra.mxu0 0
        %3873 = vmatprep.subr.bf16.mxu0 0
        %3874 = vmatpush1.bf16.xpose.msra.mxu0 0
        %3875 = vmatprep.subr.bf16.mxu0 0
        %3876 = vmatpush1.bf16.xpose.msra.mxu0 0
        %3877 = vmatprep.subr.bf16.mxu0 0
        %3878 = vmatpush1.bf16.xpose.msra.mxu0 0
        %3879 = vmatprep.subr.bf16.mxu0 0
        %3880 = vmatpush1.bf16.xpose.msra.mxu0 0
        %3881 = vmatprep.subr.bf16.mxu0 0
        %3882 = vmatpush1.bf16.xpose.msra.mxu0 0
        %3883 = vmatprep.subr.bf16.mxu0 0
        %3884 = vmatpush1.bf16.xpose.msra.mxu0 0
        %3885 = vmatprep.subr.bf16.mxu0 0
        %3886 = vmatpush1.bf16.xpose.msra.mxu0 0
        %3887 = vmatprep.mubr.bf16.mxu0 0
        %3888 = vmatmul.mubr.bf16.gmra.mrb[0].mxu0 %v3850
        %v3889 = vpop.f32.mrb[0].mxu0
        %v3890 = vadd.f32 0.0, %v3889
        %v3891 = vpop.f32.mrb[0].mxu0
        %v3892 = vpop.f32.mrb[0].mxu0
        %v3893 = vadd.f32 0.0, %v3892
        %v3894 = vpop.f32.mrb[0].mxu0
        %3895 = vdwg.mxu0
        %v3897 = vsel %vm430, %v2374, 0
        %v3900 = vsel %vm430, %v2406, 0
        %3902 = vmatprep.subr.bf16.mxu0 0
        %3903 = vmatpush1.bf16.xpose.msra.mxu0 %v3900
        %3904 = vmatprep.subr.bf16.mxu0 0
        %3905 = vmatpush1.bf16.xpose.msra.mxu0 0
        %3906 = vmatprep.subr.bf16.mxu0 0
        %3907 = vmatpush1.bf16.xpose.msra.mxu0 0
        %3908 = vmatprep.subr.bf16.mxu0 0
        %3909 = vmatpush1.bf16.xpose.msra.mxu0 0
        %3910 = vmatprep.subr.bf16.mxu0 0
        %3911 = vmatpush1.bf16.xpose.msra.mxu0 0
        %3912 = vmatprep.subr.bf16.mxu0 0
        %3913 = vmatpush1.bf16.xpose.msra.mxu0 0
        %3914 = vmatprep.subr.bf16.mxu0 0
        %3915 = vmatpush1.bf16.xpose.msra.mxu0 0
        %3916 = vmatprep.subr.bf16.mxu0 0
        %3917 = vmatpush1.bf16.xpose.msra.mxu0 0
        %3918 = vmatprep.subr.bf16.mxu0 0
        %3919 = vmatpush1.bf16.xpose.msra.mxu0 0
        %3920 = vmatprep.subr.bf16.mxu0 0
        %3921 = vmatpush1.bf16.xpose.msra.mxu0 0
        %3922 = vmatprep.subr.bf16.mxu0 0
        %3923 = vmatpush1.bf16.xpose.msra.mxu0 0
        %3924 = vmatprep.subr.bf16.mxu0 0
        %3925 = vmatpush1.bf16.xpose.msra.mxu0 0
        %3926 = vmatprep.subr.bf16.mxu0 0
        %3927 = vmatpush1.bf16.xpose.msra.mxu0 0
        %3928 = vmatprep.subr.bf16.mxu0 0
        %3929 = vmatpush1.bf16.xpose.msra.mxu0 0
        %3930 = vmatprep.subr.bf16.mxu0 0
        %3931 = vmatpush1.bf16.xpose.msra.mxu0 0
        %3932 = vmatprep.subr.bf16.mxu0 0
        %3933 = vmatpush1.bf16.xpose.msra.mxu0 0
        %3934 = vmatprep.mubr.bf16.mxu0 0
        %3935 = vmatmul.mubr.bf16.gmra.mrb[0].mxu0 %v3897
        %v3936 = vpop.f32.mrb[0].mxu0
        %v3937 = vadd.f32 0.0, %v3936
        %v3938 = vpop.f32.mrb[0].mxu0
        %v3939 = vpop.f32.mrb[0].mxu0
        %v3940 = vadd.f32 0.0, %v3939
        %v3941 = vpop.f32.mrb[0].mxu0
        %3942 = vdwg.mxu0
        %v3943 = vld [vmem:[#allocation10] sm:$0xff]
        %v3944 = vld [vmem:[#allocation10 + $0x8] sm:$0xff]
        %v3945 = vld [vmem:[#allocation10 + $0x10] sm:$0xff]
        %v3946 = vld [vmem:[#allocation10 + $0x18] sm:$0xff]
        %v3947 = vld [vmem:[#allocation10 + $0x20] sm:$0xff]
        %v3948 = vld [vmem:[#allocation10 + $0x28] sm:$0xff]
        %v3949 = vld [vmem:[#allocation10 + $0x30] sm:$0xff]
        %v3950 = vld [vmem:[#allocation10 + $0x38] sm:$0xff]
        %v3951 = vld [vmem:[#allocation10 + $0x40] sm:$0xff]
        %v3952 = vld [vmem:[#allocation10 + $0x48] sm:$0xff]
        %v3953 = vld [vmem:[#allocation10 + $0x50] sm:$0xff]
        %v3954 = vld [vmem:[#allocation10 + $0x58] sm:$0xff]
        %v3955 = vld [vmem:[#allocation10 + $0x60] sm:$0xff]
        %v3956 = vld [vmem:[#allocation10 + $0x68] sm:$0xff]
        %v3957 = vld [vmem:[#allocation10 + $0x70] sm:$0xff]
        %v3958 = vld [vmem:[#allocation10 + $0x78] sm:$0xff]
        %v3959 = vadd.f32 %v2480, %v3943
        %v3960 = vadd.f32 %v2483, %v3944
        %v3961 = vadd.f32 %v2527, %v3943
        %v3962 = vadd.f32 %v2530, %v3944
        %v3963 = vadd.f32 %v2574, %v3943
        %v3964 = vadd.f32 %v2577, %v3944
        %v3965 = vadd.f32 %v2621, %v3943
        %v3966 = vadd.f32 %v2624, %v3944
        %v3967 = vadd.f32 %v2668, %v3945
        %v3968 = vadd.f32 %v2671, %v3946
        %v3969 = vadd.f32 %v2715, %v3945
        %v3970 = vadd.f32 %v2718, %v3946
        %v3971 = vadd.f32 %v2762, %v3945
        %v3972 = vadd.f32 %v2765, %v3946
        %v3973 = vadd.f32 %v2809, %v3945
        %v3974 = vadd.f32 %v2812, %v3946
        %v3975 = vadd.f32 %v2856, %v3947
        %v3976 = vadd.f32 %v2859, %v3948
        %v3977 = vadd.f32 %v2903, %v3947
        %v3978 = vadd.f32 %v2906, %v3948
        %v3979 = vadd.f32 %v2950, %v3947
        %v3980 = vadd.f32 %v2953, %v3948
        %v3981 = vadd.f32 %v2997, %v3947
        %v3982 = vadd.f32 %v3000, %v3948
        %v3983 = vadd.f32 %v3044, %v3949
        %v3984 = vadd.f32 %v3047, %v3950
        %v3985 = vadd.f32 %v3091, %v3949
        %v3986 = vadd.f32 %v3094, %v3950
        %v3987 = vadd.f32 %v3138, %v3949
        %v3988 = vadd.f32 %v3141, %v3950
        %v3989 = vadd.f32 %v3185, %v3949
        %v3990 = vadd.f32 %v3188, %v3950
        %v3991 = vadd.f32 %v3232, %v3951
        %v3992 = vadd.f32 %v3235, %v3952
        %v3993 = vadd.f32 %v3279, %v3951
        %v3994 = vadd.f32 %v3282, %v3952
        %v3995 = vadd.f32 %v3326, %v3951
        %v3996 = vadd.f32 %v3329, %v3952
        %v3997 = vadd.f32 %v3373, %v3951
        %v3998 = vadd.f32 %v3376, %v3952
        %v3999 = vadd.f32 %v3420, %v3953
        %v4000 = vadd.f32 %v3423, %v3954
        %v4001 = vadd.f32 %v3467, %v3953
        %v4002 = vadd.f32 %v3470, %v3954
        %v4003 = vadd.f32 %v3514, %v3953
        %v4004 = vadd.f32 %v3517, %v3954
        %v4005 = vadd.f32 %v3561, %v3953
        %v4006 = vadd.f32 %v3564, %v3954
        %v4007 = vadd.f32 %v3608, %v3955
        %v4008 = vadd.f32 %v3611, %v3956
        %v4009 = vadd.f32 %v3655, %v3955
        %v4010 = vadd.f32 %v3658, %v3956
        %v4011 = vadd.f32 %v3702, %v3955
        %v4012 = vadd.f32 %v3705, %v3956
        %v4013 = vadd.f32 %v3749, %v3955
        %v4014 = vadd.f32 %v3752, %v3956
        %v4015 = vadd.f32 %v3796, %v3957
        %v4016 = vadd.f32 %v3799, %v3958
        %v4017 = vadd.f32 %v3843, %v3957
        %v4018 = vadd.f32 %v3846, %v3958
        %v4019 = vadd.f32 %v3890, %v3957
        %v4020 = vadd.f32 %v3893, %v3958
        %v4021 = vadd.f32 %v3937, %v3957
        %v4022 = vadd.f32 %v3940, %v3958
        %vm4023 = vcmask 130048
        %v4024 = vsel %vm4023, %v3959, -inf
        %4025 = vmax.xlane.f32.xlu0 %v4024
        %v4026 = vpop.xlane.xlu0 %4025
        %v4027 = vsel %vm4023, %v3960, -inf
        %4028 = vmax.xlane.f32.xlu0 %v4027
        %v4029 = vpop.xlane.xlu0 %4028
        %v4030 = vsel %vm4023, %v3961, -inf
        %4031 = vmax.xlane.f32.xlu0 %v4030
        %v4032 = vpop.xlane.xlu0 %4031
        %v4033 = vsel %vm4023, %v3962, -inf
        %4034 = vmax.xlane.f32.xlu0 %v4033
        %v4035 = vpop.xlane.xlu0 %4034
        %v4036 = vsel %vm4023, %v3963, -inf
        %4037 = vmax.xlane.f32.xlu0 %v4036
        %v4038 = vpop.xlane.xlu0 %4037
        %v4039 = vsel %vm4023, %v3964, -inf
        %4040 = vmax.xlane.f32.xlu0 %v4039
        %v4041 = vpop.xlane.xlu0 %4040
        %v4042 = vsel %vm4023, %v3965, -inf
        %4043 = vmax.xlane.f32.xlu0 %v4042
        %v4044 = vpop.xlane.xlu0 %4043
        %v4045 = vsel %vm4023, %v3966, -inf
        %4046 = vmax.xlane.f32.xlu0 %v4045
        %v4047 = vpop.xlane.xlu0 %4046
        %v4048 = vsel %vm4023, %v3967, -inf
        %4049 = vmax.xlane.f32.xlu0 %v4048
        %v4050 = vpop.xlane.xlu0 %4049
        %v4051 = vsel %vm4023, %v3968, -inf
        %4052 = vmax.xlane.f32.xlu0 %v4051
        %v4053 = vpop.xlane.xlu0 %4052
        %v4054 = vsel %vm4023, %v3969, -inf
        %4055 = vmax.xlane.f32.xlu0 %v4054
        %v4056 = vpop.xlane.xlu0 %4055
        %v4057 = vsel %vm4023, %v3970, -inf
        %4058 = vmax.xlane.f32.xlu0 %v4057
        %v4059 = vpop.xlane.xlu0 %4058
        %v4060 = vsel %vm4023, %v3971, -inf
        %4061 = vmax.xlane.f32.xlu0 %v4060
        %v4062 = vpop.xlane.xlu0 %4061
        %v4063 = vsel %vm4023, %v3972, -inf
        %4064 = vmax.xlane.f32.xlu0 %v4063
        %v4065 = vpop.xlane.xlu0 %4064
        %v4066 = vsel %vm4023, %v3973, -inf
        %4067 = vmax.xlane.f32.xlu0 %v4066
        %v4068 = vpop.xlane.xlu0 %4067
        %v4069 = vsel %vm4023, %v3974, -inf
        %4070 = vmax.xlane.f32.xlu0 %v4069
        %v4071 = vpop.xlane.xlu0 %4070
        %v4072 = vsel %vm4023, %v3975, -inf
        %4073 = vmax.xlane.f32.xlu0 %v4072
        %v4074 = vpop.xlane.xlu0 %4073
        %v4075 = vsel %vm4023, %v3976, -inf
        %4076 = vmax.xlane.f32.xlu0 %v4075
        %v4077 = vpop.xlane.xlu0 %4076
        %v4078 = vsel %vm4023, %v3977, -inf
        %4079 = vmax.xlane.f32.xlu0 %v4078
        %v4080 = vpop.xlane.xlu0 %4079
        %v4081 = vsel %vm4023, %v3978, -inf
        %4082 = vmax.xlane.f32.xlu0 %v4081
        %v4083 = vpop.xlane.xlu0 %4082
        %v4084 = vsel %vm4023, %v3979, -inf
        %4085 = vmax.xlane.f32.xlu0 %v4084
        %v4086 = vpop.xlane.xlu0 %4085
        %v4087 = vsel %vm4023, %v3980, -inf
        %4088 = vmax.xlane.f32.xlu0 %v4087
        %v4089 = vpop.xlane.xlu0 %4088
        %v4090 = vsel %vm4023, %v3981, -inf
        %4091 = vmax.xlane.f32.xlu0 %v4090
        %v4092 = vpop.xlane.xlu0 %4091
        %v4093 = vsel %vm4023, %v3982, -inf
        %4094 = vmax.xlane.f32.xlu0 %v4093
        %v4095 = vpop.xlane.xlu0 %4094
        %v4096 = vsel %vm4023, %v3983, -inf
        %4097 = vmax.xlane.f32.xlu0 %v4096
        %v4098 = vpop.xlane.xlu0 %4097
        %v4099 = vsel %vm4023, %v3984, -inf
        %4100 = vmax.xlane.f32.xlu0 %v4099
        %v4101 = vpop.xlane.xlu0 %4100
        %v4102 = vsel %vm4023, %v3985, -inf
        %4103 = vmax.xlane.f32.xlu0 %v4102
        %v4104 = vpop.xlane.xlu0 %4103
        %v4105 = vsel %vm4023, %v3986, -inf
        %4106 = vmax.xlane.f32.xlu0 %v4105
        %v4107 = vpop.xlane.xlu0 %4106
        %v4108 = vsel %vm4023, %v3987, -inf
        %4109 = vmax.xlane.f32.xlu0 %v4108
        %v4110 = vpop.xlane.xlu0 %4109
        %v4111 = vsel %vm4023, %v3988, -inf
        %4112 = vmax.xlane.f32.xlu0 %v4111
        %v4113 = vpop.xlane.xlu0 %4112
        %v4114 = vsel %vm4023, %v3989, -inf
        %4115 = vmax.xlane.f32.xlu0 %v4114
        %v4116 = vpop.xlane.xlu0 %4115
        %v4117 = vsel %vm4023, %v3990, -inf
        %4118 = vmax.xlane.f32.xlu0 %v4117
        %v4119 = vpop.xlane.xlu0 %4118
        %v4120 = vsel %vm4023, %v3991, -inf
        %4121 = vmax.xlane.f32.xlu0 %v4120
        %v4122 = vpop.xlane.xlu0 %4121
        %v4123 = vsel %vm4023, %v3992, -inf
        %4124 = vmax.xlane.f32.xlu0 %v4123
        %v4125 = vpop.xlane.xlu0 %4124
        %v4126 = vsel %vm4023, %v3993, -inf
        %4127 = vmax.xlane.f32.xlu0 %v4126
        %v4128 = vpop.xlane.xlu0 %4127
        %v4129 = vsel %vm4023, %v3994, -inf
        %4130 = vmax.xlane.f32.xlu0 %v4129
        %v4131 = vpop.xlane.xlu0 %4130
        %v4132 = vsel %vm4023, %v3995, -inf
        %4133 = vmax.xlane.f32.xlu0 %v4132
        %v4134 = vpop.xlane.xlu0 %4133
        %v4135 = vsel %vm4023, %v3996, -inf
        %4136 = vmax.xlane.f32.xlu0 %v4135
        %v4137 = vpop.xlane.xlu0 %4136
        %v4138 = vsel %vm4023, %v3997, -inf
        %4139 = vmax.xlane.f32.xlu0 %v4138
        %v4140 = vpop.xlane.xlu0 %4139
        %v4141 = vsel %vm4023, %v3998, -inf
        %4142 = vmax.xlane.f32.xlu0 %v4141
        %v4143 = vpop.xlane.xlu0 %4142
        %v4144 = vsel %vm4023, %v3999, -inf
        %4145 = vmax.xlane.f32.xlu0 %v4144
        %v4146 = vpop.xlane.xlu0 %4145
        %v4147 = vsel %vm4023, %v4000, -inf
        %4148 = vmax.xlane.f32.xlu0 %v4147
        %v4149 = vpop.xlane.xlu0 %4148
        %v4150 = vsel %vm4023, %v4001, -inf
        %4151 = vmax.xlane.f32.xlu0 %v4150
        %v4152 = vpop.xlane.xlu0 %4151
        %v4153 = vsel %vm4023, %v4002, -inf
        %4154 = vmax.xlane.f32.xlu0 %v4153
        %v4155 = vpop.xlane.xlu0 %4154
        %v4156 = vsel %vm4023, %v4003, -inf
        %4157 = vmax.xlane.f32.xlu0 %v4156
        %v4158 = vpop.xlane.xlu0 %4157
        %v4159 = vsel %vm4023, %v4004, -inf
        %4160 = vmax.xlane.f32.xlu0 %v4159
        %v4161 = vpop.xlane.xlu0 %4160
        %v4162 = vsel %vm4023, %v4005, -inf
        %4163 = vmax.xlane.f32.xlu0 %v4162
        %v4164 = vpop.xlane.xlu0 %4163
        %v4165 = vsel %vm4023, %v4006, -inf
        %4166 = vmax.xlane.f32.xlu0 %v4165
        %v4167 = vpop.xlane.xlu0 %4166
        %v4168 = vsel %vm4023, %v4007, -inf
        %4169 = vmax.xlane.f32.xlu0 %v4168
        %v4170 = vpop.xlane.xlu0 %4169
        %v4171 = vsel %vm4023, %v4008, -inf
        %4172 = vmax.xlane.f32.xlu0 %v4171
        %v4173 = vpop.xlane.xlu0 %4172
        %v4174 = vsel %vm4023, %v4009, -inf
        %4175 = vmax.xlane.f32.xlu0 %v4174
        %v4176 = vpop.xlane.xlu0 %4175
        %v4177 = vsel %vm4023, %v4010, -inf
        %4178 = vmax.xlane.f32.xlu0 %v4177
        %v4179 = vpop.xlane.xlu0 %4178
        %v4180 = vsel %vm4023, %v4011, -inf
        %4181 = vmax.xlane.f32.xlu0 %v4180
        %v4182 = vpop.xlane.xlu0 %4181
        %v4183 = vsel %vm4023, %v4012, -inf
        %4184 = vmax.xlane.f32.xlu0 %v4183
        %v4185 = vpop.xlane.xlu0 %4184
        %v4186 = vsel %vm4023, %v4013, -inf
        %4187 = vmax.xlane.f32.xlu0 %v4186
        %v4188 = vpop.xlane.xlu0 %4187
        %v4189 = vsel %vm4023, %v4014, -inf
        %4190 = vmax.xlane.f32.xlu0 %v4189
        %v4191 = vpop.xlane.xlu0 %4190
        %v4192 = vsel %vm4023, %v4015, -inf
        %4193 = vmax.xlane.f32.xlu0 %v4192
        %v4194 = vpop.xlane.xlu0 %4193
        %v4195 = vsel %vm4023, %v4016, -inf
        %4196 = vmax.xlane.f32.xlu0 %v4195
        %v4197 = vpop.xlane.xlu0 %4196
        %v4198 = vsel %vm4023, %v4017, -inf
        %4199 = vmax.xlane.f32.xlu0 %v4198
        %v4200 = vpop.xlane.xlu0 %4199
        %v4201 = vsel %vm4023, %v4018, -inf
        %4202 = vmax.xlane.f32.xlu0 %v4201
        %v4203 = vpop.xlane.xlu0 %4202
        %v4204 = vsel %vm4023, %v4019, -inf
        %4205 = vmax.xlane.f32.xlu0 %v4204
        %v4206 = vpop.xlane.xlu0 %4205
        %v4207 = vsel %vm4023, %v4020, -inf
        %4208 = vmax.xlane.f32.xlu0 %v4207
        %v4209 = vpop.xlane.xlu0 %4208
        %v4210 = vsel %vm4023, %v4021, -inf
        %4211 = vmax.xlane.f32.xlu0 %v4210
        %v4212 = vpop.xlane.xlu0 %4211
        %v4213 = vsel %vm4023, %v4022, -inf
        %4214 = vmax.xlane.f32.xlu0 %v4213
        %v4215 = vpop.xlane.xlu0 %4214
        %v4216 = vsub.f32 %v3959, %v4026
        %v4217 = vsub.f32 %v3960, %v4029
        %v4218 = vsub.f32 %v3961, %v4032
        %v4219 = vsub.f32 %v3962, %v4035
        %v4220 = vsub.f32 %v3963, %v4038
        %v4221 = vsub.f32 %v3964, %v4041
        %v4222 = vsub.f32 %v3965, %v4044
        %v4223 = vsub.f32 %v3966, %v4047
        %v4224 = vsub.f32 %v3967, %v4050
        %v4225 = vsub.f32 %v3968, %v4053
        %v4226 = vsub.f32 %v3969, %v4056
        %v4227 = vsub.f32 %v3970, %v4059
        %v4228 = vsub.f32 %v3971, %v4062
        %v4229 = vsub.f32 %v3972, %v4065
        %v4230 = vsub.f32 %v3973, %v4068
        %v4231 = vsub.f32 %v3974, %v4071
        %v4232 = vsub.f32 %v3975, %v4074
        %v4233 = vsub.f32 %v3976, %v4077
        %v4234 = vsub.f32 %v3977, %v4080
        %v4235 = vsub.f32 %v3978, %v4083
        %v4236 = vsub.f32 %v3979, %v4086
        %v4237 = vsub.f32 %v3980, %v4089
        %v4238 = vsub.f32 %v3981, %v4092
        %v4239 = vsub.f32 %v3982, %v4095
        %v4240 = vsub.f32 %v3983, %v4098
        %v4241 = vsub.f32 %v3984, %v4101
        %v4242 = vsub.f32 %v3985, %v4104
        %v4243 = vsub.f32 %v3986, %v4107
        %v4244 = vsub.f32 %v3987, %v4110
        %v4245 = vsub.f32 %v3988, %v4113
        %v4246 = vsub.f32 %v3989, %v4116
        %v4247 = vsub.f32 %v3990, %v4119
        %v4248 = vsub.f32 %v3991, %v4122
        %v4249 = vsub.f32 %v3992, %v4125
        %v4250 = vsub.f32 %v3993, %v4128
        %v4251 = vsub.f32 %v3994, %v4131
        %v4252 = vsub.f32 %v3995, %v4134
        %v4253 = vsub.f32 %v3996, %v4137
        %v4254 = vsub.f32 %v3997, %v4140
        %v4255 = vsub.f32 %v3998, %v4143
        %v4256 = vsub.f32 %v3999, %v4146
        %v4257 = vsub.f32 %v4000, %v4149
        %v4258 = vsub.f32 %v4001, %v4152
        %v4259 = vsub.f32 %v4002, %v4155
        %v4260 = vsub.f32 %v4003, %v4158
        %v4261 = vsub.f32 %v4004, %v4161
        %v4262 = vsub.f32 %v4005, %v4164
        %v4263 = vsub.f32 %v4006, %v4167
        %v4264 = vsub.f32 %v4007, %v4170
        %v4265 = vsub.f32 %v4008, %v4173
        %v4266 = vsub.f32 %v4009, %v4176
        %v4267 = vsub.f32 %v4010, %v4179
        %v4268 = vsub.f32 %v4011, %v4182
        %v4269 = vsub.f32 %v4012, %v4185
        %v4270 = vsub.f32 %v4013, %v4188
        %v4271 = vsub.f32 %v4014, %v4191
        %v4272 = vsub.f32 %v4015, %v4194
        %v4273 = vsub.f32 %v4016, %v4197
        %v4274 = vsub.f32 %v4017, %v4200
        %v4275 = vsub.f32 %v4018, %v4203
        %v4276 = vsub.f32 %v4019, %v4206
        %v4277 = vsub.f32 %v4020, %v4209
        %v4278 = vsub.f32 %v4021, %v4212
        %v4279 = vsub.f32 %v4022, %v4215
        %v4280 = vmul.f32 %v4216, 1.442695
        %v4281 = vpow.pop %v4280
        %v4282 = vmul.f32 %v4217, 1.442695
        %v4283 = vpow.pop %v4282
        %v4284 = vmul.f32 %v4218, 1.442695
        %v4285 = vpow.pop %v4284
        %v4286 = vmul.f32 %v4219, 1.442695
        %v4287 = vpow.pop %v4286
        %v4288 = vmul.f32 %v4220, 1.442695
        %v4289 = vpow.pop %v4288
        %v4290 = vmul.f32 %v4221, 1.442695
        %v4291 = vpow.pop %v4290
        %v4292 = vmul.f32 %v4222, 1.442695
        %v4293 = vpow.pop %v4292
        %v4294 = vmul.f32 %v4223, 1.442695
        %v4295 = vpow.pop %v4294
        %v4296 = vmul.f32 %v4224, 1.442695
        %v4297 = vpow.pop %v4296
        %v4298 = vmul.f32 %v4225, 1.442695
        %v4299 = vpow.pop %v4298
        %v4300 = vmul.f32 %v4226, 1.442695
        %v4301 = vpow.pop %v4300
        %v4302 = vmul.f32 %v4227, 1.442695
        %v4303 = vpow.pop %v4302
        %v4304 = vmul.f32 %v4228, 1.442695
        %v4305 = vpow.pop %v4304
        %v4306 = vmul.f32 %v4229, 1.442695
        %v4307 = vpow.pop %v4306
        %v4308 = vmul.f32 %v4230, 1.442695
        %v4309 = vpow.pop %v4308
        %v4310 = vmul.f32 %v4231, 1.442695
        %v4311 = vpow.pop %v4310
        %v4312 = vmul.f32 %v4232, 1.442695
        %v4313 = vpow.pop %v4312
        %v4314 = vmul.f32 %v4233, 1.442695
        %v4315 = vpow.pop %v4314
        %v4316 = vmul.f32 %v4234, 1.442695
        %v4317 = vpow.pop %v4316
        %v4318 = vmul.f32 %v4235, 1.442695
        %v4319 = vpow.pop %v4318
        %v4320 = vmul.f32 %v4236, 1.442695
        %v4321 = vpow.pop %v4320
        %v4322 = vmul.f32 %v4237, 1.442695
        %v4323 = vpow.pop %v4322
        %v4324 = vmul.f32 %v4238, 1.442695
        %v4325 = vpow.pop %v4324
        %v4326 = vmul.f32 %v4239, 1.442695
        %v4327 = vpow.pop %v4326
        %v4328 = vmul.f32 %v4240, 1.442695
        %v4329 = vpow.pop %v4328
        %v4330 = vmul.f32 %v4241, 1.442695
        %v4331 = vpow.pop %v4330
        %v4332 = vmul.f32 %v4242, 1.442695
        %v4333 = vpow.pop %v4332
        %v4334 = vmul.f32 %v4243, 1.442695
        %v4335 = vpow.pop %v4334
        %v4336 = vmul.f32 %v4244, 1.442695
        %v4337 = vpow.pop %v4336
        %v4338 = vmul.f32 %v4245, 1.442695
        %v4339 = vpow.pop %v4338
        %v4340 = vmul.f32 %v4246, 1.442695
        %v4341 = vpow.pop %v4340
        %v4342 = vmul.f32 %v4247, 1.442695
        %v4343 = vpow.pop %v4342
        %v4344 = vmul.f32 %v4248, 1.442695
        %v4345 = vpow.pop %v4344
        %v4346 = vmul.f32 %v4249, 1.442695
        %v4347 = vpow.pop %v4346
        %v4348 = vmul.f32 %v4250, 1.442695
        %v4349 = vpow.pop %v4348
        %v4350 = vmul.f32 %v4251, 1.442695
        %v4351 = vpow.pop %v4350
        %v4352 = vmul.f32 %v4252, 1.442695
        %v4353 = vpow.pop %v4352
        %v4354 = vmul.f32 %v4253, 1.442695
        %v4355 = vpow.pop %v4354
        %v4356 = vmul.f32 %v4254, 1.442695
        %v4357 = vpow.pop %v4356
        %v4358 = vmul.f32 %v4255, 1.442695
        %v4359 = vpow.pop %v4358
        %v4360 = vmul.f32 %v4256, 1.442695
        %v4361 = vpow.pop %v4360
        %v4362 = vmul.f32 %v4257, 1.442695
        %v4363 = vpow.pop %v4362
        %v4364 = vmul.f32 %v4258, 1.442695
        %v4365 = vpow.pop %v4364
        %v4366 = vmul.f32 %v4259, 1.442695
        %v4367 = vpow.pop %v4366
        %v4368 = vmul.f32 %v4260, 1.442695
        %v4369 = vpow.pop %v4368
        %v4370 = vmul.f32 %v4261, 1.442695
        %v4371 = vpow.pop %v4370
        %v4372 = vmul.f32 %v4262, 1.442695
        %v4373 = vpow.pop %v4372
        %v4374 = vmul.f32 %v4263, 1.442695
        %v4375 = vpow.pop %v4374
        %v4376 = vmul.f32 %v4264, 1.442695
        %v4377 = vpow.pop %v4376
        %v4378 = vmul.f32 %v4265, 1.442695
        %v4379 = vpow.pop %v4378
        %v4380 = vmul.f32 %v4266, 1.442695
        %v4381 = vpow.pop %v4380
        %v4382 = vmul.f32 %v4267, 1.442695
        %v4383 = vpow.pop %v4382
        %v4384 = vmul.f32 %v4268, 1.442695
        %v4385 = vpow.pop %v4384
        %v4386 = vmul.f32 %v4269, 1.442695
        %v4387 = vpow.pop %v4386
        %v4388 = vmul.f32 %v4270, 1.442695
        %v4389 = vpow.pop %v4388
        %v4390 = vmul.f32 %v4271, 1.442695
        %v4391 = vpow.pop %v4390
        %v4392 = vmul.f32 %v4272, 1.442695
        %v4393 = vpow.pop %v4392
        %v4394 = vmul.f32 %v4273, 1.442695
        %v4395 = vpow.pop %v4394
        %v4396 = vmul.f32 %v4274, 1.442695
        %v4397 = vpow.pop %v4396
        %v4398 = vmul.f32 %v4275, 1.442695
        %v4399 = vpow.pop %v4398
        %v4400 = vmul.f32 %v4276, 1.442695
        %v4401 = vpow.pop %v4400
        %v4402 = vmul.f32 %v4277, 1.442695
        %v4403 = vpow.pop %v4402
        %v4404 = vmul.f32 %v4278, 1.442695
        %v4405 = vpow.pop %v4404
        %v4406 = vmul.f32 %v4279, 1.442695
        %v4407 = vpow.pop %v4406
        %v4408 = vsel %vm4023, %v4281, 0.0
        %4409 = vadd.xlane.f32.xlu0 %v4408
        %v4410 = vpop.xlane.xlu0 %4409
        %v4411 = vsel %vm4023, %v4283, 0.0
        %4412 = vadd.xlane.f32.xlu0 %v4411
        %v4413 = vpop.xlane.xlu0 %4412
        %v4414 = vsel %vm4023, %v4285, 0.0
        %4415 = vadd.xlane.f32.xlu0 %v4414
        %v4416 = vpop.xlane.xlu0 %4415
        %v4417 = vsel %vm4023, %v4287, 0.0
        %4418 = vadd.xlane.f32.xlu0 %v4417
        %v4419 = vpop.xlane.xlu0 %4418
        %v4420 = vsel %vm4023, %v4289, 0.0
        %4421 = vadd.xlane.f32.xlu0 %v4420
        %v4422 = vpop.xlane.xlu0 %4421
        %v4423 = vsel %vm4023, %v4291, 0.0
        %4424 = vadd.xlane.f32.xlu0 %v4423
        %v4425 = vpop.xlane.xlu0 %4424
        %v4426 = vsel %vm4023, %v4293, 0.0
        %4427 = vadd.xlane.f32.xlu0 %v4426
        %v4428 = vpop.xlane.xlu0 %4427
        %v4429 = vsel %vm4023, %v4295, 0.0
        %4430 = vadd.xlane.f32.xlu0 %v4429
        %v4431 = vpop.xlane.xlu0 %4430
        %v4432 = vsel %vm4023, %v4297, 0.0
        %4433 = vadd.xlane.f32.xlu0 %v4432
        %v4434 = vpop.xlane.xlu0 %4433
        %v4435 = vsel %vm4023, %v4299, 0.0
        %4436 = vadd.xlane.f32.xlu0 %v4435
        %v4437 = vpop.xlane.xlu0 %4436
        %v4438 = vsel %vm4023, %v4301, 0.0
        %4439 = vadd.xlane.f32.xlu0 %v4438
        %v4440 = vpop.xlane.xlu0 %4439
        %v4441 = vsel %vm4023, %v4303, 0.0
        %4442 = vadd.xlane.f32.xlu0 %v4441
        %v4443 = vpop.xlane.xlu0 %4442
        %v4444 = vsel %vm4023, %v4305, 0.0
        %4445 = vadd.xlane.f32.xlu0 %v4444
        %v4446 = vpop.xlane.xlu0 %4445
        %v4447 = vsel %vm4023, %v4307, 0.0
        %4448 = vadd.xlane.f32.xlu0 %v4447
        %v4449 = vpop.xlane.xlu0 %4448
        %v4450 = vsel %vm4023, %v4309, 0.0
        %4451 = vadd.xlane.f32.xlu0 %v4450
        %v4452 = vpop.xlane.xlu0 %4451
        %v4453 = vsel %vm4023, %v4311, 0.0
        %4454 = vadd.xlane.f32.xlu0 %v4453
        %v4455 = vpop.xlane.xlu0 %4454
        %v4456 = vsel %vm4023, %v4313, 0.0
        %4457 = vadd.xlane.f32.xlu0 %v4456
        %v4458 = vpop.xlane.xlu0 %4457
        %v4459 = vsel %vm4023, %v4315, 0.0
        %4460 = vadd.xlane.f32.xlu0 %v4459
        %v4461 = vpop.xlane.xlu0 %4460
        %v4462 = vsel %vm4023, %v4317, 0.0
        %4463 = vadd.xlane.f32.xlu0 %v4462
        %v4464 = vpop.xlane.xlu0 %4463
        %v4465 = vsel %vm4023, %v4319, 0.0
        %4466 = vadd.xlane.f32.xlu0 %v4465
        %v4467 = vpop.xlane.xlu0 %4466
        %v4468 = vsel %vm4023, %v4321, 0.0
        %4469 = vadd.xlane.f32.xlu0 %v4468
        %v4470 = vpop.xlane.xlu0 %4469
        %v4471 = vsel %vm4023, %v4323, 0.0
        %4472 = vadd.xlane.f32.xlu0 %v4471
        %v4473 = vpop.xlane.xlu0 %4472
        %v4474 = vsel %vm4023, %v4325, 0.0
        %4475 = vadd.xlane.f32.xlu0 %v4474
        %v4476 = vpop.xlane.xlu0 %4475
        %v4477 = vsel %vm4023, %v4327, 0.0
        %4478 = vadd.xlane.f32.xlu0 %v4477
        %v4479 = vpop.xlane.xlu0 %4478
        %v4480 = vsel %vm4023, %v4329, 0.0
        %4481 = vadd.xlane.f32.xlu0 %v4480
        %v4482 = vpop.xlane.xlu0 %4481
        %v4483 = vsel %vm4023, %v4331, 0.0
        %4484 = vadd.xlane.f32.xlu0 %v4483
        %v4485 = vpop.xlane.xlu0 %4484
        %v4486 = vsel %vm4023, %v4333, 0.0
        %4487 = vadd.xlane.f32.xlu0 %v4486
        %v4488 = vpop.xlane.xlu0 %4487
        %v4489 = vsel %vm4023, %v4335, 0.0
        %4490 = vadd.xlane.f32.xlu0 %v4489
        %v4491 = vpop.xlane.xlu0 %4490
        %v4492 = vsel %vm4023, %v4337, 0.0
        %4493 = vadd.xlane.f32.xlu0 %v4492
        %v4494 = vpop.xlane.xlu0 %4493
        %v4495 = vsel %vm4023, %v4339, 0.0
        %4496 = vadd.xlane.f32.xlu0 %v4495
        %v4497 = vpop.xlane.xlu0 %4496
        %v4498 = vsel %vm4023, %v4341, 0.0
        %4499 = vadd.xlane.f32.xlu0 %v4498
        %v4500 = vpop.xlane.xlu0 %4499
        %v4501 = vsel %vm4023, %v4343, 0.0
        %4502 = vadd.xlane.f32.xlu0 %v4501
        %v4503 = vpop.xlane.xlu0 %4502
        %v4504 = vsel %vm4023, %v4345, 0.0
        %4505 = vadd.xlane.f32.xlu0 %v4504
        %v4506 = vpop.xlane.xlu0 %4505
        %v4507 = vsel %vm4023, %v4347, 0.0
        %4508 = vadd.xlane.f32.xlu0 %v4507
        %v4509 = vpop.xlane.xlu0 %4508
        %v4510 = vsel %vm4023, %v4349, 0.0
        %4511 = vadd.xlane.f32.xlu0 %v4510
        %v4512 = vpop.xlane.xlu0 %4511
        %v4513 = vsel %vm4023, %v4351, 0.0
        %4514 = vadd.xlane.f32.xlu0 %v4513
        %v4515 = vpop.xlane.xlu0 %4514
        %v4516 = vsel %vm4023, %v4353, 0.0
        %4517 = vadd.xlane.f32.xlu0 %v4516
        %v4518 = vpop.xlane.xlu0 %4517
        %v4519 = vsel %vm4023, %v4355, 0.0
        %4520 = vadd.xlane.f32.xlu0 %v4519
        %v4521 = vpop.xlane.xlu0 %4520
        %v4522 = vsel %vm4023, %v4357, 0.0
        %4523 = vadd.xlane.f32.xlu0 %v4522
        %v4524 = vpop.xlane.xlu0 %4523
        %v4525 = vsel %vm4023, %v4359, 0.0
        %4526 = vadd.xlane.f32.xlu0 %v4525
        %v4527 = vpop.xlane.xlu0 %4526
        %v4528 = vsel %vm4023, %v4361, 0.0
        %4529 = vadd.xlane.f32.xlu0 %v4528
        %v4530 = vpop.xlane.xlu0 %4529
        %v4531 = vsel %vm4023, %v4363, 0.0
        %4532 = vadd.xlane.f32.xlu0 %v4531
        %v4533 = vpop.xlane.xlu0 %4532
        %v4534 = vsel %vm4023, %v4365, 0.0
        %4535 = vadd.xlane.f32.xlu0 %v4534
        %v4536 = vpop.xlane.xlu0 %4535
        %v4537 = vsel %vm4023, %v4367, 0.0
        %4538 = vadd.xlane.f32.xlu0 %v4537
        %v4539 = vpop.xlane.xlu0 %4538
        %v4540 = vsel %vm4023, %v4369, 0.0
        %4541 = vadd.xlane.f32.xlu0 %v4540
        %v4542 = vpop.xlane.xlu0 %4541
        %v4543 = vsel %vm4023, %v4371, 0.0
        %4544 = vadd.xlane.f32.xlu0 %v4543
        %v4545 = vpop.xlane.xlu0 %4544
        %v4546 = vsel %vm4023, %v4373, 0.0
        %4547 = vadd.xlane.f32.xlu0 %v4546
        %v4548 = vpop.xlane.xlu0 %4547
        %v4549 = vsel %vm4023, %v4375, 0.0
        %4550 = vadd.xlane.f32.xlu0 %v4549
        %v4551 = vpop.xlane.xlu0 %4550
        %v4552 = vsel %vm4023, %v4377, 0.0
        %4553 = vadd.xlane.f32.xlu0 %v4552
        %v4554 = vpop.xlane.xlu0 %4553
        %v4555 = vsel %vm4023, %v4379, 0.0
        %4556 = vadd.xlane.f32.xlu0 %v4555
        %v4557 = vpop.xlane.xlu0 %4556
        %v4558 = vsel %vm4023, %v4381, 0.0
        %4559 = vadd.xlane.f32.xlu0 %v4558
        %v4560 = vpop.xlane.xlu0 %4559
        %v4561 = vsel %vm4023, %v4383, 0.0
        %4562 = vadd.xlane.f32.xlu0 %v4561
        %v4563 = vpop.xlane.xlu0 %4562
        %v4564 = vsel %vm4023, %v4385, 0.0
        %4565 = vadd.xlane.f32.xlu0 %v4564
        %v4566 = vpop.xlane.xlu0 %4565
        %v4567 = vsel %vm4023, %v4387, 0.0
        %4568 = vadd.xlane.f32.xlu0 %v4567
        %v4569 = vpop.xlane.xlu0 %4568
        %v4570 = vsel %vm4023, %v4389, 0.0
        %4571 = vadd.xlane.f32.xlu0 %v4570
        %v4572 = vpop.xlane.xlu0 %4571
        %v4573 = vsel %vm4023, %v4391, 0.0
        %4574 = vadd.xlane.f32.xlu0 %v4573
        %v4575 = vpop.xlane.xlu0 %4574
        %v4576 = vsel %vm4023, %v4393, 0.0
        %4577 = vadd.xlane.f32.xlu0 %v4576
        %v4578 = vpop.xlane.xlu0 %4577
        %v4579 = vsel %vm4023, %v4395, 0.0
        %4580 = vadd.xlane.f32.xlu0 %v4579
        %v4581 = vpop.xlane.xlu0 %4580
        %v4582 = vsel %vm4023, %v4397, 0.0
        %4583 = vadd.xlane.f32.xlu0 %v4582
        %v4584 = vpop.xlane.xlu0 %4583
        %v4585 = vsel %vm4023, %v4399, 0.0
        %4586 = vadd.xlane.f32.xlu0 %v4585
        %v4587 = vpop.xlane.xlu0 %4586
        %v4588 = vsel %vm4023, %v4401, 0.0
        %4589 = vadd.xlane.f32.xlu0 %v4588
        %v4590 = vpop.xlane.xlu0 %4589
        %v4591 = vsel %vm4023, %v4403, 0.0
        %4592 = vadd.xlane.f32.xlu0 %v4591
        %v4593 = vpop.xlane.xlu0 %4592
        %v4594 = vsel %vm4023, %v4405, 0.0
        %4595 = vadd.xlane.f32.xlu0 %v4594
        %v4596 = vpop.xlane.xlu0 %4595
        %v4597 = vsel %vm4023, %v4407, 0.0
        %4598 = vadd.xlane.f32.xlu0 %v4597
        %v4599 = vpop.xlane.xlu0 %4598
        %v4600 = vrcp.pop %v4410
        %v4601 = vrcp.pop %v4413
        %v4602 = vrcp.pop %v4416
        %v4603 = vrcp.pop %v4419
        %v4604 = vrcp.pop %v4422
        %v4605 = vrcp.pop %v4425
        %v4606 = vrcp.pop %v4428
        %v4607 = vrcp.pop %v4431
        %v4608 = vrcp.pop %v4434
        %v4609 = vrcp.pop %v4437
        %v4610 = vrcp.pop %v4440
        %v4611 = vrcp.pop %v4443
        %v4612 = vrcp.pop %v4446
        %v4613 = vrcp.pop %v4449
        %v4614 = vrcp.pop %v4452
        %v4615 = vrcp.pop %v4455
        %v4616 = vrcp.pop %v4458
        %v4617 = vrcp.pop %v4461
        %v4618 = vrcp.pop %v4464
        %v4619 = vrcp.pop %v4467
        %v4620 = vrcp.pop %v4470
        %v4621 = vrcp.pop %v4473
        %v4622 = vrcp.pop %v4476
        %v4623 = vrcp.pop %v4479
        %v4624 = vrcp.pop %v4482
        %v4625 = vrcp.pop %v4485
        %v4626 = vrcp.pop %v4488
        %v4627 = vrcp.pop %v4491
        %v4628 = vrcp.pop %v4494
        %v4629 = vrcp.pop %v4497
        %v4630 = vrcp.pop %v4500
        %v4631 = vrcp.pop %v4503
        %v4632 = vrcp.pop %v4506
        %v4633 = vrcp.pop %v4509
        %v4634 = vrcp.pop %v4512
        %v4635 = vrcp.pop %v4515
        %v4636 = vrcp.pop %v4518
        %v4637 = vrcp.pop %v4521
        %v4638 = vrcp.pop %v4524
        %v4639 = vrcp.pop %v4527
        %v4640 = vrcp.pop %v4530
        %v4641 = vrcp.pop %v4533
        %v4642 = vrcp.pop %v4536
        %v4643 = vrcp.pop %v4539
        %v4644 = vrcp.pop %v4542
        %v4645 = vrcp.pop %v4545
        %v4646 = vrcp.pop %v4548
        %v4647 = vrcp.pop %v4551
        %v4648 = vrcp.pop %v4554
        %v4649 = vrcp.pop %v4557
        %v4650 = vrcp.pop %v4560
        %v4651 = vrcp.pop %v4563
        %v4652 = vrcp.pop %v4566
        %v4653 = vrcp.pop %v4569
        %v4654 = vrcp.pop %v4572
        %v4655 = vrcp.pop %v4575
        %v4656 = vrcp.pop %v4578
        %v4657 = vrcp.pop %v4581
        %v4658 = vrcp.pop %v4584
        %v4659 = vrcp.pop %v4587
        %v4660 = vrcp.pop %v4590
        %v4661 = vrcp.pop %v4593
        %v4662 = vrcp.pop %v4596
        %v4663 = vrcp.pop %v4599
        %v4664 = vmul.f32 %v4281, %v4600
        %v4665 = vmul.f32 %v4283, %v4601
        %v4666 = vmul.f32 %v4285, %v4602
        %v4667 = vmul.f32 %v4287, %v4603
        %v4668 = vmul.f32 %v4289, %v4604
        %v4669 = vmul.f32 %v4291, %v4605
        %v4670 = vmul.f32 %v4293, %v4606
        %v4671 = vmul.f32 %v4295, %v4607
        %v4672 = vmul.f32 %v4297, %v4608
        %v4673 = vmul.f32 %v4299, %v4609
        %v4674 = vmul.f32 %v4301, %v4610
        %v4675 = vmul.f32 %v4303, %v4611
        %v4676 = vmul.f32 %v4305, %v4612
        %v4677 = vmul.f32 %v4307, %v4613
        %v4678 = vmul.f32 %v4309, %v4614
        %v4679 = vmul.f32 %v4311, %v4615
        %v4680 = vmul.f32 %v4313, %v4616
        %v4681 = vmul.f32 %v4315, %v4617
        %v4682 = vmul.f32 %v4317, %v4618
        %v4683 = vmul.f32 %v4319, %v4619
        %v4684 = vmul.f32 %v4321, %v4620
        %v4685 = vmul.f32 %v4323, %v4621
        %v4686 = vmul.f32 %v4325, %v4622
        %v4687 = vmul.f32 %v4327, %v4623
        %v4688 = vmul.f32 %v4329, %v4624
        %v4689 = vmul.f32 %v4331, %v4625
        %v4690 = vmul.f32 %v4333, %v4626
        %v4691 = vmul.f32 %v4335, %v4627
        %v4692 = vmul.f32 %v4337, %v4628
        %v4693 = vmul.f32 %v4339, %v4629
        %v4694 = vmul.f32 %v4341, %v4630
        %v4695 = vmul.f32 %v4343, %v4631
        %v4696 = vmul.f32 %v4345, %v4632
        %v4697 = vmul.f32 %v4347, %v4633
        %v4698 = vmul.f32 %v4349, %v4634
        %v4699 = vmul.f32 %v4351, %v4635
        %v4700 = vmul.f32 %v4353, %v4636
        %v4701 = vmul.f32 %v4355, %v4637
        %v4702 = vmul.f32 %v4357, %v4638
        %v4703 = vmul.f32 %v4359, %v4639
        %v4704 = vmul.f32 %v4361, %v4640
        %v4705 = vmul.f32 %v4363, %v4641
        %v4706 = vmul.f32 %v4365, %v4642
        %v4707 = vmul.f32 %v4367, %v4643
        %v4708 = vmul.f32 %v4369, %v4644
        %v4709 = vmul.f32 %v4371, %v4645
        %v4710 = vmul.f32 %v4373, %v4646
        %v4711 = vmul.f32 %v4375, %v4647
        %v4712 = vmul.f32 %v4377, %v4648
        %v4713 = vmul.f32 %v4379, %v4649
        %v4714 = vmul.f32 %v4381, %v4650
        %v4715 = vmul.f32 %v4383, %v4651
        %v4716 = vmul.f32 %v4385, %v4652
        %v4717 = vmul.f32 %v4387, %v4653
        %v4718 = vmul.f32 %v4389, %v4654
        %v4719 = vmul.f32 %v4391, %v4655
        %v4720 = vmul.f32 %v4393, %v4656
        %v4721 = vmul.f32 %v4395, %v4657
        %v4722 = vmul.f32 %v4397, %v4658
        %v4723 = vmul.f32 %v4399, %v4659
        %v4724 = vmul.f32 %v4401, %v4660
        %v4725 = vmul.f32 %v4403, %v4661
        %v4726 = vmul.f32 %v4405, %v4662
        %v4727 = vmul.f32 %v4407, %v4663
        %v4728 = vpack.c.bf16 %v4665, %v4664
        %v4729 = vpack.c.bf16 %v4667, %v4666
        %v4730 = vpack.c.bf16 %v4669, %v4668
        %v4731 = vpack.c.bf16 %v4671, %v4670
        %v4732 = vpack.c.bf16 %v4673, %v4672
        %v4733 = vpack.c.bf16 %v4675, %v4674
        %v4734 = vpack.c.bf16 %v4677, %v4676
        %v4735 = vpack.c.bf16 %v4679, %v4678
        %v4736 = vpack.c.bf16 %v4681, %v4680
        %v4737 = vpack.c.bf16 %v4683, %v4682
        %v4738 = vpack.c.bf16 %v4685, %v4684
        %v4739 = vpack.c.bf16 %v4687, %v4686
        %v4740 = vpack.c.bf16 %v4689, %v4688
        %v4741 = vpack.c.bf16 %v4691, %v4690
        %v4742 = vpack.c.bf16 %v4693, %v4692
        %v4743 = vpack.c.bf16 %v4695, %v4694
        %v4744 = vpack.c.bf16 %v4697, %v4696
        %v4745 = vpack.c.bf16 %v4699, %v4698
        %v4746 = vpack.c.bf16 %v4701, %v4700
        %v4747 = vpack.c.bf16 %v4703, %v4702
        %v4748 = vpack.c.bf16 %v4705, %v4704
        %v4749 = vpack.c.bf16 %v4707, %v4706
        %v4750 = vpack.c.bf16 %v4709, %v4708
        %v4751 = vpack.c.bf16 %v4711, %v4710
        %v4752 = vpack.c.bf16 %v4713, %v4712
        %v4753 = vpack.c.bf16 %v4715, %v4714
        %v4754 = vpack.c.bf16 %v4717, %v4716
        %v4755 = vpack.c.bf16 %v4719, %v4718
        %v4756 = vpack.c.bf16 %v4721, %v4720
        %v4757 = vpack.c.bf16 %v4723, %v4722
        %v4758 = vpack.c.bf16 %v4725, %v4724
        %v4759 = vpack.c.bf16 %v4727, %v4726
        %v4761 = vsel %vm4023, %v4728, 0
        %4763 = vmatprep.subr.bf16.mxu0 0
        %4764 = vmatpush1.bf16.msra.mxu0 %v2407
        %4765 = vmatprep.subr.bf16.mxu0 0
        %4766 = vmatpush1.bf16.msra.mxu0 0
        %4767 = vmatprep.subr.bf16.mxu0 0
        %4768 = vmatpush1.bf16.msra.mxu0 0
        %4769 = vmatprep.subr.bf16.mxu0 0
        %4770 = vmatpush1.bf16.msra.mxu0 0
        %4771 = vmatprep.subr.bf16.mxu0 0
        %4772 = vmatpush1.bf16.msra.mxu0 0
        %4773 = vmatprep.subr.bf16.mxu0 0
        %4774 = vmatpush1.bf16.msra.mxu0 0
        %4775 = vmatprep.subr.bf16.mxu0 0
        %4776 = vmatpush1.bf16.msra.mxu0 0
        %4777 = vmatprep.subr.bf16.mxu0 0
        %4778 = vmatpush1.bf16.msra.mxu0 0
        %4779 = vmatprep.subr.bf16.mxu0 0
        %4780 = vmatpush1.bf16.msra.mxu0 0
        %4781 = vmatprep.subr.bf16.mxu0 0
        %4782 = vmatpush1.bf16.msra.mxu0 0
        %4783 = vmatprep.subr.bf16.mxu0 0
        %4784 = vmatpush1.bf16.msra.mxu0 0
        %4785 = vmatprep.subr.bf16.mxu0 0
        %4786 = vmatpush1.bf16.msra.mxu0 0
        %4787 = vmatprep.subr.bf16.mxu0 0
        %4788 = vmatpush1.bf16.msra.mxu0 0
        %4789 = vmatprep.subr.bf16.mxu0 0
        %4790 = vmatpush1.bf16.msra.mxu0 0
        %4791 = vmatprep.subr.bf16.mxu0 0
        %4792 = vmatpush1.bf16.msra.mxu0 0
        %4793 = vmatprep.subr.bf16.mxu0 0
        %4794 = vmatpush1.bf16.msra.mxu0 0
        %4795 = vmatprep.mubr.bf16.mxu0 0
        %4796 = vmatmul.mubr.bf16.gmra.mrb[0].mxu0 %v4761
        %v4797 = vpop.f32.mrb[0].mxu0
        %v4798 = vadd.f32 0.0, %v4797
        %v4799 = vpop.f32.mrb[0].mxu0
        %v4800 = vpop.f32.mrb[0].mxu0
        %v4801 = vadd.f32 0.0, %v4800
        %v4802 = vpop.f32.mrb[0].mxu0
        %4803 = vdwg.mxu0
        %v4805 = vsel %vm4023, %v4729, 0
        %4807 = vmatprep.subr.bf16.mxu0 0
        %4808 = vmatpush1.bf16.msra.mxu0 %v2408
        %4809 = vmatprep.subr.bf16.mxu0 0
        %4810 = vmatpush1.bf16.msra.mxu0 0
        %4811 = vmatprep.subr.bf16.mxu0 0
        %4812 = vmatpush1.bf16.msra.mxu0 0
        %4813 = vmatprep.subr.bf16.mxu0 0
        %4814 = vmatpush1.bf16.msra.mxu0 0
        %4815 = vmatprep.subr.bf16.mxu0 0
        %4816 = vmatpush1.bf16.msra.mxu0 0
        %4817 = vmatprep.subr.bf16.mxu0 0
        %4818 = vmatpush1.bf16.msra.mxu0 0
        %4819 = vmatprep.subr.bf16.mxu0 0
        %4820 = vmatpush1.bf16.msra.mxu0 0
        %4821 = vmatprep.subr.bf16.mxu0 0
        %4822 = vmatpush1.bf16.msra.mxu0 0
        %4823 = vmatprep.subr.bf16.mxu0 0
        %4824 = vmatpush1.bf16.msra.mxu0 0
        %4825 = vmatprep.subr.bf16.mxu0 0
        %4826 = vmatpush1.bf16.msra.mxu0 0
        %4827 = vmatprep.subr.bf16.mxu0 0
        %4828 = vmatpush1.bf16.msra.mxu0 0
        %4829 = vmatprep.subr.bf16.mxu0 0
        %4830 = vmatpush1.bf16.msra.mxu0 0
        %4831 = vmatprep.subr.bf16.mxu0 0
        %4832 = vmatpush1.bf16.msra.mxu0 0
        %4833 = vmatprep.subr.bf16.mxu0 0
        %4834 = vmatpush1.bf16.msra.mxu0 0
        %4835 = vmatprep.subr.bf16.mxu0 0
        %4836 = vmatpush1.bf16.msra.mxu0 0
        %4837 = vmatprep.subr.bf16.mxu0 0
        %4838 = vmatpush1.bf16.msra.mxu0 0
        %4839 = vmatprep.mubr.bf16.mxu0 0
        %4840 = vmatmul.mubr.bf16.gmra.mrb[0].mxu0 %v4805
        %v4841 = vpop.f32.mrb[0].mxu0
        %v4842 = vadd.f32 0.0, %v4841
        %v4843 = vpop.f32.mrb[0].mxu0
        %v4844 = vpop.f32.mrb[0].mxu0
        %v4845 = vadd.f32 0.0, %v4844
        %v4846 = vpop.f32.mrb[0].mxu0
        %4847 = vdwg.mxu0
        %v4849 = vsel %vm4023, %v4730, 0
        %4851 = vmatprep.subr.bf16.mxu0 0
        %4852 = vmatpush1.bf16.msra.mxu0 %v2409
        %4853 = vmatprep.subr.bf16.mxu0 0
        %4854 = vmatpush1.bf16.msra.mxu0 0
        %4855 = vmatprep.subr.bf16.mxu0 0
        %4856 = vmatpush1.bf16.msra.mxu0 0
        %4857 = vmatprep.subr.bf16.mxu0 0
        %4858 = vmatpush1.bf16.msra.mxu0 0
        %4859 = vmatprep.subr.bf16.mxu0 0
        %4860 = vmatpush1.bf16.msra.mxu0 0
        %4861 = vmatprep.subr.bf16.mxu0 0
        %4862 = vmatpush1.bf16.msra.mxu0 0
        %4863 = vmatprep.subr.bf16.mxu0 0
        %4864 = vmatpush1.bf16.msra.mxu0 0
        %4865 = vmatprep.subr.bf16.mxu0 0
        %4866 = vmatpush1.bf16.msra.mxu0 0
        %4867 = vmatprep.subr.bf16.mxu0 0
        %4868 = vmatpush1.bf16.msra.mxu0 0
        %4869 = vmatprep.subr.bf16.mxu0 0
        %4870 = vmatpush1.bf16.msra.mxu0 0
        %4871 = vmatprep.subr.bf16.mxu0 0
        %4872 = vmatpush1.bf16.msra.mxu0 0
        %4873 = vmatprep.subr.bf16.mxu0 0
        %4874 = vmatpush1.bf16.msra.mxu0 0
        %4875 = vmatprep.subr.bf16.mxu0 0
        %4876 = vmatpush1.bf16.msra.mxu0 0
        %4877 = vmatprep.subr.bf16.mxu0 0
        %4878 = vmatpush1.bf16.msra.mxu0 0
        %4879 = vmatprep.subr.bf16.mxu0 0
        %4880 = vmatpush1.bf16.msra.mxu0 0
        %4881 = vmatprep.subr.bf16.mxu0 0
        %4882 = vmatpush1.bf16.msra.mxu0 0
        %4883 = vmatprep.mubr.bf16.mxu0 0
        %4884 = vmatmul.mubr.bf16.gmra.mrb[0].mxu0 %v4849
        %v4885 = vpop.f32.mrb[0].mxu0
        %v4886 = vadd.f32 0.0, %v4885
        %v4887 = vpop.f32.mrb[0].mxu0
        %v4888 = vpop.f32.mrb[0].mxu0
        %v4889 = vadd.f32 0.0, %v4888
        %v4890 = vpop.f32.mrb[0].mxu0
        %4891 = vdwg.mxu0
        %v4893 = vsel %vm4023, %v4731, 0
        %4895 = vmatprep.subr.bf16.mxu0 0
        %4896 = vmatpush1.bf16.msra.mxu0 %v2410
        %4897 = vmatprep.subr.bf16.mxu0 0
        %4898 = vmatpush1.bf16.msra.mxu0 0
        %4899 = vmatprep.subr.bf16.mxu0 0
        %4900 = vmatpush1.bf16.msra.mxu0 0
        %4901 = vmatprep.subr.bf16.mxu0 0
        %4902 = vmatpush1.bf16.msra.mxu0 0
        %4903 = vmatprep.subr.bf16.mxu0 0
        %4904 = vmatpush1.bf16.msra.mxu0 0
        %4905 = vmatprep.subr.bf16.mxu0 0
        %4906 = vmatpush1.bf16.msra.mxu0 0
        %4907 = vmatprep.subr.bf16.mxu0 0
        %4908 = vmatpush1.bf16.msra.mxu0 0
        %4909 = vmatprep.subr.bf16.mxu0 0
        %4910 = vmatpush1.bf16.msra.mxu0 0
        %4911 = vmatprep.subr.bf16.mxu0 0
        %4912 = vmatpush1.bf16.msra.mxu0 0
        %4913 = vmatprep.subr.bf16.mxu0 0
        %4914 = vmatpush1.bf16.msra.mxu0 0
        %4915 = vmatprep.subr.bf16.mxu0 0
        %4916 = vmatpush1.bf16.msra.mxu0 0
        %4917 = vmatprep.subr.bf16.mxu0 0
        %4918 = vmatpush1.bf16.msra.mxu0 0
        %4919 = vmatprep.subr.bf16.mxu0 0
        %4920 = vmatpush1.bf16.msra.mxu0 0
        %4921 = vmatprep.subr.bf16.mxu0 0
        %4922 = vmatpush1.bf16.msra.mxu0 0
        %4923 = vmatprep.subr.bf16.mxu0 0
        %4924 = vmatpush1.bf16.msra.mxu0 0
        %4925 = vmatprep.subr.bf16.mxu0 0
        %4926 = vmatpush1.bf16.msra.mxu0 0
        %4927 = vmatprep.mubr.bf16.mxu0 0
        %4928 = vmatmul.mubr.bf16.gmra.mrb[0].mxu0 %v4893
        %v4929 = vpop.f32.mrb[0].mxu0
        %v4930 = vadd.f32 0.0, %v4929
        %v4931 = vpop.f32.mrb[0].mxu0
        %v4932 = vpop.f32.mrb[0].mxu0
        %v4933 = vadd.f32 0.0, %v4932
        %v4934 = vpop.f32.mrb[0].mxu0
        %4935 = vdwg.mxu0
        %v4937 = vsel %vm4023, %v4732, 0
        %4939 = vmatprep.subr.bf16.mxu0 0
        %4940 = vmatpush1.bf16.msra.mxu0 %v2411
        %4941 = vmatprep.subr.bf16.mxu0 0
        %4942 = vmatpush1.bf16.msra.mxu0 0
        %4943 = vmatprep.subr.bf16.mxu0 0
        %4944 = vmatpush1.bf16.msra.mxu0 0
        %4945 = vmatprep.subr.bf16.mxu0 0
        %4946 = vmatpush1.bf16.msra.mxu0 0
        %4947 = vmatprep.subr.bf16.mxu0 0
        %4948 = vmatpush1.bf16.msra.mxu0 0
        %4949 = vmatprep.subr.bf16.mxu0 0
        %4950 = vmatpush1.bf16.msra.mxu0 0
        %4951 = vmatprep.subr.bf16.mxu0 0
        %4952 = vmatpush1.bf16.msra.mxu0 0
        %4953 = vmatprep.subr.bf16.mxu0 0
        %4954 = vmatpush1.bf16.msra.mxu0 0
        %4955 = vmatprep.subr.bf16.mxu0 0
        %4956 = vmatpush1.bf16.msra.mxu0 0
        %4957 = vmatprep.subr.bf16.mxu0 0
        %4958 = vmatpush1.bf16.msra.mxu0 0
        %4959 = vmatprep.subr.bf16.mxu0 0
        %4960 = vmatpush1.bf16.msra.mxu0 0
        %4961 = vmatprep.subr.bf16.mxu0 0
        %4962 = vmatpush1.bf16.msra.mxu0 0
        %4963 = vmatprep.subr.bf16.mxu0 0
        %4964 = vmatpush1.bf16.msra.mxu0 0
        %4965 = vmatprep.subr.bf16.mxu0 0
        %4966 = vmatpush1.bf16.msra.mxu0 0
        %4967 = vmatprep.subr.bf16.mxu0 0
        %4968 = vmatpush1.bf16.msra.mxu0 0
        %4969 = vmatprep.subr.bf16.mxu0 0
        %4970 = vmatpush1.bf16.msra.mxu0 0
        %4971 = vmatprep.mubr.bf16.mxu0 0
        %4972 = vmatmul.mubr.bf16.gmra.mrb[0].mxu0 %v4937
        %v4973 = vpop.f32.mrb[0].mxu0
        %v4974 = vadd.f32 0.0, %v4973
        %v4975 = vpop.f32.mrb[0].mxu0
        %v4976 = vpop.f32.mrb[0].mxu0
        %v4977 = vadd.f32 0.0, %v4976
        %v4978 = vpop.f32.mrb[0].mxu0
        %4979 = vdwg.mxu0
        %v4981 = vsel %vm4023, %v4733, 0
        %4983 = vmatprep.subr.bf16.mxu0 0
        %4984 = vmatpush1.bf16.msra.mxu0 %v2412
        %4985 = vmatprep.subr.bf16.mxu0 0
        %4986 = vmatpush1.bf16.msra.mxu0 0
        %4987 = vmatprep.subr.bf16.mxu0 0
        %4988 = vmatpush1.bf16.msra.mxu0 0
        %4989 = vmatprep.subr.bf16.mxu0 0
        %4990 = vmatpush1.bf16.msra.mxu0 0
        %4991 = vmatprep.subr.bf16.mxu0 0
        %4992 = vmatpush1.bf16.msra.mxu0 0
        %4993 = vmatprep.subr.bf16.mxu0 0
        %4994 = vmatpush1.bf16.msra.mxu0 0
        %4995 = vmatprep.subr.bf16.mxu0 0
        %4996 = vmatpush1.bf16.msra.mxu0 0
        %4997 = vmatprep.subr.bf16.mxu0 0
        %4998 = vmatpush1.bf16.msra.mxu0 0
        %4999 = vmatprep.subr.bf16.mxu0 0
        %5000 = vmatpush1.bf16.msra.mxu0 0
        %5001 = vmatprep.subr.bf16.mxu0 0
        %5002 = vmatpush1.bf16.msra.mxu0 0
        %5003 = vmatprep.subr.bf16.mxu0 0
        %5004 = vmatpush1.bf16.msra.mxu0 0
        %5005 = vmatprep.subr.bf16.mxu0 0
        %5006 = vmatpush1.bf16.msra.mxu0 0
        %5007 = vmatprep.subr.bf16.mxu0 0
        %5008 = vmatpush1.bf16.msra.mxu0 0
        %5009 = vmatprep.subr.bf16.mxu0 0
        %5010 = vmatpush1.bf16.msra.mxu0 0
        %5011 = vmatprep.subr.bf16.mxu0 0
        %5012 = vmatpush1.bf16.msra.mxu0 0
        %5013 = vmatprep.subr.bf16.mxu0 0
        %5014 = vmatpush1.bf16.msra.mxu0 0
        %5015 = vmatprep.mubr.bf16.mxu0 0
        %5016 = vmatmul.mubr.bf16.gmra.mrb[0].mxu0 %v4981
        %v5017 = vpop.f32.mrb[0].mxu0
        %v5018 = vadd.f32 0.0, %v5017
        %v5019 = vpop.f32.mrb[0].mxu0
        %v5020 = vpop.f32.mrb[0].mxu0
        %v5021 = vadd.f32 0.0, %v5020
        %v5022 = vpop.f32.mrb[0].mxu0
        %5023 = vdwg.mxu0
        %v5025 = vsel %vm4023, %v4734, 0
        %5027 = vmatprep.subr.bf16.mxu0 0
        %5028 = vmatpush1.bf16.msra.mxu0 %v2413
        %5029 = vmatprep.subr.bf16.mxu0 0
        %5030 = vmatpush1.bf16.msra.mxu0 0
        %5031 = vmatprep.subr.bf16.mxu0 0
        %5032 = vmatpush1.bf16.msra.mxu0 0
        %5033 = vmatprep.subr.bf16.mxu0 0
        %5034 = vmatpush1.bf16.msra.mxu0 0
        %5035 = vmatprep.subr.bf16.mxu0 0
        %5036 = vmatpush1.bf16.msra.mxu0 0
        %5037 = vmatprep.subr.bf16.mxu0 0
        %5038 = vmatpush1.bf16.msra.mxu0 0
        %5039 = vmatprep.subr.bf16.mxu0 0
        %5040 = vmatpush1.bf16.msra.mxu0 0
        %5041 = vmatprep.subr.bf16.mxu0 0
        %5042 = vmatpush1.bf16.msra.mxu0 0
        %5043 = vmatprep.subr.bf16.mxu0 0
        %5044 = vmatpush1.bf16.msra.mxu0 0
        %5045 = vmatprep.subr.bf16.mxu0 0
        %5046 = vmatpush1.bf16.msra.mxu0 0
        %5047 = vmatprep.subr.bf16.mxu0 0
        %5048 = vmatpush1.bf16.msra.mxu0 0
        %5049 = vmatprep.subr.bf16.mxu0 0
        %5050 = vmatpush1.bf16.msra.mxu0 0
        %5051 = vmatprep.subr.bf16.mxu0 0
        %5052 = vmatpush1.bf16.msra.mxu0 0
        %5053 = vmatprep.subr.bf16.mxu0 0
        %5054 = vmatpush1.bf16.msra.mxu0 0
        %5055 = vmatprep.subr.bf16.mxu0 0
        %5056 = vmatpush1.bf16.msra.mxu0 0
        %5057 = vmatprep.subr.bf16.mxu0 0
        %5058 = vmatpush1.bf16.msra.mxu0 0
        %5059 = vmatprep.mubr.bf16.mxu0 0
        %5060 = vmatmul.mubr.bf16.gmra.mrb[0].mxu0 %v5025
        %v5061 = vpop.f32.mrb[0].mxu0
        %v5062 = vadd.f32 0.0, %v5061
        %v5063 = vpop.f32.mrb[0].mxu0
        %v5064 = vpop.f32.mrb[0].mxu0
        %v5065 = vadd.f32 0.0, %v5064
        %v5066 = vpop.f32.mrb[0].mxu0
        %5067 = vdwg.mxu0
        %v5069 = vsel %vm4023, %v4735, 0
        %5071 = vmatprep.subr.bf16.mxu0 0
        %5072 = vmatpush1.bf16.msra.mxu0 %v2414
        %5073 = vmatprep.subr.bf16.mxu0 0
        %5074 = vmatpush1.bf16.msra.mxu0 0
        %5075 = vmatprep.subr.bf16.mxu0 0
        %5076 = vmatpush1.bf16.msra.mxu0 0
        %5077 = vmatprep.subr.bf16.mxu0 0
        %5078 = vmatpush1.bf16.msra.mxu0 0
        %5079 = vmatprep.subr.bf16.mxu0 0
        %5080 = vmatpush1.bf16.msra.mxu0 0
        %5081 = vmatprep.subr.bf16.mxu0 0
        %5082 = vmatpush1.bf16.msra.mxu0 0
        %5083 = vmatprep.subr.bf16.mxu0 0
        %5084 = vmatpush1.bf16.msra.mxu0 0
        %5085 = vmatprep.subr.bf16.mxu0 0
        %5086 = vmatpush1.bf16.msra.mxu0 0
        %5087 = vmatprep.subr.bf16.mxu0 0
        %5088 = vmatpush1.bf16.msra.mxu0 0
        %5089 = vmatprep.subr.bf16.mxu0 0
        %5090 = vmatpush1.bf16.msra.mxu0 0
        %5091 = vmatprep.subr.bf16.mxu0 0
        %5092 = vmatpush1.bf16.msra.mxu0 0
        %5093 = vmatprep.subr.bf16.mxu0 0
        %5094 = vmatpush1.bf16.msra.mxu0 0
        %5095 = vmatprep.subr.bf16.mxu0 0
        %5096 = vmatpush1.bf16.msra.mxu0 0
        %5097 = vmatprep.subr.bf16.mxu0 0
        %5098 = vmatpush1.bf16.msra.mxu0 0
        %5099 = vmatprep.subr.bf16.mxu0 0
        %5100 = vmatpush1.bf16.msra.mxu0 0
        %5101 = vmatprep.subr.bf16.mxu0 0
        %5102 = vmatpush1.bf16.msra.mxu0 0
        %5103 = vmatprep.mubr.bf16.mxu0 0
        %5104 = vmatmul.mubr.bf16.gmra.mrb[0].mxu0 %v5069
        %v5105 = vpop.f32.mrb[0].mxu0
        %v5106 = vadd.f32 0.0, %v5105
        %v5107 = vpop.f32.mrb[0].mxu0
        %v5108 = vpop.f32.mrb[0].mxu0
        %v5109 = vadd.f32 0.0, %v5108
        %v5110 = vpop.f32.mrb[0].mxu0
        %5111 = vdwg.mxu0
        %v5113 = vsel %vm4023, %v4736, 0
        %5115 = vmatprep.subr.bf16.mxu0 0
        %5116 = vmatpush1.bf16.msra.mxu0 %v2415
        %5117 = vmatprep.subr.bf16.mxu0 0
        %5118 = vmatpush1.bf16.msra.mxu0 0
        %5119 = vmatprep.subr.bf16.mxu0 0
        %5120 = vmatpush1.bf16.msra.mxu0 0
        %5121 = vmatprep.subr.bf16.mxu0 0
        %5122 = vmatpush1.bf16.msra.mxu0 0
        %5123 = vmatprep.subr.bf16.mxu0 0
        %5124 = vmatpush1.bf16.msra.mxu0 0
        %5125 = vmatprep.subr.bf16.mxu0 0
        %5126 = vmatpush1.bf16.msra.mxu0 0
        %5127 = vmatprep.subr.bf16.mxu0 0
        %5128 = vmatpush1.bf16.msra.mxu0 0
        %5129 = vmatprep.subr.bf16.mxu0 0
        %5130 = vmatpush1.bf16.msra.mxu0 0
        %5131 = vmatprep.subr.bf16.mxu0 0
        %5132 = vmatpush1.bf16.msra.mxu0 0
        %5133 = vmatprep.subr.bf16.mxu0 0
        %5134 = vmatpush1.bf16.msra.mxu0 0
        %5135 = vmatprep.subr.bf16.mxu0 0
        %5136 = vmatpush1.bf16.msra.mxu0 0
        %5137 = vmatprep.subr.bf16.mxu0 0
        %5138 = vmatpush1.bf16.msra.mxu0 0
        %5139 = vmatprep.subr.bf16.mxu0 0
        %5140 = vmatpush1.bf16.msra.mxu0 0
        %5141 = vmatprep.subr.bf16.mxu0 0
        %5142 = vmatpush1.bf16.msra.mxu0 0
        %5143 = vmatprep.subr.bf16.mxu0 0
        %5144 = vmatpush1.bf16.msra.mxu0 0
        %5145 = vmatprep.subr.bf16.mxu0 0
        %5146 = vmatpush1.bf16.msra.mxu0 0
        %5147 = vmatprep.mubr.bf16.mxu0 0
        %5148 = vmatmul.mubr.bf16.gmra.mrb[0].mxu0 %v5113
        %v5149 = vpop.f32.mrb[0].mxu0
        %v5150 = vadd.f32 0.0, %v5149
        %v5151 = vpop.f32.mrb[0].mxu0
        %v5152 = vpop.f32.mrb[0].mxu0
        %v5153 = vadd.f32 0.0, %v5152
        %v5154 = vpop.f32.mrb[0].mxu0
        %5155 = vdwg.mxu0
        %v5157 = vsel %vm4023, %v4737, 0
        %5159 = vmatprep.subr.bf16.mxu0 0
        %5160 = vmatpush1.bf16.msra.mxu0 %v2416
        %5161 = vmatprep.subr.bf16.mxu0 0
        %5162 = vmatpush1.bf16.msra.mxu0 0
        %5163 = vmatprep.subr.bf16.mxu0 0
        %5164 = vmatpush1.bf16.msra.mxu0 0
        %5165 = vmatprep.subr.bf16.mxu0 0
        %5166 = vmatpush1.bf16.msra.mxu0 0
        %5167 = vmatprep.subr.bf16.mxu0 0
        %5168 = vmatpush1.bf16.msra.mxu0 0
        %5169 = vmatprep.subr.bf16.mxu0 0
        %5170 = vmatpush1.bf16.msra.mxu0 0
        %5171 = vmatprep.subr.bf16.mxu0 0
        %5172 = vmatpush1.bf16.msra.mxu0 0
        %5173 = vmatprep.subr.bf16.mxu0 0
        %5174 = vmatpush1.bf16.msra.mxu0 0
        %5175 = vmatprep.subr.bf16.mxu0 0
        %5176 = vmatpush1.bf16.msra.mxu0 0
        %5177 = vmatprep.subr.bf16.mxu0 0
        %5178 = vmatpush1.bf16.msra.mxu0 0
        %5179 = vmatprep.subr.bf16.mxu0 0
        %5180 = vmatpush1.bf16.msra.mxu0 0
        %5181 = vmatprep.subr.bf16.mxu0 0
        %5182 = vmatpush1.bf16.msra.mxu0 0
        %5183 = vmatprep.subr.bf16.mxu0 0
        %5184 = vmatpush1.bf16.msra.mxu0 0
        %5185 = vmatprep.subr.bf16.mxu0 0
        %5186 = vmatpush1.bf16.msra.mxu0 0
        %5187 = vmatprep.subr.bf16.mxu0 0
        %5188 = vmatpush1.bf16.msra.mxu0 0
        %5189 = vmatprep.subr.bf16.mxu0 0
        %5190 = vmatpush1.bf16.msra.mxu0 0
        %5191 = vmatprep.mubr.bf16.mxu0 0
        %5192 = vmatmul.mubr.bf16.gmra.mrb[0].mxu0 %v5157
        %v5193 = vpop.f32.mrb[0].mxu0
        %v5194 = vadd.f32 0.0, %v5193
        %v5195 = vpop.f32.mrb[0].mxu0
        %v5196 = vpop.f32.mrb[0].mxu0
        %v5197 = vadd.f32 0.0, %v5196
        %v5198 = vpop.f32.mrb[0].mxu0
        %5199 = vdwg.mxu0
        %v5201 = vsel %vm4023, %v4738, 0
        %5203 = vmatprep.subr.bf16.mxu0 0
        %5204 = vmatpush1.bf16.msra.mxu0 %v2417
        %5205 = vmatprep.subr.bf16.mxu0 0
        %5206 = vmatpush1.bf16.msra.mxu0 0
        %5207 = vmatprep.subr.bf16.mxu0 0
        %5208 = vmatpush1.bf16.msra.mxu0 0
        %5209 = vmatprep.subr.bf16.mxu0 0
        %5210 = vmatpush1.bf16.msra.mxu0 0
        %5211 = vmatprep.subr.bf16.mxu0 0
        %5212 = vmatpush1.bf16.msra.mxu0 0
        %5213 = vmatprep.subr.bf16.mxu0 0
        %5214 = vmatpush1.bf16.msra.mxu0 0
        %5215 = vmatprep.subr.bf16.mxu0 0
        %5216 = vmatpush1.bf16.msra.mxu0 0
        %5217 = vmatprep.subr.bf16.mxu0 0
        %5218 = vmatpush1.bf16.msra.mxu0 0
        %5219 = vmatprep.subr.bf16.mxu0 0
        %5220 = vmatpush1.bf16.msra.mxu0 0
        %5221 = vmatprep.subr.bf16.mxu0 0
        %5222 = vmatpush1.bf16.msra.mxu0 0
        %5223 = vmatprep.subr.bf16.mxu0 0
        %5224 = vmatpush1.bf16.msra.mxu0 0
        %5225 = vmatprep.subr.bf16.mxu0 0
        %5226 = vmatpush1.bf16.msra.mxu0 0
        %5227 = vmatprep.subr.bf16.mxu0 0
        %5228 = vmatpush1.bf16.msra.mxu0 0
        %5229 = vmatprep.subr.bf16.mxu0 0
        %5230 = vmatpush1.bf16.msra.mxu0 0
        %5231 = vmatprep.subr.bf16.mxu0 0
        %5232 = vmatpush1.bf16.msra.mxu0 0
        %5233 = vmatprep.subr.bf16.mxu0 0
        %5234 = vmatpush1.bf16.msra.mxu0 0
        %5235 = vmatprep.mubr.bf16.mxu0 0
        %5236 = vmatmul.mubr.bf16.gmra.mrb[0].mxu0 %v5201
        %v5237 = vpop.f32.mrb[0].mxu0
        %v5238 = vadd.f32 0.0, %v5237
        %v5239 = vpop.f32.mrb[0].mxu0
        %v5240 = vpop.f32.mrb[0].mxu0
        %v5241 = vadd.f32 0.0, %v5240
        %v5242 = vpop.f32.mrb[0].mxu0
        %5243 = vdwg.mxu0
        %v5245 = vsel %vm4023, %v4739, 0
        %5247 = vmatprep.subr.bf16.mxu0 0
        %5248 = vmatpush1.bf16.msra.mxu0 %v2418
        %5249 = vmatprep.subr.bf16.mxu0 0
        %5250 = vmatpush1.bf16.msra.mxu0 0
        %5251 = vmatprep.subr.bf16.mxu0 0
        %5252 = vmatpush1.bf16.msra.mxu0 0
        %5253 = vmatprep.subr.bf16.mxu0 0
        %5254 = vmatpush1.bf16.msra.mxu0 0
        %5255 = vmatprep.subr.bf16.mxu0 0
        %5256 = vmatpush1.bf16.msra.mxu0 0
        %5257 = vmatprep.subr.bf16.mxu0 0
        %5258 = vmatpush1.bf16.msra.mxu0 0
        %5259 = vmatprep.subr.bf16.mxu0 0
        %5260 = vmatpush1.bf16.msra.mxu0 0
        %5261 = vmatprep.subr.bf16.mxu0 0
        %5262 = vmatpush1.bf16.msra.mxu0 0
        %5263 = vmatprep.subr.bf16.mxu0 0
        %5264 = vmatpush1.bf16.msra.mxu0 0
        %5265 = vmatprep.subr.bf16.mxu0 0
        %5266 = vmatpush1.bf16.msra.mxu0 0
        %5267 = vmatprep.subr.bf16.mxu0 0
        %5268 = vmatpush1.bf16.msra.mxu0 0
        %5269 = vmatprep.subr.bf16.mxu0 0
        %5270 = vmatpush1.bf16.msra.mxu0 0
        %5271 = vmatprep.subr.bf16.mxu0 0
        %5272 = vmatpush1.bf16.msra.mxu0 0
        %5273 = vmatprep.subr.bf16.mxu0 0
        %5274 = vmatpush1.bf16.msra.mxu0 0
        %5275 = vmatprep.subr.bf16.mxu0 0
        %5276 = vmatpush1.bf16.msra.mxu0 0
        %5277 = vmatprep.subr.bf16.mxu0 0
        %5278 = vmatpush1.bf16.msra.mxu0 0
        %5279 = vmatprep.mubr.bf16.mxu0 0
        %5280 = vmatmul.mubr.bf16.gmra.mrb[0].mxu0 %v5245
        %v5281 = vpop.f32.mrb[0].mxu0
        %v5282 = vadd.f32 0.0, %v5281
        %v5283 = vpop.f32.mrb[0].mxu0
        %v5284 = vpop.f32.mrb[0].mxu0
        %v5285 = vadd.f32 0.0, %v5284
        %v5286 = vpop.f32.mrb[0].mxu0
        %5287 = vdwg.mxu0
        %v5289 = vsel %vm4023, %v4740, 0
        %5291 = vmatprep.subr.bf16.mxu0 0
        %5292 = vmatpush1.bf16.msra.mxu0 %v2419
        %5293 = vmatprep.subr.bf16.mxu0 0
        %5294 = vmatpush1.bf16.msra.mxu0 0
        %5295 = vmatprep.subr.bf16.mxu0 0
        %5296 = vmatpush1.bf16.msra.mxu0 0
        %5297 = vmatprep.subr.bf16.mxu0 0
        %5298 = vmatpush1.bf16.msra.mxu0 0
        %5299 = vmatprep.subr.bf16.mxu0 0
        %5300 = vmatpush1.bf16.msra.mxu0 0
        %5301 = vmatprep.subr.bf16.mxu0 0
        %5302 = vmatpush1.bf16.msra.mxu0 0
        %5303 = vmatprep.subr.bf16.mxu0 0
        %5304 = vmatpush1.bf16.msra.mxu0 0
        %5305 = vmatprep.subr.bf16.mxu0 0
        %5306 = vmatpush1.bf16.msra.mxu0 0
        %5307 = vmatprep.subr.bf16.mxu0 0
        %5308 = vmatpush1.bf16.msra.mxu0 0
        %5309 = vmatprep.subr.bf16.mxu0 0
        %5310 = vmatpush1.bf16.msra.mxu0 0
        %5311 = vmatprep.subr.bf16.mxu0 0
        %5312 = vmatpush1.bf16.msra.mxu0 0
        %5313 = vmatprep.subr.bf16.mxu0 0
        %5314 = vmatpush1.bf16.msra.mxu0 0
        %5315 = vmatprep.subr.bf16.mxu0 0
        %5316 = vmatpush1.bf16.msra.mxu0 0
        %5317 = vmatprep.subr.bf16.mxu0 0
        %5318 = vmatpush1.bf16.msra.mxu0 0
        %5319 = vmatprep.subr.bf16.mxu0 0
        %5320 = vmatpush1.bf16.msra.mxu0 0
        %5321 = vmatprep.subr.bf16.mxu0 0
        %5322 = vmatpush1.bf16.msra.mxu0 0
        %5323 = vmatprep.mubr.bf16.mxu0 0
        %5324 = vmatmul.mubr.bf16.gmra.mrb[0].mxu0 %v5289
        %v5325 = vpop.f32.mrb[0].mxu0
        %v5326 = vadd.f32 0.0, %v5325
        %v5327 = vpop.f32.mrb[0].mxu0
        %v5328 = vpop.f32.mrb[0].mxu0
        %v5329 = vadd.f32 0.0, %v5328
        %v5330 = vpop.f32.mrb[0].mxu0
        %5331 = vdwg.mxu0
        %v5333 = vsel %vm4023, %v4741, 0
        %5335 = vmatprep.subr.bf16.mxu0 0
        %5336 = vmatpush1.bf16.msra.mxu0 %v2420
        %5337 = vmatprep.subr.bf16.mxu0 0
        %5338 = vmatpush1.bf16.msra.mxu0 0
        %5339 = vmatprep.subr.bf16.mxu0 0
        %5340 = vmatpush1.bf16.msra.mxu0 0
        %5341 = vmatprep.subr.bf16.mxu0 0
        %5342 = vmatpush1.bf16.msra.mxu0 0
        %5343 = vmatprep.subr.bf16.mxu0 0
        %5344 = vmatpush1.bf16.msra.mxu0 0
        %5345 = vmatprep.subr.bf16.mxu0 0
        %5346 = vmatpush1.bf16.msra.mxu0 0
        %5347 = vmatprep.subr.bf16.mxu0 0
        %5348 = vmatpush1.bf16.msra.mxu0 0
        %5349 = vmatprep.subr.bf16.mxu0 0
        %5350 = vmatpush1.bf16.msra.mxu0 0
        %5351 = vmatprep.subr.bf16.mxu0 0
        %5352 = vmatpush1.bf16.msra.mxu0 0
        %5353 = vmatprep.subr.bf16.mxu0 0
        %5354 = vmatpush1.bf16.msra.mxu0 0
        %5355 = vmatprep.subr.bf16.mxu0 0
        %5356 = vmatpush1.bf16.msra.mxu0 0
        %5357 = vmatprep.subr.bf16.mxu0 0
        %5358 = vmatpush1.bf16.msra.mxu0 0
        %5359 = vmatprep.subr.bf16.mxu0 0
        %5360 = vmatpush1.bf16.msra.mxu0 0
        %5361 = vmatprep.subr.bf16.mxu0 0
        %5362 = vmatpush1.bf16.msra.mxu0 0
        %5363 = vmatprep.subr.bf16.mxu0 0
        %5364 = vmatpush1.bf16.msra.mxu0 0
        %5365 = vmatprep.subr.bf16.mxu0 0
        %5366 = vmatpush1.bf16.msra.mxu0 0
        %5367 = vmatprep.mubr.bf16.mxu0 0
        %5368 = vmatmul.mubr.bf16.gmra.mrb[0].mxu0 %v5333
        %v5369 = vpop.f32.mrb[0].mxu0
        %v5370 = vadd.f32 0.0, %v5369
        %v5371 = vpop.f32.mrb[0].mxu0
        %v5372 = vpop.f32.mrb[0].mxu0
        %v5373 = vadd.f32 0.0, %v5372
        %v5374 = vpop.f32.mrb[0].mxu0
        %5375 = vdwg.mxu0
        %v5377 = vsel %vm4023, %v4742, 0
        %5379 = vmatprep.subr.bf16.mxu0 0
        %5380 = vmatpush1.bf16.msra.mxu0 %v2421
        %5381 = vmatprep.subr.bf16.mxu0 0
        %5382 = vmatpush1.bf16.msra.mxu0 0
        %5383 = vmatprep.subr.bf16.mxu0 0
        %5384 = vmatpush1.bf16.msra.mxu0 0
        %5385 = vmatprep.subr.bf16.mxu0 0
        %5386 = vmatpush1.bf16.msra.mxu0 0
        %5387 = vmatprep.subr.bf16.mxu0 0
        %5388 = vmatpush1.bf16.msra.mxu0 0
        %5389 = vmatprep.subr.bf16.mxu0 0
        %5390 = vmatpush1.bf16.msra.mxu0 0
        %5391 = vmatprep.subr.bf16.mxu0 0
        %5392 = vmatpush1.bf16.msra.mxu0 0
        %5393 = vmatprep.subr.bf16.mxu0 0
        %5394 = vmatpush1.bf16.msra.mxu0 0
        %5395 = vmatprep.subr.bf16.mxu0 0
        %5396 = vmatpush1.bf16.msra.mxu0 0
        %5397 = vmatprep.subr.bf16.mxu0 0
        %5398 = vmatpush1.bf16.msra.mxu0 0
        %5399 = vmatprep.subr.bf16.mxu0 0
        %5400 = vmatpush1.bf16.msra.mxu0 0
        %5401 = vmatprep.subr.bf16.mxu0 0
        %5402 = vmatpush1.bf16.msra.mxu0 0
        %5403 = vmatprep.subr.bf16.mxu0 0
        %5404 = vmatpush1.bf16.msra.mxu0 0
        %5405 = vmatprep.subr.bf16.mxu0 0
        %5406 = vmatpush1.bf16.msra.mxu0 0
        %5407 = vmatprep.subr.bf16.mxu0 0
        %5408 = vmatpush1.bf16.msra.mxu0 0
        %5409 = vmatprep.subr.bf16.mxu0 0
        %5410 = vmatpush1.bf16.msra.mxu0 0
        %5411 = vmatprep.mubr.bf16.mxu0 0
        %5412 = vmatmul.mubr.bf16.gmra.mrb[0].mxu0 %v5377
        %v5413 = vpop.f32.mrb[0].mxu0
        %v5414 = vadd.f32 0.0, %v5413
        %v5415 = vpop.f32.mrb[0].mxu0
        %v5416 = vpop.f32.mrb[0].mxu0
        %v5417 = vadd.f32 0.0, %v5416
        %v5418 = vpop.f32.mrb[0].mxu0
        %5419 = vdwg.mxu0
        %v5421 = vsel %vm4023, %v4743, 0
        %5423 = vmatprep.subr.bf16.mxu0 0
        %5424 = vmatpush1.bf16.msra.mxu0 %v2422
        %5425 = vmatprep.subr.bf16.mxu0 0
        %5426 = vmatpush1.bf16.msra.mxu0 0
        %5427 = vmatprep.subr.bf16.mxu0 0
        %5428 = vmatpush1.bf16.msra.mxu0 0
        %5429 = vmatprep.subr.bf16.mxu0 0
        %5430 = vmatpush1.bf16.msra.mxu0 0
        %5431 = vmatprep.subr.bf16.mxu0 0
        %5432 = vmatpush1.bf16.msra.mxu0 0
        %5433 = vmatprep.subr.bf16.mxu0 0
        %5434 = vmatpush1.bf16.msra.mxu0 0
        %5435 = vmatprep.subr.bf16.mxu0 0
        %5436 = vmatpush1.bf16.msra.mxu0 0
        %5437 = vmatprep.subr.bf16.mxu0 0
        %5438 = vmatpush1.bf16.msra.mxu0 0
        %5439 = vmatprep.subr.bf16.mxu0 0
        %5440 = vmatpush1.bf16.msra.mxu0 0
        %5441 = vmatprep.subr.bf16.mxu0 0
        %5442 = vmatpush1.bf16.msra.mxu0 0
        %5443 = vmatprep.subr.bf16.mxu0 0
        %5444 = vmatpush1.bf16.msra.mxu0 0
        %5445 = vmatprep.subr.bf16.mxu0 0
        %5446 = vmatpush1.bf16.msra.mxu0 0
        %5447 = vmatprep.subr.bf16.mxu0 0
        %5448 = vmatpush1.bf16.msra.mxu0 0
        %5449 = vmatprep.subr.bf16.mxu0 0
        %5450 = vmatpush1.bf16.msra.mxu0 0
        %5451 = vmatprep.subr.bf16.mxu0 0
        %5452 = vmatpush1.bf16.msra.mxu0 0
        %5453 = vmatprep.subr.bf16.mxu0 0
        %5454 = vmatpush1.bf16.msra.mxu0 0
        %5455 = vmatprep.mubr.bf16.mxu0 0
        %5456 = vmatmul.mubr.bf16.gmra.mrb[0].mxu0 %v5421
        %v5457 = vpop.f32.mrb[0].mxu0
        %v5458 = vadd.f32 0.0, %v5457
        %v5459 = vpop.f32.mrb[0].mxu0
        %v5460 = vpop.f32.mrb[0].mxu0
        %v5461 = vadd.f32 0.0, %v5460
        %v5462 = vpop.f32.mrb[0].mxu0
        %5463 = vdwg.mxu0
        %v5465 = vsel %vm4023, %v4744, 0
        %5467 = vmatprep.subr.bf16.mxu0 0
        %5468 = vmatpush1.bf16.msra.mxu0 %v2423
        %5469 = vmatprep.subr.bf16.mxu0 0
        %5470 = vmatpush1.bf16.msra.mxu0 0
        %5471 = vmatprep.subr.bf16.mxu0 0
        %5472 = vmatpush1.bf16.msra.mxu0 0
        %5473 = vmatprep.subr.bf16.mxu0 0
        %5474 = vmatpush1.bf16.msra.mxu0 0
        %5475 = vmatprep.subr.bf16.mxu0 0
        %5476 = vmatpush1.bf16.msra.mxu0 0
        %5477 = vmatprep.subr.bf16.mxu0 0
        %5478 = vmatpush1.bf16.msra.mxu0 0
        %5479 = vmatprep.subr.bf16.mxu0 0
        %5480 = vmatpush1.bf16.msra.mxu0 0
        %5481 = vmatprep.subr.bf16.mxu0 0
        %5482 = vmatpush1.bf16.msra.mxu0 0
        %5483 = vmatprep.subr.bf16.mxu0 0
        %5484 = vmatpush1.bf16.msra.mxu0 0
        %5485 = vmatprep.subr.bf16.mxu0 0
        %5486 = vmatpush1.bf16.msra.mxu0 0
        %5487 = vmatprep.subr.bf16.mxu0 0
        %5488 = vmatpush1.bf16.msra.mxu0 0
        %5489 = vmatprep.subr.bf16.mxu0 0
        %5490 = vmatpush1.bf16.msra.mxu0 0
        %5491 = vmatprep.subr.bf16.mxu0 0
        %5492 = vmatpush1.bf16.msra.mxu0 0
        %5493 = vmatprep.subr.bf16.mxu0 0
        %5494 = vmatpush1.bf16.msra.mxu0 0
        %5495 = vmatprep.subr.bf16.mxu0 0
        %5496 = vmatpush1.bf16.msra.mxu0 0
        %5497 = vmatprep.subr.bf16.mxu0 0
        %5498 = vmatpush1.bf16.msra.mxu0 0
        %5499 = vmatprep.mubr.bf16.mxu0 0
        %5500 = vmatmul.mubr.bf16.gmra.mrb[0].mxu0 %v5465
        %v5501 = vpop.f32.mrb[0].mxu0
        %v5502 = vadd.f32 0.0, %v5501
        %v5503 = vpop.f32.mrb[0].mxu0
        %v5504 = vpop.f32.mrb[0].mxu0
        %v5505 = vadd.f32 0.0, %v5504
        %v5506 = vpop.f32.mrb[0].mxu0
        %5507 = vdwg.mxu0
        %v5509 = vsel %vm4023, %v4745, 0
        %5511 = vmatprep.subr.bf16.mxu0 0
        %5512 = vmatpush1.bf16.msra.mxu0 %v2424
        %5513 = vmatprep.subr.bf16.mxu0 0
        %5514 = vmatpush1.bf16.msra.mxu0 0
        %5515 = vmatprep.subr.bf16.mxu0 0
        %5516 = vmatpush1.bf16.msra.mxu0 0
        %5517 = vmatprep.subr.bf16.mxu0 0
        %5518 = vmatpush1.bf16.msra.mxu0 0
        %5519 = vmatprep.subr.bf16.mxu0 0
        %5520 = vmatpush1.bf16.msra.mxu0 0
        %5521 = vmatprep.subr.bf16.mxu0 0
        %5522 = vmatpush1.bf16.msra.mxu0 0
        %5523 = vmatprep.subr.bf16.mxu0 0
        %5524 = vmatpush1.bf16.msra.mxu0 0
        %5525 = vmatprep.subr.bf16.mxu0 0
        %5526 = vmatpush1.bf16.msra.mxu0 0
        %5527 = vmatprep.subr.bf16.mxu0 0
        %5528 = vmatpush1.bf16.msra.mxu0 0
        %5529 = vmatprep.subr.bf16.mxu0 0
        %5530 = vmatpush1.bf16.msra.mxu0 0
        %5531 = vmatprep.subr.bf16.mxu0 0
        %5532 = vmatpush1.bf16.msra.mxu0 0
        %5533 = vmatprep.subr.bf16.mxu0 0
        %5534 = vmatpush1.bf16.msra.mxu0 0
        %5535 = vmatprep.subr.bf16.mxu0 0
        %5536 = vmatpush1.bf16.msra.mxu0 0
        %5537 = vmatprep.subr.bf16.mxu0 0
        %5538 = vmatpush1.bf16.msra.mxu0 0
        %5539 = vmatprep.subr.bf16.mxu0 0
        %5540 = vmatpush1.bf16.msra.mxu0 0
        %5541 = vmatprep.subr.bf16.mxu0 0
        %5542 = vmatpush1.bf16.msra.mxu0 0
        %5543 = vmatprep.mubr.bf16.mxu0 0
        %5544 = vmatmul.mubr.bf16.gmra.mrb[0].mxu0 %v5509
        %v5545 = vpop.f32.mrb[0].mxu0
        %v5546 = vadd.f32 0.0, %v5545
        %v5547 = vpop.f32.mrb[0].mxu0
        %v5548 = vpop.f32.mrb[0].mxu0
        %v5549 = vadd.f32 0.0, %v5548
        %v5550 = vpop.f32.mrb[0].mxu0
        %5551 = vdwg.mxu0
        %v5553 = vsel %vm4023, %v4746, 0
        %5555 = vmatprep.subr.bf16.mxu0 0
        %5556 = vmatpush1.bf16.msra.mxu0 %v2425
        %5557 = vmatprep.subr.bf16.mxu0 0
        %5558 = vmatpush1.bf16.msra.mxu0 0
        %5559 = vmatprep.subr.bf16.mxu0 0
        %5560 = vmatpush1.bf16.msra.mxu0 0
        %5561 = vmatprep.subr.bf16.mxu0 0
        %5562 = vmatpush1.bf16.msra.mxu0 0
        %5563 = vmatprep.subr.bf16.mxu0 0
        %5564 = vmatpush1.bf16.msra.mxu0 0
        %5565 = vmatprep.subr.bf16.mxu0 0
        %5566 = vmatpush1.bf16.msra.mxu0 0
        %5567 = vmatprep.subr.bf16.mxu0 0
        %5568 = vmatpush1.bf16.msra.mxu0 0
        %5569 = vmatprep.subr.bf16.mxu0 0
        %5570 = vmatpush1.bf16.msra.mxu0 0
        %5571 = vmatprep.subr.bf16.mxu0 0
        %5572 = vmatpush1.bf16.msra.mxu0 0
        %5573 = vmatprep.subr.bf16.mxu0 0
        %5574 = vmatpush1.bf16.msra.mxu0 0
        %5575 = vmatprep.subr.bf16.mxu0 0
        %5576 = vmatpush1.bf16.msra.mxu0 0
        %5577 = vmatprep.subr.bf16.mxu0 0
        %5578 = vmatpush1.bf16.msra.mxu0 0
        %5579 = vmatprep.subr.bf16.mxu0 0
        %5580 = vmatpush1.bf16.msra.mxu0 0
        %5581 = vmatprep.subr.bf16.mxu0 0
        %5582 = vmatpush1.bf16.msra.mxu0 0
        %5583 = vmatprep.subr.bf16.mxu0 0
        %5584 = vmatpush1.bf16.msra.mxu0 0
        %5585 = vmatprep.subr.bf16.mxu0 0
        %5586 = vmatpush1.bf16.msra.mxu0 0
        %5587 = vmatprep.mubr.bf16.mxu0 0
        %5588 = vmatmul.mubr.bf16.gmra.mrb[0].mxu0 %v5553
        %v5589 = vpop.f32.mrb[0].mxu0
        %v5590 = vadd.f32 0.0, %v5589
        %v5591 = vpop.f32.mrb[0].mxu0
        %v5592 = vpop.f32.mrb[0].mxu0
        %v5593 = vadd.f32 0.0, %v5592
        %v5594 = vpop.f32.mrb[0].mxu0
        %5595 = vdwg.mxu0
        %v5597 = vsel %vm4023, %v4747, 0
        %5599 = vmatprep.subr.bf16.mxu0 0
        %5600 = vmatpush1.bf16.msra.mxu0 %v2426
        %5601 = vmatprep.subr.bf16.mxu0 0
        %5602 = vmatpush1.bf16.msra.mxu0 0
        %5603 = vmatprep.subr.bf16.mxu0 0
        %5604 = vmatpush1.bf16.msra.mxu0 0
        %5605 = vmatprep.subr.bf16.mxu0 0
        %5606 = vmatpush1.bf16.msra.mxu0 0
        %5607 = vmatprep.subr.bf16.mxu0 0
        %5608 = vmatpush1.bf16.msra.mxu0 0
        %5609 = vmatprep.subr.bf16.mxu0 0
        %5610 = vmatpush1.bf16.msra.mxu0 0
        %5611 = vmatprep.subr.bf16.mxu0 0
        %5612 = vmatpush1.bf16.msra.mxu0 0
        %5613 = vmatprep.subr.bf16.mxu0 0
        %5614 = vmatpush1.bf16.msra.mxu0 0
        %5615 = vmatprep.subr.bf16.mxu0 0
        %5616 = vmatpush1.bf16.msra.mxu0 0
        %5617 = vmatprep.subr.bf16.mxu0 0
        %5618 = vmatpush1.bf16.msra.mxu0 0
        %5619 = vmatprep.subr.bf16.mxu0 0
        %5620 = vmatpush1.bf16.msra.mxu0 0
        %5621 = vmatprep.subr.bf16.mxu0 0
        %5622 = vmatpush1.bf16.msra.mxu0 0
        %5623 = vmatprep.subr.bf16.mxu0 0
        %5624 = vmatpush1.bf16.msra.mxu0 0
        %5625 = vmatprep.subr.bf16.mxu0 0
        %5626 = vmatpush1.bf16.msra.mxu0 0
        %5627 = vmatprep.subr.bf16.mxu0 0
        %5628 = vmatpush1.bf16.msra.mxu0 0
        %5629 = vmatprep.subr.bf16.mxu0 0
        %5630 = vmatpush1.bf16.msra.mxu0 0
        %5631 = vmatprep.mubr.bf16.mxu0 0
        %5632 = vmatmul.mubr.bf16.gmra.mrb[0].mxu0 %v5597
        %v5633 = vpop.f32.mrb[0].mxu0
        %v5634 = vadd.f32 0.0, %v5633
        %v5635 = vpop.f32.mrb[0].mxu0
        %v5636 = vpop.f32.mrb[0].mxu0
        %v5637 = vadd.f32 0.0, %v5636
        %v5638 = vpop.f32.mrb[0].mxu0
        %5639 = vdwg.mxu0
        %v5641 = vsel %vm4023, %v4748, 0
        %5643 = vmatprep.subr.bf16.mxu0 0
        %5644 = vmatpush1.bf16.msra.mxu0 %v2427
        %5645 = vmatprep.subr.bf16.mxu0 0
        %5646 = vmatpush1.bf16.msra.mxu0 0
        %5647 = vmatprep.subr.bf16.mxu0 0
        %5648 = vmatpush1.bf16.msra.mxu0 0
        %5649 = vmatprep.subr.bf16.mxu0 0
        %5650 = vmatpush1.bf16.msra.mxu0 0
        %5651 = vmatprep.subr.bf16.mxu0 0
        %5652 = vmatpush1.bf16.msra.mxu0 0
        %5653 = vmatprep.subr.bf16.mxu0 0
        %5654 = vmatpush1.bf16.msra.mxu0 0
        %5655 = vmatprep.subr.bf16.mxu0 0
        %5656 = vmatpush1.bf16.msra.mxu0 0
        %5657 = vmatprep.subr.bf16.mxu0 0
        %5658 = vmatpush1.bf16.msra.mxu0 0
        %5659 = vmatprep.subr.bf16.mxu0 0
        %5660 = vmatpush1.bf16.msra.mxu0 0
        %5661 = vmatprep.subr.bf16.mxu0 0
        %5662 = vmatpush1.bf16.msra.mxu0 0
        %5663 = vmatprep.subr.bf16.mxu0 0
        %5664 = vmatpush1.bf16.msra.mxu0 0
        %5665 = vmatprep.subr.bf16.mxu0 0
        %5666 = vmatpush1.bf16.msra.mxu0 0
        %5667 = vmatprep.subr.bf16.mxu0 0
        %5668 = vmatpush1.bf16.msra.mxu0 0
        %5669 = vmatprep.subr.bf16.mxu0 0
        %5670 = vmatpush1.bf16.msra.mxu0 0
        %5671 = vmatprep.subr.bf16.mxu0 0
        %5672 = vmatpush1.bf16.msra.mxu0 0
        %5673 = vmatprep.subr.bf16.mxu0 0
        %5674 = vmatpush1.bf16.msra.mxu0 0
        %5675 = vmatprep.mubr.bf16.mxu0 0
        %5676 = vmatmul.mubr.bf16.gmra.mrb[0].mxu0 %v5641
        %v5677 = vpop.f32.mrb[0].mxu0
        %v5678 = vadd.f32 0.0, %v5677
        %v5679 = vpop.f32.mrb[0].mxu0
        %v5680 = vpop.f32.mrb[0].mxu0
        %v5681 = vadd.f32 0.0, %v5680
        %v5682 = vpop.f32.mrb[0].mxu0
        %5683 = vdwg.mxu0
        %v5685 = vsel %vm4023, %v4749, 0
        %5687 = vmatprep.subr.bf16.mxu0 0
        %5688 = vmatpush1.bf16.msra.mxu0 %v2428
        %5689 = vmatprep.subr.bf16.mxu0 0
        %5690 = vmatpush1.bf16.msra.mxu0 0
        %5691 = vmatprep.subr.bf16.mxu0 0
        %5692 = vmatpush1.bf16.msra.mxu0 0
        %5693 = vmatprep.subr.bf16.mxu0 0
        %5694 = vmatpush1.bf16.msra.mxu0 0
        %5695 = vmatprep.subr.bf16.mxu0 0
        %5696 = vmatpush1.bf16.msra.mxu0 0
        %5697 = vmatprep.subr.bf16.mxu0 0
        %5698 = vmatpush1.bf16.msra.mxu0 0
        %5699 = vmatprep.subr.bf16.mxu0 0
        %5700 = vmatpush1.bf16.msra.mxu0 0
        %5701 = vmatprep.subr.bf16.mxu0 0
        %5702 = vmatpush1.bf16.msra.mxu0 0
        %5703 = vmatprep.subr.bf16.mxu0 0
        %5704 = vmatpush1.bf16.msra.mxu0 0
        %5705 = vmatprep.subr.bf16.mxu0 0
        %5706 = vmatpush1.bf16.msra.mxu0 0
        %5707 = vmatprep.subr.bf16.mxu0 0
        %5708 = vmatpush1.bf16.msra.mxu0 0
        %5709 = vmatprep.subr.bf16.mxu0 0
        %5710 = vmatpush1.bf16.msra.mxu0 0
        %5711 = vmatprep.subr.bf16.mxu0 0
        %5712 = vmatpush1.bf16.msra.mxu0 0
        %5713 = vmatprep.subr.bf16.mxu0 0
        %5714 = vmatpush1.bf16.msra.mxu0 0
        %5715 = vmatprep.subr.bf16.mxu0 0
        %5716 = vmatpush1.bf16.msra.mxu0 0
        %5717 = vmatprep.subr.bf16.mxu0 0
        %5718 = vmatpush1.bf16.msra.mxu0 0
        %5719 = vmatprep.mubr.bf16.mxu0 0
        %5720 = vmatmul.mubr.bf16.gmra.mrb[0].mxu0 %v5685
        %v5721 = vpop.f32.mrb[0].mxu0
        %v5722 = vadd.f32 0.0, %v5721
        %v5723 = vpop.f32.mrb[0].mxu0
        %v5724 = vpop.f32.mrb[0].mxu0
        %v5725 = vadd.f32 0.0, %v5724
        %v5726 = vpop.f32.mrb[0].mxu0
        %5727 = vdwg.mxu0
        %v5729 = vsel %vm4023, %v4750, 0
        %5731 = vmatprep.subr.bf16.mxu0 0
        %5732 = vmatpush1.bf16.msra.mxu0 %v2429
        %5733 = vmatprep.subr.bf16.mxu0 0
        %5734 = vmatpush1.bf16.msra.mxu0 0
        %5735 = vmatprep.subr.bf16.mxu0 0
        %5736 = vmatpush1.bf16.msra.mxu0 0
        %5737 = vmatprep.subr.bf16.mxu0 0
        %5738 = vmatpush1.bf16.msra.mxu0 0
        %5739 = vmatprep.subr.bf16.mxu0 0
        %5740 = vmatpush1.bf16.msra.mxu0 0
        %5741 = vmatprep.subr.bf16.mxu0 0
        %5742 = vmatpush1.bf16.msra.mxu0 0
        %5743 = vmatprep.subr.bf16.mxu0 0
        %5744 = vmatpush1.bf16.msra.mxu0 0
        %5745 = vmatprep.subr.bf16.mxu0 0
        %5746 = vmatpush1.bf16.msra.mxu0 0
        %5747 = vmatprep.subr.bf16.mxu0 0
        %5748 = vmatpush1.bf16.msra.mxu0 0
        %5749 = vmatprep.subr.bf16.mxu0 0
        %5750 = vmatpush1.bf16.msra.mxu0 0
        %5751 = vmatprep.subr.bf16.mxu0 0
        %5752 = vmatpush1.bf16.msra.mxu0 0
        %5753 = vmatprep.subr.bf16.mxu0 0
        %5754 = vmatpush1.bf16.msra.mxu0 0
        %5755 = vmatprep.subr.bf16.mxu0 0
        %5756 = vmatpush1.bf16.msra.mxu0 0
        %5757 = vmatprep.subr.bf16.mxu0 0
        %5758 = vmatpush1.bf16.msra.mxu0 0
        %5759 = vmatprep.subr.bf16.mxu0 0
        %5760 = vmatpush1.bf16.msra.mxu0 0
        %5761 = vmatprep.subr.bf16.mxu0 0
        %5762 = vmatpush1.bf16.msra.mxu0 0
        %5763 = vmatprep.mubr.bf16.mxu0 0
        %5764 = vmatmul.mubr.bf16.gmra.mrb[0].mxu0 %v5729
        %v5765 = vpop.f32.mrb[0].mxu0
        %v5766 = vadd.f32 0.0, %v5765
        %v5767 = vpop.f32.mrb[0].mxu0
        %v5768 = vpop.f32.mrb[0].mxu0
        %v5769 = vadd.f32 0.0, %v5768
        %v5770 = vpop.f32.mrb[0].mxu0
        %5771 = vdwg.mxu0
        %v5773 = vsel %vm4023, %v4751, 0
        %5775 = vmatprep.subr.bf16.mxu0 0
        %5776 = vmatpush1.bf16.msra.mxu0 %v2430
        %5777 = vmatprep.subr.bf16.mxu0 0
        %5778 = vmatpush1.bf16.msra.mxu0 0
        %5779 = vmatprep.subr.bf16.mxu0 0
        %5780 = vmatpush1.bf16.msra.mxu0 0
        %5781 = vmatprep.subr.bf16.mxu0 0
        %5782 = vmatpush1.bf16.msra.mxu0 0
        %5783 = vmatprep.subr.bf16.mxu0 0
        %5784 = vmatpush1.bf16.msra.mxu0 0
        %5785 = vmatprep.subr.bf16.mxu0 0
        %5786 = vmatpush1.bf16.msra.mxu0 0
        %5787 = vmatprep.subr.bf16.mxu0 0
        %5788 = vmatpush1.bf16.msra.mxu0 0
        %5789 = vmatprep.subr.bf16.mxu0 0
        %5790 = vmatpush1.bf16.msra.mxu0 0
        %5791 = vmatprep.subr.bf16.mxu0 0
        %5792 = vmatpush1.bf16.msra.mxu0 0
        %5793 = vmatprep.subr.bf16.mxu0 0
        %5794 = vmatpush1.bf16.msra.mxu0 0
        %5795 = vmatprep.subr.bf16.mxu0 0
        %5796 = vmatpush1.bf16.msra.mxu0 0
        %5797 = vmatprep.subr.bf16.mxu0 0
        %5798 = vmatpush1.bf16.msra.mxu0 0
        %5799 = vmatprep.subr.bf16.mxu0 0
        %5800 = vmatpush1.bf16.msra.mxu0 0
        %5801 = vmatprep.subr.bf16.mxu0 0
        %5802 = vmatpush1.bf16.msra.mxu0 0
        %5803 = vmatprep.subr.bf16.mxu0 0
        %5804 = vmatpush1.bf16.msra.mxu0 0
        %5805 = vmatprep.subr.bf16.mxu0 0
        %5806 = vmatpush1.bf16.msra.mxu0 0
        %5807 = vmatprep.mubr.bf16.mxu0 0
        %5808 = vmatmul.mubr.bf16.gmra.mrb[0].mxu0 %v5773
        %v5809 = vpop.f32.mrb[0].mxu0
        %v5810 = vadd.f32 0.0, %v5809
        %v5811 = vpop.f32.mrb[0].mxu0
        %v5812 = vpop.f32.mrb[0].mxu0
        %v5813 = vadd.f32 0.0, %v5812
        %v5814 = vpop.f32.mrb[0].mxu0
        %5815 = vdwg.mxu0
        %v5817 = vsel %vm4023, %v4752, 0
        %5819 = vmatprep.subr.bf16.mxu0 0
        %5820 = vmatpush1.bf16.msra.mxu0 %v2431
        %5821 = vmatprep.subr.bf16.mxu0 0
        %5822 = vmatpush1.bf16.msra.mxu0 0
        %5823 = vmatprep.subr.bf16.mxu0 0
        %5824 = vmatpush1.bf16.msra.mxu0 0
        %5825 = vmatprep.subr.bf16.mxu0 0
        %5826 = vmatpush1.bf16.msra.mxu0 0
        %5827 = vmatprep.subr.bf16.mxu0 0
        %5828 = vmatpush1.bf16.msra.mxu0 0
        %5829 = vmatprep.subr.bf16.mxu0 0
        %5830 = vmatpush1.bf16.msra.mxu0 0
        %5831 = vmatprep.subr.bf16.mxu0 0
        %5832 = vmatpush1.bf16.msra.mxu0 0
        %5833 = vmatprep.subr.bf16.mxu0 0
        %5834 = vmatpush1.bf16.msra.mxu0 0
        %5835 = vmatprep.subr.bf16.mxu0 0
        %5836 = vmatpush1.bf16.msra.mxu0 0
        %5837 = vmatprep.subr.bf16.mxu0 0
        %5838 = vmatpush1.bf16.msra.mxu0 0
        %5839 = vmatprep.subr.bf16.mxu0 0
        %5840 = vmatpush1.bf16.msra.mxu0 0
        %5841 = vmatprep.subr.bf16.mxu0 0
        %5842 = vmatpush1.bf16.msra.mxu0 0
        %5843 = vmatprep.subr.bf16.mxu0 0
        %5844 = vmatpush1.bf16.msra.mxu0 0
        %5845 = vmatprep.subr.bf16.mxu0 0
        %5846 = vmatpush1.bf16.msra.mxu0 0
        %5847 = vmatprep.subr.bf16.mxu0 0
        %5848 = vmatpush1.bf16.msra.mxu0 0
        %5849 = vmatprep.subr.bf16.mxu0 0
        %5850 = vmatpush1.bf16.msra.mxu0 0
        %5851 = vmatprep.mubr.bf16.mxu0 0
        %5852 = vmatmul.mubr.bf16.gmra.mrb[0].mxu0 %v5817
        %v5853 = vpop.f32.mrb[0].mxu0
        %v5854 = vadd.f32 0.0, %v5853
        %v5855 = vpop.f32.mrb[0].mxu0
        %v5856 = vpop.f32.mrb[0].mxu0
        %v5857 = vadd.f32 0.0, %v5856
        %v5858 = vpop.f32.mrb[0].mxu0
        %5859 = vdwg.mxu0
        %v5861 = vsel %vm4023, %v4753, 0
        %5863 = vmatprep.subr.bf16.mxu0 0
        %5864 = vmatpush1.bf16.msra.mxu0 %v2432
        %5865 = vmatprep.subr.bf16.mxu0 0
        %5866 = vmatpush1.bf16.msra.mxu0 0
        %5867 = vmatprep.subr.bf16.mxu0 0
        %5868 = vmatpush1.bf16.msra.mxu0 0
        %5869 = vmatprep.subr.bf16.mxu0 0
        %5870 = vmatpush1.bf16.msra.mxu0 0
        %5871 = vmatprep.subr.bf16.mxu0 0
        %5872 = vmatpush1.bf16.msra.mxu0 0
        %5873 = vmatprep.subr.bf16.mxu0 0
        %5874 = vmatpush1.bf16.msra.mxu0 0
        %5875 = vmatprep.subr.bf16.mxu0 0
        %5876 = vmatpush1.bf16.msra.mxu0 0
        %5877 = vmatprep.subr.bf16.mxu0 0
        %5878 = vmatpush1.bf16.msra.mxu0 0
        %5879 = vmatprep.subr.bf16.mxu0 0
        %5880 = vmatpush1.bf16.msra.mxu0 0
        %5881 = vmatprep.subr.bf16.mxu0 0
        %5882 = vmatpush1.bf16.msra.mxu0 0
        %5883 = vmatprep.subr.bf16.mxu0 0
        %5884 = vmatpush1.bf16.msra.mxu0 0
        %5885 = vmatprep.subr.bf16.mxu0 0
        %5886 = vmatpush1.bf16.msra.mxu0 0
        %5887 = vmatprep.subr.bf16.mxu0 0
        %5888 = vmatpush1.bf16.msra.mxu0 0
        %5889 = vmatprep.subr.bf16.mxu0 0
        %5890 = vmatpush1.bf16.msra.mxu0 0
        %5891 = vmatprep.subr.bf16.mxu0 0
        %5892 = vmatpush1.bf16.msra.mxu0 0
        %5893 = vmatprep.subr.bf16.mxu0 0
        %5894 = vmatpush1.bf16.msra.mxu0 0
        %5895 = vmatprep.mubr.bf16.mxu0 0
        %5896 = vmatmul.mubr.bf16.gmra.mrb[0].mxu0 %v5861
        %v5897 = vpop.f32.mrb[0].mxu0
        %v5898 = vadd.f32 0.0, %v5897
        %v5899 = vpop.f32.mrb[0].mxu0
        %v5900 = vpop.f32.mrb[0].mxu0
        %v5901 = vadd.f32 0.0, %v5900
        %v5902 = vpop.f32.mrb[0].mxu0
        %5903 = vdwg.mxu0
        %v5905 = vsel %vm4023, %v4754, 0
        %5907 = vmatprep.subr.bf16.mxu0 0
        %5908 = vmatpush1.bf16.msra.mxu0 %v2433
        %5909 = vmatprep.subr.bf16.mxu0 0
        %5910 = vmatpush1.bf16.msra.mxu0 0
        %5911 = vmatprep.subr.bf16.mxu0 0
        %5912 = vmatpush1.bf16.msra.mxu0 0
        %5913 = vmatprep.subr.bf16.mxu0 0
        %5914 = vmatpush1.bf16.msra.mxu0 0
        %5915 = vmatprep.subr.bf16.mxu0 0
        %5916 = vmatpush1.bf16.msra.mxu0 0
        %5917 = vmatprep.subr.bf16.mxu0 0
        %5918 = vmatpush1.bf16.msra.mxu0 0
        %5919 = vmatprep.subr.bf16.mxu0 0
        %5920 = vmatpush1.bf16.msra.mxu0 0
        %5921 = vmatprep.subr.bf16.mxu0 0
        %5922 = vmatpush1.bf16.msra.mxu0 0
        %5923 = vmatprep.subr.bf16.mxu0 0
        %5924 = vmatpush1.bf16.msra.mxu0 0
        %5925 = vmatprep.subr.bf16.mxu0 0
        %5926 = vmatpush1.bf16.msra.mxu0 0
        %5927 = vmatprep.subr.bf16.mxu0 0
        %5928 = vmatpush1.bf16.msra.mxu0 0
        %5929 = vmatprep.subr.bf16.mxu0 0
        %5930 = vmatpush1.bf16.msra.mxu0 0
        %5931 = vmatprep.subr.bf16.mxu0 0
        %5932 = vmatpush1.bf16.msra.mxu0 0
        %5933 = vmatprep.subr.bf16.mxu0 0
        %5934 = vmatpush1.bf16.msra.mxu0 0
        %5935 = vmatprep.subr.bf16.mxu0 0
        %5936 = vmatpush1.bf16.msra.mxu0 0
        %5937 = vmatprep.subr.bf16.mxu0 0
        %5938 = vmatpush1.bf16.msra.mxu0 0
        %5939 = vmatprep.mubr.bf16.mxu0 0
        %5940 = vmatmul.mubr.bf16.gmra.mrb[0].mxu0 %v5905
        %v5941 = vpop.f32.mrb[0].mxu0
        %v5942 = vadd.f32 0.0, %v5941
        %v5943 = vpop.f32.mrb[0].mxu0
        %v5944 = vpop.f32.mrb[0].mxu0
        %v5945 = vadd.f32 0.0, %v5944
        %v5946 = vpop.f32.mrb[0].mxu0
        %5947 = vdwg.mxu0
        %v5949 = vsel %vm4023, %v4755, 0
        %5951 = vmatprep.subr.bf16.mxu0 0
        %5952 = vmatpush1.bf16.msra.mxu0 %v2434
        %5953 = vmatprep.subr.bf16.mxu0 0
        %5954 = vmatpush1.bf16.msra.mxu0 0
        %5955 = vmatprep.subr.bf16.mxu0 0
        %5956 = vmatpush1.bf16.msra.mxu0 0
        %5957 = vmatprep.subr.bf16.mxu0 0
        %5958 = vmatpush1.bf16.msra.mxu0 0
        %5959 = vmatprep.subr.bf16.mxu0 0
        %5960 = vmatpush1.bf16.msra.mxu0 0
        %5961 = vmatprep.subr.bf16.mxu0 0
        %5962 = vmatpush1.bf16.msra.mxu0 0
        %5963 = vmatprep.subr.bf16.mxu0 0
        %5964 = vmatpush1.bf16.msra.mxu0 0
        %5965 = vmatprep.subr.bf16.mxu0 0
        %5966 = vmatpush1.bf16.msra.mxu0 0
        %5967 = vmatprep.subr.bf16.mxu0 0
        %5968 = vmatpush1.bf16.msra.mxu0 0
        %5969 = vmatprep.subr.bf16.mxu0 0
        %5970 = vmatpush1.bf16.msra.mxu0 0
        %5971 = vmatprep.subr.bf16.mxu0 0
        %5972 = vmatpush1.bf16.msra.mxu0 0
        %5973 = vmatprep.subr.bf16.mxu0 0
        %5974 = vmatpush1.bf16.msra.mxu0 0
        %5975 = vmatprep.subr.bf16.mxu0 0
        %5976 = vmatpush1.bf16.msra.mxu0 0
        %5977 = vmatprep.subr.bf16.mxu0 0
        %5978 = vmatpush1.bf16.msra.mxu0 0
        %5979 = vmatprep.subr.bf16.mxu0 0
        %5980 = vmatpush1.bf16.msra.mxu0 0
        %5981 = vmatprep.subr.bf16.mxu0 0
        %5982 = vmatpush1.bf16.msra.mxu0 0
        %5983 = vmatprep.mubr.bf16.mxu0 0
        %5984 = vmatmul.mubr.bf16.gmra.mrb[0].mxu0 %v5949
        %v5985 = vpop.f32.mrb[0].mxu0
        %v5986 = vadd.f32 0.0, %v5985
        %v5987 = vpop.f32.mrb[0].mxu0
        %v5988 = vpop.f32.mrb[0].mxu0
        %v5989 = vadd.f32 0.0, %v5988
        %v5990 = vpop.f32.mrb[0].mxu0
        %5991 = vdwg.mxu0
        %v5993 = vsel %vm4023, %v4756, 0
        %5995 = vmatprep.subr.bf16.mxu0 0
        %5996 = vmatpush1.bf16.msra.mxu0 %v2435
        %5997 = vmatprep.subr.bf16.mxu0 0
        %5998 = vmatpush1.bf16.msra.mxu0 0
        %5999 = vmatprep.subr.bf16.mxu0 0
        %6000 = vmatpush1.bf16.msra.mxu0 0
        %6001 = vmatprep.subr.bf16.mxu0 0
        %6002 = vmatpush1.bf16.msra.mxu0 0
        %6003 = vmatprep.subr.bf16.mxu0 0
        %6004 = vmatpush1.bf16.msra.mxu0 0
        %6005 = vmatprep.subr.bf16.mxu0 0
        %6006 = vmatpush1.bf16.msra.mxu0 0
        %6007 = vmatprep.subr.bf16.mxu0 0
        %6008 = vmatpush1.bf16.msra.mxu0 0
        %6009 = vmatprep.subr.bf16.mxu0 0
        %6010 = vmatpush1.bf16.msra.mxu0 0
        %6011 = vmatprep.subr.bf16.mxu0 0
        %6012 = vmatpush1.bf16.msra.mxu0 0
        %6013 = vmatprep.subr.bf16.mxu0 0
        %6014 = vmatpush1.bf16.msra.mxu0 0
        %6015 = vmatprep.subr.bf16.mxu0 0
        %6016 = vmatpush1.bf16.msra.mxu0 0
        %6017 = vmatprep.subr.bf16.mxu0 0
        %6018 = vmatpush1.bf16.msra.mxu0 0
        %6019 = vmatprep.subr.bf16.mxu0 0
        %6020 = vmatpush1.bf16.msra.mxu0 0
        %6021 = vmatprep.subr.bf16.mxu0 0
        %6022 = vmatpush1.bf16.msra.mxu0 0
        %6023 = vmatprep.subr.bf16.mxu0 0
        %6024 = vmatpush1.bf16.msra.mxu0 0
        %6025 = vmatprep.subr.bf16.mxu0 0
        %6026 = vmatpush1.bf16.msra.mxu0 0
        %6027 = vmatprep.mubr.bf16.mxu0 0
        %6028 = vmatmul.mubr.bf16.gmra.mrb[0].mxu0 %v5993
        %v6029 = vpop.f32.mrb[0].mxu0
        %v6030 = vadd.f32 0.0, %v6029
        %v6031 = vpop.f32.mrb[0].mxu0
        %v6032 = vpop.f32.mrb[0].mxu0
        %v6033 = vadd.f32 0.0, %v6032
        %v6034 = vpop.f32.mrb[0].mxu0
        %6035 = vdwg.mxu0
        %v6037 = vsel %vm4023, %v4757, 0
        %6039 = vmatprep.subr.bf16.mxu0 0
        %6040 = vmatpush1.bf16.msra.mxu0 %v2436
        %6041 = vmatprep.subr.bf16.mxu0 0
        %6042 = vmatpush1.bf16.msra.mxu0 0
        %6043 = vmatprep.subr.bf16.mxu0 0
        %6044 = vmatpush1.bf16.msra.mxu0 0
        %6045 = vmatprep.subr.bf16.mxu0 0
        %6046 = vmatpush1.bf16.msra.mxu0 0
        %6047 = vmatprep.subr.bf16.mxu0 0
        %6048 = vmatpush1.bf16.msra.mxu0 0
        %6049 = vmatprep.subr.bf16.mxu0 0
        %6050 = vmatpush1.bf16.msra.mxu0 0
        %6051 = vmatprep.subr.bf16.mxu0 0
        %6052 = vmatpush1.bf16.msra.mxu0 0
        %6053 = vmatprep.subr.bf16.mxu0 0
        %6054 = vmatpush1.bf16.msra.mxu0 0
        %6055 = vmatprep.subr.bf16.mxu0 0
        %6056 = vmatpush1.bf16.msra.mxu0 0
        %6057 = vmatprep.subr.bf16.mxu0 0
        %6058 = vmatpush1.bf16.msra.mxu0 0
        %6059 = vmatprep.subr.bf16.mxu0 0
        %6060 = vmatpush1.bf16.msra.mxu0 0
        %6061 = vmatprep.subr.bf16.mxu0 0
        %6062 = vmatpush1.bf16.msra.mxu0 0
        %6063 = vmatprep.subr.bf16.mxu0 0
        %6064 = vmatpush1.bf16.msra.mxu0 0
        %6065 = vmatprep.subr.bf16.mxu0 0
        %6066 = vmatpush1.bf16.msra.mxu0 0
        %6067 = vmatprep.subr.bf16.mxu0 0
        %6068 = vmatpush1.bf16.msra.mxu0 0
        %6069 = vmatprep.subr.bf16.mxu0 0
        %6070 = vmatpush1.bf16.msra.mxu0 0
        %6071 = vmatprep.mubr.bf16.mxu0 0
        %6072 = vmatmul.mubr.bf16.gmra.mrb[0].mxu0 %v6037
        %v6073 = vpop.f32.mrb[0].mxu0
        %v6074 = vadd.f32 0.0, %v6073
        %v6075 = vpop.f32.mrb[0].mxu0
        %v6076 = vpop.f32.mrb[0].mxu0
        %v6077 = vadd.f32 0.0, %v6076
        %v6078 = vpop.f32.mrb[0].mxu0
        %6079 = vdwg.mxu0
        %v6081 = vsel %vm4023, %v4758, 0
        %6083 = vmatprep.subr.bf16.mxu0 0
        %6084 = vmatpush1.bf16.msra.mxu0 %v2437
        %6085 = vmatprep.subr.bf16.mxu0 0
        %6086 = vmatpush1.bf16.msra.mxu0 0
        %6087 = vmatprep.subr.bf16.mxu0 0
        %6088 = vmatpush1.bf16.msra.mxu0 0
        %6089 = vmatprep.subr.bf16.mxu0 0
        %6090 = vmatpush1.bf16.msra.mxu0 0
        %6091 = vmatprep.subr.bf16.mxu0 0
        %6092 = vmatpush1.bf16.msra.mxu0 0
        %6093 = vmatprep.subr.bf16.mxu0 0
        %6094 = vmatpush1.bf16.msra.mxu0 0
        %6095 = vmatprep.subr.bf16.mxu0 0
        %6096 = vmatpush1.bf16.msra.mxu0 0
        %6097 = vmatprep.subr.bf16.mxu0 0
        %6098 = vmatpush1.bf16.msra.mxu0 0
        %6099 = vmatprep.subr.bf16.mxu0 0
        %6100 = vmatpush1.bf16.msra.mxu0 0
        %6101 = vmatprep.subr.bf16.mxu0 0
        %6102 = vmatpush1.bf16.msra.mxu0 0
        %6103 = vmatprep.subr.bf16.mxu0 0
        %6104 = vmatpush1.bf16.msra.mxu0 0
        %6105 = vmatprep.subr.bf16.mxu0 0
        %6106 = vmatpush1.bf16.msra.mxu0 0
        %6107 = vmatprep.subr.bf16.mxu0 0
        %6108 = vmatpush1.bf16.msra.mxu0 0
        %6109 = vmatprep.subr.bf16.mxu0 0
        %6110 = vmatpush1.bf16.msra.mxu0 0
        %6111 = vmatprep.subr.bf16.mxu0 0
        %6112 = vmatpush1.bf16.msra.mxu0 0
        %6113 = vmatprep.subr.bf16.mxu0 0
        %6114 = vmatpush1.bf16.msra.mxu0 0
        %6115 = vmatprep.mubr.bf16.mxu0 0
        %6116 = vmatmul.mubr.bf16.gmra.mrb[0].mxu0 %v6081
        %v6117 = vpop.f32.mrb[0].mxu0
        %v6118 = vadd.f32 0.0, %v6117
        %v6119 = vpop.f32.mrb[0].mxu0
        %v6120 = vpop.f32.mrb[0].mxu0
        %v6121 = vadd.f32 0.0, %v6120
        %v6122 = vpop.f32.mrb[0].mxu0
        %6123 = vdwg.mxu0
        %v6125 = vsel %vm4023, %v4759, 0
        %6127 = vmatprep.subr.bf16.mxu0 0
        %6128 = vmatpush1.bf16.msra.mxu0 %v2438
        %6129 = vmatprep.subr.bf16.mxu0 0
        %6130 = vmatpush1.bf16.msra.mxu0 0
        %6131 = vmatprep.subr.bf16.mxu0 0
        %6132 = vmatpush1.bf16.msra.mxu0 0
        %6133 = vmatprep.subr.bf16.mxu0 0
        %6134 = vmatpush1.bf16.msra.mxu0 0
        %6135 = vmatprep.subr.bf16.mxu0 0
        %6136 = vmatpush1.bf16.msra.mxu0 0
        %6137 = vmatprep.subr.bf16.mxu0 0
        %6138 = vmatpush1.bf16.msra.mxu0 0
        %6139 = vmatprep.subr.bf16.mxu0 0
        %6140 = vmatpush1.bf16.msra.mxu0 0
        %6141 = vmatprep.subr.bf16.mxu0 0
        %6142 = vmatpush1.bf16.msra.mxu0 0
        %6143 = vmatprep.subr.bf16.mxu0 0
        %6144 = vmatpush1.bf16.msra.mxu0 0
        %6145 = vmatprep.subr.bf16.mxu0 0
        %6146 = vmatpush1.bf16.msra.mxu0 0
        %6147 = vmatprep.subr.bf16.mxu0 0
        %6148 = vmatpush1.bf16.msra.mxu0 0
        %6149 = vmatprep.subr.bf16.mxu0 0
        %6150 = vmatpush1.bf16.msra.mxu0 0
        %6151 = vmatprep.subr.bf16.mxu0 0
        %6152 = vmatpush1.bf16.msra.mxu0 0
        %6153 = vmatprep.subr.bf16.mxu0 0
        %6154 = vmatpush1.bf16.msra.mxu0 0
        %6155 = vmatprep.subr.bf16.mxu0 0
        %6156 = vmatpush1.bf16.msra.mxu0 0
        %6157 = vmatprep.subr.bf16.mxu0 0
        %6158 = vmatpush1.bf16.msra.mxu0 0
        %6159 = vmatprep.mubr.bf16.mxu0 0
        %6160 = vmatmul.mubr.bf16.gmra.mrb[0].mxu0 %v6125
        %v6161 = vpop.f32.mrb[0].mxu0
        %v6162 = vadd.f32 0.0, %v6161
        %v6163 = vpop.f32.mrb[0].mxu0
        %v6164 = vpop.f32.mrb[0].mxu0
        %v6165 = vadd.f32 0.0, %v6164
        %v6166 = vpop.f32.mrb[0].mxu0
        %6167 = vdwg.mxu0
        %v6168 = vpack.c.bf16 %v4801, %v4798
        %v6169 = vpack.c.bf16 %v4845, %v4842
        %v6170 = vpack.c.bf16 %v4889, %v4886
        %v6171 = vpack.c.bf16 %v4933, %v4930
        %v6172 = vpack.c.bf16 %v4977, %v4974
        %v6173 = vpack.c.bf16 %v5021, %v5018
        %v6174 = vpack.c.bf16 %v5065, %v5062
        %v6175 = vpack.c.bf16 %v5109, %v5106
        %v6176 = vpack.c.bf16 %v5153, %v5150
        %v6177 = vpack.c.bf16 %v5197, %v5194
        %v6178 = vpack.c.bf16 %v5241, %v5238
        %v6179 = vpack.c.bf16 %v5285, %v5282
        %v6180 = vpack.c.bf16 %v5329, %v5326
        %v6181 = vpack.c.bf16 %v5373, %v5370
        %v6182 = vpack.c.bf16 %v5417, %v5414
        %v6183 = vpack.c.bf16 %v5461, %v5458
        %v6184 = vpack.c.bf16 %v5505, %v5502
        %v6185 = vpack.c.bf16 %v5549, %v5546
        %v6186 = vpack.c.bf16 %v5593, %v5590
        %v6187 = vpack.c.bf16 %v5637, %v5634
        %v6188 = vpack.c.bf16 %v5681, %v5678
        %v6189 = vpack.c.bf16 %v5725, %v5722
        %v6190 = vpack.c.bf16 %v5769, %v5766
        %v6191 = vpack.c.bf16 %v5813, %v5810
        %v6192 = vpack.c.bf16 %v5857, %v5854
        %v6193 = vpack.c.bf16 %v5901, %v5898
        %v6194 = vpack.c.bf16 %v5945, %v5942
        %v6195 = vpack.c.bf16 %v5989, %v5986
        %v6196 = vpack.c.bf16 %v6033, %v6030
        %v6197 = vpack.c.bf16 %v6077, %v6074
        %v6198 = vpack.c.bf16 %v6121, %v6118
        %v6199 = vpack.c.bf16 %v6165, %v6162
        %v6200 = vld [vmem:[#allocation11] sm:$0xf]
        %v6201 = vld [vmem:[#allocation11 + $0x4] sm:$0xf]
        %v6202 = vld [vmem:[#allocation11 + $0x8] sm:$0xf]
        %v6203 = vld [vmem:[#allocation11 + $0xc] sm:$0xf]
        %v6204 = vld [vmem:[#allocation11 + $0x10] sm:$0xf]
        %v6205 = vld [vmem:[#allocation11 + $0x14] sm:$0xf]
        %v6206 = vld [vmem:[#allocation11 + $0x18] sm:$0xf]
        %v6207 = vld [vmem:[#allocation11 + $0x1c] sm:$0xf]
        %v6208 = vld [vmem:[#allocation11 + $0x20] sm:$0xf]
        %v6209 = vld [vmem:[#allocation11 + $0x24] sm:$0xf]
        %v6210 = vld [vmem:[#allocation11 + $0x28] sm:$0xf]
        %v6211 = vld [vmem:[#allocation11 + $0x2c] sm:$0xf]
        %v6212 = vld [vmem:[#allocation11 + $0x30] sm:$0xf]
        %v6213 = vld [vmem:[#allocation11 + $0x34] sm:$0xf]
        %v6214 = vld [vmem:[#allocation11 + $0x38] sm:$0xf]
        %v6215 = vld [vmem:[#allocation11 + $0x3c] sm:$0xf]
        %v6216 = vld [vmem:[#allocation11 + $0x40] sm:$0xf]
        %v6217 = vld [vmem:[#allocation11 + $0x44] sm:$0xf]
        %v6218 = vld [vmem:[#allocation11 + $0x48] sm:$0xf]
        %v6219 = vld [vmem:[#allocation11 + $0x4c] sm:$0xf]
        %v6220 = vld [vmem:[#allocation11 + $0x50] sm:$0xf]
        %v6221 = vld [vmem:[#allocation11 + $0x54] sm:$0xf]
        %v6222 = vld [vmem:[#allocation11 + $0x58] sm:$0xf]
        %v6223 = vld [vmem:[#allocation11 + $0x5c] sm:$0xf]
        %v6224 = vld [vmem:[#allocation11 + $0x60] sm:$0xf]
        %v6225 = vld [vmem:[#allocation11 + $0x64] sm:$0xf]
        %v6226 = vld [vmem:[#allocation11 + $0x68] sm:$0xf]
        %v6227 = vld [vmem:[#allocation11 + $0x6c] sm:$0xf]
        %v6228 = vld [vmem:[#allocation11 + $0x70] sm:$0xf]
        %v6229 = vld [vmem:[#allocation11 + $0x74] sm:$0xf]
        %v6230 = vld [vmem:[#allocation11 + $0x78] sm:$0xf]
        %v6231 = vld [vmem:[#allocation11 + $0x7c] sm:$0xf]
        %v6236 = vunpack.c.l.b16 %v6200
        %v6237 = vunpack.c.l.b16 %v6201
        %v6238 = vunpack.c.l.b16 %v6202
        %v6239 = vunpack.c.l.b16 %v6203
        %v6240 = vpack.c.b16 %v6237, %v6236
        %v6241 = vpack.c.b16 %v6239, %v6238
        %v6245 = vsel %vm430, %v6168, 0
        %v6248 = vsel %vm430, %v6169, 0
        %v6251 = vsel %vm430, %v6170, 0
        %v6254 = vsel %vm430, %v6171, 0
        %6256 = vmatprep.subr.bf16.mxu0 0
        %6257 = vmatpush1.bf16.msra.mxu0 %v6240
        %6258 = vmatprep.subr.bf16.mxu0 0
        %6259 = vmatpush1.bf16.msra.mxu0 %v6241
        %6260 = vmatprep.subr.bf16.mxu0 0
        %6261 = vmatpush1.bf16.msra.mxu0 0
        %6262 = vmatprep.subr.bf16.mxu0 0
        %6263 = vmatpush1.bf16.msra.mxu0 0
        %6264 = vmatprep.subr.bf16.mxu0 0
        %6265 = vmatpush1.bf16.msra.mxu0 0
        %6266 = vmatprep.subr.bf16.mxu0 0
        %6267 = vmatpush1.bf16.msra.mxu0 0
        %6268 = vmatprep.subr.bf16.mxu0 0
        %6269 = vmatpush1.bf16.msra.mxu0 0
        %6270 = vmatprep.subr.bf16.mxu0 0
        %6271 = vmatpush1.bf16.msra.mxu0 0
        %6272 = vmatprep.subr.bf16.mxu0 0
        %6273 = vmatpush1.bf16.msra.mxu0 0
        %6274 = vmatprep.subr.bf16.mxu0 0
        %6275 = vmatpush1.bf16.msra.mxu0 0
        %6276 = vmatprep.subr.bf16.mxu0 0
        %6277 = vmatpush1.bf16.msra.mxu0 0
        %6278 = vmatprep.subr.bf16.mxu0 0
        %6279 = vmatpush1.bf16.msra.mxu0 0
        %6280 = vmatprep.subr.bf16.mxu0 0
        %6281 = vmatpush1.bf16.msra.mxu0 0
        %6282 = vmatprep.subr.bf16.mxu0 0
        %6283 = vmatpush1.bf16.msra.mxu0 0
        %6284 = vmatprep.subr.bf16.mxu0 0
        %6285 = vmatpush1.bf16.msra.mxu0 0
        %6286 = vmatprep.subr.bf16.mxu0 0
        %6287 = vmatpush1.bf16.msra.mxu0 0
        %6288 = vmatprep.mubr.bf16.mxu0 0
        %6289 = vmatmul.mubr.bf16.gmra.mrb[0].mxu0 %v6245
        %v6290 = vpop.f32.mrb[0].mxu0
        %v6291 = vadd.f32 0.0, %v6290
        %v6292 = vpop.f32.mrb[0].mxu0
        %v6293 = vpop.f32.mrb[0].mxu0
        %v6294 = vadd.f32 0.0, %v6293
        %v6295 = vpop.f32.mrb[0].mxu0
        %6296 = vmatprep.mubr.bf16.mxu0 0
        %6297 = vmatmul.mubr.bf16.gmra.mrb[0].mxu0 %v6248
        %v6298 = vpop.f32.mrb[0].mxu0
        %v6299 = vadd.f32 0.0, %v6298
        %v6300 = vpop.f32.mrb[0].mxu0
        %v6301 = vpop.f32.mrb[0].mxu0
        %v6302 = vadd.f32 0.0, %v6301
        %v6303 = vpop.f32.mrb[0].mxu0
        %6304 = vmatprep.mubr.bf16.mxu0 0
        %6305 = vmatmul.mubr.bf16.gmra.mrb[0].mxu0 %v6251
        %v6306 = vpop.f32.mrb[0].mxu0
        %v6307 = vadd.f32 0.0, %v6306
        %v6308 = vpop.f32.mrb[0].mxu0
        %v6309 = vpop.f32.mrb[0].mxu0
        %v6310 = vadd.f32 0.0, %v6309
        %v6311 = vpop.f32.mrb[0].mxu0
        %6312 = vmatprep.mubr.bf16.mxu0 0
        %6313 = vmatmul.mubr.bf16.gmra.mrb[0].mxu0 %v6254
        %v6314 = vpop.f32.mrb[0].mxu0
        %v6315 = vadd.f32 0.0, %v6314
        %v6316 = vpop.f32.mrb[0].mxu0
        %v6317 = vpop.f32.mrb[0].mxu0
        %v6318 = vadd.f32 0.0, %v6317
        %v6319 = vpop.f32.mrb[0].mxu0
        %6320 = vdwg.mxu0
        %v6325 = vunpack.c.l.b16 %v6204
        %v6326 = vunpack.c.l.b16 %v6205
        %v6327 = vunpack.c.l.b16 %v6206
        %v6328 = vunpack.c.l.b16 %v6207
        %v6329 = vpack.c.b16 %v6326, %v6325
        %v6330 = vpack.c.b16 %v6328, %v6327
        %v6334 = vsel %vm430, %v6172, 0
        %v6337 = vsel %vm430, %v6173, 0
        %v6340 = vsel %vm430, %v6174, 0
        %v6343 = vsel %vm430, %v6175, 0
        %6345 = vmatprep.subr.bf16.mxu0 0
        %6346 = vmatpush1.bf16.msra.mxu0 %v6329
        %6347 = vmatprep.subr.bf16.mxu0 0
        %6348 = vmatpush1.bf16.msra.mxu0 %v6330
        %6349 = vmatprep.subr.bf16.mxu0 0
        %6350 = vmatpush1.bf16.msra.mxu0 0
        %6351 = vmatprep.subr.bf16.mxu0 0
        %6352 = vmatpush1.bf16.msra.mxu0 0
        %6353 = vmatprep.subr.bf16.mxu0 0
        %6354 = vmatpush1.bf16.msra.mxu0 0
        %6355 = vmatprep.subr.bf16.mxu0 0
        %6356 = vmatpush1.bf16.msra.mxu0 0
        %6357 = vmatprep.subr.bf16.mxu0 0
        %6358 = vmatpush1.bf16.msra.mxu0 0
        %6359 = vmatprep.subr.bf16.mxu0 0
        %6360 = vmatpush1.bf16.msra.mxu0 0
        %6361 = vmatprep.subr.bf16.mxu0 0
        %6362 = vmatpush1.bf16.msra.mxu0 0
        %6363 = vmatprep.subr.bf16.mxu0 0
        %6364 = vmatpush1.bf16.msra.mxu0 0
        %6365 = vmatprep.subr.bf16.mxu0 0
        %6366 = vmatpush1.bf16.msra.mxu0 0
        %6367 = vmatprep.subr.bf16.mxu0 0
        %6368 = vmatpush1.bf16.msra.mxu0 0
        %6369 = vmatprep.subr.bf16.mxu0 0
        %6370 = vmatpush1.bf16.msra.mxu0 0
        %6371 = vmatprep.subr.bf16.mxu0 0
        %6372 = vmatpush1.bf16.msra.mxu0 0
        %6373 = vmatprep.subr.bf16.mxu0 0
        %6374 = vmatpush1.bf16.msra.mxu0 0
        %6375 = vmatprep.subr.bf16.mxu0 0
        %6376 = vmatpush1.bf16.msra.mxu0 0
        %6377 = vmatprep.mubr.bf16.mxu0 0
        %6378 = vmatmul.mubr.bf16.gmra.mrb[0].mxu0 %v6334
        %v6379 = vpop.f32.mrb[0].mxu0
        %v6380 = vadd.f32 0.0, %v6379
        %v6381 = vpop.f32.mrb[0].mxu0
        %v6382 = vpop.f32.mrb[0].mxu0
        %v6383 = vadd.f32 0.0, %v6382
        %v6384 = vpop.f32.mrb[0].mxu0
        %6385 = vmatprep.mubr.bf16.mxu0 0
        %6386 = vmatmul.mubr.bf16.gmra.mrb[0].mxu0 %v6337
        %v6387 = vpop.f32.mrb[0].mxu0
        %v6388 = vadd.f32 0.0, %v6387
        %v6389 = vpop.f32.mrb[0].mxu0
        %v6390 = vpop.f32.mrb[0].mxu0
        %v6391 = vadd.f32 0.0, %v6390
        %v6392 = vpop.f32.mrb[0].mxu0
        %6393 = vmatprep.mubr.bf16.mxu0 0
        %6394 = vmatmul.mubr.bf16.gmra.mrb[0].mxu0 %v6340
        %v6395 = vpop.f32.mrb[0].mxu0
        %v6396 = vadd.f32 0.0, %v6395
        %v6397 = vpop.f32.mrb[0].mxu0
        %v6398 = vpop.f32.mrb[0].mxu0
        %v6399 = vadd.f32 0.0, %v6398
        %v6400 = vpop.f32.mrb[0].mxu0
        %6401 = vmatprep.mubr.bf16.mxu0 0
        %6402 = vmatmul.mubr.bf16.gmra.mrb[0].mxu0 %v6343
        %v6403 = vpop.f32.mrb[0].mxu0
        %v6404 = vadd.f32 0.0, %v6403
        %v6405 = vpop.f32.mrb[0].mxu0
        %v6406 = vpop.f32.mrb[0].mxu0
        %v6407 = vadd.f32 0.0, %v6406
        %v6408 = vpop.f32.mrb[0].mxu0
        %6409 = vdwg.mxu0
        %v6414 = vunpack.c.l.b16 %v6208
        %v6415 = vunpack.c.l.b16 %v6209
        %v6416 = vunpack.c.l.b16 %v6210
        %v6417 = vunpack.c.l.b16 %v6211
        %v6418 = vpack.c.b16 %v6415, %v6414
        %v6419 = vpack.c.b16 %v6417, %v6416
        %v6423 = vsel %vm430, %v6176, 0
        %v6426 = vsel %vm430, %v6177, 0
        %v6429 = vsel %vm430, %v6178, 0
        %v6432 = vsel %vm430, %v6179, 0
        %6434 = vmatprep.subr.bf16.mxu0 0
        %6435 = vmatpush1.bf16.msra.mxu0 %v6418
        %6436 = vmatprep.subr.bf16.mxu0 0
        %6437 = vmatpush1.bf16.msra.mxu0 %v6419
        %6438 = vmatprep.subr.bf16.mxu0 0
        %6439 = vmatpush1.bf16.msra.mxu0 0
        %6440 = vmatprep.subr.bf16.mxu0 0
        %6441 = vmatpush1.bf16.msra.mxu0 0
        %6442 = vmatprep.subr.bf16.mxu0 0
        %6443 = vmatpush1.bf16.msra.mxu0 0
        %6444 = vmatprep.subr.bf16.mxu0 0
        %6445 = vmatpush1.bf16.msra.mxu0 0
        %6446 = vmatprep.subr.bf16.mxu0 0
        %6447 = vmatpush1.bf16.msra.mxu0 0
        %6448 = vmatprep.subr.bf16.mxu0 0
        %6449 = vmatpush1.bf16.msra.mxu0 0
        %6450 = vmatprep.subr.bf16.mxu0 0
        %6451 = vmatpush1.bf16.msra.mxu0 0
        %6452 = vmatprep.subr.bf16.mxu0 0
        %6453 = vmatpush1.bf16.msra.mxu0 0
        %6454 = vmatprep.subr.bf16.mxu0 0
        %6455 = vmatpush1.bf16.msra.mxu0 0
        %6456 = vmatprep.subr.bf16.mxu0 0
        %6457 = vmatpush1.bf16.msra.mxu0 0
        %6458 = vmatprep.subr.bf16.mxu0 0
        %6459 = vmatpush1.bf16.msra.mxu0 0
        %6460 = vmatprep.subr.bf16.mxu0 0
        %6461 = vmatpush1.bf16.msra.mxu0 0
        %6462 = vmatprep.subr.bf16.mxu0 0
        %6463 = vmatpush1.bf16.msra.mxu0 0
        %6464 = vmatprep.subr.bf16.mxu0 0
        %6465 = vmatpush1.bf16.msra.mxu0 0
        %6466 = vmatprep.mubr.bf16.mxu0 0
        %6467 = vmatmul.mubr.bf16.gmra.mrb[0].mxu0 %v6423
        %v6468 = vpop.f32.mrb[0].mxu0
        %v6469 = vadd.f32 0.0, %v6468
        %v6470 = vpop.f32.mrb[0].mxu0
        %v6471 = vpop.f32.mrb[0].mxu0
        %v6472 = vadd.f32 0.0, %v6471
        %v6473 = vpop.f32.mrb[0].mxu0
        %6474 = vmatprep.mubr.bf16.mxu0 0
        %6475 = vmatmul.mubr.bf16.gmra.mrb[0].mxu0 %v6426
        %v6476 = vpop.f32.mrb[0].mxu0
        %v6477 = vadd.f32 0.0, %v6476
        %v6478 = vpop.f32.mrb[0].mxu0
        %v6479 = vpop.f32.mrb[0].mxu0
        %v6480 = vadd.f32 0.0, %v6479
        %v6481 = vpop.f32.mrb[0].mxu0
        %6482 = vmatprep.mubr.bf16.mxu0 0
        %6483 = vmatmul.mubr.bf16.gmra.mrb[0].mxu0 %v6429
        %v6484 = vpop.f32.mrb[0].mxu0
        %v6485 = vadd.f32 0.0, %v6484
        %v6486 = vpop.f32.mrb[0].mxu0
        %v6487 = vpop.f32.mrb[0].mxu0
        %v6488 = vadd.f32 0.0, %v6487
        %v6489 = vpop.f32.mrb[0].mxu0
        %6490 = vmatprep.mubr.bf16.mxu0 0
        %6491 = vmatmul.mubr.bf16.gmra.mrb[0].mxu0 %v6432
        %v6492 = vpop.f32.mrb[0].mxu0
        %v6493 = vadd.f32 0.0, %v6492
        %v6494 = vpop.f32.mrb[0].mxu0
        %v6495 = vpop.f32.mrb[0].mxu0
        %v6496 = vadd.f32 0.0, %v6495
        %v6497 = vpop.f32.mrb[0].mxu0
        %6498 = vdwg.mxu0
        %v6503 = vunpack.c.l.b16 %v6212
        %v6504 = vunpack.c.l.b16 %v6213
        %v6505 = vunpack.c.l.b16 %v6214
        %v6506 = vunpack.c.l.b16 %v6215
        %v6507 = vpack.c.b16 %v6504, %v6503
        %v6508 = vpack.c.b16 %v6506, %v6505
        %v6512 = vsel %vm430, %v6180, 0
        %v6515 = vsel %vm430, %v6181, 0
        %v6518 = vsel %vm430, %v6182, 0
        %v6521 = vsel %vm430, %v6183, 0
        %6523 = vmatprep.subr.bf16.mxu0 0
        %6524 = vmatpush1.bf16.msra.mxu0 %v6507
        %6525 = vmatprep.subr.bf16.mxu0 0
        %6526 = vmatpush1.bf16.msra.mxu0 %v6508
        %6527 = vmatprep.subr.bf16.mxu0 0
        %6528 = vmatpush1.bf16.msra.mxu0 0
        %6529 = vmatprep.subr.bf16.mxu0 0
        %6530 = vmatpush1.bf16.msra.mxu0 0
        %6531 = vmatprep.subr.bf16.mxu0 0
        %6532 = vmatpush1.bf16.msra.mxu0 0
        %6533 = vmatprep.subr.bf16.mxu0 0
        %6534 = vmatpush1.bf16.msra.mxu0 0
        %6535 = vmatprep.subr.bf16.mxu0 0
        %6536 = vmatpush1.bf16.msra.mxu0 0
        %6537 = vmatprep.subr.bf16.mxu0 0
        %6538 = vmatpush1.bf16.msra.mxu0 0
        %6539 = vmatprep.subr.bf16.mxu0 0
        %6540 = vmatpush1.bf16.msra.mxu0 0
        %6541 = vmatprep.subr.bf16.mxu0 0
        %6542 = vmatpush1.bf16.msra.mxu0 0
        %6543 = vmatprep.subr.bf16.mxu0 0
        %6544 = vmatpush1.bf16.msra.mxu0 0
        %6545 = vmatprep.subr.bf16.mxu0 0
        %6546 = vmatpush1.bf16.msra.mxu0 0
        %6547 = vmatprep.subr.bf16.mxu0 0
        %6548 = vmatpush1.bf16.msra.mxu0 0
        %6549 = vmatprep.subr.bf16.mxu0 0
        %6550 = vmatpush1.bf16.msra.mxu0 0
        %6551 = vmatprep.subr.bf16.mxu0 0
        %6552 = vmatpush1.bf16.msra.mxu0 0
        %6553 = vmatprep.subr.bf16.mxu0 0
        %6554 = vmatpush1.bf16.msra.mxu0 0
        %6555 = vmatprep.mubr.bf16.mxu0 0
        %6556 = vmatmul.mubr.bf16.gmra.mrb[0].mxu0 %v6512
        %v6557 = vpop.f32.mrb[0].mxu0
        %v6558 = vadd.f32 0.0, %v6557
        %v6559 = vpop.f32.mrb[0].mxu0
        %v6560 = vpop.f32.mrb[0].mxu0
        %v6561 = vadd.f32 0.0, %v6560
        %v6562 = vpop.f32.mrb[0].mxu0
        %6563 = vmatprep.mubr.bf16.mxu0 0
        %6564 = vmatmul.mubr.bf16.gmra.mrb[0].mxu0 %v6515
        %v6565 = vpop.f32.mrb[0].mxu0
        %v6566 = vadd.f32 0.0, %v6565
        %v6567 = vpop.f32.mrb[0].mxu0
        %v6568 = vpop.f32.mrb[0].mxu0
        %v6569 = vadd.f32 0.0, %v6568
        %v6570 = vpop.f32.mrb[0].mxu0
        %6571 = vmatprep.mubr.bf16.mxu0 0
        %6572 = vmatmul.mubr.bf16.gmra.mrb[0].mxu0 %v6518
        %v6573 = vpop.f32.mrb[0].mxu0
        %v6574 = vadd.f32 0.0, %v6573
        %v6575 = vpop.f32.mrb[0].mxu0
        %v6576 = vpop.f32.mrb[0].mxu0
        %v6577 = vadd.f32 0.0, %v6576
        %v6578 = vpop.f32.mrb[0].mxu0
        %6579 = vmatprep.mubr.bf16.mxu0 0
        %6580 = vmatmul.mubr.bf16.gmra.mrb[0].mxu0 %v6521
        %v6581 = vpop.f32.mrb[0].mxu0
        %v6582 = vadd.f32 0.0, %v6581
        %v6583 = vpop.f32.mrb[0].mxu0
        %v6584 = vpop.f32.mrb[0].mxu0
        %v6585 = vadd.f32 0.0, %v6584
        %v6586 = vpop.f32.mrb[0].mxu0
        %6587 = vdwg.mxu0
        %v6592 = vunpack.c.l.b16 %v6216
        %v6593 = vunpack.c.l.b16 %v6217
        %v6594 = vunpack.c.l.b16 %v6218
        %v6595 = vunpack.c.l.b16 %v6219
        %v6596 = vpack.c.b16 %v6593, %v6592
        %v6597 = vpack.c.b16 %v6595, %v6594
        %v6601 = vsel %vm430, %v6184, 0
        %v6604 = vsel %vm430, %v6185, 0
        %v6607 = vsel %vm430, %v6186, 0
        %v6610 = vsel %vm430, %v6187, 0
        %6612 = vmatprep.subr.bf16.mxu0 0
        %6613 = vmatpush1.bf16.msra.mxu0 %v6596
        %6614 = vmatprep.subr.bf16.mxu0 0
        %6615 = vmatpush1.bf16.msra.mxu0 %v6597
        %6616 = vmatprep.subr.bf16.mxu0 0
        %6617 = vmatpush1.bf16.msra.mxu0 0
        %6618 = vmatprep.subr.bf16.mxu0 0
        %6619 = vmatpush1.bf16.msra.mxu0 0
        %6620 = vmatprep.subr.bf16.mxu0 0
        %6621 = vmatpush1.bf16.msra.mxu0 0
        %6622 = vmatprep.subr.bf16.mxu0 0
        %6623 = vmatpush1.bf16.msra.mxu0 0
        %6624 = vmatprep.subr.bf16.mxu0 0
        %6625 = vmatpush1.bf16.msra.mxu0 0
        %6626 = vmatprep.subr.bf16.mxu0 0
        %6627 = vmatpush1.bf16.msra.mxu0 0
        %6628 = vmatprep.subr.bf16.mxu0 0
        %6629 = vmatpush1.bf16.msra.mxu0 0
        %6630 = vmatprep.subr.bf16.mxu0 0
        %6631 = vmatpush1.bf16.msra.mxu0 0
        %6632 = vmatprep.subr.bf16.mxu0 0
        %6633 = vmatpush1.bf16.msra.mxu0 0
        %6634 = vmatprep.subr.bf16.mxu0 0
        %6635 = vmatpush1.bf16.msra.mxu0 0
        %6636 = vmatprep.subr.bf16.mxu0 0
        %6637 = vmatpush1.bf16.msra.mxu0 0
        %6638 = vmatprep.subr.bf16.mxu0 0
        %6639 = vmatpush1.bf16.msra.mxu0 0
        %6640 = vmatprep.subr.bf16.mxu0 0
        %6641 = vmatpush1.bf16.msra.mxu0 0
        %6642 = vmatprep.subr.bf16.mxu0 0
        %6643 = vmatpush1.bf16.msra.mxu0 0
        %6644 = vmatprep.mubr.bf16.mxu0 0
        %6645 = vmatmul.mubr.bf16.gmra.mrb[0].mxu0 %v6601
        %v6646 = vpop.f32.mrb[0].mxu0
        %v6647 = vadd.f32 0.0, %v6646
        %v6648 = vpop.f32.mrb[0].mxu0
        %v6649 = vpop.f32.mrb[0].mxu0
        %v6650 = vadd.f32 0.0, %v6649
        %v6651 = vpop.f32.mrb[0].mxu0
        %6652 = vmatprep.mubr.bf16.mxu0 0
        %6653 = vmatmul.mubr.bf16.gmra.mrb[0].mxu0 %v6604
        %v6654 = vpop.f32.mrb[0].mxu0
        %v6655 = vadd.f32 0.0, %v6654
        %v6656 = vpop.f32.mrb[0].mxu0
        %v6657 = vpop.f32.mrb[0].mxu0
        %v6658 = vadd.f32 0.0, %v6657
        %v6659 = vpop.f32.mrb[0].mxu0
        %6660 = vmatprep.mubr.bf16.mxu0 0
        %6661 = vmatmul.mubr.bf16.gmra.mrb[0].mxu0 %v6607
        %v6662 = vpop.f32.mrb[0].mxu0
        %v6663 = vadd.f32 0.0, %v6662
        %v6664 = vpop.f32.mrb[0].mxu0
        %v6665 = vpop.f32.mrb[0].mxu0
        %v6666 = vadd.f32 0.0, %v6665
        %v6667 = vpop.f32.mrb[0].mxu0
        %6668 = vmatprep.mubr.bf16.mxu0 0
        %6669 = vmatmul.mubr.bf16.gmra.mrb[0].mxu0 %v6610
        %v6670 = vpop.f32.mrb[0].mxu0
        %v6671 = vadd.f32 0.0, %v6670
        %v6672 = vpop.f32.mrb[0].mxu0
        %v6673 = vpop.f32.mrb[0].mxu0
        %v6674 = vadd.f32 0.0, %v6673
        %v6675 = vpop.f32.mrb[0].mxu0
        %6676 = vdwg.mxu0
        %v6681 = vunpack.c.l.b16 %v6220
        %v6682 = vunpack.c.l.b16 %v6221
        %v6683 = vunpack.c.l.b16 %v6222
        %v6684 = vunpack.c.l.b16 %v6223
        %v6685 = vpack.c.b16 %v6682, %v6681
        %v6686 = vpack.c.b16 %v6684, %v6683
        %v6690 = vsel %vm430, %v6188, 0
        %v6693 = vsel %vm430, %v6189, 0
        %v6696 = vsel %vm430, %v6190, 0
        %v6699 = vsel %vm430, %v6191, 0
        %6701 = vmatprep.subr.bf16.mxu0 0
        %6702 = vmatpush1.bf16.msra.mxu0 %v6685
        %6703 = vmatprep.subr.bf16.mxu0 0
        %6704 = vmatpush1.bf16.msra.mxu0 %v6686
        %6705 = vmatprep.subr.bf16.mxu0 0
        %6706 = vmatpush1.bf16.msra.mxu0 0
        %6707 = vmatprep.subr.bf16.mxu0 0
        %6708 = vmatpush1.bf16.msra.mxu0 0
        %6709 = vmatprep.subr.bf16.mxu0 0
        %6710 = vmatpush1.bf16.msra.mxu0 0
        %6711 = vmatprep.subr.bf16.mxu0 0
        %6712 = vmatpush1.bf16.msra.mxu0 0
        %6713 = vmatprep.subr.bf16.mxu0 0
        %6714 = vmatpush1.bf16.msra.mxu0 0
        %6715 = vmatprep.subr.bf16.mxu0 0
        %6716 = vmatpush1.bf16.msra.mxu0 0
        %6717 = vmatprep.subr.bf16.mxu0 0
        %6718 = vmatpush1.bf16.msra.mxu0 0
        %6719 = vmatprep.subr.bf16.mxu0 0
        %6720 = vmatpush1.bf16.msra.mxu0 0
        %6721 = vmatprep.subr.bf16.mxu0 0
        %6722 = vmatpush1.bf16.msra.mxu0 0
        %6723 = vmatprep.subr.bf16.mxu0 0
        %6724 = vmatpush1.bf16.msra.mxu0 0
        %6725 = vmatprep.subr.bf16.mxu0 0
        %6726 = vmatpush1.bf16.msra.mxu0 0
        %6727 = vmatprep.subr.bf16.mxu0 0
        %6728 = vmatpush1.bf16.msra.mxu0 0
        %6729 = vmatprep.subr.bf16.mxu0 0
        %6730 = vmatpush1.bf16.msra.mxu0 0
        %6731 = vmatprep.subr.bf16.mxu0 0
        %6732 = vmatpush1.bf16.msra.mxu0 0
        %6733 = vmatprep.mubr.bf16.mxu0 0
        %6734 = vmatmul.mubr.bf16.gmra.mrb[0].mxu0 %v6690
        %v6735 = vpop.f32.mrb[0].mxu0
        %v6736 = vadd.f32 0.0, %v6735
        %v6737 = vpop.f32.mrb[0].mxu0
        %v6738 = vpop.f32.mrb[0].mxu0
        %v6739 = vadd.f32 0.0, %v6738
        %v6740 = vpop.f32.mrb[0].mxu0
        %6741 = vmatprep.mubr.bf16.mxu0 0
        %6742 = vmatmul.mubr.bf16.gmra.mrb[0].mxu0 %v6693
        %v6743 = vpop.f32.mrb[0].mxu0
        %v6744 = vadd.f32 0.0, %v6743
        %v6745 = vpop.f32.mrb[0].mxu0
        %v6746 = vpop.f32.mrb[0].mxu0
        %v6747 = vadd.f32 0.0, %v6746
        %v6748 = vpop.f32.mrb[0].mxu0
        %6749 = vmatprep.mubr.bf16.mxu0 0
        %6750 = vmatmul.mubr.bf16.gmra.mrb[0].mxu0 %v6696
        %v6751 = vpop.f32.mrb[0].mxu0
        %v6752 = vadd.f32 0.0, %v6751
        %v6753 = vpop.f32.mrb[0].mxu0
        %v6754 = vpop.f32.mrb[0].mxu0
        %v6755 = vadd.f32 0.0, %v6754
        %v6756 = vpop.f32.mrb[0].mxu0
        %6757 = vmatprep.mubr.bf16.mxu0 0
        %6758 = vmatmul.mubr.bf16.gmra.mrb[0].mxu0 %v6699
        %v6759 = vpop.f32.mrb[0].mxu0
        %v6760 = vadd.f32 0.0, %v6759
        %v6761 = vpop.f32.mrb[0].mxu0
        %v6762 = vpop.f32.mrb[0].mxu0
        %v6763 = vadd.f32 0.0, %v6762
        %v6764 = vpop.f32.mrb[0].mxu0
        %6765 = vdwg.mxu0
        %v6770 = vunpack.c.l.b16 %v6224
        %v6771 = vunpack.c.l.b16 %v6225
        %v6772 = vunpack.c.l.b16 %v6226
        %v6773 = vunpack.c.l.b16 %v6227
        %v6774 = vpack.c.b16 %v6771, %v6770
        %v6775 = vpack.c.b16 %v6773, %v6772
        %v6779 = vsel %vm430, %v6192, 0
        %v6782 = vsel %vm430, %v6193, 0
        %v6785 = vsel %vm430, %v6194, 0
        %v6788 = vsel %vm430, %v6195, 0
        %6790 = vmatprep.subr.bf16.mxu0 0
        %6791 = vmatpush1.bf16.msra.mxu0 %v6774
        %6792 = vmatprep.subr.bf16.mxu0 0
        %6793 = vmatpush1.bf16.msra.mxu0 %v6775
        %6794 = vmatprep.subr.bf16.mxu0 0
        %6795 = vmatpush1.bf16.msra.mxu0 0
        %6796 = vmatprep.subr.bf16.mxu0 0
        %6797 = vmatpush1.bf16.msra.mxu0 0
        %6798 = vmatprep.subr.bf16.mxu0 0
        %6799 = vmatpush1.bf16.msra.mxu0 0
        %6800 = vmatprep.subr.bf16.mxu0 0
        %6801 = vmatpush1.bf16.msra.mxu0 0
        %6802 = vmatprep.subr.bf16.mxu0 0
        %6803 = vmatpush1.bf16.msra.mxu0 0
        %6804 = vmatprep.subr.bf16.mxu0 0
        %6805 = vmatpush1.bf16.msra.mxu0 0
        %6806 = vmatprep.subr.bf16.mxu0 0
        %6807 = vmatpush1.bf16.msra.mxu0 0
        %6808 = vmatprep.subr.bf16.mxu0 0
        %6809 = vmatpush1.bf16.msra.mxu0 0
        %6810 = vmatprep.subr.bf16.mxu0 0
        %6811 = vmatpush1.bf16.msra.mxu0 0
        %6812 = vmatprep.subr.bf16.mxu0 0
        %6813 = vmatpush1.bf16.msra.mxu0 0
        %6814 = vmatprep.subr.bf16.mxu0 0
        %6815 = vmatpush1.bf16.msra.mxu0 0
        %6816 = vmatprep.subr.bf16.mxu0 0
        %6817 = vmatpush1.bf16.msra.mxu0 0
        %6818 = vmatprep.subr.bf16.mxu0 0
        %6819 = vmatpush1.bf16.msra.mxu0 0
        %6820 = vmatprep.subr.bf16.mxu0 0
        %6821 = vmatpush1.bf16.msra.mxu0 0
        %6822 = vmatprep.mubr.bf16.mxu0 0
        %6823 = vmatmul.mubr.bf16.gmra.mrb[0].mxu0 %v6779
        %v6824 = vpop.f32.mrb[0].mxu0
        %v6825 = vadd.f32 0.0, %v6824
        %v6826 = vpop.f32.mrb[0].mxu0
        %v6827 = vpop.f32.mrb[0].mxu0
        %v6828 = vadd.f32 0.0, %v6827
        %v6829 = vpop.f32.mrb[0].mxu0
        %6830 = vmatprep.mubr.bf16.mxu0 0
        %6831 = vmatmul.mubr.bf16.gmra.mrb[0].mxu0 %v6782
        %v6832 = vpop.f32.mrb[0].mxu0
        %v6833 = vadd.f32 0.0, %v6832
        %v6834 = vpop.f32.mrb[0].mxu0
        %v6835 = vpop.f32.mrb[0].mxu0
        %v6836 = vadd.f32 0.0, %v6835
        %v6837 = vpop.f32.mrb[0].mxu0
        %6838 = vmatprep.mubr.bf16.mxu0 0
        %6839 = vmatmul.mubr.bf16.gmra.mrb[0].mxu0 %v6785
        %v6840 = vpop.f32.mrb[0].mxu0
        %v6841 = vadd.f32 0.0, %v6840
        %v6842 = vpop.f32.mrb[0].mxu0
        %v6843 = vpop.f32.mrb[0].mxu0
        %v6844 = vadd.f32 0.0, %v6843
        %v6845 = vpop.f32.mrb[0].mxu0
        %6846 = vmatprep.mubr.bf16.mxu0 0
        %6847 = vmatmul.mubr.bf16.gmra.mrb[0].mxu0 %v6788
        %v6848 = vpop.f32.mrb[0].mxu0
        %v6849 = vadd.f32 0.0, %v6848
        %v6850 = vpop.f32.mrb[0].mxu0
        %v6851 = vpop.f32.mrb[0].mxu0
        %v6852 = vadd.f32 0.0, %v6851
        %v6853 = vpop.f32.mrb[0].mxu0
        %6854 = vdwg.mxu0
        %v6859 = vunpack.c.l.b16 %v6228
        %v6860 = vunpack.c.l.b16 %v6229
        %v6861 = vunpack.c.l.b16 %v6230
        %v6862 = vunpack.c.l.b16 %v6231
        %v6863 = vpack.c.b16 %v6860, %v6859
        %v6864 = vpack.c.b16 %v6862, %v6861
        %v6868 = vsel %vm430, %v6196, 0
        %v6871 = vsel %vm430, %v6197, 0
        %v6874 = vsel %vm430, %v6198, 0
        %v6877 = vsel %vm430, %v6199, 0
        %6879 = vmatprep.subr.bf16.mxu0 0
        %6880 = vmatpush1.bf16.msra.mxu0 %v6863
        %6881 = vmatprep.subr.bf16.mxu0 0
        %6882 = vmatpush1.bf16.msra.mxu0 %v6864
        %6883 = vmatprep.subr.bf16.mxu0 0
        %6884 = vmatpush1.bf16.msra.mxu0 0
        %6885 = vmatprep.subr.bf16.mxu0 0
        %6886 = vmatpush1.bf16.msra.mxu0 0
        %6887 = vmatprep.subr.bf16.mxu0 0
        %6888 = vmatpush1.bf16.msra.mxu0 0
        %6889 = vmatprep.subr.bf16.mxu0 0
        %6890 = vmatpush1.bf16.msra.mxu0 0
        %6891 = vmatprep.subr.bf16.mxu0 0
        %6892 = vmatpush1.bf16.msra.mxu0 0
        %6893 = vmatprep.subr.bf16.mxu0 0
        %6894 = vmatpush1.bf16.msra.mxu0 0
        %6895 = vmatprep.subr.bf16.mxu0 0
        %6896 = vmatpush1.bf16.msra.mxu0 0
        %6897 = vmatprep.subr.bf16.mxu0 0
        %6898 = vmatpush1.bf16.msra.mxu0 0
        %6899 = vmatprep.subr.bf16.mxu0 0
        %6900 = vmatpush1.bf16.msra.mxu0 0
        %6901 = vmatprep.subr.bf16.mxu0 0
        %6902 = vmatpush1.bf16.msra.mxu0 0
        %6903 = vmatprep.subr.bf16.mxu0 0
        %6904 = vmatpush1.bf16.msra.mxu0 0
        %6905 = vmatprep.subr.bf16.mxu0 0
        %6906 = vmatpush1.bf16.msra.mxu0 0
        %6907 = vmatprep.subr.bf16.mxu0 0
        %6908 = vmatpush1.bf16.msra.mxu0 0
        %6909 = vmatprep.subr.bf16.mxu0 0
        %6910 = vmatpush1.bf16.msra.mxu0 0
        %6911 = vmatprep.mubr.bf16.mxu0 0
        %6912 = vmatmul.mubr.bf16.gmra.mrb[0].mxu0 %v6868
        %v6913 = vpop.f32.mrb[0].mxu0
        %v6914 = vadd.f32 0.0, %v6913
        %v6915 = vpop.f32.mrb[0].mxu0
        %v6916 = vpop.f32.mrb[0].mxu0
        %v6917 = vadd.f32 0.0, %v6916
        %v6918 = vpop.f32.mrb[0].mxu0
        %6919 = vmatprep.mubr.bf16.mxu0 0
        %6920 = vmatmul.mubr.bf16.gmra.mrb[0].mxu0 %v6871
        %v6921 = vpop.f32.mrb[0].mxu0
        %v6922 = vadd.f32 0.0, %v6921
        %v6923 = vpop.f32.mrb[0].mxu0
        %v6924 = vpop.f32.mrb[0].mxu0
        %v6925 = vadd.f32 0.0, %v6924
        %v6926 = vpop.f32.mrb[0].mxu0
        %6927 = vmatprep.mubr.bf16.mxu0 0
        %6928 = vmatmul.mubr.bf16.gmra.mrb[0].mxu0 %v6874
        %v6929 = vpop.f32.mrb[0].mxu0
        %v6930 = vadd.f32 0.0, %v6929
        %v6931 = vpop.f32.mrb[0].mxu0
        %v6932 = vpop.f32.mrb[0].mxu0
        %v6933 = vadd.f32 0.0, %v6932
        %v6934 = vpop.f32.mrb[0].mxu0
        %6935 = vmatprep.mubr.bf16.mxu0 0
        %6936 = vmatmul.mubr.bf16.gmra.mrb[0].mxu0 %v6877
        %v6937 = vpop.f32.mrb[0].mxu0
        %v6938 = vadd.f32 0.0, %v6937
        %v6939 = vpop.f32.mrb[0].mxu0
        %v6940 = vpop.f32.mrb[0].mxu0
        %v6941 = vadd.f32 0.0, %v6940
        %v6942 = vpop.f32.mrb[0].mxu0
        %6943 = vdwg.mxu0
        %v6944 = vsel %vm430, %v6291, 0.0
        %v6945 = vsel %vm430, %v6380, 0.0
        %v6946 = vadd.f32 %v6944, %v6945
        %v6947 = vsel %vm430, %v6469, 0.0
        %v6948 = vadd.f32 %v6946, %v6947
        %v6949 = vsel %vm430, %v6558, 0.0
        %v6950 = vadd.f32 %v6948, %v6949
        %v6951 = vsel %vm430, %v6647, 0.0
        %v6952 = vadd.f32 %v6950, %v6951
        %v6953 = vsel %vm430, %v6736, 0.0
        %v6954 = vadd.f32 %v6952, %v6953
        %v6955 = vsel %vm430, %v6825, 0.0
        %v6956 = vadd.f32 %v6954, %v6955
        %v6957 = vsel %vm430, %v6914, 0.0
        %v6958 = vadd.f32 %v6956, %v6957
        %v6959 = vsel %vm430, %v6294, 0.0
        %v6960 = vsel %vm430, %v6383, 0.0
        %v6961 = vadd.f32 %v6959, %v6960
        %v6962 = vsel %vm430, %v6472, 0.0
        %v6963 = vadd.f32 %v6961, %v6962
        %v6964 = vsel %vm430, %v6561, 0.0
        %v6965 = vadd.f32 %v6963, %v6964
        %v6966 = vsel %vm430, %v6650, 0.0
        %v6967 = vadd.f32 %v6965, %v6966
        %v6968 = vsel %vm430, %v6739, 0.0
        %v6969 = vadd.f32 %v6967, %v6968
        %v6970 = vsel %vm430, %v6828, 0.0
        %v6971 = vadd.f32 %v6969, %v6970
        %v6972 = vsel %vm430, %v6917, 0.0
        %v6973 = vadd.f32 %v6971, %v6972
        %v6974 = vsel %vm430, %v6299, 0.0
        %v6975 = vsel %vm430, %v6388, 0.0
        %v6976 = vadd.f32 %v6974, %v6975
        %v6977 = vsel %vm430, %v6477, 0.0
        %v6978 = vadd.f32 %v6976, %v6977
        %v6979 = vsel %vm430, %v6566, 0.0
        %v6980 = vadd.f32 %v6978, %v6979
        %v6981 = vsel %vm430, %v6655, 0.0
        %v6982 = vadd.f32 %v6980, %v6981
        %v6983 = vsel %vm430, %v6744, 0.0
        %v6984 = vadd.f32 %v6982, %v6983
        %v6985 = vsel %vm430, %v6833, 0.0
        %v6986 = vadd.f32 %v6984, %v6985
        %v6987 = vsel %vm430, %v6922, 0.0
        %v6988 = vadd.f32 %v6986, %v6987
        %v6989 = vsel %vm430, %v6302, 0.0
        %v6990 = vsel %vm430, %v6391, 0.0
        %v6991 = vadd.f32 %v6989, %v6990
        %v6992 = vsel %vm430, %v6480, 0.0
        %v6993 = vadd.f32 %v6991, %v6992
        %v6994 = vsel %vm430, %v6569, 0.0
        %v6995 = vadd.f32 %v6993, %v6994
        %v6996 = vsel %vm430, %v6658, 0.0
        %v6997 = vadd.f32 %v6995, %v6996
        %v6998 = vsel %vm430, %v6747, 0.0
        %v6999 = vadd.f32 %v6997, %v6998
        %v7000 = vsel %vm430, %v6836, 0.0
        %v7001 = vadd.f32 %v6999, %v7000
        %v7002 = vsel %vm430, %v6925, 0.0
        %v7003 = vadd.f32 %v7001, %v7002
        %v7004 = vsel %vm430, %v6307, 0.0
        %v7005 = vsel %vm430, %v6396, 0.0
        %v7006 = vadd.f32 %v7004, %v7005
        %v7007 = vsel %vm430, %v6485, 0.0
        %v7008 = vadd.f32 %v7006, %v7007
        %v7009 = vsel %vm430, %v6574, 0.0
        %v7010 = vadd.f32 %v7008, %v7009
        %v7011 = vsel %vm430, %v6663, 0.0
        %v7012 = vadd.f32 %v7010, %v7011
        %v7013 = vsel %vm430, %v6752, 0.0
        %v7014 = vadd.f32 %v7012, %v7013
        %v7015 = vsel %vm430, %v6841, 0.0
        %v7016 = vadd.f32 %v7014, %v7015
        %v7017 = vsel %vm430, %v6930, 0.0
        %v7018 = vadd.f32 %v7016, %v7017
        %v7019 = vsel %vm430, %v6310, 0.0
        %v7020 = vsel %vm430, %v6399, 0.0
        %v7021 = vadd.f32 %v7019, %v7020
        %v7022 = vsel %vm430, %v6488, 0.0
        %v7023 = vadd.f32 %v7021, %v7022
        %v7024 = vsel %vm430, %v6577, 0.0
        %v7025 = vadd.f32 %v7023, %v7024
        %v7026 = vsel %vm430, %v6666, 0.0
        %v7027 = vadd.f32 %v7025, %v7026
        %v7028 = vsel %vm430, %v6755, 0.0
        %v7029 = vadd.f32 %v7027, %v7028
        %v7030 = vsel %vm430, %v6844, 0.0
        %v7031 = vadd.f32 %v7029, %v7030
        %v7032 = vsel %vm430, %v6933, 0.0
        %v7033 = vadd.f32 %v7031, %v7032
        %v7034 = vsel %vm430, %v6315, 0.0
        %v7035 = vsel %vm430, %v6404, 0.0
        %v7036 = vadd.f32 %v7034, %v7035
        %v7037 = vsel %vm430, %v6493, 0.0
        %v7038 = vadd.f32 %v7036, %v7037
        %v7039 = vsel %vm430, %v6582, 0.0
        %v7040 = vadd.f32 %v7038, %v7039
        %v7041 = vsel %vm430, %v6671, 0.0
        %v7042 = vadd.f32 %v7040, %v7041
        %v7043 = vsel %vm430, %v6760, 0.0
        %v7044 = vadd.f32 %v7042, %v7043
        %v7045 = vsel %vm430, %v6849, 0.0
        %v7046 = vadd.f32 %v7044, %v7045
        %v7047 = vsel %vm430, %v6938, 0.0
        %v7048 = vadd.f32 %v7046, %v7047
        %v7049 = vsel %vm430, %v6318, 0.0
        %v7050 = vsel %vm430, %v6407, 0.0
        %v7051 = vadd.f32 %v7049, %v7050
        %v7052 = vsel %vm430, %v6496, 0.0
        %v7053 = vadd.f32 %v7051, %v7052
        %v7054 = vsel %vm430, %v6585, 0.0
        %v7055 = vadd.f32 %v7053, %v7054
        %v7056 = vsel %vm430, %v6674, 0.0
        %v7057 = vadd.f32 %v7055, %v7056
        %v7058 = vsel %vm430, %v6763, 0.0
        %v7059 = vadd.f32 %v7057, %v7058
        %v7060 = vsel %vm430, %v6852, 0.0
        %v7061 = vadd.f32 %v7059, %v7060
        %v7062 = vsel %vm430, %v6941, 0.0
        %v7063 = vadd.f32 %v7061, %v7062
        %v7064 = vld [vmem:[%s6] sm:$0x1]
        %v7066 = vlaneseq
        %v7067 = vshrl.u32 %v7066, 7
        %v7068 = vsub.s32 0, %v7067
        %v7069 = vrot.slane %v7064, %v7068
        %v7071 = vadd.f32 %v6958, %v7069
        %v7072 = vadd.f32 %v6973, %v7069
        %v7073 = vadd.f32 %v6988, %v7069
        %v7074 = vadd.f32 %v7003, %v7069
        %v7075 = vadd.f32 %v7018, %v7069
        %v7076 = vadd.f32 %v7033, %v7069
        %v7077 = vadd.f32 %v7048, %v7069
        %v7078 = vadd.f32 %v7063, %v7069
        %7079 = vst.msk [vmem:[%s370] sm:$0xff] %vm430, %v7071
        %7080 = vst.msk [vmem:[%s370 + $0x8] sm:$0xff] %vm430, %v7072
        %7081 = vst.msk [vmem:[%s370 + $0x10] sm:$0xff] %vm430, %v7073
        %7082 = vst.msk [vmem:[%s370 + $0x18] sm:$0xff] %vm430, %v7074
        %7083 = vst.msk [vmem:[%s370 + $0x20] sm:$0xff] %vm430, %v7075
        %7084 = vst.msk [vmem:[%s370 + $0x28] sm:$0xff] %vm430, %v7076
        %7085 = vst.msk [vmem:[%s370 + $0x30] sm:$0xff] %vm430, %v7077
        %7086 = vst.msk [vmem:[%s370 + $0x38] sm:$0xff] %vm430, %v7078
        %s7087 = sand.u32 %s187, 1
        %s7088 = scalar_lea.sflag [#allocation4], %s7087
        %s7089 = sand.u32 %s187, 1
        %s7090 = smul.addr %s7089, 64
        %s7091 = scalar_lea.vmem [#allocation13], %s7090
        // Predicated region
        $region73: #{tpu_custom_call.1} parent=47 // pred_check
          %p7092 = pneg %p197
        $region74: #{tpu_custom_call.1} parent=47 // pred_check_branch
          %7094 = sbr.rel (%p7092) target = $region76
        $region75: #{tpu_custom_call.1} parent=47 // pred_region
          %s7095 = smul.u32 4, %s27
          %s7097 = ssub.s32 1024, 1024
          %7098 = vsyncadd %s7088, %s7097
          %s7099 = smul.addr %s7095, 2
          %s7100 = smul.addr %s7099, 128
          %s7101 = scalar_lea.hbm %s7, %s7100
          %s7102 = sshll.u32 %s7091, 4
          %s7103 = int_to_ptr.vmem [resolvable:$true] %s7102
          %7108 = dma.vmem_to_hbm [thread:$0]  %s7103, 1024, %s7101, %s7088, 128, 128, 8
        $region76: #{tpu_custom_call.1} parent=47 // pred_fallthru
          _
      $region48: #{tpu_custom_call.1} parent=5 // pred_fallthru
        _
      %p7109 = scmp.le.s32.totalorder 2, %s22
      // Predicated region
      $region77: #{tpu_custom_call.1} parent=5 // pred_check
        %p7110 = pneg %p7109
      $region78: #{tpu_custom_call.1} parent=5 // pred_check_branch
        %7112 = sbr.rel (%p7110) target = $region80
      $region79: #{tpu_custom_call.1} parent=5 // pred_region
        %s7113 = ssub.s32 %s22, 2
        // Predicated region
        $region81: #{tpu_custom_call.1} parent=79 // pred_check
          %p7114 = pneg %p203
        $region82: #{tpu_custom_call.1} parent=79 // pred_check_branch
          %7116 = sbr.rel (%p7114) target = $region84
        $region83: #{tpu_custom_call.1} parent=79 // pred_region
          %s7117 = sand.u32 %s188, 1
          %s7118 = scalar_lea.sflag [#allocation4], %s7117
          %s7119 = sand.u32 %s188, 1
          %s7120 = smul.addr %s7119, 64
          %s7121 = scalar_lea.vmem [#allocation13], %s7120
          %7122 = dma.done %s7118, 1024
        $region84: #{tpu_custom_call.1} parent=79 // pred_fallthru
          _
      $region80: #{tpu_custom_call.1} parent=5 // pred_fallthru
        _
    $region6: #{tpu_custom_call.1} parent=1 // loop_footer
      %s26 = sadd.s32 1, %s22
    $region7: #{tpu_custom_call.1} parent=1 // loop_footer_branch
      %21 = sbr.rel target = $region3
    $region8: #{tpu_custom_call.1} parent=1 // loop_exit
      _
    %7123 = vsyncpa [#allocation3], 1
    %s7124 = scalar_lea.sflag [#allocation3], 1
    %7125 = vsyncpa %s7124, 1
    %7126 = vsyncpa [#allocation6], 1
    %7127 = vsyncpa [#allocation9], 1
    %7128 = vsyncpa [#allocation12], 1
    %7129 = vsyncpa [#allocation4], 1
    %s7130 = scalar_lea.sflag [#allocation4], 1
    %7131 = vsyncpa %s7130, 1

</llo_original>
